<compile_context>
chip_gen: v6e
topology: v6e:2x2x1
jax: 0.10.0
libtpu: 0.0.40
codegen_flags: <defaults>
</compile_context>

<pallas_src>
import jax
import jax.numpy as jnp
from jax import lax
from jax.experimental import pallas as pl
from jax.experimental.pallas import tpu as pltpu

LRELU_SLOPE = 0.1
BN_EPS = 1e-5


def _default_vmem_limit():
    try:
        info = pltpu.get_tpu_info()
        for name in ("vmem_capacity_bytes", "vmem_size_bytes", "vmem_bytes"):
            cap = getattr(info, name, None)
            if cap:
                return int(min(cap * 3 // 4, 100 * 1024 * 1024))
    except Exception:
        pass
    return 48 * 1024 * 1024


_VMEM_LIMIT = _default_vmem_limit()


# ---------------------------------------------------------------------------
# Kernel 1: one-pass per-channel sum / sum-of-squares (BatchNorm batch stats)
# for the very first block's input.  Lane-dense (rows, 128) view when C | 128.
# ---------------------------------------------------------------------------
def _make_stats_kernel(rows, tr):
    ragged = (rows % tr) != 0

    def kernel(x_ref, sum_ref, ssq_ref):
        @pl.when(pl.program_id(0) == 0)
        def _init():
            sum_ref[...] = jnp.zeros_like(sum_ref)
            ssq_ref[...] = jnp.zeros_like(ssq_ref)

        x = x_ref[...].astype(jnp.float32)
        if ragged:
            ridx = (lax.broadcasted_iota(jnp.int32, x.shape, 0)
                    + pl.program_id(0) * tr)
            x = jnp.where(ridx < rows, x, 0.0)
        sum_ref[...] += jnp.sum(x, axis=0, keepdims=True)
        ssq_ref[...] += jnp.sum(x * x, axis=0, keepdims=True)

    return kernel


def pallas_channel_stats(x4d):
    """Training-mode BatchNorm2d batch statistics (mean, biased var) per channel."""
    N, H, W, C = x4d.shape
    R = N * H * W
    if C < 128 and 128 % C == 0 and (R * C) % 128 == 0:
        L, fold = 128, 128 // C                      # lane-dense view
        x2d = x4d.reshape((R * C) // 128, 128)
    else:
        L, fold = C, 1
        x2d = x4d.reshape(R, C)
    rows = x2d.shape[0]
    tr = rows if rows <= 1024 else 1024
    grid = pl.cdiv(rows, tr)
    s, ss = pl.pallas_call(
        _make_stats_kernel(rows, tr),
        out_shape=(jax.ShapeDtypeStruct((1, L), jnp.float32),
                   jax.ShapeDtypeStruct((1, L), jnp.float32)),
        grid=(grid,),
        in_specs=[pl.BlockSpec((tr, L), lambda i: (i, 0))],
        out_specs=(pl.BlockSpec((1, L), lambda i: (0, 0)),
                   pl.BlockSpec((1, L), lambda i: (0, 0))),
        compiler_params=pltpu.CompilerParams(
            dimension_semantics=("arbitrary",),
            vmem_limit_bytes=_VMEM_LIMIT),
    )(x2d)
    if fold > 1:
        s = s.reshape(fold, C).sum(axis=0)
        ss = ss.reshape(fold, C).sum(axis=0)
    else:
        s = s.reshape(C)
        ss = ss.reshape(C)
    mean = s / R
    var = jnp.maximum(ss / R - mean * mean, 0.0)     # biased var, as torch fwd
    return mean, var


# ---------------------------------------------------------------------------
# Kernel 2: fused 3x3 conv.
#   prologue : (optional) BN-affine + LeakyReLU applied ONCE to the whole
#              plane, single bf16 cast, exact zero padding (in-kernel halo for
#              stride 1, precomputed mask for the phase-split stride-2 path).
#   body     : im2col into a VMEM scratch -> ONE (M, 9*Cin)x(9*Cin, Cout) MXU
#              matmul with f32 accumulation.
#   epilogue : (optional) per-sample timestep-emb bias, fused 1x1 shortcut
#              conv (with optional activation), identity residual, and the
#              per-step BN partial sums of the stored value (one pass).
# ---------------------------------------------------------------------------
def _make_fused_conv_kernel(*, KH, KW, stride, padding, H, W, Hq, Ho, Wo,
                            Cin, Cout, BT, apply_act, has_bias, has_res,
                            has_sc, sc_act, prepadded):
    s = stride
    M = BT * Ho * Wo

    def kernel(*refs):
        it = iter(refs)
        x_ref = next(it)
        w_ref = next(it)
        scale_ref = next(it) if apply_act else None
        shift_ref = next(it) if apply_act else None
        mask_ref = next(it) if (apply_act and prepadded) else None
        bias_ref = next(it) if has_bias else None
        res_ref = next(it) if has_res else None
        sx_ref = next(it) if has_sc else None
        sw_ref = next(it) if has_sc else None
        sscale_ref = next(it) if (has_sc and sc_act) else None
        sshift_ref = next(it) if (has_sc and sc_act) else None
        o_ref = next(it)
        sum_ref = next(it)
        ssq_ref = next(it)
        act_ref = next(it)
        col_ref = next(it)

        # ---- prologue: whole-plane BN affine + LeakyReLU, single bf16 cast --
        if apply_act:
            xv = x_ref[...].astype(jnp.float32)
            t = xv * scale_ref[...] + shift_ref[...]
            t = jnp.where(t >= 0, t, LRELU_SLOPE * t)
            if prepadded:
                # the activation must not leak into the conv's zero padding
                t = t * mask_ref[...]
            xb = t.astype(jnp.bfloat16)
        else:
            xb = x_ref[...].astype(jnp.bfloat16)

        if prepadded:
            act_ref[...] = xb
        else:
            # zero-padding done in VMEM: memset halo, store interior
            act_ref[...] = jnp.zeros_like(act_ref)
            act_ref[:, padding:padding + H, padding:padding + W, :] = xb

        # ---- im2col into VMEM -> one big MXU matmul ----
        for kh in range(KH):
            for kw in range(KW):
                t_idx = kh * KW + kw
                if prepadded and s > 1:
                    ph = (kh % s) * s + (kw % s)          # phase plane
                    r0 = ph * Hq + kh // s
                    c0 = kw // s
                else:
                    r0, c0 = kh, kw
                tap = act_ref[:, r0:r0 + Ho, c0:c0 + Wo, :]
                col_ref[:, t_idx * Cin:(t_idx + 1) * Cin] = tap.reshape(M, Cin)

        acc = jnp.dot(col_ref[...], w_ref[...],
                      preferred_element_type=jnp.float32)        # (M, Cout)
        acc = acc.reshape(BT, Ho * Wo, Cout)

        # ---- epilogues ----
        if has_bias:                                   # timestep-emb bias
            acc = acc + bias_ref[...]
        if has_sc:                                     # fused 1x1 shortcut conv
            sx = sx_ref[...].astype(jnp.float32)
            if sc_act:
                tt = sx * sscale_ref[...] + sshift_ref[...]
                sx = jnp.where(tt >= 0, tt, LRELU_SLOPE * tt)
            sc = jnp.dot(sx.reshape(M, sx.shape[-1]).astype(jnp.bfloat16),
                         sw_ref[...], preferred_element_type=jnp.float32)
            acc = acc + sc.reshape(BT, Ho * Wo, Cout)
        if has_res:                                    # fused identity residual
            acc = acc + res_ref[...].astype(jnp.float32)

        # per-step partial BN stats of (the f32 value of) what is stored
        part = jnp.sum(acc, axis=0)                    # (Ho*Wo, Cout)
        sum_ref[...] = jnp.sum(part, axis=0, keepdims=True)
        part2 = jnp.sum(acc * acc, axis=0)
        ssq_ref[...] = jnp.sum(part2, axis=0, keepdims=True)

        o_ref[...] = acc.astype(o_ref.dtype)

    return kernel


def _pad_and_phase_split(x, KH, KW, stride, padding):
    """Zero-pad and, for stride>1, split into stride*stride phase planes so every
    conv tap becomes a unit-stride *static* slice inside the kernel."""
    N, H, W, C = x.shape
    s = stride
    Ho = (H + 2 * padding - KH) // s + 1
    Wo = (W + 2 * padding - KW) // s + 1
    Hneed = (Ho - 1) * s + KH
    Wneed = (Wo - 1) * s + KW
    xp = jnp.pad(x, ((0, 0),
                     (padding, max(0, Hneed - H - padding)),
                     (padding, max(0, Wneed - W - padding)),
                     (0, 0)))
    Hp, Wp = xp.shape[1], xp.shape[2]
    if s == 1:
        return xp, Hp, Wp, Ho, Wo
    Hq = -(-Hp // s)
    Wq = -(-Wp // s)
    xp = jnp.pad(xp, ((0, 0), (0, Hq * s - Hp), (0, Wq * s - Wp), (0, 0)))
    xph = xp.reshape(N, Hq, s, Wq, s, C).transpose(0, 2, 4, 1, 3, 5)
    xph = xph.reshape(N, s * s * Hq, Wq, C)
    return xph, Hq, Wq, Ho, Wo


def _pick_batch_tile(n, rows_per_sample):
    """Samples per grid step: aim at M >= ~256 rows but keep >= 2 grid steps."""
    target = max(1, 256 // max(1, rows_per_sample))
    best = 1
    for d in range(1, n + 1):
        if n % d != 0 or d > target:
            continue
        if n >= 2 and n // d < 2:
            continue
        best = d
    return best


def fused_conv(x, w_torch, *, stride, padding,
               act_scale=None, act_shift=None,
               sample_bias=None, residual=None,
               shortcut_x=None, shortcut_w=None,
               shortcut_scale=None, shortcut_shift=None,
               out_dtype=jnp.bfloat16):
    """3x3 conv (torch weight layout (Cout,Cin,KH,KW), no bias) with fused
    prologue/epilogues.  Returns (out NHWC, per-step sum, per-step sum-of-sq)."""
    N, H, W, Cin = x.shape
    Cout, Cin_w, KH, KW = w_torch.shape
    assert Cin_w == Cin

    apply_act = act_scale is not None
    has_bias = sample_bias is not None
    has_res = residual is not None
    has_sc = shortcut_x is not None
    sc_act = shortcut_scale is not None
    prepadded = stride > 1

    mask = None
    if prepadded:
        xin, Hq, PW, Ho, Wo = _pad_and_phase_split(x, KH, KW, stride, padding)
        PH = stride * stride * Hq
        if apply_act:
            mask = _pad_and_phase_split(
                jnp.ones((1, H, W, 1), jnp.float32), KH, KW, stride, padding)[0][0]
    else:
        Ho = H + 2 * padding - KH + 1
        Wo = W + 2 * padding - KW + 1
        Hq = 0
        PH, PW = H + 2 * padding, W + 2 * padding
        xin = x

    BT = _pick_batch_tile(N, Ho * Wo)
    G = N // BT
    M = BT * Ho * Wo
    KC = KH * KW * Cin

    wt = jnp.transpose(w_torch, (2, 3, 1, 0)).reshape(KC, Cout).astype(jnp.bfloat16)

    args = [xin, wt]
    in_specs = [
        pl.BlockSpec((BT,) + tuple(xin.shape[1:]), lambda n: (n, 0, 0, 0)),
        pl.BlockSpec((KC, Cout), lambda n: (0, 0)),
    ]
    if apply_act:
        args += [act_scale.reshape(1, Cin).astype(jnp.float32),
                 act_shift.reshape(1, Cin).astype(jnp.float32)]
        in_specs += [pl.BlockSpec((1, Cin), lambda n: (0, 0)),
                     pl.BlockSpec((1, Cin), lambda n: (0, 0))]
        if prepadded:
            args.append(mask)
            in_specs.append(pl.BlockSpec(tuple(mask.shape), lambda n: (0, 0, 0)))
    if has_bias:
        args.append(sample_bias.reshape(N, 1, Cout).astype(jnp.float32))
        in_specs.append(pl.BlockSpec((BT, 1, Cout), lambda n: (n, 0, 0)))
    if has_res:
        args.append(residual.reshape(N, Ho * Wo, Cout))
        in_specs.append(pl.BlockSpec((BT, Ho * Wo, Cout), lambda n: (n, 0, 0)))
    if has_sc:
        Cs = shortcut_x.shape[-1]
        args += [shortcut_x.reshape(N, Ho * Wo, Cs),
                 shortcut_w.astype(jnp.bfloat16)]
        in_specs += [pl.BlockSpec((BT, Ho * Wo, Cs), lambda n: (n, 0, 0)),
                     pl.BlockSpec((Cs, Cout), lambda n: (0, 0))]
        if sc_act:
            args += [shortcut_scale.reshape(1, Cs).astype(jnp.float32),
                     shortcut_shift.reshape(1, Cs).astype(jnp.float32)]
            in_specs += [pl.BlockSpec((1, Cs), lambda n: (0, 0)),
                         pl.BlockSpec((1, Cs), lambda n: (0, 0))]

    kernel = _make_fused_conv_kernel(
        KH=KH, KW=KW, stride=stride, padding=padding, H=H, W=W, Hq=Hq,
        Ho=Ho, Wo=Wo, Cin=Cin, Cout=Cout, BT=BT,
        apply_act=apply_act, has_bias=has_bias, has_res=has_res,
        has_sc=has_sc, sc_act=sc_act, prepadded=prepadded)

    out, ssum, ssq = pl.pallas_call(
        kernel,
        out_shape=(jax.ShapeDtypeStruct((N, Ho * Wo, Cout), out_dtype),
                   jax.ShapeDtypeStruct((G, 1, Cout), jnp.float32),
                   jax.ShapeDtypeStruct((G, 1, Cout), jnp.float32)),
        grid=(G,),
        in_specs=in_specs,
        out_specs=(pl.BlockSpec((BT, Ho * Wo, Cout), lambda n: (n, 0, 0)),
                   pl.BlockSpec((None, 1, Cout), lambda n: (n, 0, 0)),
                   pl.BlockSpec((None, 1, Cout), lambda n: (n, 0, 0))),
        scratch_shapes=[pltpu.VMEM((BT, PH, PW, Cin), jnp.bfloat16),
                        pltpu.VMEM((M, KC), jnp.bfloat16)],
        compiler_params=pltpu.CompilerParams(
            dimension_semantics=("parallel",),
            vmem_limit_bytes=_VMEM_LIMIT),
    )(*args)
    return out.reshape(N, Ho, Wo, Cout), ssum, ssq


# ------------------------------- block / model ------------------------------

def _bn_affine(gamma, beta, mean, var, C):
    inv = gamma * lax.rsqrt(var + BN_EPS)
    return inv.reshape(1, C), (beta - mean * inv).reshape(1, C)


def timestep_basic_block_forward(x, emb, p, in_stats=None):
    equal, stride, abr = p["equal"], p["stride"], p["activate_before_residual"]
    N, H, W, Cin = x.shape
    Cout = p["w1"].shape[0]

    # bn1 is only needed when its output is consumed (FixMatch quirk: when
    # not equalInOut and not activate_before_residual, bn1/relu1 is unused).
    need_bn1 = equal or abr
    scale1 = shift1 = None
    if need_bn1:
        if in_stats is None:
            mean1, var1 = pallas_channel_stats(x)
        else:
            mean1, var1 = in_stats          # carried from previous block's conv2
        scale1, shift1 = _bn_affine(p["gamma1"], p["beta1"], mean1, var1, Cin)

    # timestep embedding projection: tiny, plain JAX (launch-overhead dominated)
    emb_bias = emb @ p["we"].T + p["be"][None, :]      # (N, Cout)

    # conv1 with fused bn1+lrelu prologue and emb-bias epilogue (bf16 output)
    h, hsum, hssq = fused_conv(
        x, p["w1"], stride=stride, padding=1,
        act_scale=scale1, act_shift=shift1, sample_bias=emb_bias,
        out_dtype=jnp.bfloat16)
    _, Ho, Wo, _ = h.shape
    cnt = float(N * Ho * Wo)

    # bn2 statistics from conv1's fused partial sums (no extra pass over h)
    mean2 = hsum.sum(axis=(0, 1)) / cnt
    var2 = jnp.maximum(hssq.sum(axis=(0, 1)) / cnt - mean2 * mean2, 0.0)
    scale2, shift2 = _bn_affine(p["gamma2"], p["beta2"], mean2, var2, Cout)

    # TODO(synk): dropout assumed identity (module instantiated with drop_rate=0.0)
    # conv2 with fused bn2+lrelu prologue and residual / shortcut-conv epilogue
    if equal:
        out, osum, ossq = fused_conv(
            h, p["w2"], stride=1, padding=1,
            act_scale=scale2, act_shift=shift2, residual=x,
            out_dtype=jnp.bfloat16)
    else:
        xs = x[:, ::stride, ::stride, :]                              # 1x1, pad=0
        ws = jnp.transpose(p["ws"][:, :, 0, 0]).astype(jnp.bfloat16)  # (Cin,Cout)
        out, osum, ossq = fused_conv(
            h, p["w2"], stride=1, padding=1,
            act_scale=scale2, act_shift=shift2,
            shortcut_x=xs, shortcut_w=ws,
            shortcut_scale=scale1 if abr else None,
            shortcut_shift=shift1 if abr else None,
            out_dtype=jnp.bfloat16)

    # carry the output's batch statistics forward (next block's bn1 input)
    mean_o = osum.sum(axis=(0, 1)) / cnt
    var_o = jnp.maximum(ossq.sum(axis=(0, 1)) / cnt - mean_o * mean_o, 0.0)
    return out, (mean_o, var_o)


def timestep_network_block_forward(x, emb, params):
    out = x
    stats = None
    for p in params:
        out, stats = timestep_basic_block_forward(out, emb, p, in_stats=stats)
    return out.astype(jnp.float32)


def init_network_block_params(key, nb_layers, in_planes, out_planes, stride,
                              emb_size, activate_before_residual):
    params = []
    for i in range(int(nb_layers)):
        cin = in_planes if i == 0 else out_planes
        s = stride if i == 0 else 1
        equal = (cin == out_planes)
        key, k0, k1, k2, k3, k4, k5, k6 = jax.random.split(key, 8)
        p = dict(
            gamma1=jnp.ones((cin,), jnp.float32)
                   + 0.01 * jax.random.normal(k0, (cin,), jnp.float32),
            beta1=0.01 * jax.random.normal(k1, (cin,), jnp.float32),
            w1=0.1 * jax.random.normal(k2, (out_planes, cin, 3, 3), jnp.float32),
            we=0.1 * jax.random.normal(k3, (out_planes, emb_size), jnp.float32),
            be=0.01 * jax.random.normal(k4, (out_planes,), jnp.float32),
            gamma2=jnp.ones((out_planes,), jnp.float32),
            beta2=jnp.zeros((out_planes,), jnp.float32),
            w2=0.1 * jax.random.normal(k5, (out_planes, out_planes, 3, 3),
                                       jnp.float32),
            equal=equal, stride=s,
            activate_before_residual=activate_before_residual,
        )
        if not equal:
            p["ws"] = 0.1 * jax.random.normal(k6, (out_planes, cin, 1, 1),
                                              jnp.float32)
        params.append(p)
    return params


if __name__ == "__main__":
    key = jax.random.PRNGKey(0)
    k_x, k_emb, k_p = jax.random.split(key, 3)

    # Small shapes consistent with the module: nb_layers=2, in=4, out=8,
    # stride=2, emb_size=16, drop_rate=0.0, activate_before_residual=True.
    N, Cin, H, W = 2, 4, 16, 16
    Cout, emb_size, nb_layers, stride = 8, 16, 2, 2

    x_nchw = jax.random.normal(k_x, (N, Cin, H, W), jnp.float32)
    emb = jax.random.normal(k_emb, (N, emb_size), jnp.float32)
    params = init_network_block_params(
        k_p, nb_layers, Cin, Cout, stride, emb_size,
        activate_before_residual=True)

    fwd = jax.jit(lambda xx, ee: timestep_network_block_forward(xx, ee, params))

    x_nhwc = jnp.transpose(x_nchw, (0, 2, 3, 1))          # NCHW -> NHWC
    out_nhwc = fwd(x_nhwc, emb)
    out_nchw = jnp.transpose(out_nhwc, (0, 3, 1, 2))      # back to NCHW
    jax.block_until_ready(out_nchw)

    assert out_nchw.shape == (N, Cout, H // stride, W // stride)
    assert bool(jnp.all(jnp.isfinite(out_nchw)))
    print("KERNEL_OK")
</pallas_src>

<mosaic_0001>
module attributes {stable_mosaic.version = 11 : i64} {
  func.func @kernel(%arg0: i32, %arg1: memref<16x128xf32, #tpu.memory_space<vmem>>, %arg2: memref<1x128xf32, #tpu.memory_space<vmem>>, %arg3: memref<1x128xf32, #tpu.memory_space<vmem>>) attributes {dimension_semantics = [#tpu.dimension_semantics<arbitrary>], iteration_bounds = array<i64: 1>, scalar_prefetch = 0 : i64, scratch_operands = 0 : i64, tpu.core_type = #tpu.core_type<tc>, window_params = [{transform_indices = @transform_0, window_bounds = array<i64: 16, 128>}, {pipeline_mode = #tpu.pipeline_mode<synchronous>, transform_indices = @transform_1, window_bounds = array<i64: 1, 128>}, {pipeline_mode = #tpu.pipeline_mode<synchronous>, transform_indices = @transform_2, window_bounds = array<i64: 1, 128>}]} {
    %c0_i32 = arith.constant 0 : i32
    %0 = arith.cmpi eq, %arg0, %c0_i32 : i32
    %1 = arith.extui %0 : i1 to i32
    %c0_i32_0 = arith.constant 0 : i32
    %2 = arith.cmpi ne, %1, %c0_i32_0 : i32
    scf.if %2 {
      %cst_11 = arith.constant 0.000000e+00 : f32
      %15 = vector.broadcast %cst_11 : f32 to vector<1x128xf32>
      %c0_12 = arith.constant 0 : index
      %c0_13 = arith.constant 0 : index
      %16 = vector.load %arg2[%c0_12, %c0_13] : memref<1x128xf32, #tpu.memory_space<vmem>>, vector<1x128xf32>
      tpu.vector_store %arg2[%c0_12, %c0_13], %15 {strides = array<i32>} : memref<1x128xf32, #tpu.memory_space<vmem>>, vector<1x128xf32>,
      %cst_14 = arith.constant 0.000000e+00 : f32
      %17 = vector.broadcast %cst_14 : f32 to vector<1x128xf32>
      %c0_15 = arith.constant 0 : index
      %c0_16 = arith.constant 0 : index
      %18 = vector.load %arg3[%c0_15, %c0_16] : memref<1x128xf32, #tpu.memory_space<vmem>>, vector<1x128xf32>
      tpu.vector_store %arg3[%c0_15, %c0_16], %17 {strides = array<i32>} : memref<1x128xf32, #tpu.memory_space<vmem>>, vector<1x128xf32>,
    } else {
    }
    %c0 = arith.constant 0 : index
    %c0_1 = arith.constant 0 : index
    %3 = vector.load %arg1[%c0, %c0_1] : memref<16x128xf32, #tpu.memory_space<vmem>>, vector<16x128xf32>
    %c0_2 = arith.constant 0 : index
    %c0_3 = arith.constant 0 : index
    %4 = vector.load %arg2[%c0_2, %c0_3] : memref<1x128xf32, #tpu.memory_space<vmem>>, vector<1x128xf32>
    %cst = arith.constant dense<0.000000e+00> : vector<128xf32>
    %5 = vector.multi_reduction <add>, %3, %cst [0] : vector<16x128xf32> to vector<128xf32>
    %6 = vector.shape_cast %5 : vector<128xf32> to vector<1x128xf32>
    %7 = arith.addf %4, %6 : vector<1x128xf32>
    %c0_4 = arith.constant 0 : index
    %c0_5 = arith.constant 0 : index
    %8 = vector.load %arg2[%c0_4, %c0_5] : memref<1x128xf32, #tpu.memory_space<vmem>>, vector<1x128xf32>
    tpu.vector_store %arg2[%c0_4, %c0_5], %7 {strides = array<i32>} : memref<1x128xf32, #tpu.memory_space<vmem>>, vector<1x128xf32>,
    %c0_6 = arith.constant 0 : index
    %c0_7 = arith.constant 0 : index
    %9 = vector.load %arg3[%c0_6, %c0_7] : memref<1x128xf32, #tpu.memory_space<vmem>>, vector<1x128xf32>
    %10 = arith.mulf %3, %3 : vector<16x128xf32>
    %cst_8 = arith.constant dense<0.000000e+00> : vector<128xf32>
    %11 = vector.multi_reduction <add>, %10, %cst_8 [0] : vector<16x128xf32> to vector<128xf32>
    %12 = vector.shape_cast %11 : vector<128xf32> to vector<1x128xf32>
    %13 = arith.addf %9, %12 : vector<1x128xf32>
    %c0_9 = arith.constant 0 : index
    %c0_10 = arith.constant 0 : index
    %14 = vector.load %arg3[%c0_9, %c0_10] : memref<1x128xf32, #tpu.memory_space<vmem>>, vector<1x128xf32>
    tpu.vector_store %arg3[%c0_9, %c0_10], %13 {strides = array<i32>} : memref<1x128xf32, #tpu.memory_space<vmem>>, vector<1x128xf32>,
    return
  }
  func.func @transform_0(%arg0: i32) -> (i32, i32) {
    %c0_i32 = arith.constant 0 : i32
    %c0_i32_0 = arith.constant 0 : i32
    return %arg0, %c0_i32 : i32, i32
  }
  func.func @transform_1(%arg0: i32) -> (i32, i32) {
    %c0_i32 = arith.constant 0 : i32
    %c0_i32_0 = arith.constant 0 : i32
    %c0_i32_1 = arith.constant 0 : i32
    return %c0_i32, %c0_i32_0 : i32, i32
  }
  func.func @transform_2(%arg0: i32) -> (i32, i32) {
    %c0_i32 = arith.constant 0 : i32
    %c0_i32_0 = arith.constant 0 : i32
    %c0_i32_1 = arith.constant 0 : i32
    return %c0_i32, %c0_i32_0 : i32, i32
  }
}

module attributes {stable_mosaic.version = 11 : i64} {
  func.func @kernel(%arg0: i32, %arg1: memref<1x36x9x4xf32, #tpu.memory_space<vmem>>, %arg2: memref<36x8xbf16, #tpu.memory_space<vmem>>, %arg3: memref<1x4xf32, #tpu.memory_space<vmem>>, %arg4: memref<1x4xf32, #tpu.memory_space<vmem>>, %arg5: memref<36x9x1xf32, #tpu.memory_space<vmem>>, %arg6: memref<1x1x8xf32, #tpu.memory_space<vmem>>, %arg7: memref<1x64x8xbf16, #tpu.memory_space<vmem>>, %arg8: memref<1x1x8xf32, #tpu.memory_space<vmem>>, %arg9: memref<1x1x8xf32, #tpu.memory_space<vmem>>, %arg10: memref<1x36x9x4xbf16, #tpu.memory_space<vmem>>, %arg11: memref<64x36xbf16, #tpu.memory_space<vmem>>) attributes {dimension_semantics = [#tpu.dimension_semantics<parallel>], iteration_bounds = array<i64: 2>, scalar_prefetch = 0 : i64, scratch_operands = 2 : i64, tpu.core_type = #tpu.core_type<tc>, window_params = [{transform_indices = @transform_0, window_bounds = array<i64: 1, 36, 9, 4>}, {pipeline_mode = #tpu.pipeline_mode<synchronous>, transform_indices = @transform_1, window_bounds = array<i64: 36, 8>}, {pipeline_mode = #tpu.pipeline_mode<synchronous>, transform_indices = @transform_2, window_bounds = array<i64: 1, 4>}, {pipeline_mode = #tpu.pipeline_mode<synchronous>, transform_indices = @transform_3, window_bounds = array<i64: 1, 4>}, {pipeline_mode = #tpu.pipeline_mode<synchronous>, transform_indices = @transform_4, window_bounds = array<i64: 36, 9, 1>}, {transform_indices = @transform_5, window_bounds = array<i64: 1, 1, 8>}, {transform_indices = @transform_6, window_bounds = array<i64: 1, 64, 8>}, {transform_indices = @transform_7, window_bounds = array<i64: 1, 1, 8>}, {transform_indices = @transform_8, window_bounds = array<i64: 1, 1, 8>}]} {
    %c0 = arith.constant 0 : index
    %c0_0 = arith.constant 0 : index
    %c0_1 = arith.constant 0 : index
    %c0_2 = arith.constant 0 : index
    %0 = vector.load %arg1[%c0, %c0_0, %c0_1, %c0_2] : memref<1x36x9x4xf32, #tpu.memory_space<vmem>>, vector<1x36x9x4xf32>
    %c0_3 = arith.constant 0 : index
    %c0_4 = arith.constant 0 : index
    %1 = vector.load %arg3[%c0_3, %c0_4] : memref<1x4xf32, #tpu.memory_space<vmem>>, vector<1x4xf32>
    %2 = vector.shape_cast %1 : vector<1x4xf32> to vector<1x1x1x4xf32>
    %3 = vector.broadcast %2 : vector<1x1x1x4xf32> to vector<1x36x9x4xf32>
    %4 = arith.mulf %0, %3 : vector<1x36x9x4xf32>
    %c0_5 = arith.constant 0 : index
    %c0_6 = arith.constant 0 : index
    %5 = vector.load %arg4[%c0_5, %c0_6] : memref<1x4xf32, #tpu.memory_space<vmem>>, vector<1x4xf32>
    %6 = vector.shape_cast %5 : vector<1x4xf32> to vector<1x1x1x4xf32>
    %7 = vector.broadcast %6 : vector<1x1x1x4xf32> to vector<1x36x9x4xf32>
    %8 = arith.addf %4, %7 : vector<1x36x9x4xf32>
    %cst = arith.constant 0.000000e+00 : f32
    %9 = vector.broadcast %cst : f32 to vector<1x36x9x4xf32>
    %10 = arith.cmpf oge, %8, %9 : vector<1x36x9x4xf32>
    %cst_7 = arith.constant 1.000000e-01 : f32
    %11 = vector.broadcast %cst_7 : f32 to vector<1x36x9x4xf32>
    %12 = arith.mulf %11, %8 : vector<1x36x9x4xf32>
    %13 = arith.select %10, %8, %12 : vector<1x36x9x4xi1>, vector<1x36x9x4xf32>
    %c0_8 = arith.constant 0 : index
    %c0_9 = arith.constant 0 : index
    %c0_10 = arith.constant 0 : index
    %14 = vector.load %arg5[%c0_8, %c0_9, %c0_10] : memref<36x9x1xf32, #tpu.memory_space<vmem>>, vector<36x9x1xf32>
    %15 = vector.shape_cast %14 : vector<36x9x1xf32> to vector<1x36x9x1xf32>
    %16 = vector.broadcast %15 : vector<1x36x9x1xf32> to vector<1x36x9x4xf32>
    %17 = arith.mulf %13, %16 : vector<1x36x9x4xf32>
    %18 = arith.truncf %17 : vector<1x36x9x4xf32> to vector<1x36x9x4xbf16>
    %c0_11 = arith.constant 0 : index
    %c0_12 = arith.constant 0 : index
    %c0_13 = arith.constant 0 : index
    %c0_14 = arith.constant 0 : index
    %19 = vector.load %arg10[%c0_11, %c0_12, %c0_13, %c0_14] : memref<1x36x9x4xbf16, #tpu.memory_space<vmem>>, vector<1x36x9x4xbf16>
    tpu.vector_store %arg10[%c0_11, %c0_12, %c0_13, %c0_14], %18 {strides = array<i32>} : memref<1x36x9x4xbf16, #tpu.memory_space<vmem>>, vector<1x36x9x4xbf16>,
    %c0_15 = arith.constant 0 : index
    %c0_16 = arith.constant 0 : index
    %c0_17 = arith.constant 0 : index
    %c0_18 = arith.constant 0 : index
    %20 = vector.load %arg10[%c0_15, %c0_16, %c0_17, %c0_18] : memref<1x36x9x4xbf16, #tpu.memory_space<vmem>>, vector<1x8x8x4xbf16>
    %21 = vector.shape_cast %20 : vector<1x8x8x4xbf16> to vector<64x4xbf16>
    %c0_19 = arith.constant 0 : index
    %c0_20 = arith.constant 0 : index
    %22 = vector.load %arg11[%c0_19, %c0_20] : memref<64x36xbf16, #tpu.memory_space<vmem>>, vector<64x4xbf16>
    tpu.vector_store %arg11[%c0_19, %c0_20], %21 {strides = array<i32>} : memref<64x36xbf16, #tpu.memory_space<vmem>>, vector<64x4xbf16>,
    %c0_21 = arith.constant 0 : index
    %c9 = arith.constant 9 : index
    %c0_22 = arith.constant 0 : index
    %c0_23 = arith.constant 0 : index
    %23 = vector.load %arg10[%c0_21, %c9, %c0_22, %c0_23] : memref<1x36x9x4xbf16, #tpu.memory_space<vmem>>, vector<1x8x8x4xbf16>
    %24 = vector.shape_cast %23 : vector<1x8x8x4xbf16> to vector<64x4xbf16>
    %c0_24 = arith.constant 0 : index
    %c4 = arith.constant 4 : index
    %25 = vector.load %arg11[%c0_24, %c4] : memref<64x36xbf16, #tpu.memory_space<vmem>>, vector<64x4xbf16>
    tpu.vector_store %arg11[%c0_24, %c4], %24 {strides = array<i32>} : memref<64x36xbf16, #tpu.memory_space<vmem>>, vector<64x4xbf16>,
    %c0_25 = arith.constant 0 : index
    %c0_26 = arith.constant 0 : index
    %c1 = arith.constant 1 : index
    %c0_27 = arith.constant 0 : index
    %26 = vector.load %arg10[%c0_25, %c0_26, %c1, %c0_27] : memref<1x36x9x4xbf16, #tpu.memory_space<vmem>>, vector<1x8x8x4xbf16>
    %27 = vector.shape_cast %26 : vector<1x8x8x4xbf16> to vector<64x4xbf16>
    %c0_28 = arith.constant 0 : index
    %c8 = arith.constant 8 : index
    %28 = vector.load %arg11[%c0_28, %c8] : memref<64x36xbf16, #tpu.memory_space<vmem>>, vector<64x4xbf16>
    tpu.vector_store %arg11[%c0_28, %c8], %27 {strides = array<i32>} : memref<64x36xbf16, #tpu.memory_space<vmem>>, vector<64x4xbf16>,
    %c0_29 = arith.constant 0 : index
    %c18 = arith.constant 18 : index
    %c0_30 = arith.constant 0 : index
    %c0_31 = arith.constant 0 : index
    %29 = vector.load %arg10[%c0_29, %c18, %c0_30, %c0_31] : memref<1x36x9x4xbf16, #tpu.memory_space<vmem>>, vector<1x8x8x4xbf16>
    %30 = vector.shape_cast %29 : vector<1x8x8x4xbf16> to vector<64x4xbf16>
    %c0_32 = arith.constant 0 : index
    %c12 = arith.constant 12 : index
    %31 = vector.load %arg11[%c0_32, %c12] : memref<64x36xbf16, #tpu.memory_space<vmem>>, vector<64x4xbf16>
    tpu.vector_store %arg11[%c0_32, %c12], %30 {strides = array<i32>} : memref<64x36xbf16, #tpu.memory_space<vmem>>, vector<64x4xbf16>,
    %c0_33 = arith.constant 0 : index
    %c27 = arith.constant 27 : index
    %c0_34 = arith.constant 0 : index
    %c0_35 = arith.constant 0 : index
    %32 = vector.load %arg10[%c0_33, %c27, %c0_34, %c0_35] : memref<1x36x9x4xbf16, #tpu.memory_space<vmem>>, vector<1x8x8x4xbf16>
    %33 = vector.shape_cast %32 : vector<1x8x8x4xbf16> to vector<64x4xbf16>
    %c0_36 = arith.constant 0 : index
    %c16 = arith.constant 16 : index
    %34 = vector.load %arg11[%c0_36, %c16] : memref<64x36xbf16, #tpu.memory_space<vmem>>, vector<64x4xbf16>
    tpu.vector_store %arg11[%c0_36, %c16], %33 {strides = array<i32>} : memref<64x36xbf16, #tpu.memory_space<vmem>>, vector<64x4xbf16>,
    %c0_37 = arith.constant 0 : index
    %c18_38 = arith.constant 18 : index
    %c1_39 = arith.constant 1 : index
    %c0_40 = arith.constant 0 : index
    %35 = vector.load %arg10[%c0_37, %c18_38, %c1_39, %c0_40] : memref<1x36x9x4xbf16, #tpu.memory_space<vmem>>, vector<1x8x8x4xbf16>
    %36 = vector.shape_cast %35 : vector<1x8x8x4xbf16> to vector<64x4xbf16>
    %c0_41 = arith.constant 0 : index
    %c20 = arith.constant 20 : index
    %37 = vector.load %arg11[%c0_41, %c20] : memref<64x36xbf16, #tpu.memory_space<vmem>>, vector<64x4xbf16>
    tpu.vector_store %arg11[%c0_41, %c20], %36 {strides = array<i32>} : memref<64x36xbf16, #tpu.memory_space<vmem>>, vector<64x4xbf16>,
    %c0_42 = arith.constant 0 : index
    %c1_43 = arith.constant 1 : index
    %c0_44 = arith.constant 0 : index
    %c0_45 = arith.constant 0 : index
    %38 = vector.load %arg10[%c0_42, %c1_43, %c0_44, %c0_45] : memref<1x36x9x4xbf16, #tpu.memory_space<vmem>>, vector<1x8x8x4xbf16>
    %39 = vector.shape_cast %38 : vector<1x8x8x4xbf16> to vector<64x4xbf16>
    %c0_46 = arith.constant 0 : index
    %c24 = arith.constant 24 : index
    %40 = vector.load %arg11[%c0_46, %c24] : memref<64x36xbf16, #tpu.memory_space<vmem>>, vector<64x4xbf16>
    tpu.vector_store %arg11[%c0_46, %c24], %39 {strides = array<i32>} : memref<64x36xbf16, #tpu.memory_space<vmem>>, vector<64x4xbf16>,
    %c0_47 = arith.constant 0 : index
    %c10 = arith.constant 10 : index
    %c0_48 = arith.constant 0 : index
    %c0_49 = arith.constant 0 : index
    %41 = vector.load %arg10[%c0_47, %c10, %c0_48, %c0_49] : memref<1x36x9x4xbf16, #tpu.memory_space<vmem>>, vector<1x8x8x4xbf16>
    %42 = vector.shape_cast %41 : vector<1x8x8x4xbf16> to vector<64x4xbf16>
    %c0_50 = arith.constant 0 : index
    %c28 = arith.constant 28 : index
    %43 = vector.load %arg11[%c0_50, %c28] : memref<64x36xbf16, #tpu.memory_space<vmem>>, vector<64x4xbf16>
    tpu.vector_store %arg11[%c0_50, %c28], %42 {strides = array<i32>} : memref<64x36xbf16, #tpu.memory_space<vmem>>, vector<64x4xbf16>,
    %c0_51 = arith.constant 0 : index
    %c1_52 = arith.constant 1 : index
    %c1_53 = arith.constant 1 : index
    %c0_54 = arith.constant 0 : index
    %44 = vector.load %arg10[%c0_51, %c1_52, %c1_53, %c0_54] : memref<1x36x9x4xbf16, #tpu.memory_space<vmem>>, vector<1x8x8x4xbf16>
    %45 = vector.shape_cast %44 : vector<1x8x8x4xbf16> to vector<64x4xbf16>
    %c0_55 = arith.constant 0 : index
    %c32 = arith.constant 32 : index
    %46 = vector.load %arg11[%c0_55, %c32] : memref<64x36xbf16, #tpu.memory_space<vmem>>, vector<64x4xbf16>
    tpu.vector_store %arg11[%c0_55, %c32], %45 {strides = array<i32>} : memref<64x36xbf16, #tpu.memory_space<vmem>>, vector<64x4xbf16>,
    %c0_56 = arith.constant 0 : index
    %c0_57 = arith.constant 0 : index
    %47 = vector.load %arg11[%c0_56, %c0_57] : memref<64x36xbf16, #tpu.memory_space<vmem>>, vector<64x36xbf16>
    %c0_58 = arith.constant 0 : index
    %c0_59 = arith.constant 0 : index
    %48 = vector.load %arg2[%c0_58, %c0_59] : memref<36x8xbf16, #tpu.memory_space<vmem>>, vector<36x8xbf16>
    %cst_60 = arith.constant dense<0.000000e+00> : vector<64x8xf32>
    %49 = tpu.matmul %47, %48, %cst_60 {dimension_numbers = #tpu.dot_dimension_numbers<[1], [0], [0], [1], [0, 0, 1, 1], [], []>} : vector<64x36xbf16>, vector<36x8xbf16>, vector<64x8xf32> -> vector<64x8xf32>
    %50 = vector.shape_cast %49 : vector<64x8xf32> to vector<1x64x8xf32>
    %c0_61 = arith.constant 0 : index
    %c0_62 = arith.constant 0 : index
    %c0_63 = arith.constant 0 : index
    %51 = vector.load %arg6[%c0_61, %c0_62, %c0_63] : memref<1x1x8xf32, #tpu.memory_space<vmem>>, vector<1x1x8xf32>
    %52 = vector.broadcast %51 : vector<1x1x8xf32> to vector<1x64x8xf32>
    %53 = arith.addf %50, %52 : vector<1x64x8xf32>
    %cst_64 = arith.constant dense<0.000000e+00> : vector<64x8xf32>
    %54 = vector.multi_reduction <add>, %53, %cst_64 [0] : vector<1x64x8xf32> to vector<64x8xf32>
    %cst_65 = arith.constant dense<0.000000e+00> : vector<8xf32>
    %55 = vector.multi_reduction <add>, %54, %cst_65 [0] : vector<64x8xf32> to vector<8xf32>
    %56 = vector.shape_cast %55 : vector<8xf32> to vector<1x8xf32>
    %c0_66 = arith.constant 0 : index
    %c0_67 = arith.constant 0 : index
    %c0_68 = arith.constant 0 : index
    %57 = vector.load %arg8[%c0_66, %c0_67, %c0_68] : memref<1x1x8xf32, #tpu.memory_space<vmem>>, vector<1x1x8xf32>
    %58 = vector.shape_cast %57 : vector<1x1x8xf32> to vector<1x8xf32>
    %59 = vector.shape_cast %56 : vector<1x8xf32> to vector<1x1x8xf32>
    tpu.vector_store %arg8[%c0_66, %c0_67, %c0_68], %59 {strides = array<i32>} : memref<1x1x8xf32, #tpu.memory_space<vmem>>, vector<1x1x8xf32>,
    %60 = arith.mulf %53, %53 : vector<1x64x8xf32>
    %cst_69 = arith.constant dense<0.000000e+00> : vector<64x8xf32>
    %61 = vector.multi_reduction <add>, %60, %cst_69 [0] : vector<1x64x8xf32> to vector<64x8xf32>
    %cst_70 = arith.constant dense<0.000000e+00> : vector<8xf32>
    %62 = vector.multi_reduction <add>, %61, %cst_70 [0] : vector<64x8xf32> to vector<8xf32>
    %63 = vector.shape_cast %62 : vector<8xf32> to vector<1x8xf32>
    %c0_71 = arith.constant 0 : index
    %c0_72 = arith.constant 0 : index
    %c0_73 = arith.constant 0 : index
    %64 = vector.load %arg9[%c0_71, %c0_72, %c0_73] : memref<1x1x8xf32, #tpu.memory_space<vmem>>, vector<1x1x8xf32>
    %65 = vector.shape_cast %64 : vector<1x1x8xf32> to vector<1x8xf32>
    %66 = vector.shape_cast %63 : vector<1x8xf32> to vector<1x1x8xf32>
    tpu.vector_store %arg9[%c0_71, %c0_72, %c0_73], %66 {strides = array<i32>} : memref<1x1x8xf32, #tpu.memory_space<vmem>>, vector<1x1x8xf32>,
    %67 = arith.truncf %53 : vector<1x64x8xf32> to vector<1x64x8xbf16>
    %c0_74 = arith.constant 0 : index
    %c0_75 = arith.constant 0 : index
    %c0_76 = arith.constant 0 : index
    %68 = vector.load %arg7[%c0_74, %c0_75, %c0_76] : memref<1x64x8xbf16, #tpu.memory_space<vmem>>, vector<1x64x8xbf16>
    tpu.vector_store %arg7[%c0_74, %c0_75, %c0_76], %67 {strides = array<i32>} : memref<1x64x8xbf16, #tpu.memory_space<vmem>>, vector<1x64x8xbf16>,
    return
  }
  func.func @transform_0(%arg0: i32) -> (i32, i32, i32, i32) {
    %c0_i32 = arith.constant 0 : i32
    %c0_i32_0 = arith.constant 0 : i32
    %c0_i32_1 = arith.constant 0 : i32
    %c0_i32_2 = arith.constant 0 : i32
    return %arg0, %c0_i32, %c0_i32_0, %c0_i32_1 : i32, i32, i32, i32
  }
  func.func @transform_1(%arg0: i32) -> (i32, i32) {
    %c0_i32 = arith.constant 0 : i32
    %c0_i32_0 = arith.constant 0 : i32
    %c0_i32_1 = arith.constant 0 : i32
    return %c0_i32, %c0_i32_0 : i32, i32
  }
  func.func @transform_2(%arg0: i32) -> (i32, i32) {
    %c0_i32 = arith.constant 0 : i32
    %c0_i32_0 = arith.constant 0 : i32
    %c0_i32_1 = arith.constant 0 : i32
    return %c0_i32, %c0_i32_0 : i32, i32
  }
  func.func @transform_3(%arg0: i32) -> (i32, i32) {
    %c0_i32 = arith.constant 0 : i32
    %c0_i32_0 = arith.constant 0 : i32
    %c0_i32_1 = arith.constant 0 : i32
    return %c0_i32, %c0_i32_0 : i32, i32
  }
  func.func @transform_4(%arg0: i32) -> (i32, i32, i32) {
    %c0_i32 = arith.constant 0 : i32
    %c0_i32_0 = arith.constant 0 : i32
    %c0_i32_1 = arith.constant 0 : i32
    %c0_i32_2 = arith.constant 0 : i32
    return %c0_i32, %c0_i32_0, %c0_i32_1 : i32, i32, i32
  }
  func.func @transform_5(%arg0: i32) -> (i32, i32, i32) {
    %c0_i32 = arith.constant 0 : i32
    %c0_i32_0 = arith.constant 0 : i32
    %c0_i32_1 = arith.constant 0 : i32
    return %arg0, %c0_i32, %c0_i32_0 : i32, i32, i32
  }
  func.func @transform_6(%arg0: i32) -> (i32, i32, i32) {
    %c0_i32 = arith.constant 0 : i32
    %c0_i32_0 = arith.constant 0 : i32
    %c0_i32_1 = arith.constant 0 : i32
    return %arg0, %c0_i32, %c0_i32_0 : i32, i32, i32
  }
  func.func @transform_7(%arg0: i32) -> (i32, i32, i32) {
    %c0_i32 = arith.constant 0 : i32
    %c0_i32_0 = arith.constant 0 : i32
    %c0_i32_1 = arith.constant 0 : i32
    return %arg0, %c0_i32, %c0_i32_0 : i32, i32, i32
  }
  func.func @transform_8(%arg0: i32) -> (i32, i32, i32) {
    %c0_i32 = arith.constant 0 : i32
    %c0_i32_0 = arith.constant 0 : i32
    %c0_i32_1 = arith.constant 0 : i32
    return %arg0, %c0_i32, %c0_i32_0 : i32, i32, i32
  }
}

module attributes {stable_mosaic.version = 11 : i64} {
  func.func @kernel(%arg0: i32, %arg1: memref<1x8x8x8xbf16, #tpu.memory_space<vmem>>, %arg2: memref<72x8xbf16, #tpu.memory_space<vmem>>, %arg3: memref<1x8xf32, #tpu.memory_space<vmem>>, %arg4: memref<1x8xf32, #tpu.memory_space<vmem>>, %arg5: memref<1x64x4xf32, #tpu.memory_space<vmem>>, %arg6: memref<4x8xbf16, #tpu.memory_space<vmem>>, %arg7: memref<1x4xf32, #tpu.memory_space<vmem>>, %arg8: memref<1x4xf32, #tpu.memory_space<vmem>>, %arg9: memref<1x64x8xbf16, #tpu.memory_space<vmem>>, %arg10: memref<1x1x8xf32, #tpu.memory_space<vmem>>, %arg11: memref<1x1x8xf32, #tpu.memory_space<vmem>>, %arg12: memref<1x10x10x8xbf16, #tpu.memory_space<vmem>>, %arg13: memref<64x72xbf16, #tpu.memory_space<vmem>>) attributes {dimension_semantics = [#tpu.dimension_semantics<parallel>], iteration_bounds = array<i64: 2>, scalar_prefetch = 0 : i64, scratch_operands = 2 : i64, tpu.core_type = #tpu.core_type<tc>, window_params = [{transform_indices = @transform_0, window_bounds = array<i64: 1, 8, 8, 8>}, {pipeline_mode = #tpu.pipeline_mode<synchronous>, transform_indices = @transform_1, window_bounds = array<i64: 72, 8>}, {pipeline_mode = #tpu.pipeline_mode<synchronous>, transform_indices = @transform_2, window_bounds = array<i64: 1, 8>}, {pipeline_mode = #tpu.pipeline_mode<synchronous>, transform_indices = @transform_3, window_bounds = array<i64: 1, 8>}, {transform_indices = @transform_4, window_bounds = array<i64: 1, 64, 4>}, {pipeline_mode = #tpu.pipeline_mode<synchronous>, transform_indices = @transform_5, window_bounds = array<i64: 4, 8>}, {pipeline_mode = #tpu.pipeline_mode<synchronous>, transform_indices = @transform_6, window_bounds = array<i64: 1, 4>}, {pipeline_mode = #tpu.pipeline_mode<synchronous>, transform_indices = @transform_7, window_bounds = array<i64: 1, 4>}, {transform_indices = @transform_8, window_bounds = array<i64: 1, 64, 8>}, {transform_indices = @transform_9, window_bounds = array<i64: 1, 1, 8>}, {transform_indices = @transform_10, window_bounds = array<i64: 1, 1, 8>}]} {
    %c0 = arith.constant 0 : index
    %c0_0 = arith.constant 0 : index
    %c0_1 = arith.constant 0 : index
    %c0_2 = arith.constant 0 : index
    %0 = vector.load %arg1[%c0, %c0_0, %c0_1, %c0_2] : memref<1x8x8x8xbf16, #tpu.memory_space<vmem>>, vector<1x8x8x8xbf16>
    %1 = arith.extf %0 : vector<1x8x8x8xbf16> to vector<1x8x8x8xf32>
    %c0_3 = arith.constant 0 : index
    %c0_4 = arith.constant 0 : index
    %2 = vector.load %arg3[%c0_3, %c0_4] : memref<1x8xf32, #tpu.memory_space<vmem>>, vector<1x8xf32>
    %3 = vector.shape_cast %2 : vector<1x8xf32> to vector<1x1x1x8xf32>
    %4 = vector.broadcast %3 : vector<1x1x1x8xf32> to vector<1x8x8x8xf32>
    %5 = arith.mulf %1, %4 : vector<1x8x8x8xf32>
    %c0_5 = arith.constant 0 : index
    %c0_6 = arith.constant 0 : index
    %6 = vector.load %arg4[%c0_5, %c0_6] : memref<1x8xf32, #tpu.memory_space<vmem>>, vector<1x8xf32>
    %7 = vector.shape_cast %6 : vector<1x8xf32> to vector<1x1x1x8xf32>
    %8 = vector.broadcast %7 : vector<1x1x1x8xf32> to vector<1x8x8x8xf32>
    %9 = arith.addf %5, %8 : vector<1x8x8x8xf32>
    %cst = arith.constant 0.000000e+00 : f32
    %10 = vector.broadcast %cst : f32 to vector<1x8x8x8xf32>
    %11 = arith.cmpf oge, %9, %10 : vector<1x8x8x8xf32>
    %cst_7 = arith.constant 1.000000e-01 : f32
    %12 = vector.broadcast %cst_7 : f32 to vector<1x8x8x8xf32>
    %13 = arith.mulf %12, %9 : vector<1x8x8x8xf32>
    %14 = arith.select %11, %9, %13 : vector<1x8x8x8xi1>, vector<1x8x8x8xf32>
    %15 = arith.truncf %14 : vector<1x8x8x8xf32> to vector<1x8x8x8xbf16>
    %cst_8 = arith.constant 0.000000e+00 : bf16
    %16 = vector.broadcast %cst_8 : bf16 to vector<1x10x10x8xbf16>
    %c0_9 = arith.constant 0 : index
    %c0_10 = arith.constant 0 : index
    %c0_11 = arith.constant 0 : index
    %c0_12 = arith.constant 0 : index
    %17 = vector.load %arg12[%c0_9, %c0_10, %c0_11, %c0_12] : memref<1x10x10x8xbf16, #tpu.memory_space<vmem>>, vector<1x10x10x8xbf16>
    tpu.vector_store %arg12[%c0_9, %c0_10, %c0_11, %c0_12], %16 {strides = array<i32>} : memref<1x10x10x8xbf16, #tpu.memory_space<vmem>>, vector<1x10x10x8xbf16>,
    %c0_13 = arith.constant 0 : index
    %c1 = arith.constant 1 : index
    %c1_14 = arith.constant 1 : index
    %c0_15 = arith.constant 0 : index
    %18 = vector.load %arg12[%c0_13, %c1, %c1_14, %c0_15] : memref<1x10x10x8xbf16, #tpu.memory_space<vmem>>, vector<1x8x8x8xbf16>
    tpu.vector_store %arg12[%c0_13, %c1, %c1_14, %c0_15], %15 {strides = array<i32>} : memref<1x10x10x8xbf16, #tpu.memory_space<vmem>>, vector<1x8x8x8xbf16>,
    %c0_16 = arith.constant 0 : index
    %c0_17 = arith.constant 0 : index
    %c0_18 = arith.constant 0 : index
    %c0_19 = arith.constant 0 : index
    %19 = vector.load %arg12[%c0_16, %c0_17, %c0_18, %c0_19] : memref<1x10x10x8xbf16, #tpu.memory_space<vmem>>, vector<1x8x8x8xbf16>
    %20 = vector.shape_cast %19 : vector<1x8x8x8xbf16> to vector<64x8xbf16>
    %c0_20 = arith.constant 0 : index
    %c0_21 = arith.constant 0 : index
    %21 = vector.load %arg13[%c0_20, %c0_21] : memref<64x72xbf16, #tpu.memory_space<vmem>>, vector<64x8xbf16>
    tpu.vector_store %arg13[%c0_20, %c0_21], %20 {strides = array<i32>} : memref<64x72xbf16, #tpu.memory_space<vmem>>, vector<64x8xbf16>,
    %c0_22 = arith.constant 0 : index
    %c0_23 = arith.constant 0 : index
    %c1_24 = arith.constant 1 : index
    %c0_25 = arith.constant 0 : index
    %22 = vector.load %arg12[%c0_22, %c0_23, %c1_24, %c0_25] : memref<1x10x10x8xbf16, #tpu.memory_space<vmem>>, vector<1x8x8x8xbf16>
    %23 = vector.shape_cast %22 : vector<1x8x8x8xbf16> to vector<64x8xbf16>
    %c0_26 = arith.constant 0 : index
    %c8 = arith.constant 8 : index
    %24 = vector.load %arg13[%c0_26, %c8] : memref<64x72xbf16, #tpu.memory_space<vmem>>, vector<64x8xbf16>
    tpu.vector_store %arg13[%c0_26, %c8], %23 {strides = array<i32>} : memref<64x72xbf16, #tpu.memory_space<vmem>>, vector<64x8xbf16>,
    %c0_27 = arith.constant 0 : index
    %c0_28 = arith.constant 0 : index
    %c2 = arith.constant 2 : index
    %c0_29 = arith.constant 0 : index
    %25 = vector.load %arg12[%c0_27, %c0_28, %c2, %c0_29] : memref<1x10x10x8xbf16, #tpu.memory_space<vmem>>, vector<1x8x8x8xbf16>
    %26 = vector.shape_cast %25 : vector<1x8x8x8xbf16> to vector<64x8xbf16>
    %c0_30 = arith.constant 0 : index
    %c16 = arith.constant 16 : index
    %27 = vector.load %arg13[%c0_30, %c16] : memref<64x72xbf16, #tpu.memory_space<vmem>>, vector<64x8xbf16>
    tpu.vector_store %arg13[%c0_30, %c16], %26 {strides = array<i32>} : memref<64x72xbf16, #tpu.memory_space<vmem>>, vector<64x8xbf16>,
    %c0_31 = arith.constant 0 : index
    %c1_32 = arith.constant 1 : index
    %c0_33 = arith.constant 0 : index
    %c0_34 = arith.constant 0 : index
    %28 = vector.load %arg12[%c0_31, %c1_32, %c0_33, %c0_34] : memref<1x10x10x8xbf16, #tpu.memory_space<vmem>>, vector<1x8x8x8xbf16>
    %29 = vector.shape_cast %28 : vector<1x8x8x8xbf16> to vector<64x8xbf16>
    %c0_35 = arith.constant 0 : index
    %c24 = arith.constant 24 : index
    %30 = vector.load %arg13[%c0_35, %c24] : memref<64x72xbf16, #tpu.memory_space<vmem>>, vector<64x8xbf16>
    tpu.vector_store %arg13[%c0_35, %c24], %29 {strides = array<i32>} : memref<64x72xbf16, #tpu.memory_space<vmem>>, vector<64x8xbf16>,
    %c0_36 = arith.constant 0 : index
    %c1_37 = arith.constant 1 : index
    %c1_38 = arith.constant 1 : index
    %c0_39 = arith.constant 0 : index
    %31 = vector.load %arg12[%c0_36, %c1_37, %c1_38, %c0_39] : memref<1x10x10x8xbf16, #tpu.memory_space<vmem>>, vector<1x8x8x8xbf16>
    %32 = vector.shape_cast %31 : vector<1x8x8x8xbf16> to vector<64x8xbf16>
    %c0_40 = arith.constant 0 : index
    %c32 = arith.constant 32 : index
    %33 = vector.load %arg13[%c0_40, %c32] : memref<64x72xbf16, #tpu.memory_space<vmem>>, vector<64x8xbf16>
    tpu.vector_store %arg13[%c0_40, %c32], %32 {strides = array<i32>} : memref<64x72xbf16, #tpu.memory_space<vmem>>, vector<64x8xbf16>,
    %c0_41 = arith.constant 0 : index
    %c1_42 = arith.constant 1 : index
    %c2_43 = arith.constant 2 : index
    %c0_44 = arith.constant 0 : index
    %34 = vector.load %arg12[%c0_41, %c1_42, %c2_43, %c0_44] : memref<1x10x10x8xbf16, #tpu.memory_space<vmem>>, vector<1x8x8x8xbf16>
    %35 = vector.shape_cast %34 : vector<1x8x8x8xbf16> to vector<64x8xbf16>
    %c0_45 = arith.constant 0 : index
    %c40 = arith.constant 40 : index
    %36 = vector.load %arg13[%c0_45, %c40] : memref<64x72xbf16, #tpu.memory_space<vmem>>, vector<64x8xbf16>
    tpu.vector_store %arg13[%c0_45, %c40], %35 {strides = array<i32>} : memref<64x72xbf16, #tpu.memory_space<vmem>>, vector<64x8xbf16>,
    %c0_46 = arith.constant 0 : index
    %c2_47 = arith.constant 2 : index
    %c0_48 = arith.constant 0 : index
    %c0_49 = arith.constant 0 : index
    %37 = vector.load %arg12[%c0_46, %c2_47, %c0_48, %c0_49] : memref<1x10x10x8xbf16, #tpu.memory_space<vmem>>, vector<1x8x8x8xbf16>
    %38 = vector.shape_cast %37 : vector<1x8x8x8xbf16> to vector<64x8xbf16>
    %c0_50 = arith.constant 0 : index
    %c48 = arith.constant 48 : index
    %39 = vector.load %arg13[%c0_50, %c48] : memref<64x72xbf16, #tpu.memory_space<vmem>>, vector<64x8xbf16>
    tpu.vector_store %arg13[%c0_50, %c48], %38 {strides = array<i32>} : memref<64x72xbf16, #tpu.memory_space<vmem>>, vector<64x8xbf16>,
    %c0_51 = arith.constant 0 : index
    %c2_52 = arith.constant 2 : index
    %c1_53 = arith.constant 1 : index
    %c0_54 = arith.constant 0 : index
    %40 = vector.load %arg12[%c0_51, %c2_52, %c1_53, %c0_54] : memref<1x10x10x8xbf16, #tpu.memory_space<vmem>>, vector<1x8x8x8xbf16>
    %41 = vector.shape_cast %40 : vector<1x8x8x8xbf16> to vector<64x8xbf16>
    %c0_55 = arith.constant 0 : index
    %c56 = arith.constant 56 : index
    %42 = vector.load %arg13[%c0_55, %c56] : memref<64x72xbf16, #tpu.memory_space<vmem>>, vector<64x8xbf16>
    tpu.vector_store %arg13[%c0_55, %c56], %41 {strides = array<i32>} : memref<64x72xbf16, #tpu.memory_space<vmem>>, vector<64x8xbf16>,
    %c0_56 = arith.constant 0 : index
    %c2_57 = arith.constant 2 : index
    %c2_58 = arith.constant 2 : index
    %c0_59 = arith.constant 0 : index
    %43 = vector.load %arg12[%c0_56, %c2_57, %c2_58, %c0_59] : memref<1x10x10x8xbf16, #tpu.memory_space<vmem>>, vector<1x8x8x8xbf16>
    %44 = vector.shape_cast %43 : vector<1x8x8x8xbf16> to vector<64x8xbf16>
    %c0_60 = arith.constant 0 : index
    %c64 = arith.constant 64 : index
    %45 = vector.load %arg13[%c0_60, %c64] : memref<64x72xbf16, #tpu.memory_space<vmem>>, vector<64x8xbf16>
    tpu.vector_store %arg13[%c0_60, %c64], %44 {strides = array<i32>} : memref<64x72xbf16, #tpu.memory_space<vmem>>, vector<64x8xbf16>,
    %c0_61 = arith.constant 0 : index
    %c0_62 = arith.constant 0 : index
    %46 = vector.load %arg13[%c0_61, %c0_62] : memref<64x72xbf16, #tpu.memory_space<vmem>>, vector<64x72xbf16>
    %c0_63 = arith.constant 0 : index
    %c0_64 = arith.constant 0 : index
    %47 = vector.load %arg2[%c0_63, %c0_64] : memref<72x8xbf16, #tpu.memory_space<vmem>>, vector<72x8xbf16>
    %cst_65 = arith.constant dense<0.000000e+00> : vector<64x8xf32>
    %48 = tpu.matmul %46, %47, %cst_65 {dimension_numbers = #tpu.dot_dimension_numbers<[1], [0], [0], [1], [0, 0, 1, 1], [], []>} : vector<64x72xbf16>, vector<72x8xbf16>, vector<64x8xf32> -> vector<64x8xf32>
    %49 = vector.shape_cast %48 : vector<64x8xf32> to vector<1x64x8xf32>
    %c0_66 = arith.constant 0 : index
    %c0_67 = arith.constant 0 : index
    %c0_68 = arith.constant 0 : index
    %50 = vector.load %arg5[%c0_66, %c0_67, %c0_68] : memref<1x64x4xf32, #tpu.memory_space<vmem>>, vector<1x64x4xf32>
    %c0_69 = arith.constant 0 : index
    %c0_70 = arith.constant 0 : index
    %51 = vector.load %arg7[%c0_69, %c0_70] : memref<1x4xf32, #tpu.memory_space<vmem>>, vector<1x4xf32>
    %52 = vector.shape_cast %51 : vector<1x4xf32> to vector<1x1x4xf32>
    %53 = vector.broadcast %52 : vector<1x1x4xf32> to vector<1x64x4xf32>
    %54 = arith.mulf %50, %53 : vector<1x64x4xf32>
    %c0_71 = arith.constant 0 : index
    %c0_72 = arith.constant 0 : index
    %55 = vector.load %arg8[%c0_71, %c0_72] : memref<1x4xf32, #tpu.memory_space<vmem>>, vector<1x4xf32>
    %56 = vector.shape_cast %55 : vector<1x4xf32> to vector<1x1x4xf32>
    %57 = vector.broadcast %56 : vector<1x1x4xf32> to vector<1x64x4xf32>
    %58 = arith.addf %54, %57 : vector<1x64x4xf32>
    %cst_73 = arith.constant 0.000000e+00 : f32
    %59 = vector.broadcast %cst_73 : f32 to vector<1x64x4xf32>
    %60 = arith.cmpf oge, %58, %59 : vector<1x64x4xf32>
    %cst_74 = arith.constant 1.000000e-01 : f32
    %61 = vector.broadcast %cst_74 : f32 to vector<1x64x4xf32>
    %62 = arith.mulf %61, %58 : vector<1x64x4xf32>
    %63 = arith.select %60, %58, %62 : vector<1x64x4xi1>, vector<1x64x4xf32>
    %64 = vector.shape_cast %63 : vector<1x64x4xf32> to vector<64x4xf32>
    %65 = arith.truncf %64 : vector<64x4xf32> to vector<64x4xbf16>
    %c0_75 = arith.constant 0 : index
    %c0_76 = arith.constant 0 : index
    %66 = vector.load %arg6[%c0_75, %c0_76] : memref<4x8xbf16, #tpu.memory_space<vmem>>, vector<4x8xbf16>
    %cst_77 = arith.constant dense<0.000000e+00> : vector<64x8xf32>
    %67 = tpu.matmul %65, %66, %cst_77 {dimension_numbers = #tpu.dot_dimension_numbers<[1], [0], [0], [1], [0, 0, 1, 1], [], []>} : vector<64x4xbf16>, vector<4x8xbf16>, vector<64x8xf32> -> vector<64x8xf32>
    %68 = vector.shape_cast %67 : vector<64x8xf32> to vector<1x64x8xf32>
    %69 = arith.addf %49, %68 : vector<1x64x8xf32>
    %cst_78 = arith.constant dense<0.000000e+00> : vector<64x8xf32>
    %70 = vector.multi_reduction <add>, %69, %cst_78 [0] : vector<1x64x8xf32> to vector<64x8xf32>
    %cst_79 = arith.constant dense<0.000000e+00> : vector<8xf32>
    %71 = vector.multi_reduction <add>, %70, %cst_79 [0] : vector<64x8xf32> to vector<8xf32>
    %72 = vector.shape_cast %71 : vector<8xf32> to vector<1x8xf32>
    %c0_80 = arith.constant 0 : index
    %c0_81 = arith.constant 0 : index
    %c0_82 = arith.constant 0 : index
    %73 = vector.load %arg10[%c0_80, %c0_81, %c0_82] : memref<1x1x8xf32, #tpu.memory_space<vmem>>, vector<1x1x8xf32>
    %74 = vector.shape_cast %73 : vector<1x1x8xf32> to vector<1x8xf32>
    %75 = vector.shape_cast %72 : vector<1x8xf32> to vector<1x1x8xf32>
    tpu.vector_store %arg10[%c0_80, %c0_81, %c0_82], %75 {strides = array<i32>} : memref<1x1x8xf32, #tpu.memory_space<vmem>>, vector<1x1x8xf32>,
    %76 = arith.mulf %69, %69 : vector<1x64x8xf32>
    %cst_83 = arith.constant dense<0.000000e+00> : vector<64x8xf32>
    %77 = vector.multi_reduction <add>, %76, %cst_83 [0] : vector<1x64x8xf32> to vector<64x8xf32>
    %cst_84 = arith.constant dense<0.000000e+00> : vector<8xf32>
    %78 = vector.multi_reduction <add>, %77, %cst_84 [0] : vector<64x8xf32> to vector<8xf32>
    %79 = vector.shape_cast %78 : vector<8xf32> to vector<1x8xf32>
    %c0_85 = arith.constant 0 : index
    %c0_86 = arith.constant 0 : index
    %c0_87 = arith.constant 0 : index
    %80 = vector.load %arg11[%c0_85, %c0_86, %c0_87] : memref<1x1x8xf32, #tpu.memory_space<vmem>>, vector<1x1x8xf32>
    %81 = vector.shape_cast %80 : vector<1x1x8xf32> to vector<1x8xf32>
    %82 = vector.shape_cast %79 : vector<1x8xf32> to vector<1x1x8xf32>
    tpu.vector_store %arg11[%c0_85, %c0_86, %c0_87], %82 {strides = array<i32>} : memref<1x1x8xf32, #tpu.memory_space<vmem>>, vector<1x1x8xf32>,
    %83 = arith.truncf %69 : vector<1x64x8xf32> to vector<1x64x8xbf16>
    %c0_88 = arith.constant 0 : index
    %c0_89 = arith.constant 0 : index
    %c0_90 = arith.constant 0 : index
    %84 = vector.load %arg9[%c0_88, %c0_89, %c0_90] : memref<1x64x8xbf16, #tpu.memory_space<vmem>>, vector<1x64x8xbf16>
    tpu.vector_store %arg9[%c0_88, %c0_89, %c0_90], %83 {strides = array<i32>} : memref<1x64x8xbf16, #tpu.memory_space<vmem>>, vector<1x64x8xbf16>,
    return
  }
  func.func @transform_0(%arg0: i32) -> (i32, i32, i32, i32) {
    %c0_i32 = arith.constant 0 : i32
    %c0_i32_0 = arith.constant 0 : i32
    %c0_i32_1 = arith.constant 0 : i32
    %c0_i32_2 = arith.constant 0 : i32
    return %arg0, %c0_i32, %c0_i32_0, %c0_i32_1 : i32, i32, i32, i32
  }
  func.func @transform_1(%arg0: i32) -> (i32, i32) {
    %c0_i32 = arith.constant 0 : i32
    %c0_i32_0 = arith.constant 0 : i32
    %c0_i32_1 = arith.constant 0 : i32
    return %c0_i32, %c0_i32_0 : i32, i32
  }
  func.func @transform_2(%arg0: i32) -> (i32, i32) {
    %c0_i32 = arith.constant 0 : i32
    %c0_i32_0 = arith.constant 0 : i32
    %c0_i32_1 = arith.constant 0 : i32
    return %c0_i32, %c0_i32_0 : i32, i32
  }
  func.func @transform_3(%arg0: i32) -> (i32, i32) {
    %c0_i32 = arith.constant 0 : i32
    %c0_i32_0 = arith.constant 0 : i32
    %c0_i32_1 = arith.constant 0 : i32
    return %c0_i32, %c0_i32_0 : i32, i32
  }
  func.func @transform_4(%arg0: i32) -> (i32, i32, i32) {
    %c0_i32 = arith.constant 0 : i32
    %c0_i32_0 = arith.constant 0 : i32
    %c0_i32_1 = arith.constant 0 : i32
    return %arg0, %c0_i32, %c0_i32_0 : i32, i32, i32
  }
  func.func @transform_5(%arg0: i32) -> (i32, i32) {
    %c0_i32 = arith.constant 0 : i32
    %c0_i32_0 = arith.constant 0 : i32
    %c0_i32_1 = arith.constant 0 : i32
    return %c0_i32, %c0_i32_0 : i32, i32
  }
  func.func @transform_6(%arg0: i32) -> (i32, i32) {
    %c0_i32 = arith.constant 0 : i32
    %c0_i32_0 = arith.constant 0 : i32
    %c0_i32_1 = arith.constant 0 : i32
    return %c0_i32, %c0_i32_0 : i32, i32
  }
  func.func @transform_7(%arg0: i32) -> (i32, i32) {
    %c0_i32 = arith.constant 0 : i32
    %c0_i32_0 = arith.constant 0 : i32
    %c0_i32_1 = arith.constant 0 : i32
    return %c0_i32, %c0_i32_0 : i32, i32
  }
  func.func @transform_8(%arg0: i32) -> (i32, i32, i32) {
    %c0_i32 = arith.constant 0 : i32
    %c0_i32_0 = arith.constant 0 : i32
    %c0_i32_1 = arith.constant 0 : i32
    return %arg0, %c0_i32, %c0_i32_0 : i32, i32, i32
  }
  func.func @transform_9(%arg0: i32) -> (i32, i32, i32) {
    %c0_i32 = arith.constant 0 : i32
    %c0_i32_0 = arith.constant 0 : i32
    %c0_i32_1 = arith.constant 0 : i32
    return %arg0, %c0_i32, %c0_i32_0 : i32, i32, i32
  }
  func.func @transform_10(%arg0: i32) -> (i32, i32, i32) {
    %c0_i32 = arith.constant 0 : i32
    %c0_i32_0 = arith.constant 0 : i32
    %c0_i32_1 = arith.constant 0 : i32
    return %arg0, %c0_i32, %c0_i32_0 : i32, i32, i32
  }
}

module attributes {stable_mosaic.version = 11 : i64} {
  func.func @kernel(%arg0: i32, %arg1: memref<1x8x8x8xbf16, #tpu.memory_space<vmem>>, %arg2: memref<72x8xbf16, #tpu.memory_space<vmem>>, %arg3: memref<1x8xf32, #tpu.memory_space<vmem>>, %arg4: memref<1x8xf32, #tpu.memory_space<vmem>>, %arg5: memref<1x64x8xbf16, #tpu.memory_space<vmem>>, %arg6: memref<1x64x8xbf16, #tpu.memory_space<vmem>>, %arg7: memref<1x1x8xf32, #tpu.memory_space<vmem>>, %arg8: memref<1x1x8xf32, #tpu.memory_space<vmem>>, %arg9: memref<1x10x10x8xbf16, #tpu.memory_space<vmem>>, %arg10: memref<64x72xbf16, #tpu.memory_space<vmem>>) attributes {dimension_semantics = [#tpu.dimension_semantics<parallel>], iteration_bounds = array<i64: 2>, scalar_prefetch = 0 : i64, scratch_operands = 2 : i64, tpu.core_type = #tpu.core_type<tc>, window_params = [{transform_indices = @transform_0, window_bounds = array<i64: 1, 8, 8, 8>}, {pipeline_mode = #tpu.pipeline_mode<synchronous>, transform_indices = @transform_1, window_bounds = array<i64: 72, 8>}, {pipeline_mode = #tpu.pipeline_mode<synchronous>, transform_indices = @transform_2, window_bounds = array<i64: 1, 8>}, {pipeline_mode = #tpu.pipeline_mode<synchronous>, transform_indices = @transform_3, window_bounds = array<i64: 1, 8>}, {transform_indices = @transform_4, window_bounds = array<i64: 1, 64, 8>}, {transform_indices = @transform_5, window_bounds = array<i64: 1, 64, 8>}, {transform_indices = @transform_6, window_bounds = array<i64: 1, 1, 8>}, {transform_indices = @transform_7, window_bounds = array<i64: 1, 1, 8>}]} {
    %c0 = arith.constant 0 : index
    %c0_0 = arith.constant 0 : index
    %c0_1 = arith.constant 0 : index
    %c0_2 = arith.constant 0 : index
    %0 = vector.load %arg1[%c0, %c0_0, %c0_1, %c0_2] : memref<1x8x8x8xbf16, #tpu.memory_space<vmem>>, vector<1x8x8x8xbf16>
    %1 = arith.extf %0 : vector<1x8x8x8xbf16> to vector<1x8x8x8xf32>
    %c0_3 = arith.constant 0 : index
    %c0_4 = arith.constant 0 : index
    %2 = vector.load %arg3[%c0_3, %c0_4] : memref<1x8xf32, #tpu.memory_space<vmem>>, vector<1x8xf32>
    %3 = vector.shape_cast %2 : vector<1x8xf32> to vector<1x1x1x8xf32>
    %4 = vector.broadcast %3 : vector<1x1x1x8xf32> to vector<1x8x8x8xf32>
    %5 = arith.mulf %1, %4 : vector<1x8x8x8xf32>
    %c0_5 = arith.constant 0 : index
    %c0_6 = arith.constant 0 : index
    %6 = vector.load %arg4[%c0_5, %c0_6] : memref<1x8xf32, #tpu.memory_space<vmem>>, vector<1x8xf32>
    %7 = vector.shape_cast %6 : vector<1x8xf32> to vector<1x1x1x8xf32>
    %8 = vector.broadcast %7 : vector<1x1x1x8xf32> to vector<1x8x8x8xf32>
    %9 = arith.addf %5, %8 : vector<1x8x8x8xf32>
    %cst = arith.constant 0.000000e+00 : f32
    %10 = vector.broadcast %cst : f32 to vector<1x8x8x8xf32>
    %11 = arith.cmpf oge, %9, %10 : vector<1x8x8x8xf32>
    %cst_7 = arith.constant 1.000000e-01 : f32
    %12 = vector.broadcast %cst_7 : f32 to vector<1x8x8x8xf32>
    %13 = arith.mulf %12, %9 : vector<1x8x8x8xf32>
    %14 = arith.select %11, %9, %13 : vector<1x8x8x8xi1>, vector<1x8x8x8xf32>
    %15 = arith.truncf %14 : vector<1x8x8x8xf32> to vector<1x8x8x8xbf16>
    %cst_8 = arith.constant 0.000000e+00 : bf16
    %16 = vector.broadcast %cst_8 : bf16 to vector<1x10x10x8xbf16>
    %c0_9 = arith.constant 0 : index
    %c0_10 = arith.constant 0 : index
    %c0_11 = arith.constant 0 : index
    %c0_12 = arith.constant 0 : index
    %17 = vector.load %arg9[%c0_9, %c0_10, %c0_11, %c0_12] : memref<1x10x10x8xbf16, #tpu.memory_space<vmem>>, vector<1x10x10x8xbf16>
    tpu.vector_store %arg9[%c0_9, %c0_10, %c0_11, %c0_12], %16 {strides = array<i32>} : memref<1x10x10x8xbf16, #tpu.memory_space<vmem>>, vector<1x10x10x8xbf16>,
    %c0_13 = arith.constant 0 : index
    %c1 = arith.constant 1 : index
    %c1_14 = arith.constant 1 : index
    %c0_15 = arith.constant 0 : index
    %18 = vector.load %arg9[%c0_13, %c1, %c1_14, %c0_15] : memref<1x10x10x8xbf16, #tpu.memory_space<vmem>>, vector<1x8x8x8xbf16>
    tpu.vector_store %arg9[%c0_13, %c1, %c1_14, %c0_15], %15 {strides = array<i32>} : memref<1x10x10x8xbf16, #tpu.memory_space<vmem>>, vector<1x8x8x8xbf16>,
    %c0_16 = arith.constant 0 : index
    %c0_17 = arith.constant 0 : index
    %c0_18 = arith.constant 0 : index
    %c0_19 = arith.constant 0 : index
    %19 = vector.load %arg9[%c0_16, %c0_17, %c0_18, %c0_19] : memref<1x10x10x8xbf16, #tpu.memory_space<vmem>>, vector<1x8x8x8xbf16>
    %20 = vector.shape_cast %19 : vector<1x8x8x8xbf16> to vector<64x8xbf16>
    %c0_20 = arith.constant 0 : index
    %c0_21 = arith.constant 0 : index
    %21 = vector.load %arg10[%c0_20, %c0_21] : memref<64x72xbf16, #tpu.memory_space<vmem>>, vector<64x8xbf16>
    tpu.vector_store %arg10[%c0_20, %c0_21], %20 {strides = array<i32>} : memref<64x72xbf16, #tpu.memory_space<vmem>>, vector<64x8xbf16>,
    %c0_22 = arith.constant 0 : index
    %c0_23 = arith.constant 0 : index
    %c1_24 = arith.constant 1 : index
    %c0_25 = arith.constant 0 : index
    %22 = vector.load %arg9[%c0_22, %c0_23, %c1_24, %c0_25] : memref<1x10x10x8xbf16, #tpu.memory_space<vmem>>, vector<1x8x8x8xbf16>
    %23 = vector.shape_cast %22 : vector<1x8x8x8xbf16> to vector<64x8xbf16>
    %c0_26 = arith.constant 0 : index
    %c8 = arith.constant 8 : index
    %24 = vector.load %arg10[%c0_26, %c8] : memref<64x72xbf16, #tpu.memory_space<vmem>>, vector<64x8xbf16>
    tpu.vector_store %arg10[%c0_26, %c8], %23 {strides = array<i32>} : memref<64x72xbf16, #tpu.memory_space<vmem>>, vector<64x8xbf16>,
    %c0_27 = arith.constant 0 : index
    %c0_28 = arith.constant 0 : index
    %c2 = arith.constant 2 : index
    %c0_29 = arith.constant 0 : index
    %25 = vector.load %arg9[%c0_27, %c0_28, %c2, %c0_29] : memref<1x10x10x8xbf16, #tpu.memory_space<vmem>>, vector<1x8x8x8xbf16>
    %26 = vector.shape_cast %25 : vector<1x8x8x8xbf16> to vector<64x8xbf16>
    %c0_30 = arith.constant 0 : index
    %c16 = arith.constant 16 : index
    %27 = vector.load %arg10[%c0_30, %c16] : memref<64x72xbf16, #tpu.memory_space<vmem>>, vector<64x8xbf16>
    tpu.vector_store %arg10[%c0_30, %c16], %26 {strides = array<i32>} : memref<64x72xbf16, #tpu.memory_space<vmem>>, vector<64x8xbf16>,
    %c0_31 = arith.constant 0 : index
    %c1_32 = arith.constant 1 : index
    %c0_33 = arith.constant 0 : index
    %c0_34 = arith.constant 0 : index
    %28 = vector.load %arg9[%c0_31, %c1_32, %c0_33, %c0_34] : memref<1x10x10x8xbf16, #tpu.memory_space<vmem>>, vector<1x8x8x8xbf16>
    %29 = vector.shape_cast %28 : vector<1x8x8x8xbf16> to vector<64x8xbf16>
    %c0_35 = arith.constant 0 : index
    %c24 = arith.constant 24 : index
    %30 = vector.load %arg10[%c0_35, %c24] : memref<64x72xbf16, #tpu.memory_space<vmem>>, vector<64x8xbf16>
    tpu.vector_store %arg10[%c0_35, %c24], %29 {strides = array<i32>} : memref<64x72xbf16, #tpu.memory_space<vmem>>, vector<64x8xbf16>,
    %c0_36 = arith.constant 0 : index
    %c1_37 = arith.constant 1 : index
    %c1_38 = arith.constant 1 : index
    %c0_39 = arith.constant 0 : index
    %31 = vector.load %arg9[%c0_36, %c1_37, %c1_38, %c0_39] : memref<1x10x10x8xbf16, #tpu.memory_space<vmem>>, vector<1x8x8x8xbf16>
    %32 = vector.shape_cast %31 : vector<1x8x8x8xbf16> to vector<64x8xbf16>
    %c0_40 = arith.constant 0 : index
    %c32 = arith.constant 32 : index
    %33 = vector.load %arg10[%c0_40, %c32] : memref<64x72xbf16, #tpu.memory_space<vmem>>, vector<64x8xbf16>
    tpu.vector_store %arg10[%c0_40, %c32], %32 {strides = array<i32>} : memref<64x72xbf16, #tpu.memory_space<vmem>>, vector<64x8xbf16>,
    %c0_41 = arith.constant 0 : index
    %c1_42 = arith.constant 1 : index
    %c2_43 = arith.constant 2 : index
    %c0_44 = arith.constant 0 : index
    %34 = vector.load %arg9[%c0_41, %c1_42, %c2_43, %c0_44] : memref<1x10x10x8xbf16, #tpu.memory_space<vmem>>, vector<1x8x8x8xbf16>
    %35 = vector.shape_cast %34 : vector<1x8x8x8xbf16> to vector<64x8xbf16>
    %c0_45 = arith.constant 0 : index
    %c40 = arith.constant 40 : index
    %36 = vector.load %arg10[%c0_45, %c40] : memref<64x72xbf16, #tpu.memory_space<vmem>>, vector<64x8xbf16>
    tpu.vector_store %arg10[%c0_45, %c40], %35 {strides = array<i32>} : memref<64x72xbf16, #tpu.memory_space<vmem>>, vector<64x8xbf16>,
    %c0_46 = arith.constant 0 : index
    %c2_47 = arith.constant 2 : index
    %c0_48 = arith.constant 0 : index
    %c0_49 = arith.constant 0 : index
    %37 = vector.load %arg9[%c0_46, %c2_47, %c0_48, %c0_49] : memref<1x10x10x8xbf16, #tpu.memory_space<vmem>>, vector<1x8x8x8xbf16>
    %38 = vector.shape_cast %37 : vector<1x8x8x8xbf16> to vector<64x8xbf16>
    %c0_50 = arith.constant 0 : index
    %c48 = arith.constant 48 : index
    %39 = vector.load %arg10[%c0_50, %c48] : memref<64x72xbf16, #tpu.memory_space<vmem>>, vector<64x8xbf16>
    tpu.vector_store %arg10[%c0_50, %c48], %38 {strides = array<i32>} : memref<64x72xbf16, #tpu.memory_space<vmem>>, vector<64x8xbf16>,
    %c0_51 = arith.constant 0 : index
    %c2_52 = arith.constant 2 : index
    %c1_53 = arith.constant 1 : index
    %c0_54 = arith.constant 0 : index
    %40 = vector.load %arg9[%c0_51, %c2_52, %c1_53, %c0_54] : memref<1x10x10x8xbf16, #tpu.memory_space<vmem>>, vector<1x8x8x8xbf16>
    %41 = vector.shape_cast %40 : vector<1x8x8x8xbf16> to vector<64x8xbf16>
    %c0_55 = arith.constant 0 : index
    %c56 = arith.constant 56 : index
    %42 = vector.load %arg10[%c0_55, %c56] : memref<64x72xbf16, #tpu.memory_space<vmem>>, vector<64x8xbf16>
    tpu.vector_store %arg10[%c0_55, %c56], %41 {strides = array<i32>} : memref<64x72xbf16, #tpu.memory_space<vmem>>, vector<64x8xbf16>,
    %c0_56 = arith.constant 0 : index
    %c2_57 = arith.constant 2 : index
    %c2_58 = arith.constant 2 : index
    %c0_59 = arith.constant 0 : index
    %43 = vector.load %arg9[%c0_56, %c2_57, %c2_58, %c0_59] : memref<1x10x10x8xbf16, #tpu.memory_space<vmem>>, vector<1x8x8x8xbf16>
    %44 = vector.shape_cast %43 : vector<1x8x8x8xbf16> to vector<64x8xbf16>
    %c0_60 = arith.constant 0 : index
    %c64 = arith.constant 64 : index
    %45 = vector.load %arg10[%c0_60, %c64] : memref<64x72xbf16, #tpu.memory_space<vmem>>, vector<64x8xbf16>
    tpu.vector_store %arg10[%c0_60, %c64], %44 {strides = array<i32>} : memref<64x72xbf16, #tpu.memory_space<vmem>>, vector<64x8xbf16>,
    %c0_61 = arith.constant 0 : index
    %c0_62 = arith.constant 0 : index
    %46 = vector.load %arg10[%c0_61, %c0_62] : memref<64x72xbf16, #tpu.memory_space<vmem>>, vector<64x72xbf16>
    %c0_63 = arith.constant 0 : index
    %c0_64 = arith.constant 0 : index
    %47 = vector.load %arg2[%c0_63, %c0_64] : memref<72x8xbf16, #tpu.memory_space<vmem>>, vector<72x8xbf16>
    %cst_65 = arith.constant dense<0.000000e+00> : vector<64x8xf32>
    %48 = tpu.matmul %46, %47, %cst_65 {dimension_numbers = #tpu.dot_dimension_numbers<[1], [0], [0], [1], [0, 0, 1, 1], [], []>} : vector<64x72xbf16>, vector<72x8xbf16>, vector<64x8xf32> -> vector<64x8xf32>
    %49 = vector.shape_cast %48 : vector<64x8xf32> to vector<1x64x8xf32>
    %c0_66 = arith.constant 0 : index
    %c0_67 = arith.constant 0 : index
    %c0_68 = arith.constant 0 : index
    %50 = vector.load %arg5[%c0_66, %c0_67, %c0_68] : memref<1x64x8xbf16, #tpu.memory_space<vmem>>, vector<1x64x8xbf16>
    %51 = arith.extf %50 : vector<1x64x8xbf16> to vector<1x64x8xf32>
    %52 = arith.addf %49, %51 : vector<1x64x8xf32>
    %cst_69 = arith.constant dense<0.000000e+00> : vector<64x8xf32>
    %53 = vector.multi_reduction <add>, %52, %cst_69 [0] : vector<1x64x8xf32> to vector<64x8xf32>
    %cst_70 = arith.constant dense<0.000000e+00> : vector<8xf32>
    %54 = vector.multi_reduction <add>, %53, %cst_70 [0] : vector<64x8xf32> to vector<8xf32>
    %55 = vector.shape_cast %54 : vector<8xf32> to vector<1x8xf32>
    %c0_71 = arith.constant 0 : index
    %c0_72 = arith.constant 0 : index
    %c0_73 = arith.constant 0 : index
    %56 = vector.load %arg7[%c0_71, %c0_72, %c0_73] : memref<1x1x8xf32, #tpu.memory_space<vmem>>, vector<1x1x8xf32>
    %57 = vector.shape_cast %56 : vector<1x1x8xf32> to vector<1x8xf32>
    %58 = vector.shape_cast %55 : vector<1x8xf32> to vector<1x1x8xf32>
    tpu.vector_store %arg7[%c0_71, %c0_72, %c0_73], %58 {strides = array<i32>} : memref<1x1x8xf32, #tpu.memory_space<vmem>>, vector<1x1x8xf32>,
    %59 = arith.mulf %52, %52 : vector<1x64x8xf32>
    %cst_74 = arith.constant dense<0.000000e+00> : vector<64x8xf32>
    %60 = vector.multi_reduction <add>, %59, %cst_74 [0] : vector<1x64x8xf32> to vector<64x8xf32>
    %cst_75 = arith.constant dense<0.000000e+00> : vector<8xf32>
    %61 = vector.multi_reduction <add>, %60, %cst_75 [0] : vector<64x8xf32> to vector<8xf32>
    %62 = vector.shape_cast %61 : vector<8xf32> to vector<1x8xf32>
    %c0_76 = arith.constant 0 : index
    %c0_77 = arith.constant 0 : index
    %c0_78 = arith.constant 0 : index
    %63 = vector.load %arg8[%c0_76, %c0_77, %c0_78] : memref<1x1x8xf32, #tpu.memory_space<vmem>>, vector<1x1x8xf32>
    %64 = vector.shape_cast %63 : vector<1x1x8xf32> to vector<1x8xf32>
    %65 = vector.shape_cast %62 : vector<1x8xf32> to vector<1x1x8xf32>
    tpu.vector_store %arg8[%c0_76, %c0_77, %c0_78], %65 {strides = array<i32>} : memref<1x1x8xf32, #tpu.memory_space<vmem>>, vector<1x1x8xf32>,
    %66 = arith.truncf %52 : vector<1x64x8xf32> to vector<1x64x8xbf16>
    %c0_79 = arith.constant 0 : index
    %c0_80 = arith.constant 0 : index
    %c0_81 = arith.constant 0 : index
    %67 = vector.load %arg6[%c0_79, %c0_80, %c0_81] : memref<1x64x8xbf16, #tpu.memory_space<vmem>>, vector<1x64x8xbf16>
    tpu.vector_store %arg6[%c0_79, %c0_80, %c0_81], %66 {strides = array<i32>} : memref<1x64x8xbf16, #tpu.memory_space<vmem>>, vector<1x64x8xbf16>,
    return
  }
  func.func @transform_0(%arg0: i32) -> (i32, i32, i32, i32) {
    %c0_i32 = arith.constant 0 : i32
    %c0_i32_0 = arith.constant 0 : i32
    %c0_i32_1 = arith.constant 0 : i32
    %c0_i32_2 = arith.constant 0 : i32
    return %arg0, %c0_i32, %c0_i32_0, %c0_i32_1 : i32, i32, i32, i32
  }
  func.func @transform_1(%arg0: i32) -> (i32, i32) {
    %c0_i32 = arith.constant 0 : i32
    %c0_i32_0 = arith.constant 0 : i32
    %c0_i32_1 = arith.constant 0 : i32
    return %c0_i32, %c0_i32_0 : i32, i32
  }
  func.func @transform_2(%arg0: i32) -> (i32, i32) {
    %c0_i32 = arith.constant 0 : i32
    %c0_i32_0 = arith.constant 0 : i32
    %c0_i32_1 = arith.constant 0 : i32
    return %c0_i32, %c0_i32_0 : i32, i32
  }
  func.func @transform_3(%arg0: i32) -> (i32, i32) {
    %c0_i32 = arith.constant 0 : i32
    %c0_i32_0 = arith.constant 0 : i32
    %c0_i32_1 = arith.constant 0 : i32
    return %c0_i32, %c0_i32_0 : i32, i32
  }
  func.func @transform_4(%arg0: i32) -> (i32, i32, i32) {
    %c0_i32 = arith.constant 0 : i32
    %c0_i32_0 = arith.constant 0 : i32
    %c0_i32_1 = arith.constant 0 : i32
    return %arg0, %c0_i32, %c0_i32_0 : i32, i32, i32
  }
  func.func @transform_5(%arg0: i32) -> (i32, i32, i32) {
    %c0_i32 = arith.constant 0 : i32
    %c0_i32_0 = arith.constant 0 : i32
    %c0_i32_1 = arith.constant 0 : i32
    return %arg0, %c0_i32, %c0_i32_0 : i32, i32, i32
  }
  func.func @transform_6(%arg0: i32) -> (i32, i32, i32) {
    %c0_i32 = arith.constant 0 : i32
    %c0_i32_0 = arith.constant 0 : i32
    %c0_i32_1 = arith.constant 0 : i32
    return %arg0, %c0_i32, %c0_i32_0 : i32, i32, i32
  }
  func.func @transform_7(%arg0: i32) -> (i32, i32, i32) {
    %c0_i32 = arith.constant 0 : i32
    %c0_i32_0 = arith.constant 0 : i32
    %c0_i32_1 = arith.constant 0 : i32
    return %arg0, %c0_i32, %c0_i32_0 : i32, i32, i32
  }
}

module attributes {stable_mosaic.version = 11 : i64} {
  func.func @kernel(%arg0: i32, %arg1: memref<1x8x8x8xbf16, #tpu.memory_space<vmem>>, %arg2: memref<72x8xbf16, #tpu.memory_space<vmem>>, %arg3: memref<1x8xf32, #tpu.memory_space<vmem>>, %arg4: memref<1x8xf32, #tpu.memory_space<vmem>>, %arg5: memref<1x1x8xf32, #tpu.memory_space<vmem>>, %arg6: memref<1x64x8xbf16, #tpu.memory_space<vmem>>, %arg7: memref<1x1x8xf32, #tpu.memory_space<vmem>>, %arg8: memref<1x1x8xf32, #tpu.memory_space<vmem>>, %arg9: memref<1x10x10x8xbf16, #tpu.memory_space<vmem>>, %arg10: memref<64x72xbf16, #tpu.memory_space<vmem>>) attributes {dimension_semantics = [#tpu.dimension_semantics<parallel>], iteration_bounds = array<i64: 2>, scalar_prefetch = 0 : i64, scratch_operands = 2 : i64, tpu.core_type = #tpu.core_type<tc>, window_params = [{transform_indices = @transform_0, window_bounds = array<i64: 1, 8, 8, 8>}, {pipeline_mode = #tpu.pipeline_mode<synchronous>, transform_indices = @transform_1, window_bounds = array<i64: 72, 8>}, {pipeline_mode = #tpu.pipeline_mode<synchronous>, transform_indices = @transform_2, window_bounds = array<i64: 1, 8>}, {pipeline_mode = #tpu.pipeline_mode<synchronous>, transform_indices = @transform_3, window_bounds = array<i64: 1, 8>}, {transform_indices = @transform_4, window_bounds = array<i64: 1, 1, 8>}, {transform_indices = @transform_5, window_bounds = array<i64: 1, 64, 8>}, {transform_indices = @transform_6, window_bounds = array<i64: 1, 1, 8>}, {transform_indices = @transform_7, window_bounds = array<i64: 1, 1, 8>}]} {
    %c0 = arith.constant 0 : index
    %c0_0 = arith.constant 0 : index
    %c0_1 = arith.constant 0 : index
    %c0_2 = arith.constant 0 : index
    %0 = vector.load %arg1[%c0, %c0_0, %c0_1, %c0_2] : memref<1x8x8x8xbf16, #tpu.memory_space<vmem>>, vector<1x8x8x8xbf16>
    %1 = arith.extf %0 : vector<1x8x8x8xbf16> to vector<1x8x8x8xf32>
    %c0_3 = arith.constant 0 : index
    %c0_4 = arith.constant 0 : index
    %2 = vector.load %arg3[%c0_3, %c0_4] : memref<1x8xf32, #tpu.memory_space<vmem>>, vector<1x8xf32>
    %3 = vector.shape_cast %2 : vector<1x8xf32> to vector<1x1x1x8xf32>
    %4 = vector.broadcast %3 : vector<1x1x1x8xf32> to vector<1x8x8x8xf32>
    %5 = arith.mulf %1, %4 : vector<1x8x8x8xf32>
    %c0_5 = arith.constant 0 : index
    %c0_6 = arith.constant 0 : index
    %6 = vector.load %arg4[%c0_5, %c0_6] : memref<1x8xf32, #tpu.memory_space<vmem>>, vector<1x8xf32>
    %7 = vector.shape_cast %6 : vector<1x8xf32> to vector<1x1x1x8xf32>
    %8 = vector.broadcast %7 : vector<1x1x1x8xf32> to vector<1x8x8x8xf32>
    %9 = arith.addf %5, %8 : vector<1x8x8x8xf32>
    %cst = arith.constant 0.000000e+00 : f32
    %10 = vector.broadcast %cst : f32 to vector<1x8x8x8xf32>
    %11 = arith.cmpf oge, %9, %10 : vector<1x8x8x8xf32>
    %cst_7 = arith.constant 1.000000e-01 : f32
    %12 = vector.broadcast %cst_7 : f32 to vector<1x8x8x8xf32>
    %13 = arith.mulf %12, %9 : vector<1x8x8x8xf32>
    %14 = arith.select %11, %9, %13 : vector<1x8x8x8xi1>, vector<1x8x8x8xf32>
    %15 = arith.truncf %14 : vector<1x8x8x8xf32> to vector<1x8x8x8xbf16>
    %cst_8 = arith.constant 0.000000e+00 : bf16
    %16 = vector.broadcast %cst_8 : bf16 to vector<1x10x10x8xbf16>
    %c0_9 = arith.constant 0 : index
    %c0_10 = arith.constant 0 : index
    %c0_11 = arith.constant 0 : index
    %c0_12 = arith.constant 0 : index
    %17 = vector.load %arg9[%c0_9, %c0_10, %c0_11, %c0_12] : memref<1x10x10x8xbf16, #tpu.memory_space<vmem>>, vector<1x10x10x8xbf16>
    tpu.vector_store %arg9[%c0_9, %c0_10, %c0_11, %c0_12], %16 {strides = array<i32>} : memref<1x10x10x8xbf16, #tpu.memory_space<vmem>>, vector<1x10x10x8xbf16>,
    %c0_13 = arith.constant 0 : index
    %c1 = arith.constant 1 : index
    %c1_14 = arith.constant 1 : index
    %c0_15 = arith.constant 0 : index
    %18 = vector.load %arg9[%c0_13, %c1, %c1_14, %c0_15] : memref<1x10x10x8xbf16, #tpu.memory_space<vmem>>, vector<1x8x8x8xbf16>
    tpu.vector_store %arg9[%c0_13, %c1, %c1_14, %c0_15], %15 {strides = array<i32>} : memref<1x10x10x8xbf16, #tpu.memory_space<vmem>>, vector<1x8x8x8xbf16>,
    %c0_16 = arith.constant 0 : index
    %c0_17 = arith.constant 0 : index
    %c0_18 = arith.constant 0 : index
    %c0_19 = arith.constant 0 : index
    %19 = vector.load %arg9[%c0_16, %c0_17, %c0_18, %c0_19] : memref<1x10x10x8xbf16, #tpu.memory_space<vmem>>, vector<1x8x8x8xbf16>
    %20 = vector.shape_cast %19 : vector<1x8x8x8xbf16> to vector<64x8xbf16>
    %c0_20 = arith.constant 0 : index
    %c0_21 = arith.constant 0 : index
    %21 = vector.load %arg10[%c0_20, %c0_21] : memref<64x72xbf16, #tpu.memory_space<vmem>>, vector<64x8xbf16>
    tpu.vector_store %arg10[%c0_20, %c0_21], %20 {strides = array<i32>} : memref<64x72xbf16, #tpu.memory_space<vmem>>, vector<64x8xbf16>,
    %c0_22 = arith.constant 0 : index
    %c0_23 = arith.constant 0 : index
    %c1_24 = arith.constant 1 : index
    %c0_25 = arith.constant 0 : index
    %22 = vector.load %arg9[%c0_22, %c0_23, %c1_24, %c0_25] : memref<1x10x10x8xbf16, #tpu.memory_space<vmem>>, vector<1x8x8x8xbf16>
    %23 = vector.shape_cast %22 : vector<1x8x8x8xbf16> to vector<64x8xbf16>
    %c0_26 = arith.constant 0 : index
    %c8 = arith.constant 8 : index
    %24 = vector.load %arg10[%c0_26, %c8] : memref<64x72xbf16, #tpu.memory_space<vmem>>, vector<64x8xbf16>
    tpu.vector_store %arg10[%c0_26, %c8], %23 {strides = array<i32>} : memref<64x72xbf16, #tpu.memory_space<vmem>>, vector<64x8xbf16>,
    %c0_27 = arith.constant 0 : index
    %c0_28 = arith.constant 0 : index
    %c2 = arith.constant 2 : index
    %c0_29 = arith.constant 0 : index
    %25 = vector.load %arg9[%c0_27, %c0_28, %c2, %c0_29] : memref<1x10x10x8xbf16, #tpu.memory_space<vmem>>, vector<1x8x8x8xbf16>
    %26 = vector.shape_cast %25 : vector<1x8x8x8xbf16> to vector<64x8xbf16>
    %c0_30 = arith.constant 0 : index
    %c16 = arith.constant 16 : index
    %27 = vector.load %arg10[%c0_30, %c16] : memref<64x72xbf16, #tpu.memory_space<vmem>>, vector<64x8xbf16>
    tpu.vector_store %arg10[%c0_30, %c16], %26 {strides = array<i32>} : memref<64x72xbf16, #tpu.memory_space<vmem>>, vector<64x8xbf16>,
    %c0_31 = arith.constant 0 : index
    %c1_32 = arith.constant 1 : index
    %c0_33 = arith.constant 0 : index
    %c0_34 = arith.constant 0 : index
    %28 = vector.load %arg9[%c0_31, %c1_32, %c0_33, %c0_34] : memref<1x10x10x8xbf16, #tpu.memory_space<vmem>>, vector<1x8x8x8xbf16>
    %29 = vector.shape_cast %28 : vector<1x8x8x8xbf16> to vector<64x8xbf16>
    %c0_35 = arith.constant 0 : index
    %c24 = arith.constant 24 : index
    %30 = vector.load %arg10[%c0_35, %c24] : memref<64x72xbf16, #tpu.memory_space<vmem>>, vector<64x8xbf16>
    tpu.vector_store %arg10[%c0_35, %c24], %29 {strides = array<i32>} : memref<64x72xbf16, #tpu.memory_space<vmem>>, vector<64x8xbf16>,
    %c0_36 = arith.constant 0 : index
    %c1_37 = arith.constant 1 : index
    %c1_38 = arith.constant 1 : index
    %c0_39 = arith.constant 0 : index
    %31 = vector.load %arg9[%c0_36, %c1_37, %c1_38, %c0_39] : memref<1x10x10x8xbf16, #tpu.memory_space<vmem>>, vector<1x8x8x8xbf16>
    %32 = vector.shape_cast %31 : vector<1x8x8x8xbf16> to vector<64x8xbf16>
    %c0_40 = arith.constant 0 : index
    %c32 = arith.constant 32 : index
    %33 = vector.load %arg10[%c0_40, %c32] : memref<64x72xbf16, #tpu.memory_space<vmem>>, vector<64x8xbf16>
    tpu.vector_store %arg10[%c0_40, %c32], %32 {strides = array<i32>} : memref<64x72xbf16, #tpu.memory_space<vmem>>, vector<64x8xbf16>,
    %c0_41 = arith.constant 0 : index
    %c1_42 = arith.constant 1 : index
    %c2_43 = arith.constant 2 : index
    %c0_44 = arith.constant 0 : index
    %34 = vector.load %arg9[%c0_41, %c1_42, %c2_43, %c0_44] : memref<1x10x10x8xbf16, #tpu.memory_space<vmem>>, vector<1x8x8x8xbf16>
    %35 = vector.shape_cast %34 : vector<1x8x8x8xbf16> to vector<64x8xbf16>
    %c0_45 = arith.constant 0 : index
    %c40 = arith.constant 40 : index
    %36 = vector.load %arg10[%c0_45, %c40] : memref<64x72xbf16, #tpu.memory_space<vmem>>, vector<64x8xbf16>
    tpu.vector_store %arg10[%c0_45, %c40], %35 {strides = array<i32>} : memref<64x72xbf16, #tpu.memory_space<vmem>>, vector<64x8xbf16>,
    %c0_46 = arith.constant 0 : index
    %c2_47 = arith.constant 2 : index
    %c0_48 = arith.constant 0 : index
    %c0_49 = arith.constant 0 : index
    %37 = vector.load %arg9[%c0_46, %c2_47, %c0_48, %c0_49] : memref<1x10x10x8xbf16, #tpu.memory_space<vmem>>, vector<1x8x8x8xbf16>
    %38 = vector.shape_cast %37 : vector<1x8x8x8xbf16> to vector<64x8xbf16>
    %c0_50 = arith.constant 0 : index
    %c48 = arith.constant 48 : index
    %39 = vector.load %arg10[%c0_50, %c48] : memref<64x72xbf16, #tpu.memory_space<vmem>>, vector<64x8xbf16>
    tpu.vector_store %arg10[%c0_50, %c48], %38 {strides = array<i32>} : memref<64x72xbf16, #tpu.memory_space<vmem>>, vector<64x8xbf16>,
    %c0_51 = arith.constant 0 : index
    %c2_52 = arith.constant 2 : index
    %c1_53 = arith.constant 1 : index
    %c0_54 = arith.constant 0 : index
    %40 = vector.load %arg9[%c0_51, %c2_52, %c1_53, %c0_54] : memref<1x10x10x8xbf16, #tpu.memory_space<vmem>>, vector<1x8x8x8xbf16>
    %41 = vector.shape_cast %40 : vector<1x8x8x8xbf16> to vector<64x8xbf16>
    %c0_55 = arith.constant 0 : index
    %c56 = arith.constant 56 : index
    %42 = vector.load %arg10[%c0_55, %c56] : memref<64x72xbf16, #tpu.memory_space<vmem>>, vector<64x8xbf16>
    tpu.vector_store %arg10[%c0_55, %c56], %41 {strides = array<i32>} : memref<64x72xbf16, #tpu.memory_space<vmem>>, vector<64x8xbf16>,
    %c0_56 = arith.constant 0 : index
    %c2_57 = arith.constant 2 : index
    %c2_58 = arith.constant 2 : index
    %c0_59 = arith.constant 0 : index
    %43 = vector.load %arg9[%c0_56, %c2_57, %c2_58, %c0_59] : memref<1x10x10x8xbf16, #tpu.memory_space<vmem>>, vector<1x8x8x8xbf16>
    %44 = vector.shape_cast %43 : vector<1x8x8x8xbf16> to vector<64x8xbf16>
    %c0_60 = arith.constant 0 : index
    %c64 = arith.constant 64 : index
    %45 = vector.load %arg10[%c0_60, %c64] : memref<64x72xbf16, #tpu.memory_space<vmem>>, vector<64x8xbf16>
    tpu.vector_store %arg10[%c0_60, %c64], %44 {strides = array<i32>} : memref<64x72xbf16, #tpu.memory_space<vmem>>, vector<64x8xbf16>,
    %c0_61 = arith.constant 0 : index
    %c0_62 = arith.constant 0 : index
    %46 = vector.load %arg10[%c0_61, %c0_62] : memref<64x72xbf16, #tpu.memory_space<vmem>>, vector<64x72xbf16>
    %c0_63 = arith.constant 0 : index
    %c0_64 = arith.constant 0 : index
    %47 = vector.load %arg2[%c0_63, %c0_64] : memref<72x8xbf16, #tpu.memory_space<vmem>>, vector<72x8xbf16>
    %cst_65 = arith.constant dense<0.000000e+00> : vector<64x8xf32>
    %48 = tpu.matmul %46, %47, %cst_65 {dimension_numbers = #tpu.dot_dimension_numbers<[1], [0], [0], [1], [0, 0, 1, 1], [], []>} : vector<64x72xbf16>, vector<72x8xbf16>, vector<64x8xf32> -> vector<64x8xf32>
    %49 = vector.shape_cast %48 : vector<64x8xf32> to vector<1x64x8xf32>
    %c0_66 = arith.constant 0 : index
    %c0_67 = arith.constant 0 : index
    %c0_68 = arith.constant 0 : index
    %50 = vector.load %arg5[%c0_66, %c0_67, %c0_68] : memref<1x1x8xf32, #tpu.memory_space<vmem>>, vector<1x1x8xf32>
    %51 = vector.broadcast %50 : vector<1x1x8xf32> to vector<1x64x8xf32>
    %52 = arith.addf %49, %51 : vector<1x64x8xf32>
    %cst_69 = arith.constant dense<0.000000e+00> : vector<64x8xf32>
    %53 = vector.multi_reduction <add>, %52, %cst_69 [0] : vector<1x64x8xf32> to vector<64x8xf32>
    %cst_70 = arith.constant dense<0.000000e+00> : vector<8xf32>
    %54 = vector.multi_reduction <add>, %53, %cst_70 [0] : vector<64x8xf32> to vector<8xf32>
    %55 = vector.shape_cast %54 : vector<8xf32> to vector<1x8xf32>
    %c0_71 = arith.constant 0 : index
    %c0_72 = arith.constant 0 : index
    %c0_73 = arith.constant 0 : index
    %56 = vector.load %arg7[%c0_71, %c0_72, %c0_73] : memref<1x1x8xf32, #tpu.memory_space<vmem>>, vector<1x1x8xf32>
    %57 = vector.shape_cast %56 : vector<1x1x8xf32> to vector<1x8xf32>
    %58 = vector.shape_cast %55 : vector<1x8xf32> to vector<1x1x8xf32>
    tpu.vector_store %arg7[%c0_71, %c0_72, %c0_73], %58 {strides = array<i32>} : memref<1x1x8xf32, #tpu.memory_space<vmem>>, vector<1x1x8xf32>,
    %59 = arith.mulf %52, %52 : vector<1x64x8xf32>
    %cst_74 = arith.constant dense<0.000000e+00> : vector<64x8xf32>
    %60 = vector.multi_reduction <add>, %59, %cst_74 [0] : vector<1x64x8xf32> to vector<64x8xf32>
    %cst_75 = arith.constant dense<0.000000e+00> : vector<8xf32>
    %61 = vector.multi_reduction <add>, %60, %cst_75 [0] : vector<64x8xf32> to vector<8xf32>
    %62 = vector.shape_cast %61 : vector<8xf32> to vector<1x8xf32>
    %c0_76 = arith.constant 0 : index
    %c0_77 = arith.constant 0 : index
    %c0_78 = arith.constant 0 : index
    %63 = vector.load %arg8[%c0_76, %c0_77, %c0_78] : memref<1x1x8xf32, #tpu.memory_space<vmem>>, vector<1x1x8xf32>
    %64 = vector.shape_cast %63 : vector<1x1x8xf32> to vector<1x8xf32>
    %65 = vector.shape_cast %62 : vector<1x8xf32> to vector<1x1x8xf32>
    tpu.vector_store %arg8[%c0_76, %c0_77, %c0_78], %65 {strides = array<i32>} : memref<1x1x8xf32, #tpu.memory_space<vmem>>, vector<1x1x8xf32>,
    %66 = arith.truncf %52 : vector<1x64x8xf32> to vector<1x64x8xbf16>
    %c0_79 = arith.constant 0 : index
    %c0_80 = arith.constant 0 : index
    %c0_81 = arith.constant 0 : index
    %67 = vector.load %arg6[%c0_79, %c0_80, %c0_81] : memref<1x64x8xbf16, #tpu.memory_space<vmem>>, vector<1x64x8xbf16>
    tpu.vector_store %arg6[%c0_79, %c0_80, %c0_81], %66 {strides = array<i32>} : memref<1x64x8xbf16, #tpu.memory_space<vmem>>, vector<1x64x8xbf16>,
    return
  }
  func.func @transform_0(%arg0: i32) -> (i32, i32, i32, i32) {
    %c0_i32 = arith.constant 0 : i32
    %c0_i32_0 = arith.constant 0 : i32
    %c0_i32_1 = arith.constant 0 : i32
    %c0_i32_2 = arith.constant 0 : i32
    return %arg0, %c0_i32, %c0_i32_0, %c0_i32_1 : i32, i32, i32, i32
  }
  func.func @transform_1(%arg0: i32) -> (i32, i32) {
    %c0_i32 = arith.constant 0 : i32
    %c0_i32_0 = arith.constant 0 : i32
    %c0_i32_1 = arith.constant 0 : i32
    return %c0_i32, %c0_i32_0 : i32, i32
  }
  func.func @transform_2(%arg0: i32) -> (i32, i32) {
    %c0_i32 = arith.constant 0 : i32
    %c0_i32_0 = arith.constant 0 : i32
    %c0_i32_1 = arith.constant 0 : i32
    return %c0_i32, %c0_i32_0 : i32, i32
  }
  func.func @transform_3(%arg0: i32) -> (i32, i32) {
    %c0_i32 = arith.constant 0 : i32
    %c0_i32_0 = arith.constant 0 : i32
    %c0_i32_1 = arith.constant 0 : i32
    return %c0_i32, %c0_i32_0 : i32, i32
  }
  func.func @transform_4(%arg0: i32) -> (i32, i32, i32) {
    %c0_i32 = arith.constant 0 : i32
    %c0_i32_0 = arith.constant 0 : i32
    %c0_i32_1 = arith.constant 0 : i32
    return %arg0, %c0_i32, %c0_i32_0 : i32, i32, i32
  }
  func.func @transform_5(%arg0: i32) -> (i32, i32, i32) {
    %c0_i32 = arith.constant 0 : i32
    %c0_i32_0 = arith.constant 0 : i32
    %c0_i32_1 = arith.constant 0 : i32
    return %arg0, %c0_i32, %c0_i32_0 : i32, i32, i32
  }
  func.func @transform_6(%arg0: i32) -> (i32, i32, i32) {
    %c0_i32 = arith.constant 0 : i32
    %c0_i32_0 = arith.constant 0 : i32
    %c0_i32_1 = arith.constant 0 : i32
    return %arg0, %c0_i32, %c0_i32_0 : i32, i32, i32
  }
  func.func @transform_7(%arg0: i32) -> (i32, i32, i32) {
    %c0_i32 = arith.constant 0 : i32
    %c0_i32_0 = arith.constant 0 : i32
    %c0_i32_1 = arith.constant 0 : i32
    return %arg0, %c0_i32, %c0_i32_0 : i32, i32, i32
  }
}

</mosaic_0001>

<llo_original>
// kernel: _lambda_.5
$region0: #{_lambda_.5}
  #allocation0 [shape = 'u32[]', space=smem, size = 0x4, offset = 0x4, fixed_abs, tag = 'smem constant byte address 0x4 - core index']
  #allocation1 [shape = 'u32[144,128]{1,0:T(1,128)}', space=vmem, size = 0x12000, scoped, tag = 'internal scratch']
  %s0 = inlined_call_operand.vmem [shape: f32[16,128], index: 0, kind: input, shape index: {}]
  %s1 = inlined_call_operand.vmem [shape: f32[1,128], index: 1, kind: output, shape index: {0}]
  %s2 = inlined_call_operand.vmem [shape: f32[1,128], index: 2, kind: output, shape index: {1}]
  %3 = xla_tuple %s1, %s2
  %s4 = sld [smem:[#allocation0]]
  $region26: #{_lambda_.5} parent=0
    _
  %s6 = ssub.s32 1, %s4
  %s7 = scalar_select 0, %s6, %s4
  // Predicated region
  $region2: #{_lambda_.5} parent=0 // pred_check
    _
  $region3: #{_lambda_.5} parent=0 // pred_check_branch
    %9 = sbr.rel (0) target = $region5
  $region4: #{_lambda_.5} parent=0 // pred_region
    _
  $region5: #{_lambda_.5} parent=0 // pred_fallthru
    _
  %p10 = scmp.eq.s32.totalorder 0, 0
  // Predicated region
  $region6: #{_lambda_.5} parent=0 // pred_check
    %p11 = pneg %p10
  $region7: #{_lambda_.5} parent=0 // pred_check_branch
    %13 = sbr.rel (%p11) target = $region9
  $region8: #{_lambda_.5} parent=0 // pred_region
    %14 = vst [vmem:[%s1] sm:$0x1] 0.0
    %15 = vst [vmem:[%s2] sm:$0x1] 0.0
  $region9: #{_lambda_.5} parent=0 // pred_fallthru
    _
  %v16 = vld [vmem:[%s0] sm:$0xff]
  %v17 = vld [vmem:[%s0 + $0x8] sm:$0xff]
  %v18 = vld [vmem:[%s1] sm:$0x1]
  %v19 = vadd.f32 %v16, %v17
  %v20 = vrot.slane %v19, 4
  %v21 = vadd.f32 %v19, %v20
  %v22 = vrot.slane %v21, 2
  %v23 = vadd.f32 %v21, %v22
  %v24 = vrot.slane %v23, 1
  %v25 = vadd.f32 %v23, %v24
  %v26 = vadd.f32 %v18, %v25
  %27 = vst [vmem:[%s1] sm:$0x1] %v26
  %v28 = vld [vmem:[%s2] sm:$0x1]
  %v29 = vmul.f32 %v16, %v16
  %v30 = vmul.f32 %v17, %v17
  %v31 = vadd.f32 %v29, %v30
  %v32 = vrot.slane %v31, 4
  %v33 = vadd.f32 %v31, %v32
  %v34 = vrot.slane %v33, 2
  %v35 = vadd.f32 %v33, %v34
  %v36 = vrot.slane %v35, 1
  %v37 = vadd.f32 %v35, %v36
  %v38 = vadd.f32 %v28, %v37
  %39 = vst [vmem:[%s2] sm:$0x1] %v38
  // Predicated region
  $region10: #{_lambda_.5} parent=0 // pred_check
    _
  $region11: #{_lambda_.5} parent=0 // pred_check_branch
    %41 = sbr.rel (0) target = $region13
  $region12: #{_lambda_.5} parent=0 // pred_region
    _
  $region13: #{_lambda_.5} parent=0 // pred_fallthru
    _
  // Predicated region
  $region14: #{_lambda_.5} parent=0 // pred_check
    _
  $region15: #{_lambda_.5} parent=0 // pred_check_branch
    %43 = sbr.rel (0) target = $region17
  $region16: #{_lambda_.5} parent=0 // pred_region
    _
  $region17: #{_lambda_.5} parent=0 // pred_fallthru
    _
  // Predicated region
  $region18: #{_lambda_.5} parent=0 // pred_check
    _
  $region19: #{_lambda_.5} parent=0 // pred_check_branch
    %45 = sbr.rel (0) target = $region21
  $region20: #{_lambda_.5} parent=0 // pred_region
    _
  $region21: #{_lambda_.5} parent=0 // pred_fallthru
    _
  // Predicated region
  $region22: #{_lambda_.5} parent=0 // pred_check
    _
  $region23: #{_lambda_.5} parent=0 // pred_check_branch
    %47 = sbr.rel (0) target = $region25
  $region24: #{_lambda_.5} parent=0 // pred_region
    _
  $region25: #{_lambda_.5} parent=0 // pred_fallthru
    _

// kernel: _lambda_.8
$region0: #{_lambda_.8}
  #allocation0 [shape = 'u32[]', space=smem, size = 0x4, offset = 0x4, fixed_abs, tag = 'smem constant byte address 0x4 - core index']
  #allocation1 [shape = 'u32[144,128]{1,0:T(1,128)}', space=vmem, size = 0x12000, scoped, tag = 'internal scratch']
  #allocation2 [shape = 'bf16[1,10,10,8]{3,2,1,0:T(8,128)(2,1)}', space=vmem, size = 0xa000, scoped, tag = 'scratch operand']
  #allocation3 [shape = 'bf16[64,72]{1,0:T(8,128)(2,1)}', space=vmem, size = 0x4000, scoped, tag = 'scratch operand']
  %s0 = inlined_call_operand.vmem [shape: bf16[2,8,8,8], index: 0, kind: input, shape index: {}]
  %s1 = inlined_call_operand.vmem [shape: bf16[72,8], index: 1, kind: input, shape index: {}]
  %s2 = inlined_call_operand.vmem [shape: f32[1,8], index: 2, kind: input, shape index: {}]
  %s3 = inlined_call_operand.vmem [shape: f32[1,8], index: 3, kind: input, shape index: {}]
  %s4 = inlined_call_operand.vmem [shape: f32[2,1,8], index: 4, kind: input, shape index: {}]
  %s5 = inlined_call_operand.vmem [shape: bf16[2,64,8], index: 5, kind: output, shape index: {0}]
  %s6 = inlined_call_operand.vmem [shape: f32[2,1,8], index: 6, kind: output, shape index: {1}]
  %s7 = inlined_call_operand.vmem [shape: f32[2,1,8], index: 7, kind: output, shape index: {2}]
  %8 = xla_tuple %s5, %s6, %s7
  %s9 = sld [smem:[#allocation0]]
  $region69: #{_lambda_.8} parent=0
    _
  %s11 = ssub.s32 1, %s9
  %s12 = scalar_select 0, %s11, %s9
  loop: start=0, step=1, limit=4
  $region2: #{_lambda_.8} parent=0 // loop_pre_header
    _
  $region3: #{_lambda_.8} parent=0 // loop_header
    %s14 = sphi 0, %s18
    %p15 = scmp.ge.s32.totalorder %s14, 4
    %s24 = sphi 0, %s26
    %s27 = sphi 0, %s24
    %s28 = sphi 0, %s27
    %s44 = sphi 0, %s28
    %s48 = sphi 0, %s48
    %s50 = sphi 0, %s48
    %s51 = sphi 0, %s50
    %s65 = sphi 0, %s51
    %s69 = sphi 0, %s69
    %s71 = sphi 0, %s69
    %s72 = sphi 0, %s71
    %s86 = sphi 0, %s72
    %s90 = sphi 0, %s90
    %s92 = sphi 0, %s90
    %s93 = sphi 0, %s92
    %s107 = sphi 0, %s93
    %s113 = sphi 0, %s115
    %s116 = sphi 0, %s113
    %s117 = sphi 0, %s116
    %s133 = sphi 0, %s117
    %s139 = sphi 0, %s141
    %s142 = sphi 0, %s139
    %s143 = sphi 0, %s142
    %s159 = sphi 0, %s143
    %s165 = sphi 0, %s167
    %s168 = sphi 0, %s165
    %s169 = sphi 0, %s168
    %s185 = sphi 0, %s169
    %s191 = sphi 0, %s193
    %s194 = sphi 0, %s191
    %s195 = sphi 0, %s194
    %s211 = sphi 0, %s195
  $region4: #{_lambda_.8} parent=0 // loop_header_branch
    %17 = sbr.rel (%p15) target = $region8
  $region5: #{_lambda_.8} parent=0 // loop_body
    %s19 = ssub.s32 %s14, 1
    %s20 = ssub.s32 %s14, 2
    %s21 = sadd.s32 %s14, 1
    %s22 = ssub.s32 %s14, %s21
    %p23 = scmp.eq.s32.totalorder %s22, 0
    %s25 = sadd.s32 %s24, 1
    %s26 = scalar_select %p23, %s24, %s25
    %p29 = pneg %p23
    %p30 = scmp.eq.s32.totalorder %s14, 1
    %p31 = por %p29, %p30
    %p32 = scmp.ne.s32.totalorder %s24, %s27
    %p33 = scmp.eq.s32.totalorder %s14, 0
    %p34 = por %p32, %p33
    %p35 = scmp.ne.s32.totalorder %s24, %s27
    %p36 = scmp.eq.s32.totalorder %s19, 1
    %p37 = por %p35, %p36
    %p38 = scmp.ne.s32.totalorder %s27, %s28
    %p39 = scmp.eq.s32.totalorder %s19, 0
    %p40 = por %p38, %p39
    %p41 = scmp.ne.s32.totalorder %s27, %s28
    %p42 = scmp.eq.s32.totalorder %s20, 1
    %p43 = por %p41, %p42
    %p45 = scmp.ne.s32.totalorder %s28, %s44
    %p46 = scmp.eq.s32.totalorder %s20, 0
    %p47 = por %p45, %p46
    %s49 = sadd.s32 %s48, 1
    %p52 = scmp.eq.s32.totalorder %s14, 1
    %p53 = scmp.ne.s32.totalorder %s48, %s50
    %p54 = scmp.eq.s32.totalorder %s14, 0
    %p55 = por %p53, %p54
    %p56 = scmp.ne.s32.totalorder %s48, %s50
    %p57 = scmp.eq.s32.totalorder %s19, 1
    %p58 = por %p56, %p57
    %p59 = scmp.ne.s32.totalorder %s50, %s51
    %p60 = scmp.eq.s32.totalorder %s19, 0
    %p61 = por %p59, %p60
    %p62 = scmp.ne.s32.totalorder %s50, %s51
    %p63 = scmp.eq.s32.totalorder %s20, 1
    %p64 = por %p62, %p63
    %p66 = scmp.ne.s32.totalorder %s51, %s65
    %p67 = scmp.eq.s32.totalorder %s20, 0
    %p68 = por %p66, %p67
    %s70 = sadd.s32 %s69, 1
    %p73 = scmp.eq.s32.totalorder %s14, 1
    %p74 = scmp.ne.s32.totalorder %s69, %s71
    %p75 = scmp.eq.s32.totalorder %s14, 0
    %p76 = por %p74, %p75
    %p77 = scmp.ne.s32.totalorder %s69, %s71
    %p78 = scmp.eq.s32.totalorder %s19, 1
    %p79 = por %p77, %p78
    %p80 = scmp.ne.s32.totalorder %s71, %s72
    %p81 = scmp.eq.s32.totalorder %s19, 0
    %p82 = por %p80, %p81
    %p83 = scmp.ne.s32.totalorder %s71, %s72
    %p84 = scmp.eq.s32.totalorder %s20, 1
    %p85 = por %p83, %p84
    %p87 = scmp.ne.s32.totalorder %s72, %s86
    %p88 = scmp.eq.s32.totalorder %s20, 0
    %p89 = por %p87, %p88
    %s91 = sadd.s32 %s90, 1
    %p94 = scmp.eq.s32.totalorder %s14, 1
    %p95 = scmp.ne.s32.totalorder %s90, %s92
    %p96 = scmp.eq.s32.totalorder %s14, 0
    %p97 = por %p95, %p96
    %p98 = scmp.ne.s32.totalorder %s90, %s92
    %p99 = scmp.eq.s32.totalorder %s19, 1
    %p100 = por %p98, %p99
    %p101 = scmp.ne.s32.totalorder %s92, %s93
    %p102 = scmp.eq.s32.totalorder %s19, 0
    %p103 = por %p101, %p102
    %p104 = scmp.ne.s32.totalorder %s92, %s93
    %p105 = scmp.eq.s32.totalorder %s20, 1
    %p106 = por %p104, %p105
    %p108 = scmp.ne.s32.totalorder %s93, %s107
    %p109 = scmp.eq.s32.totalorder %s20, 0
    %p110 = por %p108, %p109
    %s111 = ssub.s32 %s14, %s21
    %p112 = scmp.eq.s32.totalorder %s111, 0
    %s114 = sadd.s32 %s113, 1
    %s115 = scalar_select %p112, %s113, %s114
    %p118 = pneg %p112
    %p119 = scmp.eq.s32.totalorder %s14, 1
    %p120 = por %p118, %p119
    %p121 = scmp.ne.s32.totalorder %s113, %s116
    %p122 = scmp.eq.s32.totalorder %s14, 0
    %p123 = por %p121, %p122
    %p124 = scmp.ne.s32.totalorder %s113, %s116
    %p125 = scmp.eq.s32.totalorder %s19, 1
    %p126 = por %p124, %p125
    %p127 = scmp.ne.s32.totalorder %s116, %s117
    %p128 = scmp.eq.s32.totalorder %s19, 0
    %p129 = por %p127, %p128
    %p130 = scmp.ne.s32.totalorder %s116, %s117
    %p131 = scmp.eq.s32.totalorder %s20, 1
    %p132 = por %p130, %p131
    %p134 = scmp.ne.s32.totalorder %s117, %s133
    %p135 = scmp.eq.s32.totalorder %s20, 0
    %p136 = por %p134, %p135
    %s137 = ssub.s32 %s14, %s21
    %p138 = scmp.eq.s32.totalorder %s137, 0
    %s140 = sadd.s32 %s139, 1
    %s141 = scalar_select %p138, %s139, %s140
    %p144 = pneg %p138
    %p145 = scmp.eq.s32.totalorder %s14, 1
    %p146 = por %p144, %p145
    %p147 = scmp.ne.s32.totalorder %s139, %s142
    %p148 = scmp.eq.s32.totalorder %s14, 0
    %p149 = por %p147, %p148
    %p150 = scmp.ne.s32.totalorder %s139, %s142
    %p151 = scmp.eq.s32.totalorder %s19, 1
    %p152 = por %p150, %p151
    %p153 = scmp.ne.s32.totalorder %s142, %s143
    %p154 = scmp.eq.s32.totalorder %s19, 0
    %p155 = por %p153, %p154
    %p156 = scmp.ne.s32.totalorder %s142, %s143
    %p157 = scmp.eq.s32.totalorder %s20, 1
    %p158 = por %p156, %p157
    %p160 = scmp.ne.s32.totalorder %s143, %s159
    %p161 = scmp.eq.s32.totalorder %s20, 0
    %p162 = por %p160, %p161
    %s163 = ssub.s32 %s14, %s21
    %p164 = scmp.eq.s32.totalorder %s163, 0
    %s166 = sadd.s32 %s165, 1
    %s167 = scalar_select %p164, %s165, %s166
    %p170 = pneg %p164
    %p171 = scmp.eq.s32.totalorder %s14, 1
    %p172 = por %p170, %p171
    %p173 = scmp.ne.s32.totalorder %s165, %s168
    %p174 = scmp.eq.s32.totalorder %s14, 0
    %p175 = por %p173, %p174
    %p176 = scmp.ne.s32.totalorder %s165, %s168
    %p177 = scmp.eq.s32.totalorder %s19, 1
    %p178 = por %p176, %p177
    %p179 = scmp.ne.s32.totalorder %s168, %s169
    %p180 = scmp.eq.s32.totalorder %s19, 0
    %p181 = por %p179, %p180
    %p182 = scmp.ne.s32.totalorder %s168, %s169
    %p183 = scmp.eq.s32.totalorder %s20, 1
    %p184 = por %p182, %p183
    %p186 = scmp.ne.s32.totalorder %s169, %s185
    %p187 = scmp.eq.s32.totalorder %s20, 0
    %p188 = por %p186, %p187
    %s189 = ssub.s32 %s14, %s21
    %p190 = scmp.eq.s32.totalorder %s189, 0
    %s192 = sadd.s32 %s191, 1
    %s193 = scalar_select %p190, %s191, %s192
    %p196 = pneg %p190
    %p197 = scmp.eq.s32.totalorder %s14, 1
    %p198 = por %p196, %p197
    %p199 = scmp.ne.s32.totalorder %s191, %s194
    %p200 = scmp.eq.s32.totalorder %s14, 0
    %p201 = por %p199, %p200
    %p202 = scmp.ne.s32.totalorder %s191, %s194
    %p203 = scmp.eq.s32.totalorder %s19, 1
    %p204 = por %p202, %p203
    %p205 = scmp.ne.s32.totalorder %s194, %s195
    %p206 = scmp.eq.s32.totalorder %s19, 0
    %p207 = por %p205, %p206
    %p208 = scmp.ne.s32.totalorder %s194, %s195
    %p209 = scmp.eq.s32.totalorder %s20, 1
    %p210 = por %p208, %p209
    %p212 = scmp.ne.s32.totalorder %s195, %s211
    %p213 = scmp.eq.s32.totalorder %s20, 0
    %p214 = por %p212, %p213
    %p215 = scmp.le.s32.totalorder 1, %s14
    %p216 = scmp.lt.s32.totalorder %s14, 3
    %p217 = pnand %p215, %p216
    %p218 = pneg %p217
    // Predicated region
    $region9: #{_lambda_.8} parent=5 // pred_check
      _
    $region10: #{_lambda_.8} parent=5 // pred_check_branch
      %220 = sbr.rel (%p217) target = $region12
    $region11: #{_lambda_.8} parent=5 // pred_region
      %s221 = ssub.s32 %s14, 1
      // Predicated region
      $region13: #{_lambda_.8} parent=11 // pred_check
        %p222 = pneg %p61
      $region14: #{_lambda_.8} parent=11 // pred_check_branch
        %224 = sbr.rel (%p222) target = $region16
      $region15: #{_lambda_.8} parent=11 // pred_region
        _
      $region16: #{_lambda_.8} parent=11 // pred_fallthru
        _
      // Predicated region
      $region17: #{_lambda_.8} parent=11 // pred_check
        %p225 = pneg %p82
      $region18: #{_lambda_.8} parent=11 // pred_check_branch
        %227 = sbr.rel (%p225) target = $region20
      $region19: #{_lambda_.8} parent=11 // pred_region
        _
      $region20: #{_lambda_.8} parent=11 // pred_fallthru
        _
      // Predicated region
      $region21: #{_lambda_.8} parent=11 // pred_check
        %p228 = pneg %p103
      $region22: #{_lambda_.8} parent=11 // pred_check_branch
        %230 = sbr.rel (%p228) target = $region24
      $region23: #{_lambda_.8} parent=11 // pred_region
        _
      $region24: #{_lambda_.8} parent=11 // pred_fallthru
        _
    $region12: #{_lambda_.8} parent=5 // pred_fallthru
      _
    %p231 = scmp.lt.s32.totalorder %s14, 2
    // Predicated region
    $region25: #{_lambda_.8} parent=5 // pred_check
      %p232 = pneg %p231
    $region26: #{_lambda_.8} parent=5 // pred_check_branch
      %234 = sbr.rel (%p232) target = $region28
    $region27: #{_lambda_.8} parent=5 // pred_region
      // Predicated region
      $region29: #{_lambda_.8} parent=27 // pred_check
        %p235 = pneg %p34
      $region30: #{_lambda_.8} parent=27 // pred_check_branch
        %237 = sbr.rel (%p235) target = $region32
      $region31: #{_lambda_.8} parent=27 // pred_region
        %p238 = scmp.lt.s32.totalorder %s14, 1
        %s239 = scalar_select %p238, %s14, 1
        %s240 = smul.addr %s239, 8
        %s241 = smul.addr %s240, 4
        %s242 = scalar_lea.vmem %s0, %s241
      $region32: #{_lambda_.8} parent=27 // pred_fallthru
        _
      // Predicated region
      $region33: #{_lambda_.8} parent=27 // pred_check
        %p243 = pneg %p123
      $region34: #{_lambda_.8} parent=27 // pred_check_branch
        %245 = sbr.rel (%p243) target = $region36
      $region35: #{_lambda_.8} parent=27 // pred_region
        %p246 = scmp.lt.s32.totalorder %s14, 1
        %s247 = scalar_select %p246, %s14, 1
        %s248 = scalar_lea.vmem %s4, %s247
      $region36: #{_lambda_.8} parent=27 // pred_fallthru
        _
    $region28: #{_lambda_.8} parent=5 // pred_fallthru
      _
    %p249 = scmp.le.s32.totalorder 1, %s14
    %p250 = scmp.lt.s32.totalorder %s14, 3
    %p251 = pnand %p249, %p250
    %p252 = pneg %p251
    // Predicated region
    $region37: #{_lambda_.8} parent=5 // pred_check
      _
    $region38: #{_lambda_.8} parent=5 // pred_check_branch
      %254 = sbr.rel (%p251) target = $region40
    $region39: #{_lambda_.8} parent=5 // pred_region
      %s255 = ssub.s32 %s14, 1
      %p256 = scmp.lt.s32.totalorder %s19, 1
      %s257 = scalar_select %p256, %s19, 1
      %s258 = smul.addr %s257, 8
      %s259 = smul.addr %s258, 4
      %s260 = scalar_lea.vmem %s0, %s259
      %p261 = pneg %p40
      %p262 = pneg %p37
      %p263 = pneg %p61
      %p264 = pneg %p58
      %p265 = pneg %p82
      %p266 = pneg %p79
      %p267 = pneg %p103
      %p268 = pneg %p100
      %p269 = scmp.lt.s32.totalorder %s19, 1
      %s270 = scalar_select %p269, %s19, 1
      %s271 = scalar_lea.vmem %s4, %s270
      %p272 = pneg %p129
      %p273 = pneg %p126
      %p274 = pneg %p155
      %p275 = pneg %p152
      %p276 = scmp.lt.s32.totalorder %s19, 1
      %s277 = scalar_select %p276, %s19, 1
      %s278 = smul.addr %s277, 8
      %s279 = smul.addr %s278, 4
      %s280 = scalar_lea.vmem %s5, %s279
      %p281 = pneg %p181
      %p282 = pneg %p178
      %p283 = scmp.lt.s32.totalorder %s19, 1
      %s284 = scalar_select %p283, %s19, 1
      %s285 = scalar_lea.vmem %s6, %s284
      %p286 = pneg %p207
      %p287 = pneg %p204
      %p288 = scmp.lt.s32.totalorder %s19, 1
      %s289 = scalar_select %p288, %s19, 1
      %s290 = scalar_lea.vmem %s7, %s289
      %p291 = scmp.lt.s32.totalorder %s19, 1
      %s292 = scalar_select %p291, %s19, 1
      %s293 = smul.addr %s292, 8
      %s294 = smul.addr %s293, 4
      %s295 = scalar_lea.vmem %s0, %s294
      %p296 = scmp.lt.s32.totalorder %s19, 1
      %s297 = scalar_select %p296, %s19, 1
      %s298 = scalar_lea.vmem %s4, %s297
      %p299 = scmp.lt.s32.totalorder %s19, 1
      %s300 = scalar_select %p299, %s19, 1
      %s301 = smul.addr %s300, 8
      %s302 = smul.addr %s301, 4
      %s303 = scalar_lea.vmem %s5, %s302
      %p304 = scmp.lt.s32.totalorder %s19, 1
      %s305 = scalar_select %p304, %s19, 1
      %s306 = scalar_lea.vmem %s6, %s305
      %p307 = scmp.lt.s32.totalorder %s19, 1
      %s308 = scalar_select %p307, %s19, 1
      %s309 = scalar_lea.vmem %s7, %s308
      %v311 = vld [vmem:[%s295] sm:$0xf]
      %v312 = vld [vmem:[%s295 + $0x4] sm:$0xf]
      %v313 = vld [vmem:[%s295 + $0x8] sm:$0xf]
      %v314 = vld [vmem:[%s295 + $0xc] sm:$0xf]
      %v315 = vld [vmem:[%s295 + $0x10] sm:$0xf]
      %v316 = vld [vmem:[%s295 + $0x14] sm:$0xf]
      %v317 = vld [vmem:[%s295 + $0x18] sm:$0xf]
      %v318 = vld [vmem:[%s295 + $0x1c] sm:$0xf]
      %v319 = vunpack.c.l.bf16 %v311
      %v320 = vunpack.c.l.bf16 %v312
      %v321 = vunpack.c.l.bf16 %v313
      %v322 = vunpack.c.l.bf16 %v314
      %v323 = vunpack.c.l.bf16 %v315
      %v324 = vunpack.c.l.bf16 %v316
      %v325 = vunpack.c.l.bf16 %v317
      %v326 = vunpack.c.l.bf16 %v318
      %v327 = vld [vmem:[%s2] sm:$0x1]
      %v329 = vlaneseq
      %v330 = vshrl.u32 %v329, 7
      %v331 = vsub.s32 0, %v330
      %v332 = vrot.slane %v327, %v331
      %v334 = vmul.f32 %v319, %v332
      %v335 = vmul.f32 %v320, %v332
      %v336 = vmul.f32 %v321, %v332
      %v337 = vmul.f32 %v322, %v332
      %v338 = vmul.f32 %v323, %v332
      %v339 = vmul.f32 %v324, %v332
      %v340 = vmul.f32 %v325, %v332
      %v341 = vmul.f32 %v326, %v332
      %v342 = vld [vmem:[%s3] sm:$0x1]
      %v344 = vlaneseq
      %v345 = vshrl.u32 %v344, 7
      %v346 = vsub.s32 0, %v345
      %v347 = vrot.slane %v342, %v346
      %v349 = vadd.f32 %v334, %v347
      %v350 = vadd.f32 %v335, %v347
      %v351 = vadd.f32 %v336, %v347
      %v352 = vadd.f32 %v337, %v347
      %v353 = vadd.f32 %v338, %v347
      %v354 = vadd.f32 %v339, %v347
      %v355 = vadd.f32 %v340, %v347
      %v356 = vadd.f32 %v341, %v347
      %vm357 = vcmp.ge.f32.partialorder %v349, 0.0
      %vm358 = vcmp.ge.f32.partialorder %v350, 0.0
      %vm359 = vcmp.ge.f32.partialorder %v351, 0.0
      %vm360 = vcmp.ge.f32.partialorder %v352, 0.0
      %vm361 = vcmp.ge.f32.partialorder %v353, 0.0
      %vm362 = vcmp.ge.f32.partialorder %v354, 0.0
      %vm363 = vcmp.ge.f32.partialorder %v355, 0.0
      %vm364 = vcmp.ge.f32.partialorder %v356, 0.0
      %v365 = vmul.f32 %v349, 0.1
      %v366 = vmul.f32 %v350, 0.1
      %v367 = vmul.f32 %v351, 0.1
      %v368 = vmul.f32 %v352, 0.1
      %v369 = vmul.f32 %v353, 0.1
      %v370 = vmul.f32 %v354, 0.1
      %v371 = vmul.f32 %v355, 0.1
      %v372 = vmul.f32 %v356, 0.1
      %v373 = vsel %vm357, %v349, %v365
      %v374 = vsel %vm358, %v350, %v366
      %v375 = vsel %vm359, %v351, %v367
      %v376 = vsel %vm360, %v352, %v368
      %v377 = vsel %vm361, %v353, %v369
      %v378 = vsel %vm362, %v354, %v370
      %v379 = vsel %vm363, %v355, %v371
      %v380 = vsel %vm364, %v356, %v372
      %v381 = vpack.c.bf16 %v373, %v373
      %v382 = vpack.c.bf16 %v374, %v374
      %v383 = vpack.c.bf16 %v375, %v375
      %v384 = vpack.c.bf16 %v376, %v376
      %v385 = vpack.c.bf16 %v377, %v377
      %v386 = vpack.c.bf16 %v378, %v378
      %v387 = vpack.c.bf16 %v379, %v379
      %v388 = vpack.c.bf16 %v380, %v380
      %vm389 = vcmask 60416
      %390 = vst.msk [vmem:[#allocation2] sm:$0xf] %vm389, 0
      %vm391 = vcmask 57344
      %392 = vst.msk [vmem:[#allocation2 + $0x4] sm:$0x1] %vm391, 0
      %393 = vst.msk [vmem:[#allocation2 + $0x8] sm:$0xf] %vm389, 0
      %394 = vst.msk [vmem:[#allocation2 + $0xc] sm:$0x1] %vm391, 0
      %395 = vst.msk [vmem:[#allocation2 + $0x10] sm:$0xf] %vm389, 0
      %396 = vst.msk [vmem:[#allocation2 + $0x14] sm:$0x1] %vm391, 0
      %397 = vst.msk [vmem:[#allocation2 + $0x18] sm:$0xf] %vm389, 0
      %398 = vst.msk [vmem:[#allocation2 + $0x1c] sm:$0x1] %vm391, 0
      %399 = vst.msk [vmem:[#allocation2 + $0x20] sm:$0xf] %vm389, 0
      %400 = vst.msk [vmem:[#allocation2 + $0x24] sm:$0x1] %vm391, 0
      %401 = vst.msk [vmem:[#allocation2 + $0x28] sm:$0xf] %vm389, 0
      %402 = vst.msk [vmem:[#allocation2 + $0x2c] sm:$0x1] %vm391, 0
      %403 = vst.msk [vmem:[#allocation2 + $0x30] sm:$0xf] %vm389, 0
      %404 = vst.msk [vmem:[#allocation2 + $0x34] sm:$0x1] %vm391, 0
      %405 = vst.msk [vmem:[#allocation2 + $0x38] sm:$0xf] %vm389, 0
      %406 = vst.msk [vmem:[#allocation2 + $0x3c] sm:$0x1] %vm391, 0
      %407 = vst.msk [vmem:[#allocation2 + $0x40] sm:$0xf] %vm389, 0
      %408 = vst.msk [vmem:[#allocation2 + $0x44] sm:$0x1] %vm391, 0
      %409 = vst.msk [vmem:[#allocation2 + $0x48] sm:$0xf] %vm389, 0
      %410 = vst.msk [vmem:[#allocation2 + $0x4c] sm:$0x1] %vm391, 0
      %v419 = vunpack.c.l.b16 %v381
      %v420 = vunpack.c.l.b16 %v382
      %v421 = vunpack.c.l.b16 %v383
      %v422 = vunpack.c.l.b16 %v384
      %v423 = vunpack.c.l.b16 %v385
      %v424 = vunpack.c.l.b16 %v386
      %v425 = vunpack.c.l.b16 %v387
      %v426 = vunpack.c.l.b16 %v388
      %v427 = vpack.c.b16 %v419, %v419
      %v428 = vpack.c.b16 %v420, %v420
      %v429 = vpack.c.b16 %v421, %v421
      %v430 = vpack.c.b16 %v422, %v422
      %v431 = vpack.c.b16 %v423, %v423
      %v432 = vpack.c.b16 %v424, %v424
      %v433 = vpack.c.b16 %v425, %v425
      %v434 = vpack.c.b16 %v426, %v426
      %v436 = vshrl.u32 %v427, 16
      %v438 = vrot.slane %v436, 7
      %v439 = vshll.u32 %v427, 16
      %v441 = vor.u32 %v438, %v439
      %v442 = vrot.slane %v438, 4
      %v444 = vshrl.u32 %v428, 16
      %v446 = vrot.slane %v444, 7
      %v447 = vshll.u32 %v428, 16
      %v449 = vor.u32 %v446, %v447
      %v450 = vrot.slane %v446, 4
      %v452 = vshrl.u32 %v429, 16
      %v454 = vrot.slane %v452, 7
      %v455 = vshll.u32 %v429, 16
      %v457 = vor.u32 %v454, %v455
      %v458 = vrot.slane %v454, 4
      %v460 = vshrl.u32 %v430, 16
      %v462 = vrot.slane %v460, 7
      %v463 = vshll.u32 %v430, 16
      %v465 = vor.u32 %v462, %v463
      %v466 = vrot.slane %v462, 4
      %v468 = vshrl.u32 %v431, 16
      %v470 = vrot.slane %v468, 7
      %v471 = vshll.u32 %v431, 16
      %v473 = vor.u32 %v470, %v471
      %v474 = vrot.slane %v470, 4
      %v476 = vshrl.u32 %v432, 16
      %v478 = vrot.slane %v476, 7
      %v479 = vshll.u32 %v432, 16
      %v481 = vor.u32 %v478, %v479
      %v482 = vrot.slane %v478, 4
      %v484 = vshrl.u32 %v433, 16
      %v486 = vrot.slane %v484, 7
      %v487 = vshll.u32 %v433, 16
      %v489 = vor.u32 %v486, %v487
      %v490 = vrot.slane %v486, 4
      %v492 = vshrl.u32 %v434, 16
      %v494 = vrot.slane %v492, 7
      %v495 = vshll.u32 %v434, 16
      %v497 = vor.u32 %v494, %v495
      %v498 = vrot.slane %v494, 4
      %s515 = scalar_lea.vmem [#allocation2], 8
      %vm516 = vcmask 60416
      %vm517 = vsmask.f32 7938
      %vm518 = vmand %vm516, %vm517
      %v519 = vld [vmem:[%s515] sm:$0xf]
      %v520 = vsel %vm518, %v441, %v519
      %521 = vst [vmem:[%s515] sm:$0xf] %v520
      %vm522 = vcmask 57344
      %vm523 = vsmask.f32 256
      %vm524 = vmand %vm522, %vm523
      %v525 = vld [vmem:[%s515 + $0x4] sm:$0x1]
      %v526 = vsel %vm524, %v442, %v525
      %527 = vst [vmem:[%s515 + $0x4] sm:$0x1] %v526
      %v528 = vld [vmem:[%s515 + $0x8] sm:$0xf]
      %v529 = vsel %vm518, %v449, %v528
      %530 = vst [vmem:[%s515 + $0x8] sm:$0xf] %v529
      %v531 = vld [vmem:[%s515 + $0xc] sm:$0x1]
      %v532 = vsel %vm524, %v450, %v531
      %533 = vst [vmem:[%s515 + $0xc] sm:$0x1] %v532
      %v534 = vld [vmem:[%s515 + $0x10] sm:$0xf]
      %v535 = vsel %vm518, %v457, %v534
      %536 = vst [vmem:[%s515 + $0x10] sm:$0xf] %v535
      %v537 = vld [vmem:[%s515 + $0x14] sm:$0x1]
      %v538 = vsel %vm524, %v458, %v537
      %539 = vst [vmem:[%s515 + $0x14] sm:$0x1] %v538
      %v540 = vld [vmem:[%s515 + $0x18] sm:$0xf]
      %v541 = vsel %vm518, %v465, %v540
      %542 = vst [vmem:[%s515 + $0x18] sm:$0xf] %v541
      %v543 = vld [vmem:[%s515 + $0x1c] sm:$0x1]
      %v544 = vsel %vm524, %v466, %v543
      %545 = vst [vmem:[%s515 + $0x1c] sm:$0x1] %v544
      %v546 = vld [vmem:[%s515 + $0x20] sm:$0xf]
      %v547 = vsel %vm518, %v473, %v546
      %548 = vst [vmem:[%s515 + $0x20] sm:$0xf] %v547
      %v549 = vld [vmem:[%s515 + $0x24] sm:$0x1]
      %v550 = vsel %vm524, %v474, %v549
      %551 = vst [vmem:[%s515 + $0x24] sm:$0x1] %v550
      %v552 = vld [vmem:[%s515 + $0x28] sm:$0xf]
      %v553 = vsel %vm518, %v481, %v552
      %554 = vst [vmem:[%s515 + $0x28] sm:$0xf] %v553
      %v555 = vld [vmem:[%s515 + $0x2c] sm:$0x1]
      %v556 = vsel %vm524, %v482, %v555
      %557 = vst [vmem:[%s515 + $0x2c] sm:$0x1] %v556
      %v558 = vld [vmem:[%s515 + $0x30] sm:$0xf]
      %v559 = vsel %vm518, %v489, %v558
      %560 = vst [vmem:[%s515 + $0x30] sm:$0xf] %v559
      %v561 = vld [vmem:[%s515 + $0x34] sm:$0x1]
      %v562 = vsel %vm524, %v490, %v561
      %563 = vst [vmem:[%s515 + $0x34] sm:$0x1] %v562
      %v564 = vld [vmem:[%s515 + $0x38] sm:$0xf]
      %v565 = vsel %vm518, %v497, %v564
      %566 = vst [vmem:[%s515 + $0x38] sm:$0xf] %v565
      %v567 = vld [vmem:[%s515 + $0x3c] sm:$0x1]
      %v568 = vsel %vm524, %v498, %v567
      %569 = vst [vmem:[%s515 + $0x3c] sm:$0x1] %v568
      %v570 = vld [vmem:[#allocation2] sm:$0xf]
      %v571 = vld [vmem:[#allocation2 + $0x8] sm:$0xf]
      %v572 = vld [vmem:[#allocation2 + $0x10] sm:$0xf]
      %v573 = vld [vmem:[#allocation2 + $0x18] sm:$0xf]
      %v574 = vld [vmem:[#allocation2 + $0x20] sm:$0xf]
      %v575 = vld [vmem:[#allocation2 + $0x28] sm:$0xf]
      %v576 = vld [vmem:[#allocation2 + $0x30] sm:$0xf]
      %v577 = vld [vmem:[#allocation2 + $0x38] sm:$0xf]
      %578 = vst.msk [vmem:[#allocation3] sm:$0xf] %vm389, %v570
      %579 = vst.msk [vmem:[#allocation3 + $0x4] sm:$0xf] %vm389, %v571
      %580 = vst.msk [vmem:[#allocation3 + $0x8] sm:$0xf] %vm389, %v572
      %581 = vst.msk [vmem:[#allocation3 + $0xc] sm:$0xf] %vm389, %v573
      %582 = vst.msk [vmem:[#allocation3 + $0x10] sm:$0xf] %vm389, %v574
      %583 = vst.msk [vmem:[#allocation3 + $0x14] sm:$0xf] %vm389, %v575
      %584 = vst.msk [vmem:[#allocation3 + $0x18] sm:$0xf] %vm389, %v576
      %585 = vst.msk [vmem:[#allocation3 + $0x1c] sm:$0xf] %vm389, %v577
      %v586 = vld [vmem:[#allocation2] sm:$0xf]
      %v587 = vld [vmem:[#allocation2 + $0x4] sm:$0x1]
      %v588 = vld [vmem:[#allocation2 + $0x8] sm:$0xf]
      %v589 = vld [vmem:[#allocation2 + $0xc] sm:$0x1]
      %v590 = vld [vmem:[#allocation2 + $0x10] sm:$0xf]
      %v591 = vld [vmem:[#allocation2 + $0x14] sm:$0x1]
      %v592 = vld [vmem:[#allocation2 + $0x18] sm:$0xf]
      %v593 = vld [vmem:[#allocation2 + $0x1c] sm:$0x1]
      %v594 = vld [vmem:[#allocation2 + $0x20] sm:$0xf]
      %v595 = vld [vmem:[#allocation2 + $0x24] sm:$0x1]
      %v596 = vld [vmem:[#allocation2 + $0x28] sm:$0xf]
      %v597 = vld [vmem:[#allocation2 + $0x2c] sm:$0x1]
      %v598 = vld [vmem:[#allocation2 + $0x30] sm:$0xf]
      %v599 = vld [vmem:[#allocation2 + $0x34] sm:$0x1]
      %v600 = vld [vmem:[#allocation2 + $0x38] sm:$0xf]
      %v601 = vld [vmem:[#allocation2 + $0x3c] sm:$0x1]
      %vm602 = vsmask.f32 3328
      %vm603 = vsmask.f32 7440
      %vm604 = vmor %vm602, %vm603
      %v606 = vshrl.u32 %v586, 16
      %v608 = vrot.slane %v606, 4
      %v609 = vshll.u32 %v586, 16
      %v611 = vrot.slane %v609, 5
      %v612 = vor.u32 %v608, %v611
      %v613 = vrot.slane %v612, 4
      %v615 = vshll.u32 %v587, 16
      %v617 = vrot.slane %v615, 5
      %v618 = vsel %vm604, %v613, %v617
      %v620 = vshrl.u32 %v588, 16
      %v622 = vrot.slane %v620, 4
      %v623 = vshll.u32 %v588, 16
      %v625 = vrot.slane %v623, 5
      %v626 = vor.u32 %v622, %v625
      %v627 = vrot.slane %v626, 4
      %v629 = vshll.u32 %v589, 16
      %v631 = vrot.slane %v629, 5
      %v632 = vsel %vm604, %v627, %v631
      %v634 = vshrl.u32 %v590, 16
      %v636 = vrot.slane %v634, 4
      %v637 = vshll.u32 %v590, 16
      %v639 = vrot.slane %v637, 5
      %v640 = vor.u32 %v636, %v639
      %v641 = vrot.slane %v640, 4
      %v643 = vshll.u32 %v591, 16
      %v645 = vrot.slane %v643, 5
      %v646 = vsel %vm604, %v641, %v645
      %v648 = vshrl.u32 %v592, 16
      %v650 = vrot.slane %v648, 4
      %v651 = vshll.u32 %v592, 16
      %v653 = vrot.slane %v651, 5
      %v654 = vor.u32 %v650, %v653
      %v655 = vrot.slane %v654, 4
      %v657 = vshll.u32 %v593, 16
      %v659 = vrot.slane %v657, 5
      %v660 = vsel %vm604, %v655, %v659
      %v662 = vshrl.u32 %v594, 16
      %v664 = vrot.slane %v662, 4
      %v665 = vshll.u32 %v594, 16
      %v667 = vrot.slane %v665, 5
      %v668 = vor.u32 %v664, %v667
      %v669 = vrot.slane %v668, 4
      %v671 = vshll.u32 %v595, 16
      %v673 = vrot.slane %v671, 5
      %v674 = vsel %vm604, %v669, %v673
      %v676 = vshrl.u32 %v596, 16
      %v678 = vrot.slane %v676, 4
      %v679 = vshll.u32 %v596, 16
      %v681 = vrot.slane %v679, 5
      %v682 = vor.u32 %v678, %v681
      %v683 = vrot.slane %v682, 4
      %v685 = vshll.u32 %v597, 16
      %v687 = vrot.slane %v685, 5
      %v688 = vsel %vm604, %v683, %v687
      %v690 = vshrl.u32 %v598, 16
      %v692 = vrot.slane %v690, 4
      %v693 = vshll.u32 %v598, 16
      %v695 = vrot.slane %v693, 5
      %v696 = vor.u32 %v692, %v695
      %v697 = vrot.slane %v696, 4
      %v699 = vshll.u32 %v599, 16
      %v701 = vrot.slane %v699, 5
      %v702 = vsel %vm604, %v697, %v701
      %v704 = vshrl.u32 %v600, 16
      %v706 = vrot.slane %v704, 4
      %v707 = vshll.u32 %v600, 16
      %v709 = vrot.slane %v707, 5
      %v710 = vor.u32 %v706, %v709
      %v711 = vrot.slane %v710, 4
      %v713 = vshll.u32 %v601, 16
      %v715 = vrot.slane %v713, 5
      %v716 = vsel %vm604, %v711, %v715
      %717 = vrot.lane.b32.xlu0 %v618, 8
      %v718 = vpop.permute.xlu0 %717
      %719 = vrot.lane.b32.xlu0 %v632, 8
      %v720 = vpop.permute.xlu0 %719
      %721 = vrot.lane.b32.xlu0 %v646, 8
      %v722 = vpop.permute.xlu0 %721
      %723 = vrot.lane.b32.xlu0 %v660, 8
      %v724 = vpop.permute.xlu0 %723
      %725 = vrot.lane.b32.xlu0 %v674, 8
      %v726 = vpop.permute.xlu0 %725
      %727 = vrot.lane.b32.xlu0 %v688, 8
      %v728 = vpop.permute.xlu0 %727
      %729 = vrot.lane.b32.xlu0 %v702, 8
      %v730 = vpop.permute.xlu0 %729
      %731 = vrot.lane.b32.xlu0 %v716, 8
      %v732 = vpop.permute.xlu0 %731
      %vm741 = vcmask 126016
      %742 = vst.msk [vmem:[#allocation3] sm:$0xf] %vm741, %v718
      %743 = vst.msk [vmem:[#allocation3 + $0x4] sm:$0xf] %vm741, %v720
      %744 = vst.msk [vmem:[#allocation3 + $0x8] sm:$0xf] %vm741, %v722
      %745 = vst.msk [vmem:[#allocation3 + $0xc] sm:$0xf] %vm741, %v724
      %746 = vst.msk [vmem:[#allocation3 + $0x10] sm:$0xf] %vm741, %v726
      %747 = vst.msk [vmem:[#allocation3 + $0x14] sm:$0xf] %vm741, %v728
      %748 = vst.msk [vmem:[#allocation3 + $0x18] sm:$0xf] %vm741, %v730
      %749 = vst.msk [vmem:[#allocation3 + $0x1c] sm:$0xf] %vm741, %v732
      %v750 = vld [vmem:[#allocation2] sm:$0xe]
      %v751 = vld [vmem:[#allocation2 + $0x4] sm:$0x1]
      %v752 = vld [vmem:[#allocation2 + $0x8] sm:$0xe]
      %v753 = vld [vmem:[#allocation2 + $0xc] sm:$0x1]
      %v754 = vld [vmem:[#allocation2 + $0x10] sm:$0xe]
      %v755 = vld [vmem:[#allocation2 + $0x14] sm:$0x1]
      %v756 = vld [vmem:[#allocation2 + $0x18] sm:$0xe]
      %v757 = vld [vmem:[#allocation2 + $0x1c] sm:$0x1]
      %v758 = vld [vmem:[#allocation2 + $0x20] sm:$0xe]
      %v759 = vld [vmem:[#allocation2 + $0x24] sm:$0x1]
      %v760 = vld [vmem:[#allocation2 + $0x28] sm:$0xe]
      %v761 = vld [vmem:[#allocation2 + $0x2c] sm:$0x1]
      %v762 = vld [vmem:[#allocation2 + $0x30] sm:$0xe]
      %v763 = vld [vmem:[#allocation2 + $0x34] sm:$0x1]
      %v764 = vld [vmem:[#allocation2 + $0x38] sm:$0xe]
      %v765 = vld [vmem:[#allocation2 + $0x3c] sm:$0x1]
      %vm782 = vcmask 1042432
      %vm783 = vcmask 1046532
      %vm784 = vmor %vm782, %vm783
      %v785 = vrot.slane %v750, 5
      %v786 = vrot.slane %v785, 4
      %v787 = vrot.slane %v751, 5
      %v788 = vsel %vm784, %v786, %v787
      %v789 = vrot.slane %v752, 5
      %v790 = vrot.slane %v789, 4
      %v791 = vrot.slane %v753, 5
      %v792 = vsel %vm784, %v790, %v791
      %v793 = vrot.slane %v754, 5
      %v794 = vrot.slane %v793, 4
      %v795 = vrot.slane %v755, 5
      %v796 = vsel %vm784, %v794, %v795
      %v797 = vrot.slane %v756, 5
      %v798 = vrot.slane %v797, 4
      %v799 = vrot.slane %v757, 5
      %v800 = vsel %vm784, %v798, %v799
      %v801 = vrot.slane %v758, 5
      %v802 = vrot.slane %v801, 4
      %v803 = vrot.slane %v759, 5
      %v804 = vsel %vm784, %v802, %v803
      %v805 = vrot.slane %v760, 5
      %v806 = vrot.slane %v805, 4
      %v807 = vrot.slane %v761, 5
      %v808 = vsel %vm784, %v806, %v807
      %v809 = vrot.slane %v762, 5
      %v810 = vrot.slane %v809, 4
      %v811 = vrot.slane %v763, 5
      %v812 = vsel %vm784, %v810, %v811
      %v813 = vrot.slane %v764, 5
      %v814 = vrot.slane %v813, 4
      %v815 = vrot.slane %v765, 5
      %v816 = vsel %vm784, %v814, %v815
      %817 = vrot.lane.b32.xlu0 %v788, 16
      %v818 = vpop.permute.xlu0 %817
      %819 = vrot.lane.b32.xlu0 %v792, 16
      %v820 = vpop.permute.xlu0 %819
      %821 = vrot.lane.b32.xlu0 %v796, 16
      %v822 = vpop.permute.xlu0 %821
      %823 = vrot.lane.b32.xlu0 %v800, 16
      %v824 = vpop.permute.xlu0 %823
      %825 = vrot.lane.b32.xlu0 %v804, 16
      %v826 = vpop.permute.xlu0 %825
      %827 = vrot.lane.b32.xlu0 %v808, 16
      %v828 = vpop.permute.xlu0 %827
      %829 = vrot.lane.b32.xlu0 %v812, 16
      %v830 = vpop.permute.xlu0 %829
      %831 = vrot.lane.b32.xlu0 %v816, 16
      %v832 = vpop.permute.xlu0 %831
      %vm841 = vcmask 191616
      %842 = vst.msk [vmem:[#allocation3] sm:$0xf] %vm841, %v818
      %843 = vst.msk [vmem:[#allocation3 + $0x4] sm:$0xf] %vm841, %v820
      %844 = vst.msk [vmem:[#allocation3 + $0x8] sm:$0xf] %vm841, %v822
      %845 = vst.msk [vmem:[#allocation3 + $0xc] sm:$0xf] %vm841, %v824
      %846 = vst.msk [vmem:[#allocation3 + $0x10] sm:$0xf] %vm841, %v826
      %847 = vst.msk [vmem:[#allocation3 + $0x14] sm:$0xf] %vm841, %v828
      %848 = vst.msk [vmem:[#allocation3 + $0x18] sm:$0xf] %vm841, %v830
      %849 = vst.msk [vmem:[#allocation3 + $0x1c] sm:$0xf] %vm841, %v832
      %v850 = vld [vmem:[%s515] sm:$0xf]
      %v851 = vld [vmem:[%s515 + $0x8] sm:$0xf]
      %v852 = vld [vmem:[%s515 + $0x10] sm:$0xf]
      %v853 = vld [vmem:[%s515 + $0x18] sm:$0xf]
      %v854 = vld [vmem:[%s515 + $0x20] sm:$0xf]
      %v855 = vld [vmem:[%s515 + $0x28] sm:$0xf]
      %v856 = vld [vmem:[%s515 + $0x30] sm:$0xf]
      %v857 = vld [vmem:[%s515 + $0x38] sm:$0xf]
      %866 = vrot.lane.b32.xlu0 %v850, 24
      %v867 = vpop.permute.xlu0 %866
      %868 = vrot.lane.b32.xlu0 %v851, 24
      %v869 = vpop.permute.xlu0 %868
      %870 = vrot.lane.b32.xlu0 %v852, 24
      %v871 = vpop.permute.xlu0 %870
      %872 = vrot.lane.b32.xlu0 %v853, 24
      %v873 = vpop.permute.xlu0 %872
      %874 = vrot.lane.b32.xlu0 %v854, 24
      %v875 = vpop.permute.xlu0 %874
      %876 = vrot.lane.b32.xlu0 %v855, 24
      %v877 = vpop.permute.xlu0 %876
      %878 = vrot.lane.b32.xlu0 %v856, 24
      %v879 = vpop.permute.xlu0 %878
      %880 = vrot.lane.b32.xlu0 %v857, 24
      %v881 = vpop.permute.xlu0 %880
      %vm890 = vcmask 257216
      %891 = vst.msk [vmem:[#allocation3] sm:$0xf] %vm890, %v867
      %892 = vst.msk [vmem:[#allocation3 + $0x4] sm:$0xf] %vm890, %v869
      %893 = vst.msk [vmem:[#allocation3 + $0x8] sm:$0xf] %vm890, %v871
      %894 = vst.msk [vmem:[#allocation3 + $0xc] sm:$0xf] %vm890, %v873
      %895 = vst.msk [vmem:[#allocation3 + $0x10] sm:$0xf] %vm890, %v875
      %896 = vst.msk [vmem:[#allocation3 + $0x14] sm:$0xf] %vm890, %v877
      %897 = vst.msk [vmem:[#allocation3 + $0x18] sm:$0xf] %vm890, %v879
      %898 = vst.msk [vmem:[#allocation3 + $0x1c] sm:$0xf] %vm890, %v881
      %v899 = vld [vmem:[%s515] sm:$0xf]
      %v900 = vld [vmem:[%s515 + $0x4] sm:$0x1]
      %v901 = vld [vmem:[%s515 + $0x8] sm:$0xf]
      %v902 = vld [vmem:[%s515 + $0xc] sm:$0x1]
      %v903 = vld [vmem:[%s515 + $0x10] sm:$0xf]
      %v904 = vld [vmem:[%s515 + $0x14] sm:$0x1]
      %v905 = vld [vmem:[%s515 + $0x18] sm:$0xf]
      %v906 = vld [vmem:[%s515 + $0x1c] sm:$0x1]
      %v907 = vld [vmem:[%s515 + $0x20] sm:$0xf]
      %v908 = vld [vmem:[%s515 + $0x24] sm:$0x1]
      %v909 = vld [vmem:[%s515 + $0x28] sm:$0xf]
      %v910 = vld [vmem:[%s515 + $0x2c] sm:$0x1]
      %v911 = vld [vmem:[%s515 + $0x30] sm:$0xf]
      %v912 = vld [vmem:[%s515 + $0x34] sm:$0x1]
      %v913 = vld [vmem:[%s515 + $0x38] sm:$0xf]
      %v914 = vld [vmem:[%s515 + $0x3c] sm:$0x1]
      %v916 = vshrl.u32 %v899, 16
      %v918 = vrot.slane %v916, 4
      %v919 = vshll.u32 %v899, 16
      %v921 = vrot.slane %v919, 5
      %v922 = vor.u32 %v918, %v921
      %v923 = vrot.slane %v922, 4
      %v925 = vshll.u32 %v900, 16
      %v927 = vrot.slane %v925, 5
      %v928 = vsel %vm604, %v923, %v927
      %v930 = vshrl.u32 %v901, 16
      %v932 = vrot.slane %v930, 4
      %v933 = vshll.u32 %v901, 16
      %v935 = vrot.slane %v933, 5
      %v936 = vor.u32 %v932, %v935
      %v937 = vrot.slane %v936, 4
      %v939 = vshll.u32 %v902, 16
      %v941 = vrot.slane %v939, 5
      %v942 = vsel %vm604, %v937, %v941
      %v944 = vshrl.u32 %v903, 16
      %v946 = vrot.slane %v944, 4
      %v947 = vshll.u32 %v903, 16
      %v949 = vrot.slane %v947, 5
      %v950 = vor.u32 %v946, %v949
      %v951 = vrot.slane %v950, 4
      %v953 = vshll.u32 %v904, 16
      %v955 = vrot.slane %v953, 5
      %v956 = vsel %vm604, %v951, %v955
      %v958 = vshrl.u32 %v905, 16
      %v960 = vrot.slane %v958, 4
      %v961 = vshll.u32 %v905, 16
      %v963 = vrot.slane %v961, 5
      %v964 = vor.u32 %v960, %v963
      %v965 = vrot.slane %v964, 4
      %v967 = vshll.u32 %v906, 16
      %v969 = vrot.slane %v967, 5
      %v970 = vsel %vm604, %v965, %v969
      %v972 = vshrl.u32 %v907, 16
      %v974 = vrot.slane %v972, 4
      %v975 = vshll.u32 %v907, 16
      %v977 = vrot.slane %v975, 5
      %v978 = vor.u32 %v974, %v977
      %v979 = vrot.slane %v978, 4
      %v981 = vshll.u32 %v908, 16
      %v983 = vrot.slane %v981, 5
      %v984 = vsel %vm604, %v979, %v983
      %v986 = vshrl.u32 %v909, 16
      %v988 = vrot.slane %v986, 4
      %v989 = vshll.u32 %v909, 16
      %v991 = vrot.slane %v989, 5
      %v992 = vor.u32 %v988, %v991
      %v993 = vrot.slane %v992, 4
      %v995 = vshll.u32 %v910, 16
      %v997 = vrot.slane %v995, 5
      %v998 = vsel %vm604, %v993, %v997
      %v1000 = vshrl.u32 %v911, 16
      %v1002 = vrot.slane %v1000, 4
      %v1003 = vshll.u32 %v911, 16
      %v1005 = vrot.slane %v1003, 5
      %v1006 = vor.u32 %v1002, %v1005
      %v1007 = vrot.slane %v1006, 4
      %v1009 = vshll.u32 %v912, 16
      %v1011 = vrot.slane %v1009, 5
      %v1012 = vsel %vm604, %v1007, %v1011
      %v1014 = vshrl.u32 %v913, 16
      %v1016 = vrot.slane %v1014, 4
      %v1017 = vshll.u32 %v913, 16
      %v1019 = vrot.slane %v1017, 5
      %v1020 = vor.u32 %v1016, %v1019
      %v1021 = vrot.slane %v1020, 4
      %v1023 = vshll.u32 %v914, 16
      %v1025 = vrot.slane %v1023, 5
      %v1026 = vsel %vm604, %v1021, %v1025
      %1027 = vrot.lane.b32.xlu0 %v928, 32
      %v1028 = vpop.permute.xlu0 %1027
      %1029 = vrot.lane.b32.xlu0 %v942, 32
      %v1030 = vpop.permute.xlu0 %1029
      %1031 = vrot.lane.b32.xlu0 %v956, 32
      %v1032 = vpop.permute.xlu0 %1031
      %1033 = vrot.lane.b32.xlu0 %v970, 32
      %v1034 = vpop.permute.xlu0 %1033
      %1035 = vrot.lane.b32.xlu0 %v984, 32
      %v1036 = vpop.permute.xlu0 %1035
      %1037 = vrot.lane.b32.xlu0 %v998, 32
      %v1038 = vpop.permute.xlu0 %1037
      %1039 = vrot.lane.b32.xlu0 %v1012, 32
      %v1040 = vpop.permute.xlu0 %1039
      %1041 = vrot.lane.b32.xlu0 %v1026, 32
      %v1042 = vpop.permute.xlu0 %1041
      %vm1051 = vcmask 322816
      %1052 = vst.msk [vmem:[#allocation3] sm:$0xf] %vm1051, %v1028
      %1053 = vst.msk [vmem:[#allocation3 + $0x4] sm:$0xf] %vm1051, %v1030
      %1054 = vst.msk [vmem:[#allocation3 + $0x8] sm:$0xf] %vm1051, %v1032
      %1055 = vst.msk [vmem:[#allocation3 + $0xc] sm:$0xf] %vm1051, %v1034
      %1056 = vst.msk [vmem:[#allocation3 + $0x10] sm:$0xf] %vm1051, %v1036
      %1057 = vst.msk [vmem:[#allocation3 + $0x14] sm:$0xf] %vm1051, %v1038
      %1058 = vst.msk [vmem:[#allocation3 + $0x18] sm:$0xf] %vm1051, %v1040
      %1059 = vst.msk [vmem:[#allocation3 + $0x1c] sm:$0xf] %vm1051, %v1042
      %v1060 = vld [vmem:[%s515] sm:$0xe]
      %v1061 = vld [vmem:[%s515 + $0x4] sm:$0x1]
      %v1062 = vld [vmem:[%s515 + $0x8] sm:$0xe]
      %v1063 = vld [vmem:[%s515 + $0xc] sm:$0x1]
      %v1064 = vld [vmem:[%s515 + $0x10] sm:$0xe]
      %v1065 = vld [vmem:[%s515 + $0x14] sm:$0x1]
      %v1066 = vld [vmem:[%s515 + $0x18] sm:$0xe]
      %v1067 = vld [vmem:[%s515 + $0x1c] sm:$0x1]
      %v1068 = vld [vmem:[%s515 + $0x20] sm:$0xe]
      %v1069 = vld [vmem:[%s515 + $0x24] sm:$0x1]
      %v1070 = vld [vmem:[%s515 + $0x28] sm:$0xe]
      %v1071 = vld [vmem:[%s515 + $0x2c] sm:$0x1]
      %v1072 = vld [vmem:[%s515 + $0x30] sm:$0xe]
      %v1073 = vld [vmem:[%s515 + $0x34] sm:$0x1]
      %v1074 = vld [vmem:[%s515 + $0x38] sm:$0xe]
      %v1075 = vld [vmem:[%s515 + $0x3c] sm:$0x1]
      %v1092 = vrot.slane %v1060, 5
      %v1093 = vrot.slane %v1092, 4
      %v1094 = vrot.slane %v1061, 5
      %v1095 = vsel %vm784, %v1093, %v1094
      %v1096 = vrot.slane %v1062, 5
      %v1097 = vrot.slane %v1096, 4
      %v1098 = vrot.slane %v1063, 5
      %v1099 = vsel %vm784, %v1097, %v1098
      %v1100 = vrot.slane %v1064, 5
      %v1101 = vrot.slane %v1100, 4
      %v1102 = vrot.slane %v1065, 5
      %v1103 = vsel %vm784, %v1101, %v1102
      %v1104 = vrot.slane %v1066, 5
      %v1105 = vrot.slane %v1104, 4
      %v1106 = vrot.slane %v1067, 5
      %v1107 = vsel %vm784, %v1105, %v1106
      %v1108 = vrot.slane %v1068, 5
      %v1109 = vrot.slane %v1108, 4
      %v1110 = vrot.slane %v1069, 5
      %v1111 = vsel %vm784, %v1109, %v1110
      %v1112 = vrot.slane %v1070, 5
      %v1113 = vrot.slane %v1112, 4
      %v1114 = vrot.slane %v1071, 5
      %v1115 = vsel %vm784, %v1113, %v1114
      %v1116 = vrot.slane %v1072, 5
      %v1117 = vrot.slane %v1116, 4
      %v1118 = vrot.slane %v1073, 5
      %v1119 = vsel %vm784, %v1117, %v1118
      %v1120 = vrot.slane %v1074, 5
      %v1121 = vrot.slane %v1120, 4
      %v1122 = vrot.slane %v1075, 5
      %v1123 = vsel %vm784, %v1121, %v1122
      %1124 = vrot.lane.b32.xlu0 %v1095, 40
      %v1125 = vpop.permute.xlu0 %1124
      %1126 = vrot.lane.b32.xlu0 %v1099, 40
      %v1127 = vpop.permute.xlu0 %1126
      %1128 = vrot.lane.b32.xlu0 %v1103, 40
      %v1129 = vpop.permute.xlu0 %1128
      %1130 = vrot.lane.b32.xlu0 %v1107, 40
      %v1131 = vpop.permute.xlu0 %1130
      %1132 = vrot.lane.b32.xlu0 %v1111, 40
      %v1133 = vpop.permute.xlu0 %1132
      %1134 = vrot.lane.b32.xlu0 %v1115, 40
      %v1135 = vpop.permute.xlu0 %1134
      %1136 = vrot.lane.b32.xlu0 %v1119, 40
      %v1137 = vpop.permute.xlu0 %1136
      %1138 = vrot.lane.b32.xlu0 %v1123, 40
      %v1139 = vpop.permute.xlu0 %1138
      %vm1148 = vcmask 388416
      %1149 = vst.msk [vmem:[#allocation3] sm:$0xf] %vm1148, %v1125
      %1150 = vst.msk [vmem:[#allocation3 + $0x4] sm:$0xf] %vm1148, %v1127
      %1151 = vst.msk [vmem:[#allocation3 + $0x8] sm:$0xf] %vm1148, %v1129
      %1152 = vst.msk [vmem:[#allocation3 + $0xc] sm:$0xf] %vm1148, %v1131
      %1153 = vst.msk [vmem:[#allocation3 + $0x10] sm:$0xf] %vm1148, %v1133
      %1154 = vst.msk [vmem:[#allocation3 + $0x14] sm:$0xf] %vm1148, %v1135
      %1155 = vst.msk [vmem:[#allocation3 + $0x18] sm:$0xf] %vm1148, %v1137
      %1156 = vst.msk [vmem:[#allocation3 + $0x1c] sm:$0xf] %vm1148, %v1139
      %s1157 = scalar_lea.vmem [#allocation2], 16
      %v1158 = vld [vmem:[%s1157] sm:$0xf]
      %v1159 = vld [vmem:[%s1157 + $0x8] sm:$0xf]
      %v1160 = vld [vmem:[%s1157 + $0x10] sm:$0xf]
      %v1161 = vld [vmem:[%s1157 + $0x18] sm:$0xf]
      %v1162 = vld [vmem:[%s1157 + $0x20] sm:$0xf]
      %v1163 = vld [vmem:[%s1157 + $0x28] sm:$0xf]
      %v1164 = vld [vmem:[%s1157 + $0x30] sm:$0xf]
      %v1165 = vld [vmem:[%s1157 + $0x38] sm:$0xf]
      %1174 = vrot.lane.b32.xlu0 %v1158, 48
      %v1175 = vpop.permute.xlu0 %1174
      %1176 = vrot.lane.b32.xlu0 %v1159, 48
      %v1177 = vpop.permute.xlu0 %1176
      %1178 = vrot.lane.b32.xlu0 %v1160, 48
      %v1179 = vpop.permute.xlu0 %1178
      %1180 = vrot.lane.b32.xlu0 %v1161, 48
      %v1181 = vpop.permute.xlu0 %1180
      %1182 = vrot.lane.b32.xlu0 %v1162, 48
      %v1183 = vpop.permute.xlu0 %1182
      %1184 = vrot.lane.b32.xlu0 %v1163, 48
      %v1185 = vpop.permute.xlu0 %1184
      %1186 = vrot.lane.b32.xlu0 %v1164, 48
      %v1187 = vpop.permute.xlu0 %1186
      %1188 = vrot.lane.b32.xlu0 %v1165, 48
      %v1189 = vpop.permute.xlu0 %1188
      %vm1198 = vcmask 454016
      %1199 = vst.msk [vmem:[#allocation3] sm:$0xf] %vm1198, %v1175
      %1200 = vst.msk [vmem:[#allocation3 + $0x4] sm:$0xf] %vm1198, %v1177
      %1201 = vst.msk [vmem:[#allocation3 + $0x8] sm:$0xf] %vm1198, %v1179
      %1202 = vst.msk [vmem:[#allocation3 + $0xc] sm:$0xf] %vm1198, %v1181
      %1203 = vst.msk [vmem:[#allocation3 + $0x10] sm:$0xf] %vm1198, %v1183
      %1204 = vst.msk [vmem:[#allocation3 + $0x14] sm:$0xf] %vm1198, %v1185
      %1205 = vst.msk [vmem:[#allocation3 + $0x18] sm:$0xf] %vm1198, %v1187
      %1206 = vst.msk [vmem:[#allocation3 + $0x1c] sm:$0xf] %vm1198, %v1189
      %v1207 = vld [vmem:[%s1157] sm:$0xf]
      %v1208 = vld [vmem:[%s1157 + $0x4] sm:$0x1]
      %v1209 = vld [vmem:[%s1157 + $0x8] sm:$0xf]
      %v1210 = vld [vmem:[%s1157 + $0xc] sm:$0x1]
      %v1211 = vld [vmem:[%s1157 + $0x10] sm:$0xf]
      %v1212 = vld [vmem:[%s1157 + $0x14] sm:$0x1]
      %v1213 = vld [vmem:[%s1157 + $0x18] sm:$0xf]
      %v1214 = vld [vmem:[%s1157 + $0x1c] sm:$0x1]
      %v1215 = vld [vmem:[%s1157 + $0x20] sm:$0xf]
      %v1216 = vld [vmem:[%s1157 + $0x24] sm:$0x1]
      %v1217 = vld [vmem:[%s1157 + $0x28] sm:$0xf]
      %v1218 = vld [vmem:[%s1157 + $0x2c] sm:$0x1]
      %v1219 = vld [vmem:[%s1157 + $0x30] sm:$0xf]
      %v1220 = vld [vmem:[%s1157 + $0x34] sm:$0x1]
      %v1221 = vld [vmem:[%s1157 + $0x38] sm:$0xf]
      %v1222 = vld [vmem:[%s1157 + $0x3c] sm:$0x1]
      %v1224 = vshrl.u32 %v1207, 16
      %v1226 = vrot.slane %v1224, 4
      %v1227 = vshll.u32 %v1207, 16
      %v1229 = vrot.slane %v1227, 5
      %v1230 = vor.u32 %v1226, %v1229
      %v1231 = vrot.slane %v1230, 4
      %v1233 = vshll.u32 %v1208, 16
      %v1235 = vrot.slane %v1233, 5
      %v1236 = vsel %vm604, %v1231, %v1235
      %v1238 = vshrl.u32 %v1209, 16
      %v1240 = vrot.slane %v1238, 4
      %v1241 = vshll.u32 %v1209, 16
      %v1243 = vrot.slane %v1241, 5
      %v1244 = vor.u32 %v1240, %v1243
      %v1245 = vrot.slane %v1244, 4
      %v1247 = vshll.u32 %v1210, 16
      %v1249 = vrot.slane %v1247, 5
      %v1250 = vsel %vm604, %v1245, %v1249
      %v1252 = vshrl.u32 %v1211, 16
      %v1254 = vrot.slane %v1252, 4
      %v1255 = vshll.u32 %v1211, 16
      %v1257 = vrot.slane %v1255, 5
      %v1258 = vor.u32 %v1254, %v1257
      %v1259 = vrot.slane %v1258, 4
      %v1261 = vshll.u32 %v1212, 16
      %v1263 = vrot.slane %v1261, 5
      %v1264 = vsel %vm604, %v1259, %v1263
      %v1266 = vshrl.u32 %v1213, 16
      %v1268 = vrot.slane %v1266, 4
      %v1269 = vshll.u32 %v1213, 16
      %v1271 = vrot.slane %v1269, 5
      %v1272 = vor.u32 %v1268, %v1271
      %v1273 = vrot.slane %v1272, 4
      %v1275 = vshll.u32 %v1214, 16
      %v1277 = vrot.slane %v1275, 5
      %v1278 = vsel %vm604, %v1273, %v1277
      %v1280 = vshrl.u32 %v1215, 16
      %v1282 = vrot.slane %v1280, 4
      %v1283 = vshll.u32 %v1215, 16
      %v1285 = vrot.slane %v1283, 5
      %v1286 = vor.u32 %v1282, %v1285
      %v1287 = vrot.slane %v1286, 4
      %v1289 = vshll.u32 %v1216, 16
      %v1291 = vrot.slane %v1289, 5
      %v1292 = vsel %vm604, %v1287, %v1291
      %v1294 = vshrl.u32 %v1217, 16
      %v1296 = vrot.slane %v1294, 4
      %v1297 = vshll.u32 %v1217, 16
      %v1299 = vrot.slane %v1297, 5
      %v1300 = vor.u32 %v1296, %v1299
      %v1301 = vrot.slane %v1300, 4
      %v1303 = vshll.u32 %v1218, 16
      %v1305 = vrot.slane %v1303, 5
      %v1306 = vsel %vm604, %v1301, %v1305
      %v1308 = vshrl.u32 %v1219, 16
      %v1310 = vrot.slane %v1308, 4
      %v1311 = vshll.u32 %v1219, 16
      %v1313 = vrot.slane %v1311, 5
      %v1314 = vor.u32 %v1310, %v1313
      %v1315 = vrot.slane %v1314, 4
      %v1317 = vshll.u32 %v1220, 16
      %v1319 = vrot.slane %v1317, 5
      %v1320 = vsel %vm604, %v1315, %v1319
      %v1322 = vshrl.u32 %v1221, 16
      %v1324 = vrot.slane %v1322, 4
      %v1325 = vshll.u32 %v1221, 16
      %v1327 = vrot.slane %v1325, 5
      %v1328 = vor.u32 %v1324, %v1327
      %v1329 = vrot.slane %v1328, 4
      %v1331 = vshll.u32 %v1222, 16
      %v1333 = vrot.slane %v1331, 5
      %v1334 = vsel %vm604, %v1329, %v1333
      %1335 = vrot.lane.b32.xlu0 %v1236, 56
      %v1336 = vpop.permute.xlu0 %1335
      %1337 = vrot.lane.b32.xlu0 %v1250, 56
      %v1338 = vpop.permute.xlu0 %1337
      %1339 = vrot.lane.b32.xlu0 %v1264, 56
      %v1340 = vpop.permute.xlu0 %1339
      %1341 = vrot.lane.b32.xlu0 %v1278, 56
      %v1342 = vpop.permute.xlu0 %1341
      %1343 = vrot.lane.b32.xlu0 %v1292, 56
      %v1344 = vpop.permute.xlu0 %1343
      %1345 = vrot.lane.b32.xlu0 %v1306, 56
      %v1346 = vpop.permute.xlu0 %1345
      %1347 = vrot.lane.b32.xlu0 %v1320, 56
      %v1348 = vpop.permute.xlu0 %1347
      %1349 = vrot.lane.b32.xlu0 %v1334, 56
      %v1350 = vpop.permute.xlu0 %1349
      %vm1359 = vcmask 519616
      %1360 = vst.msk [vmem:[#allocation3] sm:$0xf] %vm1359, %v1336
      %1361 = vst.msk [vmem:[#allocation3 + $0x4] sm:$0xf] %vm1359, %v1338
      %1362 = vst.msk [vmem:[#allocation3 + $0x8] sm:$0xf] %vm1359, %v1340
      %1363 = vst.msk [vmem:[#allocation3 + $0xc] sm:$0xf] %vm1359, %v1342
      %1364 = vst.msk [vmem:[#allocation3 + $0x10] sm:$0xf] %vm1359, %v1344
      %1365 = vst.msk [vmem:[#allocation3 + $0x14] sm:$0xf] %vm1359, %v1346
      %1366 = vst.msk [vmem:[#allocation3 + $0x18] sm:$0xf] %vm1359, %v1348
      %1367 = vst.msk [vmem:[#allocation3 + $0x1c] sm:$0xf] %vm1359, %v1350
      %v1368 = vld [vmem:[%s1157] sm:$0xe]
      %v1369 = vld [vmem:[%s1157 + $0x4] sm:$0x1]
      %v1370 = vld [vmem:[%s1157 + $0x8] sm:$0xe]
      %v1371 = vld [vmem:[%s1157 + $0xc] sm:$0x1]
      %v1372 = vld [vmem:[%s1157 + $0x10] sm:$0xe]
      %v1373 = vld [vmem:[%s1157 + $0x14] sm:$0x1]
      %v1374 = vld [vmem:[%s1157 + $0x18] sm:$0xe]
      %v1375 = vld [vmem:[%s1157 + $0x1c] sm:$0x1]
      %v1376 = vld [vmem:[%s1157 + $0x20] sm:$0xe]
      %v1377 = vld [vmem:[%s1157 + $0x24] sm:$0x1]
      %v1378 = vld [vmem:[%s1157 + $0x28] sm:$0xe]
      %v1379 = vld [vmem:[%s1157 + $0x2c] sm:$0x1]
      %v1380 = vld [vmem:[%s1157 + $0x30] sm:$0xe]
      %v1381 = vld [vmem:[%s1157 + $0x34] sm:$0x1]
      %v1382 = vld [vmem:[%s1157 + $0x38] sm:$0xe]
      %v1383 = vld [vmem:[%s1157 + $0x3c] sm:$0x1]
      %v1400 = vrot.slane %v1368, 5
      %v1401 = vrot.slane %v1400, 4
      %v1402 = vrot.slane %v1369, 5
      %v1403 = vsel %vm784, %v1401, %v1402
      %v1404 = vrot.slane %v1370, 5
      %v1405 = vrot.slane %v1404, 4
      %v1406 = vrot.slane %v1371, 5
      %v1407 = vsel %vm784, %v1405, %v1406
      %v1408 = vrot.slane %v1372, 5
      %v1409 = vrot.slane %v1408, 4
      %v1410 = vrot.slane %v1373, 5
      %v1411 = vsel %vm784, %v1409, %v1410
      %v1412 = vrot.slane %v1374, 5
      %v1413 = vrot.slane %v1412, 4
      %v1414 = vrot.slane %v1375, 5
      %v1415 = vsel %vm784, %v1413, %v1414
      %v1416 = vrot.slane %v1376, 5
      %v1417 = vrot.slane %v1416, 4
      %v1418 = vrot.slane %v1377, 5
      %v1419 = vsel %vm784, %v1417, %v1418
      %v1420 = vrot.slane %v1378, 5
      %v1421 = vrot.slane %v1420, 4
      %v1422 = vrot.slane %v1379, 5
      %v1423 = vsel %vm784, %v1421, %v1422
      %v1424 = vrot.slane %v1380, 5
      %v1425 = vrot.slane %v1424, 4
      %v1426 = vrot.slane %v1381, 5
      %v1427 = vsel %vm784, %v1425, %v1426
      %v1428 = vrot.slane %v1382, 5
      %v1429 = vrot.slane %v1428, 4
      %v1430 = vrot.slane %v1383, 5
      %v1431 = vsel %vm784, %v1429, %v1430
      %1432 = vrot.lane.b32.xlu0 %v1403, 64
      %v1433 = vpop.permute.xlu0 %1432
      %1434 = vrot.lane.b32.xlu0 %v1407, 64
      %v1435 = vpop.permute.xlu0 %1434
      %1436 = vrot.lane.b32.xlu0 %v1411, 64
      %v1437 = vpop.permute.xlu0 %1436
      %1438 = vrot.lane.b32.xlu0 %v1415, 64
      %v1439 = vpop.permute.xlu0 %1438
      %1440 = vrot.lane.b32.xlu0 %v1419, 64
      %v1441 = vpop.permute.xlu0 %1440
      %1442 = vrot.lane.b32.xlu0 %v1423, 64
      %v1443 = vpop.permute.xlu0 %1442
      %1444 = vrot.lane.b32.xlu0 %v1427, 64
      %v1445 = vpop.permute.xlu0 %1444
      %1446 = vrot.lane.b32.xlu0 %v1431, 64
      %v1447 = vpop.permute.xlu0 %1446
      %vm1456 = vcmask 585216
      %1457 = vst.msk [vmem:[#allocation3] sm:$0xf] %vm1456, %v1433
      %1458 = vst.msk [vmem:[#allocation3 + $0x4] sm:$0xf] %vm1456, %v1435
      %1459 = vst.msk [vmem:[#allocation3 + $0x8] sm:$0xf] %vm1456, %v1437
      %1460 = vst.msk [vmem:[#allocation3 + $0xc] sm:$0xf] %vm1456, %v1439
      %1461 = vst.msk [vmem:[#allocation3 + $0x10] sm:$0xf] %vm1456, %v1441
      %1462 = vst.msk [vmem:[#allocation3 + $0x14] sm:$0xf] %vm1456, %v1443
      %1463 = vst.msk [vmem:[#allocation3 + $0x18] sm:$0xf] %vm1456, %v1445
      %1464 = vst.msk [vmem:[#allocation3 + $0x1c] sm:$0xf] %vm1456, %v1447
      %v1465 = vld [vmem:[#allocation3] sm:$0xf]
      %v1466 = vld [vmem:[#allocation3 + $0x4] sm:$0xf]
      %v1467 = vld [vmem:[#allocation3 + $0x8] sm:$0xf]
      %v1468 = vld [vmem:[#allocation3 + $0xc] sm:$0xf]
      %v1469 = vld [vmem:[#allocation3 + $0x10] sm:$0xf]
      %v1470 = vld [vmem:[#allocation3 + $0x14] sm:$0xf]
      %v1471 = vld [vmem:[#allocation3 + $0x18] sm:$0xf]
      %v1472 = vld [vmem:[#allocation3 + $0x1c] sm:$0xf]
      %v1473 = vld [vmem:[%s1] sm:$0xf]
      %v1474 = vld [vmem:[%s1 + $0x4] sm:$0xf]
      %v1475 = vld [vmem:[%s1 + $0x8] sm:$0xf]
      %v1476 = vld [vmem:[%s1 + $0xc] sm:$0xf]
      %v1477 = vld [vmem:[%s1 + $0x10] sm:$0xf]
      %v1478 = vld [vmem:[%s1 + $0x14] sm:$0xf]
      %v1479 = vld [vmem:[%s1 + $0x18] sm:$0xf]
      %v1480 = vld [vmem:[%s1 + $0x1c] sm:$0xf]
      %v1481 = vld [vmem:[%s1 + $0x20] sm:$0xf]
      %v1490 = vunpack.c.l.b16 %v1465
      %v1491 = vunpack.c.l.b16 %v1466
      %v1492 = vunpack.c.l.b16 %v1467
      %v1493 = vunpack.c.l.b16 %v1468
      %v1494 = vunpack.c.l.b16 %v1469
      %v1495 = vunpack.c.l.b16 %v1470
      %v1496 = vunpack.c.l.b16 %v1471
      %v1497 = vunpack.c.l.b16 %v1472
      %v1498 = vpack.c.b16 %v1491, %v1490
      %v1499 = vpack.c.b16 %v1493, %v1492
      %v1500 = vpack.c.b16 %v1495, %v1494
      %v1501 = vpack.c.b16 %v1497, %v1496
      %v1511 = vunpack.c.l.b16 %v1473
      %v1512 = vunpack.c.l.b16 %v1474
      %v1513 = vunpack.c.l.b16 %v1475
      %v1514 = vunpack.c.l.b16 %v1476
      %v1515 = vunpack.c.l.b16 %v1477
      %v1516 = vunpack.c.l.b16 %v1478
      %v1517 = vunpack.c.l.b16 %v1479
      %v1518 = vunpack.c.l.b16 %v1480
      %v1519 = vunpack.c.l.b16 %v1481
      %v1520 = vpack.c.b16 %v1512, %v1511
      %v1521 = vpack.c.b16 %v1514, %v1513
      %v1522 = vpack.c.b16 %v1516, %v1515
      %v1523 = vpack.c.b16 %v1518, %v1517
      %v1524 = vpack.c.b16 %v1519, %v1519
      %vm1529 = vcmask 588800
      %v1531 = vsel %vm1529, %v1498, 0
      %v1534 = vsel %vm1529, %v1499, 0
      %v1537 = vsel %vm1529, %v1500, 0
      %v1540 = vsel %vm1529, %v1501, 0
      %vm1542 = vcmask 1043456
      %v1544 = vsel %vm1542, %v1524, 0
      %1546 = vmatprep.subr.bf16.mxu0 0
      %1547 = vmatpush1.bf16.msra.mxu0 0
      %1548 = vmatprep.subr.bf16.mxu0 0
      %1549 = vmatpush1.bf16.msra.mxu0 0
      %1550 = vmatprep.subr.bf16.mxu0 0
      %1551 = vmatpush1.bf16.msra.mxu0 0
      %1552 = vmatprep.subr.bf16.mxu0 0
      %1553 = vmatpush1.bf16.msra.mxu0 %v1544
      %1554 = vmatprep.subr.bf16.mxu0 0
      %1555 = vmatpush1.bf16.msra.mxu0 %v1523
      %1556 = vmatprep.subr.bf16.mxu0 0
      %1557 = vmatpush1.bf16.msra.mxu0 %v1522
      %1558 = vmatprep.subr.bf16.mxu0 0
      %1559 = vmatpush1.bf16.msra.mxu0 %v1521
      %1560 = vmatprep.subr.bf16.mxu0 0
      %1561 = vmatpush1.bf16.msra.mxu0 %v1520
      %1562 = vmatprep.subr.bf16.mxu0 0
      %1563 = vmatpush2.bf16.msra.mxu0 0
      %1564 = vmatprep.subr.bf16.mxu0 0
      %1565 = vmatpush2.bf16.msra.mxu0 0
      %1566 = vmatprep.subr.bf16.mxu0 0
      %1567 = vmatpush2.bf16.msra.mxu0 0
      %1568 = vmatprep.subr.bf16.mxu0 0
      %1569 = vmatpush2.bf16.msra.mxu0 0
      %1570 = vmatprep.subr.bf16.mxu0 0
      %1571 = vmatpush2.bf16.msra.mxu0 0
      %1572 = vmatprep.subr.bf16.mxu0 0
      %1573 = vmatpush2.bf16.msra.mxu0 0
      %1574 = vmatprep.subr.bf16.mxu0 0
      %1575 = vmatpush2.bf16.msra.mxu0 0
      %1576 = vmatprep.subr.bf16.mxu0 0
      %1577 = vmatpush2.bf16.msra.mxu0 0
      %1578 = vmatprep.mubr.bf16.mxu0 0
      %1579 = vmatmul.mubr.bf16.gmra.mxu0 %v1531
      %v1580 = vpop.f32.mrf.mxu0
      %v1581 = vadd.f32 0.0, %v1580
      %v1582 = vpop.f32.mrf.mxu0
      %v1583 = vpop.f32.mrf.mxu0
      %v1584 = vadd.f32 0.0, %v1583
      %v1585 = vpop.f32.mrf.mxu0
      %1586 = vmatprep.mubr.bf16.mxu0 0
      %1587 = vmatmul.mubr.bf16.gmra.mxu0 %v1534
      %v1588 = vpop.f32.mrf.mxu0
      %v1589 = vadd.f32 0.0, %v1588
      %v1590 = vpop.f32.mrf.mxu0
      %v1591 = vpop.f32.mrf.mxu0
      %v1592 = vadd.f32 0.0, %v1591
      %v1593 = vpop.f32.mrf.mxu0
      %1594 = vmatprep.mubr.bf16.mxu0 0
      %1595 = vmatmul.mubr.bf16.gmra.mxu0 %v1537
      %v1596 = vpop.f32.mrf.mxu0
      %v1597 = vadd.f32 0.0, %v1596
      %v1598 = vpop.f32.mrf.mxu0
      %v1599 = vpop.f32.mrf.mxu0
      %v1600 = vadd.f32 0.0, %v1599
      %v1601 = vpop.f32.mrf.mxu0
      %1602 = vmatprep.mubr.bf16.mxu0 0
      %1603 = vmatmul.mubr.bf16.gmra.mxu0 %v1540
      %v1604 = vpop.f32.mrf.mxu0
      %v1605 = vadd.f32 0.0, %v1604
      %v1606 = vpop.f32.mrf.mxu0
      %v1607 = vpop.f32.mrf.mxu0
      %v1608 = vadd.f32 0.0, %v1607
      %v1609 = vpop.f32.mrf.mxu0
      %1610 = vdwg.mxu0
      %v1611 = vld [vmem:[%s298] sm:$0x1]
      %v1613 = vlaneseq
      %v1614 = vshrl.u32 %v1613, 7
      %v1615 = vsub.s32 0, %v1614
      %v1616 = vrot.slane %v1611, %v1615
      %v1618 = vadd.f32 %v1581, %v1616
      %v1619 = vadd.f32 %v1584, %v1616
      %v1620 = vadd.f32 %v1589, %v1616
      %v1621 = vadd.f32 %v1592, %v1616
      %v1622 = vadd.f32 %v1597, %v1616
      %v1623 = vadd.f32 %v1600, %v1616
      %v1624 = vadd.f32 %v1605, %v1616
      %v1625 = vadd.f32 %v1608, %v1616
      %v1626 = vadd.f32 %v1618, 0.0
      %v1627 = vadd.f32 %v1619, 0.0
      %v1628 = vadd.f32 %v1620, 0.0
      %v1629 = vadd.f32 %v1621, 0.0
      %v1630 = vadd.f32 %v1622, 0.0
      %v1631 = vadd.f32 %v1623, 0.0
      %v1632 = vadd.f32 %v1624, 0.0
      %v1633 = vadd.f32 %v1625, 0.0
      %vm1634 = vcmask 64512
      %v1635 = vsel %vm1634, %v1626, 0.0
      %v1636 = vsel %vm1634, %v1627, 0.0
      %v1637 = vadd.f32 %v1635, %v1636
      %v1638 = vsel %vm1634, %v1628, 0.0
      %v1639 = vadd.f32 %v1637, %v1638
      %v1640 = vsel %vm1634, %v1629, 0.0
      %v1641 = vadd.f32 %v1639, %v1640
      %v1642 = vsel %vm1634, %v1630, 0.0
      %v1643 = vadd.f32 %v1641, %v1642
      %v1644 = vsel %vm1634, %v1631, 0.0
      %v1645 = vadd.f32 %v1643, %v1644
      %v1646 = vsel %vm1634, %v1632, 0.0
      %v1647 = vadd.f32 %v1645, %v1646
      %v1648 = vsel %vm1634, %v1633, 0.0
      %v1649 = vadd.f32 %v1647, %v1648
      %v1650 = vrot.slane %v1649, 4
      %v1651 = vadd.f32 %v1649, %v1650
      %v1652 = vrot.slane %v1651, 2
      %v1653 = vadd.f32 %v1651, %v1652
      %v1654 = vrot.slane %v1653, 1
      %v1655 = vadd.f32 %v1653, %v1654
      %1656 = vst.msk [vmem:[%s306] sm:$0x1] %vm391, %v1655
      %v1657 = vmul.f32 %v1618, %v1618
      %v1658 = vmul.f32 %v1619, %v1619
      %v1659 = vmul.f32 %v1620, %v1620
      %v1660 = vmul.f32 %v1621, %v1621
      %v1661 = vmul.f32 %v1622, %v1622
      %v1662 = vmul.f32 %v1623, %v1623
      %v1663 = vmul.f32 %v1624, %v1624
      %v1664 = vmul.f32 %v1625, %v1625
      %v1665 = vadd.f32 %v1657, 0.0
      %v1666 = vadd.f32 %v1658, 0.0
      %v1667 = vadd.f32 %v1659, 0.0
      %v1668 = vadd.f32 %v1660, 0.0
      %v1669 = vadd.f32 %v1661, 0.0
      %v1670 = vadd.f32 %v1662, 0.0
      %v1671 = vadd.f32 %v1663, 0.0
      %v1672 = vadd.f32 %v1664, 0.0
      %v1673 = vsel %vm1634, %v1665, 0.0
      %v1674 = vsel %vm1634, %v1666, 0.0
      %v1675 = vadd.f32 %v1673, %v1674
      %v1676 = vsel %vm1634, %v1667, 0.0
      %v1677 = vadd.f32 %v1675, %v1676
      %v1678 = vsel %vm1634, %v1668, 0.0
      %v1679 = vadd.f32 %v1677, %v1678
      %v1680 = vsel %vm1634, %v1669, 0.0
      %v1681 = vadd.f32 %v1679, %v1680
      %v1682 = vsel %vm1634, %v1670, 0.0
      %v1683 = vadd.f32 %v1681, %v1682
      %v1684 = vsel %vm1634, %v1671, 0.0
      %v1685 = vadd.f32 %v1683, %v1684
      %v1686 = vsel %vm1634, %v1672, 0.0
      %v1687 = vadd.f32 %v1685, %v1686
      %v1688 = vrot.slane %v1687, 4
      %v1689 = vadd.f32 %v1687, %v1688
      %v1690 = vrot.slane %v1689, 2
      %v1691 = vadd.f32 %v1689, %v1690
      %v1692 = vrot.slane %v1691, 1
      %v1693 = vadd.f32 %v1691, %v1692
      %1694 = vst.msk [vmem:[%s309] sm:$0x1] %vm391, %v1693
      %v1695 = vpack.c.bf16 %v1619, %v1618
      %v1696 = vpack.c.bf16 %v1621, %v1620
      %v1697 = vpack.c.bf16 %v1623, %v1622
      %v1698 = vpack.c.bf16 %v1625, %v1624
      %v1703 = vunpack.c.l.b16 %v1695
      %v1704 = vunpack.c.h.b16 %v1695
      %v1705 = vunpack.c.l.b16 %v1696
      %v1706 = vunpack.c.h.b16 %v1696
      %v1707 = vunpack.c.l.b16 %v1697
      %v1708 = vunpack.c.h.b16 %v1697
      %v1709 = vunpack.c.l.b16 %v1698
      %v1710 = vunpack.c.h.b16 %v1698
      %v1711 = vpack.c.b16 %v1703, %v1703
      %v1712 = vpack.c.b16 %v1704, %v1704
      %v1713 = vpack.c.b16 %v1705, %v1705
      %v1714 = vpack.c.b16 %v1706, %v1706
      %v1715 = vpack.c.b16 %v1707, %v1707
      %v1716 = vpack.c.b16 %v1708, %v1708
      %v1717 = vpack.c.b16 %v1709, %v1709
      %v1718 = vpack.c.b16 %v1710, %v1710
      %1727 = vst.msk [vmem:[%s303] sm:$0xf] %vm389, %v1711
      %1728 = vst.msk [vmem:[%s303 + $0x4] sm:$0xf] %vm389, %v1712
      %1729 = vst.msk [vmem:[%s303 + $0x8] sm:$0xf] %vm389, %v1713
      %1730 = vst.msk [vmem:[%s303 + $0xc] sm:$0xf] %vm389, %v1714
      %1731 = vst.msk [vmem:[%s303 + $0x10] sm:$0xf] %vm389, %v1715
      %1732 = vst.msk [vmem:[%s303 + $0x14] sm:$0xf] %vm389, %v1716
      %1733 = vst.msk [vmem:[%s303 + $0x18] sm:$0xf] %vm389, %v1717
      %1734 = vst.msk [vmem:[%s303 + $0x1c] sm:$0xf] %vm389, %v1718
      %p1735 = scmp.lt.s32.totalorder %s19, 1
      %s1736 = scalar_select %p1735, %s19, 1
      %s1737 = smul.addr %s1736, 8
      %s1738 = smul.addr %s1737, 4
      %s1739 = scalar_lea.vmem %s5, %s1738
      %p1740 = scmp.lt.s32.totalorder %s19, 1
      %s1741 = scalar_select %p1740, %s19, 1
      %s1742 = scalar_lea.vmem %s6, %s1741
      %p1743 = scmp.lt.s32.totalorder %s19, 1
      %s1744 = scalar_select %p1743, %s19, 1
      %s1745 = scalar_lea.vmem %s7, %s1744
      // Predicated region
      $region41: #{_lambda_.8} parent=39 // pred_check
        %p1746 = pneg %p152
      $region42: #{_lambda_.8} parent=39 // pred_check_branch
        %1748 = sbr.rel (%p1746) target = $region44
      $region43: #{_lambda_.8} parent=39 // pred_region
        _
      $region44: #{_lambda_.8} parent=39 // pred_fallthru
        _
      // Predicated region
      $region45: #{_lambda_.8} parent=39 // pred_check
        %p1749 = pneg %p178
      $region46: #{_lambda_.8} parent=39 // pred_check_branch
        %1751 = sbr.rel (%p1749) target = $region48
      $region47: #{_lambda_.8} parent=39 // pred_region
        _
      $region48: #{_lambda_.8} parent=39 // pred_fallthru
        _
      // Predicated region
      $region49: #{_lambda_.8} parent=39 // pred_check
        %p1752 = pneg %p204
      $region50: #{_lambda_.8} parent=39 // pred_check_branch
        %1754 = sbr.rel (%p1752) target = $region52
      $region51: #{_lambda_.8} parent=39 // pred_region
        _
      $region52: #{_lambda_.8} parent=39 // pred_fallthru
        _
    $region40: #{_lambda_.8} parent=5 // pred_fallthru
      _
    %p1755 = scmp.le.s32.totalorder 2, %s14
    // Predicated region
    $region53: #{_lambda_.8} parent=5 // pred_check
      %p1756 = pneg %p1755
    $region54: #{_lambda_.8} parent=5 // pred_check_branch
      %1758 = sbr.rel (%p1756) target = $region56
    $region55: #{_lambda_.8} parent=5 // pred_region
      %s1759 = ssub.s32 %s14, 2
      // Predicated region
      $region57: #{_lambda_.8} parent=55 // pred_check
        %p1760 = pneg %p158
      $region58: #{_lambda_.8} parent=55 // pred_check_branch
        %1762 = sbr.rel (%p1760) target = $region60
      $region59: #{_lambda_.8} parent=55 // pred_region
        %p1763 = scmp.lt.s32.totalorder %s20, 1
        %s1764 = scalar_select %p1763, %s20, 1
        %s1765 = smul.addr %s1764, 8
        %s1766 = smul.addr %s1765, 4
        %s1767 = scalar_lea.vmem %s5, %s1766
      $region60: #{_lambda_.8} parent=55 // pred_fallthru
        _
      // Predicated region
      $region61: #{_lambda_.8} parent=55 // pred_check
        %p1768 = pneg %p184
      $region62: #{_lambda_.8} parent=55 // pred_check_branch
        %1770 = sbr.rel (%p1768) target = $region64
      $region63: #{_lambda_.8} parent=55 // pred_region
        %p1771 = scmp.lt.s32.totalorder %s20, 1
        %s1772 = scalar_select %p1771, %s20, 1
        %s1773 = scalar_lea.vmem %s6, %s1772
      $region64: #{_lambda_.8} parent=55 // pred_fallthru
        _
      // Predicated region
      $region65: #{_lambda_.8} parent=55 // pred_check
        %p1774 = pneg %p210
      $region66: #{_lambda_.8} parent=55 // pred_check_branch
        %1776 = sbr.rel (%p1774) target = $region68
      $region67: #{_lambda_.8} parent=55 // pred_region
        %p1777 = scmp.lt.s32.totalorder %s20, 1
        %s1778 = scalar_select %p1777, %s20, 1
        %s1779 = scalar_lea.vmem %s7, %s1778
      $region68: #{_lambda_.8} parent=55 // pred_fallthru
        _
    $region56: #{_lambda_.8} parent=5 // pred_fallthru
      _
  $region6: #{_lambda_.8} parent=0 // loop_footer
    %s18 = sadd.s32 1, %s14
  $region7: #{_lambda_.8} parent=0 // loop_footer_branch
    %13 = sbr.rel target = $region3
  $region8: #{_lambda_.8} parent=0 // loop_exit
    _

// kernel: _lambda_.7
$region0: #{_lambda_.7}
  #allocation0 [shape = 'u32[]', space=smem, size = 0x4, offset = 0x4, fixed_abs, tag = 'smem constant byte address 0x4 - core index']
  #allocation1 [shape = 'u32[144,128]{1,0:T(1,128)}', space=vmem, size = 0x12000, scoped, tag = 'internal scratch']
  #allocation2 [shape = 'bf16[1,10,10,8]{3,2,1,0:T(8,128)(2,1)}', space=vmem, size = 0xa000, scoped, tag = 'scratch operand']
  #allocation3 [shape = 'bf16[64,72]{1,0:T(8,128)(2,1)}', space=vmem, size = 0x4000, scoped, tag = 'scratch operand']
  %s0 = inlined_call_operand.vmem [shape: bf16[2,8,8,8], index: 0, kind: input, shape index: {}]
  %s1 = inlined_call_operand.vmem [shape: bf16[72,8], index: 1, kind: input, shape index: {}]
  %s2 = inlined_call_operand.vmem [shape: f32[1,8], index: 2, kind: input, shape index: {}]
  %s3 = inlined_call_operand.vmem [shape: f32[1,8], index: 3, kind: input, shape index: {}]
  %s4 = inlined_call_operand.vmem [shape: f32[2,64,4], index: 4, kind: input, shape index: {}]
  %s5 = inlined_call_operand.vmem [shape: bf16[4,8], index: 5, kind: input, shape index: {}]
  %s6 = inlined_call_operand.vmem [shape: f32[1,4], index: 6, kind: input, shape index: {}]
  %s7 = inlined_call_operand.vmem [shape: f32[1,4], index: 7, kind: input, shape index: {}]
  %s8 = inlined_call_operand.vmem [shape: bf16[2,64,8], index: 8, kind: output, shape index: {0}]
  %s9 = inlined_call_operand.vmem [shape: f32[2,1,8], index: 9, kind: output, shape index: {1}]
  %s10 = inlined_call_operand.vmem [shape: f32[2,1,8], index: 10, kind: output, shape index: {2}]
  %11 = xla_tuple %s8, %s9, %s10
  %s12 = sld [smem:[#allocation0]]
  $region81: #{_lambda_.7} parent=0
    _
  %s14 = ssub.s32 1, %s12
  %s15 = scalar_select 0, %s14, %s12
  loop: start=0, step=1, limit=4
  $region2: #{_lambda_.7} parent=0 // loop_pre_header
    _
  $region3: #{_lambda_.7} parent=0 // loop_header
    %s17 = sphi 0, %s21
    %p18 = scmp.ge.s32.totalorder %s17, 4
    %s27 = sphi 0, %s29
    %s30 = sphi 0, %s27
    %s31 = sphi 0, %s30
    %s47 = sphi 0, %s31
    %s51 = sphi 0, %s51
    %s53 = sphi 0, %s51
    %s54 = sphi 0, %s53
    %s68 = sphi 0, %s54
    %s72 = sphi 0, %s72
    %s74 = sphi 0, %s72
    %s75 = sphi 0, %s74
    %s89 = sphi 0, %s75
    %s93 = sphi 0, %s93
    %s95 = sphi 0, %s93
    %s96 = sphi 0, %s95
    %s110 = sphi 0, %s96
    %s116 = sphi 0, %s118
    %s119 = sphi 0, %s116
    %s120 = sphi 0, %s119
    %s136 = sphi 0, %s120
    %s140 = sphi 0, %s140
    %s142 = sphi 0, %s140
    %s143 = sphi 0, %s142
    %s157 = sphi 0, %s143
    %s161 = sphi 0, %s161
    %s163 = sphi 0, %s161
    %s164 = sphi 0, %s163
    %s178 = sphi 0, %s164
    %s182 = sphi 0, %s182
    %s184 = sphi 0, %s182
    %s185 = sphi 0, %s184
    %s199 = sphi 0, %s185
    %s205 = sphi 0, %s207
    %s208 = sphi 0, %s205
    %s209 = sphi 0, %s208
    %s225 = sphi 0, %s209
    %s231 = sphi 0, %s233
    %s234 = sphi 0, %s231
    %s235 = sphi 0, %s234
    %s251 = sphi 0, %s235
    %s257 = sphi 0, %s259
    %s260 = sphi 0, %s257
    %s261 = sphi 0, %s260
    %s277 = sphi 0, %s261
  $region4: #{_lambda_.7} parent=0 // loop_header_branch
    %20 = sbr.rel (%p18) target = $region8
  $region5: #{_lambda_.7} parent=0 // loop_body
    %s22 = ssub.s32 %s17, 1
    %s23 = ssub.s32 %s17, 2
    %s24 = sadd.s32 %s17, 1
    %s25 = ssub.s32 %s17, %s24
    %p26 = scmp.eq.s32.totalorder %s25, 0
    %s28 = sadd.s32 %s27, 1
    %s29 = scalar_select %p26, %s27, %s28
    %p32 = pneg %p26
    %p33 = scmp.eq.s32.totalorder %s17, 1
    %p34 = por %p32, %p33
    %p35 = scmp.ne.s32.totalorder %s27, %s30
    %p36 = scmp.eq.s32.totalorder %s17, 0
    %p37 = por %p35, %p36
    %p38 = scmp.ne.s32.totalorder %s27, %s30
    %p39 = scmp.eq.s32.totalorder %s22, 1
    %p40 = por %p38, %p39
    %p41 = scmp.ne.s32.totalorder %s30, %s31
    %p42 = scmp.eq.s32.totalorder %s22, 0
    %p43 = por %p41, %p42
    %p44 = scmp.ne.s32.totalorder %s30, %s31
    %p45 = scmp.eq.s32.totalorder %s23, 1
    %p46 = por %p44, %p45
    %p48 = scmp.ne.s32.totalorder %s31, %s47
    %p49 = scmp.eq.s32.totalorder %s23, 0
    %p50 = por %p48, %p49
    %s52 = sadd.s32 %s51, 1
    %p55 = scmp.eq.s32.totalorder %s17, 1
    %p56 = scmp.ne.s32.totalorder %s51, %s53
    %p57 = scmp.eq.s32.totalorder %s17, 0
    %p58 = por %p56, %p57
    %p59 = scmp.ne.s32.totalorder %s51, %s53
    %p60 = scmp.eq.s32.totalorder %s22, 1
    %p61 = por %p59, %p60
    %p62 = scmp.ne.s32.totalorder %s53, %s54
    %p63 = scmp.eq.s32.totalorder %s22, 0
    %p64 = por %p62, %p63
    %p65 = scmp.ne.s32.totalorder %s53, %s54
    %p66 = scmp.eq.s32.totalorder %s23, 1
    %p67 = por %p65, %p66
    %p69 = scmp.ne.s32.totalorder %s54, %s68
    %p70 = scmp.eq.s32.totalorder %s23, 0
    %p71 = por %p69, %p70
    %s73 = sadd.s32 %s72, 1
    %p76 = scmp.eq.s32.totalorder %s17, 1
    %p77 = scmp.ne.s32.totalorder %s72, %s74
    %p78 = scmp.eq.s32.totalorder %s17, 0
    %p79 = por %p77, %p78
    %p80 = scmp.ne.s32.totalorder %s72, %s74
    %p81 = scmp.eq.s32.totalorder %s22, 1
    %p82 = por %p80, %p81
    %p83 = scmp.ne.s32.totalorder %s74, %s75
    %p84 = scmp.eq.s32.totalorder %s22, 0
    %p85 = por %p83, %p84
    %p86 = scmp.ne.s32.totalorder %s74, %s75
    %p87 = scmp.eq.s32.totalorder %s23, 1
    %p88 = por %p86, %p87
    %p90 = scmp.ne.s32.totalorder %s75, %s89
    %p91 = scmp.eq.s32.totalorder %s23, 0
    %p92 = por %p90, %p91
    %s94 = sadd.s32 %s93, 1
    %p97 = scmp.eq.s32.totalorder %s17, 1
    %p98 = scmp.ne.s32.totalorder %s93, %s95
    %p99 = scmp.eq.s32.totalorder %s17, 0
    %p100 = por %p98, %p99
    %p101 = scmp.ne.s32.totalorder %s93, %s95
    %p102 = scmp.eq.s32.totalorder %s22, 1
    %p103 = por %p101, %p102
    %p104 = scmp.ne.s32.totalorder %s95, %s96
    %p105 = scmp.eq.s32.totalorder %s22, 0
    %p106 = por %p104, %p105
    %p107 = scmp.ne.s32.totalorder %s95, %s96
    %p108 = scmp.eq.s32.totalorder %s23, 1
    %p109 = por %p107, %p108
    %p111 = scmp.ne.s32.totalorder %s96, %s110
    %p112 = scmp.eq.s32.totalorder %s23, 0
    %p113 = por %p111, %p112
    %s114 = ssub.s32 %s17, %s24
    %p115 = scmp.eq.s32.totalorder %s114, 0
    %s117 = sadd.s32 %s116, 1
    %s118 = scalar_select %p115, %s116, %s117
    %p121 = pneg %p115
    %p122 = scmp.eq.s32.totalorder %s17, 1
    %p123 = por %p121, %p122
    %p124 = scmp.ne.s32.totalorder %s116, %s119
    %p125 = scmp.eq.s32.totalorder %s17, 0
    %p126 = por %p124, %p125
    %p127 = scmp.ne.s32.totalorder %s116, %s119
    %p128 = scmp.eq.s32.totalorder %s22, 1
    %p129 = por %p127, %p128
    %p130 = scmp.ne.s32.totalorder %s119, %s120
    %p131 = scmp.eq.s32.totalorder %s22, 0
    %p132 = por %p130, %p131
    %p133 = scmp.ne.s32.totalorder %s119, %s120
    %p134 = scmp.eq.s32.totalorder %s23, 1
    %p135 = por %p133, %p134
    %p137 = scmp.ne.s32.totalorder %s120, %s136
    %p138 = scmp.eq.s32.totalorder %s23, 0
    %p139 = por %p137, %p138
    %s141 = sadd.s32 %s140, 1
    %p144 = scmp.eq.s32.totalorder %s17, 1
    %p145 = scmp.ne.s32.totalorder %s140, %s142
    %p146 = scmp.eq.s32.totalorder %s17, 0
    %p147 = por %p145, %p146
    %p148 = scmp.ne.s32.totalorder %s140, %s142
    %p149 = scmp.eq.s32.totalorder %s22, 1
    %p150 = por %p148, %p149
    %p151 = scmp.ne.s32.totalorder %s142, %s143
    %p152 = scmp.eq.s32.totalorder %s22, 0
    %p153 = por %p151, %p152
    %p154 = scmp.ne.s32.totalorder %s142, %s143
    %p155 = scmp.eq.s32.totalorder %s23, 1
    %p156 = por %p154, %p155
    %p158 = scmp.ne.s32.totalorder %s143, %s157
    %p159 = scmp.eq.s32.totalorder %s23, 0
    %p160 = por %p158, %p159
    %s162 = sadd.s32 %s161, 1
    %p165 = scmp.eq.s32.totalorder %s17, 1
    %p166 = scmp.ne.s32.totalorder %s161, %s163
    %p167 = scmp.eq.s32.totalorder %s17, 0
    %p168 = por %p166, %p167
    %p169 = scmp.ne.s32.totalorder %s161, %s163
    %p170 = scmp.eq.s32.totalorder %s22, 1
    %p171 = por %p169, %p170
    %p172 = scmp.ne.s32.totalorder %s163, %s164
    %p173 = scmp.eq.s32.totalorder %s22, 0
    %p174 = por %p172, %p173
    %p175 = scmp.ne.s32.totalorder %s163, %s164
    %p176 = scmp.eq.s32.totalorder %s23, 1
    %p177 = por %p175, %p176
    %p179 = scmp.ne.s32.totalorder %s164, %s178
    %p180 = scmp.eq.s32.totalorder %s23, 0
    %p181 = por %p179, %p180
    %s183 = sadd.s32 %s182, 1
    %p186 = scmp.eq.s32.totalorder %s17, 1
    %p187 = scmp.ne.s32.totalorder %s182, %s184
    %p188 = scmp.eq.s32.totalorder %s17, 0
    %p189 = por %p187, %p188
    %p190 = scmp.ne.s32.totalorder %s182, %s184
    %p191 = scmp.eq.s32.totalorder %s22, 1
    %p192 = por %p190, %p191
    %p193 = scmp.ne.s32.totalorder %s184, %s185
    %p194 = scmp.eq.s32.totalorder %s22, 0
    %p195 = por %p193, %p194
    %p196 = scmp.ne.s32.totalorder %s184, %s185
    %p197 = scmp.eq.s32.totalorder %s23, 1
    %p198 = por %p196, %p197
    %p200 = scmp.ne.s32.totalorder %s185, %s199
    %p201 = scmp.eq.s32.totalorder %s23, 0
    %p202 = por %p200, %p201
    %s203 = ssub.s32 %s17, %s24
    %p204 = scmp.eq.s32.totalorder %s203, 0
    %s206 = sadd.s32 %s205, 1
    %s207 = scalar_select %p204, %s205, %s206
    %p210 = pneg %p204
    %p211 = scmp.eq.s32.totalorder %s17, 1
    %p212 = por %p210, %p211
    %p213 = scmp.ne.s32.totalorder %s205, %s208
    %p214 = scmp.eq.s32.totalorder %s17, 0
    %p215 = por %p213, %p214
    %p216 = scmp.ne.s32.totalorder %s205, %s208
    %p217 = scmp.eq.s32.totalorder %s22, 1
    %p218 = por %p216, %p217
    %p219 = scmp.ne.s32.totalorder %s208, %s209
    %p220 = scmp.eq.s32.totalorder %s22, 0
    %p221 = por %p219, %p220
    %p222 = scmp.ne.s32.totalorder %s208, %s209
    %p223 = scmp.eq.s32.totalorder %s23, 1
    %p224 = por %p222, %p223
    %p226 = scmp.ne.s32.totalorder %s209, %s225
    %p227 = scmp.eq.s32.totalorder %s23, 0
    %p228 = por %p226, %p227
    %s229 = ssub.s32 %s17, %s24
    %p230 = scmp.eq.s32.totalorder %s229, 0
    %s232 = sadd.s32 %s231, 1
    %s233 = scalar_select %p230, %s231, %s232
    %p236 = pneg %p230
    %p237 = scmp.eq.s32.totalorder %s17, 1
    %p238 = por %p236, %p237
    %p239 = scmp.ne.s32.totalorder %s231, %s234
    %p240 = scmp.eq.s32.totalorder %s17, 0
    %p241 = por %p239, %p240
    %p242 = scmp.ne.s32.totalorder %s231, %s234
    %p243 = scmp.eq.s32.totalorder %s22, 1
    %p244 = por %p242, %p243
    %p245 = scmp.ne.s32.totalorder %s234, %s235
    %p246 = scmp.eq.s32.totalorder %s22, 0
    %p247 = por %p245, %p246
    %p248 = scmp.ne.s32.totalorder %s234, %s235
    %p249 = scmp.eq.s32.totalorder %s23, 1
    %p250 = por %p248, %p249
    %p252 = scmp.ne.s32.totalorder %s235, %s251
    %p253 = scmp.eq.s32.totalorder %s23, 0
    %p254 = por %p252, %p253
    %s255 = ssub.s32 %s17, %s24
    %p256 = scmp.eq.s32.totalorder %s255, 0
    %s258 = sadd.s32 %s257, 1
    %s259 = scalar_select %p256, %s257, %s258
    %p262 = pneg %p256
    %p263 = scmp.eq.s32.totalorder %s17, 1
    %p264 = por %p262, %p263
    %p265 = scmp.ne.s32.totalorder %s257, %s260
    %p266 = scmp.eq.s32.totalorder %s17, 0
    %p267 = por %p265, %p266
    %p268 = scmp.ne.s32.totalorder %s257, %s260
    %p269 = scmp.eq.s32.totalorder %s22, 1
    %p270 = por %p268, %p269
    %p271 = scmp.ne.s32.totalorder %s260, %s261
    %p272 = scmp.eq.s32.totalorder %s22, 0
    %p273 = por %p271, %p272
    %p274 = scmp.ne.s32.totalorder %s260, %s261
    %p275 = scmp.eq.s32.totalorder %s23, 1
    %p276 = por %p274, %p275
    %p278 = scmp.ne.s32.totalorder %s261, %s277
    %p279 = scmp.eq.s32.totalorder %s23, 0
    %p280 = por %p278, %p279
    %p281 = scmp.le.s32.totalorder 1, %s17
    %p282 = scmp.lt.s32.totalorder %s17, 3
    %p283 = pnand %p281, %p282
    %p284 = pneg %p283
    // Predicated region
    $region9: #{_lambda_.7} parent=5 // pred_check
      _
    $region10: #{_lambda_.7} parent=5 // pred_check_branch
      %286 = sbr.rel (%p283) target = $region12
    $region11: #{_lambda_.7} parent=5 // pred_region
      %s287 = ssub.s32 %s17, 1
      // Predicated region
      $region13: #{_lambda_.7} parent=11 // pred_check
        %p288 = pneg %p64
      $region14: #{_lambda_.7} parent=11 // pred_check_branch
        %290 = sbr.rel (%p288) target = $region16
      $region15: #{_lambda_.7} parent=11 // pred_region
        _
      $region16: #{_lambda_.7} parent=11 // pred_fallthru
        _
      // Predicated region
      $region17: #{_lambda_.7} parent=11 // pred_check
        %p291 = pneg %p85
      $region18: #{_lambda_.7} parent=11 // pred_check_branch
        %293 = sbr.rel (%p291) target = $region20
      $region19: #{_lambda_.7} parent=11 // pred_region
        _
      $region20: #{_lambda_.7} parent=11 // pred_fallthru
        _
      // Predicated region
      $region21: #{_lambda_.7} parent=11 // pred_check
        %p294 = pneg %p106
      $region22: #{_lambda_.7} parent=11 // pred_check_branch
        %296 = sbr.rel (%p294) target = $region24
      $region23: #{_lambda_.7} parent=11 // pred_region
        _
      $region24: #{_lambda_.7} parent=11 // pred_fallthru
        _
      // Predicated region
      $region25: #{_lambda_.7} parent=11 // pred_check
        %p297 = pneg %p153
      $region26: #{_lambda_.7} parent=11 // pred_check_branch
        %299 = sbr.rel (%p297) target = $region28
      $region27: #{_lambda_.7} parent=11 // pred_region
        _
      $region28: #{_lambda_.7} parent=11 // pred_fallthru
        _
      // Predicated region
      $region29: #{_lambda_.7} parent=11 // pred_check
        %p300 = pneg %p174
      $region30: #{_lambda_.7} parent=11 // pred_check_branch
        %302 = sbr.rel (%p300) target = $region32
      $region31: #{_lambda_.7} parent=11 // pred_region
        _
      $region32: #{_lambda_.7} parent=11 // pred_fallthru
        _
      // Predicated region
      $region33: #{_lambda_.7} parent=11 // pred_check
        %p303 = pneg %p195
      $region34: #{_lambda_.7} parent=11 // pred_check_branch
        %305 = sbr.rel (%p303) target = $region36
      $region35: #{_lambda_.7} parent=11 // pred_region
        _
      $region36: #{_lambda_.7} parent=11 // pred_fallthru
        _
    $region12: #{_lambda_.7} parent=5 // pred_fallthru
      _
    %p306 = scmp.lt.s32.totalorder %s17, 2
    // Predicated region
    $region37: #{_lambda_.7} parent=5 // pred_check
      %p307 = pneg %p306
    $region38: #{_lambda_.7} parent=5 // pred_check_branch
      %309 = sbr.rel (%p307) target = $region40
    $region39: #{_lambda_.7} parent=5 // pred_region
      // Predicated region
      $region41: #{_lambda_.7} parent=39 // pred_check
        %p310 = pneg %p37
      $region42: #{_lambda_.7} parent=39 // pred_check_branch
        %312 = sbr.rel (%p310) target = $region44
      $region43: #{_lambda_.7} parent=39 // pred_region
        %p313 = scmp.lt.s32.totalorder %s17, 1
        %s314 = scalar_select %p313, %s17, 1
        %s315 = smul.addr %s314, 8
        %s316 = smul.addr %s315, 4
        %s317 = scalar_lea.vmem %s0, %s316
      $region44: #{_lambda_.7} parent=39 // pred_fallthru
        _
      // Predicated region
      $region45: #{_lambda_.7} parent=39 // pred_check
        %p318 = pneg %p126
      $region46: #{_lambda_.7} parent=39 // pred_check_branch
        %320 = sbr.rel (%p318) target = $region48
      $region47: #{_lambda_.7} parent=39 // pred_region
        %p321 = scmp.lt.s32.totalorder %s17, 1
        %s322 = scalar_select %p321, %s17, 1
        %s323 = smul.addr %s322, 8
        %s324 = smul.addr %s323, 8
        %s325 = scalar_lea.vmem %s4, %s324
      $region48: #{_lambda_.7} parent=39 // pred_fallthru
        _
    $region40: #{_lambda_.7} parent=5 // pred_fallthru
      _
    %p326 = scmp.le.s32.totalorder 1, %s17
    %p327 = scmp.lt.s32.totalorder %s17, 3
    %p328 = pnand %p326, %p327
    %p329 = pneg %p328
    // Predicated region
    $region49: #{_lambda_.7} parent=5 // pred_check
      _
    $region50: #{_lambda_.7} parent=5 // pred_check_branch
      %331 = sbr.rel (%p328) target = $region52
    $region51: #{_lambda_.7} parent=5 // pred_region
      %s332 = ssub.s32 %s17, 1
      %p333 = scmp.lt.s32.totalorder %s22, 1
      %s334 = scalar_select %p333, %s22, 1
      %s335 = smul.addr %s334, 8
      %s336 = smul.addr %s335, 4
      %s337 = scalar_lea.vmem %s0, %s336
      %p338 = pneg %p43
      %p339 = pneg %p40
      %p340 = pneg %p64
      %p341 = pneg %p61
      %p342 = pneg %p85
      %p343 = pneg %p82
      %p344 = pneg %p106
      %p345 = pneg %p103
      %p346 = scmp.lt.s32.totalorder %s22, 1
      %s347 = scalar_select %p346, %s22, 1
      %s348 = smul.addr %s347, 8
      %s349 = smul.addr %s348, 8
      %s350 = scalar_lea.vmem %s4, %s349
      %p351 = pneg %p132
      %p352 = pneg %p129
      %p353 = pneg %p153
      %p354 = pneg %p150
      %p355 = pneg %p174
      %p356 = pneg %p171
      %p357 = pneg %p195
      %p358 = pneg %p192
      %p359 = pneg %p221
      %p360 = pneg %p218
      %p361 = scmp.lt.s32.totalorder %s22, 1
      %s362 = scalar_select %p361, %s22, 1
      %s363 = smul.addr %s362, 8
      %s364 = smul.addr %s363, 4
      %s365 = scalar_lea.vmem %s8, %s364
      %p366 = pneg %p247
      %p367 = pneg %p244
      %p368 = scmp.lt.s32.totalorder %s22, 1
      %s369 = scalar_select %p368, %s22, 1
      %s370 = scalar_lea.vmem %s9, %s369
      %p371 = pneg %p273
      %p372 = pneg %p270
      %p373 = scmp.lt.s32.totalorder %s22, 1
      %s374 = scalar_select %p373, %s22, 1
      %s375 = scalar_lea.vmem %s10, %s374
      %p376 = scmp.lt.s32.totalorder %s22, 1
      %s377 = scalar_select %p376, %s22, 1
      %s378 = smul.addr %s377, 8
      %s379 = smul.addr %s378, 4
      %s380 = scalar_lea.vmem %s0, %s379
      %p381 = scmp.lt.s32.totalorder %s22, 1
      %s382 = scalar_select %p381, %s22, 1
      %s383 = smul.addr %s382, 8
      %s384 = smul.addr %s383, 8
      %s385 = scalar_lea.vmem %s4, %s384
      %p386 = scmp.lt.s32.totalorder %s22, 1
      %s387 = scalar_select %p386, %s22, 1
      %s388 = smul.addr %s387, 8
      %s389 = smul.addr %s388, 4
      %s390 = scalar_lea.vmem %s8, %s389
      %p391 = scmp.lt.s32.totalorder %s22, 1
      %s392 = scalar_select %p391, %s22, 1
      %s393 = scalar_lea.vmem %s9, %s392
      %p394 = scmp.lt.s32.totalorder %s22, 1
      %s395 = scalar_select %p394, %s22, 1
      %s396 = scalar_lea.vmem %s10, %s395
      %v398 = vld [vmem:[%s380] sm:$0xf]
      %v399 = vld [vmem:[%s380 + $0x4] sm:$0xf]
      %v400 = vld [vmem:[%s380 + $0x8] sm:$0xf]
      %v401 = vld [vmem:[%s380 + $0xc] sm:$0xf]
      %v402 = vld [vmem:[%s380 + $0x10] sm:$0xf]
      %v403 = vld [vmem:[%s380 + $0x14] sm:$0xf]
      %v404 = vld [vmem:[%s380 + $0x18] sm:$0xf]
      %v405 = vld [vmem:[%s380 + $0x1c] sm:$0xf]
      %v406 = vunpack.c.l.bf16 %v398
      %v407 = vunpack.c.l.bf16 %v399
      %v408 = vunpack.c.l.bf16 %v400
      %v409 = vunpack.c.l.bf16 %v401
      %v410 = vunpack.c.l.bf16 %v402
      %v411 = vunpack.c.l.bf16 %v403
      %v412 = vunpack.c.l.bf16 %v404
      %v413 = vunpack.c.l.bf16 %v405
      %v414 = vld [vmem:[%s2] sm:$0x1]
      %v416 = vlaneseq
      %v417 = vshrl.u32 %v416, 7
      %v418 = vsub.s32 0, %v417
      %v419 = vrot.slane %v414, %v418
      %v421 = vmul.f32 %v406, %v419
      %v422 = vmul.f32 %v407, %v419
      %v423 = vmul.f32 %v408, %v419
      %v424 = vmul.f32 %v409, %v419
      %v425 = vmul.f32 %v410, %v419
      %v426 = vmul.f32 %v411, %v419
      %v427 = vmul.f32 %v412, %v419
      %v428 = vmul.f32 %v413, %v419
      %v429 = vld [vmem:[%s3] sm:$0x1]
      %v431 = vlaneseq
      %v432 = vshrl.u32 %v431, 7
      %v433 = vsub.s32 0, %v432
      %v434 = vrot.slane %v429, %v433
      %v436 = vadd.f32 %v421, %v434
      %v437 = vadd.f32 %v422, %v434
      %v438 = vadd.f32 %v423, %v434
      %v439 = vadd.f32 %v424, %v434
      %v440 = vadd.f32 %v425, %v434
      %v441 = vadd.f32 %v426, %v434
      %v442 = vadd.f32 %v427, %v434
      %v443 = vadd.f32 %v428, %v434
      %vm444 = vcmp.ge.f32.partialorder %v436, 0.0
      %vm445 = vcmp.ge.f32.partialorder %v437, 0.0
      %vm446 = vcmp.ge.f32.partialorder %v438, 0.0
      %vm447 = vcmp.ge.f32.partialorder %v439, 0.0
      %vm448 = vcmp.ge.f32.partialorder %v440, 0.0
      %vm449 = vcmp.ge.f32.partialorder %v441, 0.0
      %vm450 = vcmp.ge.f32.partialorder %v442, 0.0
      %vm451 = vcmp.ge.f32.partialorder %v443, 0.0
      %v452 = vmul.f32 %v436, 0.1
      %v453 = vmul.f32 %v437, 0.1
      %v454 = vmul.f32 %v438, 0.1
      %v455 = vmul.f32 %v439, 0.1
      %v456 = vmul.f32 %v440, 0.1
      %v457 = vmul.f32 %v441, 0.1
      %v458 = vmul.f32 %v442, 0.1
      %v459 = vmul.f32 %v443, 0.1
      %v460 = vsel %vm444, %v436, %v452
      %v461 = vsel %vm445, %v437, %v453
      %v462 = vsel %vm446, %v438, %v454
      %v463 = vsel %vm447, %v439, %v455
      %v464 = vsel %vm448, %v440, %v456
      %v465 = vsel %vm449, %v441, %v457
      %v466 = vsel %vm450, %v442, %v458
      %v467 = vsel %vm451, %v443, %v459
      %v468 = vpack.c.bf16 %v460, %v460
      %v469 = vpack.c.bf16 %v461, %v461
      %v470 = vpack.c.bf16 %v462, %v462
      %v471 = vpack.c.bf16 %v463, %v463
      %v472 = vpack.c.bf16 %v464, %v464
      %v473 = vpack.c.bf16 %v465, %v465
      %v474 = vpack.c.bf16 %v466, %v466
      %v475 = vpack.c.bf16 %v467, %v467
      %vm476 = vcmask 60416
      %477 = vst.msk [vmem:[#allocation2] sm:$0xf] %vm476, 0
      %vm478 = vcmask 57344
      %479 = vst.msk [vmem:[#allocation2 + $0x4] sm:$0x1] %vm478, 0
      %480 = vst.msk [vmem:[#allocation2 + $0x8] sm:$0xf] %vm476, 0
      %481 = vst.msk [vmem:[#allocation2 + $0xc] sm:$0x1] %vm478, 0
      %482 = vst.msk [vmem:[#allocation2 + $0x10] sm:$0xf] %vm476, 0
      %483 = vst.msk [vmem:[#allocation2 + $0x14] sm:$0x1] %vm478, 0
      %484 = vst.msk [vmem:[#allocation2 + $0x18] sm:$0xf] %vm476, 0
      %485 = vst.msk [vmem:[#allocation2 + $0x1c] sm:$0x1] %vm478, 0
      %486 = vst.msk [vmem:[#allocation2 + $0x20] sm:$0xf] %vm476, 0
      %487 = vst.msk [vmem:[#allocation2 + $0x24] sm:$0x1] %vm478, 0
      %488 = vst.msk [vmem:[#allocation2 + $0x28] sm:$0xf] %vm476, 0
      %489 = vst.msk [vmem:[#allocation2 + $0x2c] sm:$0x1] %vm478, 0
      %490 = vst.msk [vmem:[#allocation2 + $0x30] sm:$0xf] %vm476, 0
      %491 = vst.msk [vmem:[#allocation2 + $0x34] sm:$0x1] %vm478, 0
      %492 = vst.msk [vmem:[#allocation2 + $0x38] sm:$0xf] %vm476, 0
      %493 = vst.msk [vmem:[#allocation2 + $0x3c] sm:$0x1] %vm478, 0
      %494 = vst.msk [vmem:[#allocation2 + $0x40] sm:$0xf] %vm476, 0
      %495 = vst.msk [vmem:[#allocation2 + $0x44] sm:$0x1] %vm478, 0
      %496 = vst.msk [vmem:[#allocation2 + $0x48] sm:$0xf] %vm476, 0
      %497 = vst.msk [vmem:[#allocation2 + $0x4c] sm:$0x1] %vm478, 0
      %v506 = vunpack.c.l.b16 %v468
      %v507 = vunpack.c.l.b16 %v469
      %v508 = vunpack.c.l.b16 %v470
      %v509 = vunpack.c.l.b16 %v471
      %v510 = vunpack.c.l.b16 %v472
      %v511 = vunpack.c.l.b16 %v473
      %v512 = vunpack.c.l.b16 %v474
      %v513 = vunpack.c.l.b16 %v475
      %v514 = vpack.c.b16 %v506, %v506
      %v515 = vpack.c.b16 %v507, %v507
      %v516 = vpack.c.b16 %v508, %v508
      %v517 = vpack.c.b16 %v509, %v509
      %v518 = vpack.c.b16 %v510, %v510
      %v519 = vpack.c.b16 %v511, %v511
      %v520 = vpack.c.b16 %v512, %v512
      %v521 = vpack.c.b16 %v513, %v513
      %v523 = vshrl.u32 %v514, 16
      %v525 = vrot.slane %v523, 7
      %v526 = vshll.u32 %v514, 16
      %v528 = vor.u32 %v525, %v526
      %v529 = vrot.slane %v525, 4
      %v531 = vshrl.u32 %v515, 16
      %v533 = vrot.slane %v531, 7
      %v534 = vshll.u32 %v515, 16
      %v536 = vor.u32 %v533, %v534
      %v537 = vrot.slane %v533, 4
      %v539 = vshrl.u32 %v516, 16
      %v541 = vrot.slane %v539, 7
      %v542 = vshll.u32 %v516, 16
      %v544 = vor.u32 %v541, %v542
      %v545 = vrot.slane %v541, 4
      %v547 = vshrl.u32 %v517, 16
      %v549 = vrot.slane %v547, 7
      %v550 = vshll.u32 %v517, 16
      %v552 = vor.u32 %v549, %v550
      %v553 = vrot.slane %v549, 4
      %v555 = vshrl.u32 %v518, 16
      %v557 = vrot.slane %v555, 7
      %v558 = vshll.u32 %v518, 16
      %v560 = vor.u32 %v557, %v558
      %v561 = vrot.slane %v557, 4
      %v563 = vshrl.u32 %v519, 16
      %v565 = vrot.slane %v563, 7
      %v566 = vshll.u32 %v519, 16
      %v568 = vor.u32 %v565, %v566
      %v569 = vrot.slane %v565, 4
      %v571 = vshrl.u32 %v520, 16
      %v573 = vrot.slane %v571, 7
      %v574 = vshll.u32 %v520, 16
      %v576 = vor.u32 %v573, %v574
      %v577 = vrot.slane %v573, 4
      %v579 = vshrl.u32 %v521, 16
      %v581 = vrot.slane %v579, 7
      %v582 = vshll.u32 %v521, 16
      %v584 = vor.u32 %v581, %v582
      %v585 = vrot.slane %v581, 4
      %s602 = scalar_lea.vmem [#allocation2], 8
      %vm603 = vcmask 60416
      %vm604 = vsmask.f32 7938
      %vm605 = vmand %vm603, %vm604
      %v606 = vld [vmem:[%s602] sm:$0xf]
      %v607 = vsel %vm605, %v528, %v606
      %608 = vst [vmem:[%s602] sm:$0xf] %v607
      %vm609 = vcmask 57344
      %vm610 = vsmask.f32 256
      %vm611 = vmand %vm609, %vm610
      %v612 = vld [vmem:[%s602 + $0x4] sm:$0x1]
      %v613 = vsel %vm611, %v529, %v612
      %614 = vst [vmem:[%s602 + $0x4] sm:$0x1] %v613
      %v615 = vld [vmem:[%s602 + $0x8] sm:$0xf]
      %v616 = vsel %vm605, %v536, %v615
      %617 = vst [vmem:[%s602 + $0x8] sm:$0xf] %v616
      %v618 = vld [vmem:[%s602 + $0xc] sm:$0x1]
      %v619 = vsel %vm611, %v537, %v618
      %620 = vst [vmem:[%s602 + $0xc] sm:$0x1] %v619
      %v621 = vld [vmem:[%s602 + $0x10] sm:$0xf]
      %v622 = vsel %vm605, %v544, %v621
      %623 = vst [vmem:[%s602 + $0x10] sm:$0xf] %v622
      %v624 = vld [vmem:[%s602 + $0x14] sm:$0x1]
      %v625 = vsel %vm611, %v545, %v624
      %626 = vst [vmem:[%s602 + $0x14] sm:$0x1] %v625
      %v627 = vld [vmem:[%s602 + $0x18] sm:$0xf]
      %v628 = vsel %vm605, %v552, %v627
      %629 = vst [vmem:[%s602 + $0x18] sm:$0xf] %v628
      %v630 = vld [vmem:[%s602 + $0x1c] sm:$0x1]
      %v631 = vsel %vm611, %v553, %v630
      %632 = vst [vmem:[%s602 + $0x1c] sm:$0x1] %v631
      %v633 = vld [vmem:[%s602 + $0x20] sm:$0xf]
      %v634 = vsel %vm605, %v560, %v633
      %635 = vst [vmem:[%s602 + $0x20] sm:$0xf] %v634
      %v636 = vld [vmem:[%s602 + $0x24] sm:$0x1]
      %v637 = vsel %vm611, %v561, %v636
      %638 = vst [vmem:[%s602 + $0x24] sm:$0x1] %v637
      %v639 = vld [vmem:[%s602 + $0x28] sm:$0xf]
      %v640 = vsel %vm605, %v568, %v639
      %641 = vst [vmem:[%s602 + $0x28] sm:$0xf] %v640
      %v642 = vld [vmem:[%s602 + $0x2c] sm:$0x1]
      %v643 = vsel %vm611, %v569, %v642
      %644 = vst [vmem:[%s602 + $0x2c] sm:$0x1] %v643
      %v645 = vld [vmem:[%s602 + $0x30] sm:$0xf]
      %v646 = vsel %vm605, %v576, %v645
      %647 = vst [vmem:[%s602 + $0x30] sm:$0xf] %v646
      %v648 = vld [vmem:[%s602 + $0x34] sm:$0x1]
      %v649 = vsel %vm611, %v577, %v648
      %650 = vst [vmem:[%s602 + $0x34] sm:$0x1] %v649
      %v651 = vld [vmem:[%s602 + $0x38] sm:$0xf]
      %v652 = vsel %vm605, %v584, %v651
      %653 = vst [vmem:[%s602 + $0x38] sm:$0xf] %v652
      %v654 = vld [vmem:[%s602 + $0x3c] sm:$0x1]
      %v655 = vsel %vm611, %v585, %v654
      %656 = vst [vmem:[%s602 + $0x3c] sm:$0x1] %v655
      %v657 = vld [vmem:[#allocation2] sm:$0xf]
      %v658 = vld [vmem:[#allocation2 + $0x8] sm:$0xf]
      %v659 = vld [vmem:[#allocation2 + $0x10] sm:$0xf]
      %v660 = vld [vmem:[#allocation2 + $0x18] sm:$0xf]
      %v661 = vld [vmem:[#allocation2 + $0x20] sm:$0xf]
      %v662 = vld [vmem:[#allocation2 + $0x28] sm:$0xf]
      %v663 = vld [vmem:[#allocation2 + $0x30] sm:$0xf]
      %v664 = vld [vmem:[#allocation2 + $0x38] sm:$0xf]
      %665 = vst.msk [vmem:[#allocation3] sm:$0xf] %vm476, %v657
      %666 = vst.msk [vmem:[#allocation3 + $0x4] sm:$0xf] %vm476, %v658
      %667 = vst.msk [vmem:[#allocation3 + $0x8] sm:$0xf] %vm476, %v659
      %668 = vst.msk [vmem:[#allocation3 + $0xc] sm:$0xf] %vm476, %v660
      %669 = vst.msk [vmem:[#allocation3 + $0x10] sm:$0xf] %vm476, %v661
      %670 = vst.msk [vmem:[#allocation3 + $0x14] sm:$0xf] %vm476, %v662
      %671 = vst.msk [vmem:[#allocation3 + $0x18] sm:$0xf] %vm476, %v663
      %672 = vst.msk [vmem:[#allocation3 + $0x1c] sm:$0xf] %vm476, %v664
      %v673 = vld [vmem:[#allocation2] sm:$0xf]
      %v674 = vld [vmem:[#allocation2 + $0x4] sm:$0x1]
      %v675 = vld [vmem:[#allocation2 + $0x8] sm:$0xf]
      %v676 = vld [vmem:[#allocation2 + $0xc] sm:$0x1]
      %v677 = vld [vmem:[#allocation2 + $0x10] sm:$0xf]
      %v678 = vld [vmem:[#allocation2 + $0x14] sm:$0x1]
      %v679 = vld [vmem:[#allocation2 + $0x18] sm:$0xf]
      %v680 = vld [vmem:[#allocation2 + $0x1c] sm:$0x1]
      %v681 = vld [vmem:[#allocation2 + $0x20] sm:$0xf]
      %v682 = vld [vmem:[#allocation2 + $0x24] sm:$0x1]
      %v683 = vld [vmem:[#allocation2 + $0x28] sm:$0xf]
      %v684 = vld [vmem:[#allocation2 + $0x2c] sm:$0x1]
      %v685 = vld [vmem:[#allocation2 + $0x30] sm:$0xf]
      %v686 = vld [vmem:[#allocation2 + $0x34] sm:$0x1]
      %v687 = vld [vmem:[#allocation2 + $0x38] sm:$0xf]
      %v688 = vld [vmem:[#allocation2 + $0x3c] sm:$0x1]
      %vm689 = vsmask.f32 3328
      %vm690 = vsmask.f32 7440
      %vm691 = vmor %vm689, %vm690
      %v693 = vshrl.u32 %v673, 16
      %v695 = vrot.slane %v693, 4
      %v696 = vshll.u32 %v673, 16
      %v698 = vrot.slane %v696, 5
      %v699 = vor.u32 %v695, %v698
      %v700 = vrot.slane %v699, 4
      %v702 = vshll.u32 %v674, 16
      %v704 = vrot.slane %v702, 5
      %v705 = vsel %vm691, %v700, %v704
      %v707 = vshrl.u32 %v675, 16
      %v709 = vrot.slane %v707, 4
      %v710 = vshll.u32 %v675, 16
      %v712 = vrot.slane %v710, 5
      %v713 = vor.u32 %v709, %v712
      %v714 = vrot.slane %v713, 4
      %v716 = vshll.u32 %v676, 16
      %v718 = vrot.slane %v716, 5
      %v719 = vsel %vm691, %v714, %v718
      %v721 = vshrl.u32 %v677, 16
      %v723 = vrot.slane %v721, 4
      %v724 = vshll.u32 %v677, 16
      %v726 = vrot.slane %v724, 5
      %v727 = vor.u32 %v723, %v726
      %v728 = vrot.slane %v727, 4
      %v730 = vshll.u32 %v678, 16
      %v732 = vrot.slane %v730, 5
      %v733 = vsel %vm691, %v728, %v732
      %v735 = vshrl.u32 %v679, 16
      %v737 = vrot.slane %v735, 4
      %v738 = vshll.u32 %v679, 16
      %v740 = vrot.slane %v738, 5
      %v741 = vor.u32 %v737, %v740
      %v742 = vrot.slane %v741, 4
      %v744 = vshll.u32 %v680, 16
      %v746 = vrot.slane %v744, 5
      %v747 = vsel %vm691, %v742, %v746
      %v749 = vshrl.u32 %v681, 16
      %v751 = vrot.slane %v749, 4
      %v752 = vshll.u32 %v681, 16
      %v754 = vrot.slane %v752, 5
      %v755 = vor.u32 %v751, %v754
      %v756 = vrot.slane %v755, 4
      %v758 = vshll.u32 %v682, 16
      %v760 = vrot.slane %v758, 5
      %v761 = vsel %vm691, %v756, %v760
      %v763 = vshrl.u32 %v683, 16
      %v765 = vrot.slane %v763, 4
      %v766 = vshll.u32 %v683, 16
      %v768 = vrot.slane %v766, 5
      %v769 = vor.u32 %v765, %v768
      %v770 = vrot.slane %v769, 4
      %v772 = vshll.u32 %v684, 16
      %v774 = vrot.slane %v772, 5
      %v775 = vsel %vm691, %v770, %v774
      %v777 = vshrl.u32 %v685, 16
      %v779 = vrot.slane %v777, 4
      %v780 = vshll.u32 %v685, 16
      %v782 = vrot.slane %v780, 5
      %v783 = vor.u32 %v779, %v782
      %v784 = vrot.slane %v783, 4
      %v786 = vshll.u32 %v686, 16
      %v788 = vrot.slane %v786, 5
      %v789 = vsel %vm691, %v784, %v788
      %v791 = vshrl.u32 %v687, 16
      %v793 = vrot.slane %v791, 4
      %v794 = vshll.u32 %v687, 16
      %v796 = vrot.slane %v794, 5
      %v797 = vor.u32 %v793, %v796
      %v798 = vrot.slane %v797, 4
      %v800 = vshll.u32 %v688, 16
      %v802 = vrot.slane %v800, 5
      %v803 = vsel %vm691, %v798, %v802
      %804 = vrot.lane.b32.xlu0 %v705, 8
      %v805 = vpop.permute.xlu0 %804
      %806 = vrot.lane.b32.xlu0 %v719, 8
      %v807 = vpop.permute.xlu0 %806
      %808 = vrot.lane.b32.xlu0 %v733, 8
      %v809 = vpop.permute.xlu0 %808
      %810 = vrot.lane.b32.xlu0 %v747, 8
      %v811 = vpop.permute.xlu0 %810
      %812 = vrot.lane.b32.xlu0 %v761, 8
      %v813 = vpop.permute.xlu0 %812
      %814 = vrot.lane.b32.xlu0 %v775, 8
      %v815 = vpop.permute.xlu0 %814
      %816 = vrot.lane.b32.xlu0 %v789, 8
      %v817 = vpop.permute.xlu0 %816
      %818 = vrot.lane.b32.xlu0 %v803, 8
      %v819 = vpop.permute.xlu0 %818
      %vm828 = vcmask 126016
      %829 = vst.msk [vmem:[#allocation3] sm:$0xf] %vm828, %v805
      %830 = vst.msk [vmem:[#allocation3 + $0x4] sm:$0xf] %vm828, %v807
      %831 = vst.msk [vmem:[#allocation3 + $0x8] sm:$0xf] %vm828, %v809
      %832 = vst.msk [vmem:[#allocation3 + $0xc] sm:$0xf] %vm828, %v811
      %833 = vst.msk [vmem:[#allocation3 + $0x10] sm:$0xf] %vm828, %v813
      %834 = vst.msk [vmem:[#allocation3 + $0x14] sm:$0xf] %vm828, %v815
      %835 = vst.msk [vmem:[#allocation3 + $0x18] sm:$0xf] %vm828, %v817
      %836 = vst.msk [vmem:[#allocation3 + $0x1c] sm:$0xf] %vm828, %v819
      %v837 = vld [vmem:[#allocation2] sm:$0xe]
      %v838 = vld [vmem:[#allocation2 + $0x4] sm:$0x1]
      %v839 = vld [vmem:[#allocation2 + $0x8] sm:$0xe]
      %v840 = vld [vmem:[#allocation2 + $0xc] sm:$0x1]
      %v841 = vld [vmem:[#allocation2 + $0x10] sm:$0xe]
      %v842 = vld [vmem:[#allocation2 + $0x14] sm:$0x1]
      %v843 = vld [vmem:[#allocation2 + $0x18] sm:$0xe]
      %v844 = vld [vmem:[#allocation2 + $0x1c] sm:$0x1]
      %v845 = vld [vmem:[#allocation2 + $0x20] sm:$0xe]
      %v846 = vld [vmem:[#allocation2 + $0x24] sm:$0x1]
      %v847 = vld [vmem:[#allocation2 + $0x28] sm:$0xe]
      %v848 = vld [vmem:[#allocation2 + $0x2c] sm:$0x1]
      %v849 = vld [vmem:[#allocation2 + $0x30] sm:$0xe]
      %v850 = vld [vmem:[#allocation2 + $0x34] sm:$0x1]
      %v851 = vld [vmem:[#allocation2 + $0x38] sm:$0xe]
      %v852 = vld [vmem:[#allocation2 + $0x3c] sm:$0x1]
      %vm869 = vcmask 1042432
      %vm870 = vcmask 1046532
      %vm871 = vmor %vm869, %vm870
      %v872 = vrot.slane %v837, 5
      %v873 = vrot.slane %v872, 4
      %v874 = vrot.slane %v838, 5
      %v875 = vsel %vm871, %v873, %v874
      %v876 = vrot.slane %v839, 5
      %v877 = vrot.slane %v876, 4
      %v878 = vrot.slane %v840, 5
      %v879 = vsel %vm871, %v877, %v878
      %v880 = vrot.slane %v841, 5
      %v881 = vrot.slane %v880, 4
      %v882 = vrot.slane %v842, 5
      %v883 = vsel %vm871, %v881, %v882
      %v884 = vrot.slane %v843, 5
      %v885 = vrot.slane %v884, 4
      %v886 = vrot.slane %v844, 5
      %v887 = vsel %vm871, %v885, %v886
      %v888 = vrot.slane %v845, 5
      %v889 = vrot.slane %v888, 4
      %v890 = vrot.slane %v846, 5
      %v891 = vsel %vm871, %v889, %v890
      %v892 = vrot.slane %v847, 5
      %v893 = vrot.slane %v892, 4
      %v894 = vrot.slane %v848, 5
      %v895 = vsel %vm871, %v893, %v894
      %v896 = vrot.slane %v849, 5
      %v897 = vrot.slane %v896, 4
      %v898 = vrot.slane %v850, 5
      %v899 = vsel %vm871, %v897, %v898
      %v900 = vrot.slane %v851, 5
      %v901 = vrot.slane %v900, 4
      %v902 = vrot.slane %v852, 5
      %v903 = vsel %vm871, %v901, %v902
      %904 = vrot.lane.b32.xlu0 %v875, 16
      %v905 = vpop.permute.xlu0 %904
      %906 = vrot.lane.b32.xlu0 %v879, 16
      %v907 = vpop.permute.xlu0 %906
      %908 = vrot.lane.b32.xlu0 %v883, 16
      %v909 = vpop.permute.xlu0 %908
      %910 = vrot.lane.b32.xlu0 %v887, 16
      %v911 = vpop.permute.xlu0 %910
      %912 = vrot.lane.b32.xlu0 %v891, 16
      %v913 = vpop.permute.xlu0 %912
      %914 = vrot.lane.b32.xlu0 %v895, 16
      %v915 = vpop.permute.xlu0 %914
      %916 = vrot.lane.b32.xlu0 %v899, 16
      %v917 = vpop.permute.xlu0 %916
      %918 = vrot.lane.b32.xlu0 %v903, 16
      %v919 = vpop.permute.xlu0 %918
      %vm928 = vcmask 191616
      %929 = vst.msk [vmem:[#allocation3] sm:$0xf] %vm928, %v905
      %930 = vst.msk [vmem:[#allocation3 + $0x4] sm:$0xf] %vm928, %v907
      %931 = vst.msk [vmem:[#allocation3 + $0x8] sm:$0xf] %vm928, %v909
      %932 = vst.msk [vmem:[#allocation3 + $0xc] sm:$0xf] %vm928, %v911
      %933 = vst.msk [vmem:[#allocation3 + $0x10] sm:$0xf] %vm928, %v913
      %934 = vst.msk [vmem:[#allocation3 + $0x14] sm:$0xf] %vm928, %v915
      %935 = vst.msk [vmem:[#allocation3 + $0x18] sm:$0xf] %vm928, %v917
      %936 = vst.msk [vmem:[#allocation3 + $0x1c] sm:$0xf] %vm928, %v919
      %v937 = vld [vmem:[%s602] sm:$0xf]
      %v938 = vld [vmem:[%s602 + $0x8] sm:$0xf]
      %v939 = vld [vmem:[%s602 + $0x10] sm:$0xf]
      %v940 = vld [vmem:[%s602 + $0x18] sm:$0xf]
      %v941 = vld [vmem:[%s602 + $0x20] sm:$0xf]
      %v942 = vld [vmem:[%s602 + $0x28] sm:$0xf]
      %v943 = vld [vmem:[%s602 + $0x30] sm:$0xf]
      %v944 = vld [vmem:[%s602 + $0x38] sm:$0xf]
      %953 = vrot.lane.b32.xlu0 %v937, 24
      %v954 = vpop.permute.xlu0 %953
      %955 = vrot.lane.b32.xlu0 %v938, 24
      %v956 = vpop.permute.xlu0 %955
      %957 = vrot.lane.b32.xlu0 %v939, 24
      %v958 = vpop.permute.xlu0 %957
      %959 = vrot.lane.b32.xlu0 %v940, 24
      %v960 = vpop.permute.xlu0 %959
      %961 = vrot.lane.b32.xlu0 %v941, 24
      %v962 = vpop.permute.xlu0 %961
      %963 = vrot.lane.b32.xlu0 %v942, 24
      %v964 = vpop.permute.xlu0 %963
      %965 = vrot.lane.b32.xlu0 %v943, 24
      %v966 = vpop.permute.xlu0 %965
      %967 = vrot.lane.b32.xlu0 %v944, 24
      %v968 = vpop.permute.xlu0 %967
      %vm977 = vcmask 257216
      %978 = vst.msk [vmem:[#allocation3] sm:$0xf] %vm977, %v954
      %979 = vst.msk [vmem:[#allocation3 + $0x4] sm:$0xf] %vm977, %v956
      %980 = vst.msk [vmem:[#allocation3 + $0x8] sm:$0xf] %vm977, %v958
      %981 = vst.msk [vmem:[#allocation3 + $0xc] sm:$0xf] %vm977, %v960
      %982 = vst.msk [vmem:[#allocation3 + $0x10] sm:$0xf] %vm977, %v962
      %983 = vst.msk [vmem:[#allocation3 + $0x14] sm:$0xf] %vm977, %v964
      %984 = vst.msk [vmem:[#allocation3 + $0x18] sm:$0xf] %vm977, %v966
      %985 = vst.msk [vmem:[#allocation3 + $0x1c] sm:$0xf] %vm977, %v968
      %v986 = vld [vmem:[%s602] sm:$0xf]
      %v987 = vld [vmem:[%s602 + $0x4] sm:$0x1]
      %v988 = vld [vmem:[%s602 + $0x8] sm:$0xf]
      %v989 = vld [vmem:[%s602 + $0xc] sm:$0x1]
      %v990 = vld [vmem:[%s602 + $0x10] sm:$0xf]
      %v991 = vld [vmem:[%s602 + $0x14] sm:$0x1]
      %v992 = vld [vmem:[%s602 + $0x18] sm:$0xf]
      %v993 = vld [vmem:[%s602 + $0x1c] sm:$0x1]
      %v994 = vld [vmem:[%s602 + $0x20] sm:$0xf]
      %v995 = vld [vmem:[%s602 + $0x24] sm:$0x1]
      %v996 = vld [vmem:[%s602 + $0x28] sm:$0xf]
      %v997 = vld [vmem:[%s602 + $0x2c] sm:$0x1]
      %v998 = vld [vmem:[%s602 + $0x30] sm:$0xf]
      %v999 = vld [vmem:[%s602 + $0x34] sm:$0x1]
      %v1000 = vld [vmem:[%s602 + $0x38] sm:$0xf]
      %v1001 = vld [vmem:[%s602 + $0x3c] sm:$0x1]
      %v1003 = vshrl.u32 %v986, 16
      %v1005 = vrot.slane %v1003, 4
      %v1006 = vshll.u32 %v986, 16
      %v1008 = vrot.slane %v1006, 5
      %v1009 = vor.u32 %v1005, %v1008
      %v1010 = vrot.slane %v1009, 4
      %v1012 = vshll.u32 %v987, 16
      %v1014 = vrot.slane %v1012, 5
      %v1015 = vsel %vm691, %v1010, %v1014
      %v1017 = vshrl.u32 %v988, 16
      %v1019 = vrot.slane %v1017, 4
      %v1020 = vshll.u32 %v988, 16
      %v1022 = vrot.slane %v1020, 5
      %v1023 = vor.u32 %v1019, %v1022
      %v1024 = vrot.slane %v1023, 4
      %v1026 = vshll.u32 %v989, 16
      %v1028 = vrot.slane %v1026, 5
      %v1029 = vsel %vm691, %v1024, %v1028
      %v1031 = vshrl.u32 %v990, 16
      %v1033 = vrot.slane %v1031, 4
      %v1034 = vshll.u32 %v990, 16
      %v1036 = vrot.slane %v1034, 5
      %v1037 = vor.u32 %v1033, %v1036
      %v1038 = vrot.slane %v1037, 4
      %v1040 = vshll.u32 %v991, 16
      %v1042 = vrot.slane %v1040, 5
      %v1043 = vsel %vm691, %v1038, %v1042
      %v1045 = vshrl.u32 %v992, 16
      %v1047 = vrot.slane %v1045, 4
      %v1048 = vshll.u32 %v992, 16
      %v1050 = vrot.slane %v1048, 5
      %v1051 = vor.u32 %v1047, %v1050
      %v1052 = vrot.slane %v1051, 4
      %v1054 = vshll.u32 %v993, 16
      %v1056 = vrot.slane %v1054, 5
      %v1057 = vsel %vm691, %v1052, %v1056
      %v1059 = vshrl.u32 %v994, 16
      %v1061 = vrot.slane %v1059, 4
      %v1062 = vshll.u32 %v994, 16
      %v1064 = vrot.slane %v1062, 5
      %v1065 = vor.u32 %v1061, %v1064
      %v1066 = vrot.slane %v1065, 4
      %v1068 = vshll.u32 %v995, 16
      %v1070 = vrot.slane %v1068, 5
      %v1071 = vsel %vm691, %v1066, %v1070
      %v1073 = vshrl.u32 %v996, 16
      %v1075 = vrot.slane %v1073, 4
      %v1076 = vshll.u32 %v996, 16
      %v1078 = vrot.slane %v1076, 5
      %v1079 = vor.u32 %v1075, %v1078
      %v1080 = vrot.slane %v1079, 4
      %v1082 = vshll.u32 %v997, 16
      %v1084 = vrot.slane %v1082, 5
      %v1085 = vsel %vm691, %v1080, %v1084
      %v1087 = vshrl.u32 %v998, 16
      %v1089 = vrot.slane %v1087, 4
      %v1090 = vshll.u32 %v998, 16
      %v1092 = vrot.slane %v1090, 5
      %v1093 = vor.u32 %v1089, %v1092
      %v1094 = vrot.slane %v1093, 4
      %v1096 = vshll.u32 %v999, 16
      %v1098 = vrot.slane %v1096, 5
      %v1099 = vsel %vm691, %v1094, %v1098
      %v1101 = vshrl.u32 %v1000, 16
      %v1103 = vrot.slane %v1101, 4
      %v1104 = vshll.u32 %v1000, 16
      %v1106 = vrot.slane %v1104, 5
      %v1107 = vor.u32 %v1103, %v1106
      %v1108 = vrot.slane %v1107, 4
      %v1110 = vshll.u32 %v1001, 16
      %v1112 = vrot.slane %v1110, 5
      %v1113 = vsel %vm691, %v1108, %v1112
      %1114 = vrot.lane.b32.xlu0 %v1015, 32
      %v1115 = vpop.permute.xlu0 %1114
      %1116 = vrot.lane.b32.xlu0 %v1029, 32
      %v1117 = vpop.permute.xlu0 %1116
      %1118 = vrot.lane.b32.xlu0 %v1043, 32
      %v1119 = vpop.permute.xlu0 %1118
      %1120 = vrot.lane.b32.xlu0 %v1057, 32
      %v1121 = vpop.permute.xlu0 %1120
      %1122 = vrot.lane.b32.xlu0 %v1071, 32
      %v1123 = vpop.permute.xlu0 %1122
      %1124 = vrot.lane.b32.xlu0 %v1085, 32
      %v1125 = vpop.permute.xlu0 %1124
      %1126 = vrot.lane.b32.xlu0 %v1099, 32
      %v1127 = vpop.permute.xlu0 %1126
      %1128 = vrot.lane.b32.xlu0 %v1113, 32
      %v1129 = vpop.permute.xlu0 %1128
      %vm1138 = vcmask 322816
      %1139 = vst.msk [vmem:[#allocation3] sm:$0xf] %vm1138, %v1115
      %1140 = vst.msk [vmem:[#allocation3 + $0x4] sm:$0xf] %vm1138, %v1117
      %1141 = vst.msk [vmem:[#allocation3 + $0x8] sm:$0xf] %vm1138, %v1119
      %1142 = vst.msk [vmem:[#allocation3 + $0xc] sm:$0xf] %vm1138, %v1121
      %1143 = vst.msk [vmem:[#allocation3 + $0x10] sm:$0xf] %vm1138, %v1123
      %1144 = vst.msk [vmem:[#allocation3 + $0x14] sm:$0xf] %vm1138, %v1125
      %1145 = vst.msk [vmem:[#allocation3 + $0x18] sm:$0xf] %vm1138, %v1127
      %1146 = vst.msk [vmem:[#allocation3 + $0x1c] sm:$0xf] %vm1138, %v1129
      %v1147 = vld [vmem:[%s602] sm:$0xe]
      %v1148 = vld [vmem:[%s602 + $0x4] sm:$0x1]
      %v1149 = vld [vmem:[%s602 + $0x8] sm:$0xe]
      %v1150 = vld [vmem:[%s602 + $0xc] sm:$0x1]
      %v1151 = vld [vmem:[%s602 + $0x10] sm:$0xe]
      %v1152 = vld [vmem:[%s602 + $0x14] sm:$0x1]
      %v1153 = vld [vmem:[%s602 + $0x18] sm:$0xe]
      %v1154 = vld [vmem:[%s602 + $0x1c] sm:$0x1]
      %v1155 = vld [vmem:[%s602 + $0x20] sm:$0xe]
      %v1156 = vld [vmem:[%s602 + $0x24] sm:$0x1]
      %v1157 = vld [vmem:[%s602 + $0x28] sm:$0xe]
      %v1158 = vld [vmem:[%s602 + $0x2c] sm:$0x1]
      %v1159 = vld [vmem:[%s602 + $0x30] sm:$0xe]
      %v1160 = vld [vmem:[%s602 + $0x34] sm:$0x1]
      %v1161 = vld [vmem:[%s602 + $0x38] sm:$0xe]
      %v1162 = vld [vmem:[%s602 + $0x3c] sm:$0x1]
      %v1179 = vrot.slane %v1147, 5
      %v1180 = vrot.slane %v1179, 4
      %v1181 = vrot.slane %v1148, 5
      %v1182 = vsel %vm871, %v1180, %v1181
      %v1183 = vrot.slane %v1149, 5
      %v1184 = vrot.slane %v1183, 4
      %v1185 = vrot.slane %v1150, 5
      %v1186 = vsel %vm871, %v1184, %v1185
      %v1187 = vrot.slane %v1151, 5
      %v1188 = vrot.slane %v1187, 4
      %v1189 = vrot.slane %v1152, 5
      %v1190 = vsel %vm871, %v1188, %v1189
      %v1191 = vrot.slane %v1153, 5
      %v1192 = vrot.slane %v1191, 4
      %v1193 = vrot.slane %v1154, 5
      %v1194 = vsel %vm871, %v1192, %v1193
      %v1195 = vrot.slane %v1155, 5
      %v1196 = vrot.slane %v1195, 4
      %v1197 = vrot.slane %v1156, 5
      %v1198 = vsel %vm871, %v1196, %v1197
      %v1199 = vrot.slane %v1157, 5
      %v1200 = vrot.slane %v1199, 4
      %v1201 = vrot.slane %v1158, 5
      %v1202 = vsel %vm871, %v1200, %v1201
      %v1203 = vrot.slane %v1159, 5
      %v1204 = vrot.slane %v1203, 4
      %v1205 = vrot.slane %v1160, 5
      %v1206 = vsel %vm871, %v1204, %v1205
      %v1207 = vrot.slane %v1161, 5
      %v1208 = vrot.slane %v1207, 4
      %v1209 = vrot.slane %v1162, 5
      %v1210 = vsel %vm871, %v1208, %v1209
      %1211 = vrot.lane.b32.xlu0 %v1182, 40
      %v1212 = vpop.permute.xlu0 %1211
      %1213 = vrot.lane.b32.xlu0 %v1186, 40
      %v1214 = vpop.permute.xlu0 %1213
      %1215 = vrot.lane.b32.xlu0 %v1190, 40
      %v1216 = vpop.permute.xlu0 %1215
      %1217 = vrot.lane.b32.xlu0 %v1194, 40
      %v1218 = vpop.permute.xlu0 %1217
      %1219 = vrot.lane.b32.xlu0 %v1198, 40
      %v1220 = vpop.permute.xlu0 %1219
      %1221 = vrot.lane.b32.xlu0 %v1202, 40
      %v1222 = vpop.permute.xlu0 %1221
      %1223 = vrot.lane.b32.xlu0 %v1206, 40
      %v1224 = vpop.permute.xlu0 %1223
      %1225 = vrot.lane.b32.xlu0 %v1210, 40
      %v1226 = vpop.permute.xlu0 %1225
      %vm1235 = vcmask 388416
      %1236 = vst.msk [vmem:[#allocation3] sm:$0xf] %vm1235, %v1212
      %1237 = vst.msk [vmem:[#allocation3 + $0x4] sm:$0xf] %vm1235, %v1214
      %1238 = vst.msk [vmem:[#allocation3 + $0x8] sm:$0xf] %vm1235, %v1216
      %1239 = vst.msk [vmem:[#allocation3 + $0xc] sm:$0xf] %vm1235, %v1218
      %1240 = vst.msk [vmem:[#allocation3 + $0x10] sm:$0xf] %vm1235, %v1220
      %1241 = vst.msk [vmem:[#allocation3 + $0x14] sm:$0xf] %vm1235, %v1222
      %1242 = vst.msk [vmem:[#allocation3 + $0x18] sm:$0xf] %vm1235, %v1224
      %1243 = vst.msk [vmem:[#allocation3 + $0x1c] sm:$0xf] %vm1235, %v1226
      %s1244 = scalar_lea.vmem [#allocation2], 16
      %v1245 = vld [vmem:[%s1244] sm:$0xf]
      %v1246 = vld [vmem:[%s1244 + $0x8] sm:$0xf]
      %v1247 = vld [vmem:[%s1244 + $0x10] sm:$0xf]
      %v1248 = vld [vmem:[%s1244 + $0x18] sm:$0xf]
      %v1249 = vld [vmem:[%s1244 + $0x20] sm:$0xf]
      %v1250 = vld [vmem:[%s1244 + $0x28] sm:$0xf]
      %v1251 = vld [vmem:[%s1244 + $0x30] sm:$0xf]
      %v1252 = vld [vmem:[%s1244 + $0x38] sm:$0xf]
      %1261 = vrot.lane.b32.xlu0 %v1245, 48
      %v1262 = vpop.permute.xlu0 %1261
      %1263 = vrot.lane.b32.xlu0 %v1246, 48
      %v1264 = vpop.permute.xlu0 %1263
      %1265 = vrot.lane.b32.xlu0 %v1247, 48
      %v1266 = vpop.permute.xlu0 %1265
      %1267 = vrot.lane.b32.xlu0 %v1248, 48
      %v1268 = vpop.permute.xlu0 %1267
      %1269 = vrot.lane.b32.xlu0 %v1249, 48
      %v1270 = vpop.permute.xlu0 %1269
      %1271 = vrot.lane.b32.xlu0 %v1250, 48
      %v1272 = vpop.permute.xlu0 %1271
      %1273 = vrot.lane.b32.xlu0 %v1251, 48
      %v1274 = vpop.permute.xlu0 %1273
      %1275 = vrot.lane.b32.xlu0 %v1252, 48
      %v1276 = vpop.permute.xlu0 %1275
      %vm1285 = vcmask 454016
      %1286 = vst.msk [vmem:[#allocation3] sm:$0xf] %vm1285, %v1262
      %1287 = vst.msk [vmem:[#allocation3 + $0x4] sm:$0xf] %vm1285, %v1264
      %1288 = vst.msk [vmem:[#allocation3 + $0x8] sm:$0xf] %vm1285, %v1266
      %1289 = vst.msk [vmem:[#allocation3 + $0xc] sm:$0xf] %vm1285, %v1268
      %1290 = vst.msk [vmem:[#allocation3 + $0x10] sm:$0xf] %vm1285, %v1270
      %1291 = vst.msk [vmem:[#allocation3 + $0x14] sm:$0xf] %vm1285, %v1272
      %1292 = vst.msk [vmem:[#allocation3 + $0x18] sm:$0xf] %vm1285, %v1274
      %1293 = vst.msk [vmem:[#allocation3 + $0x1c] sm:$0xf] %vm1285, %v1276
      %v1294 = vld [vmem:[%s1244] sm:$0xf]
      %v1295 = vld [vmem:[%s1244 + $0x4] sm:$0x1]
      %v1296 = vld [vmem:[%s1244 + $0x8] sm:$0xf]
      %v1297 = vld [vmem:[%s1244 + $0xc] sm:$0x1]
      %v1298 = vld [vmem:[%s1244 + $0x10] sm:$0xf]
      %v1299 = vld [vmem:[%s1244 + $0x14] sm:$0x1]
      %v1300 = vld [vmem:[%s1244 + $0x18] sm:$0xf]
      %v1301 = vld [vmem:[%s1244 + $0x1c] sm:$0x1]
      %v1302 = vld [vmem:[%s1244 + $0x20] sm:$0xf]
      %v1303 = vld [vmem:[%s1244 + $0x24] sm:$0x1]
      %v1304 = vld [vmem:[%s1244 + $0x28] sm:$0xf]
      %v1305 = vld [vmem:[%s1244 + $0x2c] sm:$0x1]
      %v1306 = vld [vmem:[%s1244 + $0x30] sm:$0xf]
      %v1307 = vld [vmem:[%s1244 + $0x34] sm:$0x1]
      %v1308 = vld [vmem:[%s1244 + $0x38] sm:$0xf]
      %v1309 = vld [vmem:[%s1244 + $0x3c] sm:$0x1]
      %v1311 = vshrl.u32 %v1294, 16
      %v1313 = vrot.slane %v1311, 4
      %v1314 = vshll.u32 %v1294, 16
      %v1316 = vrot.slane %v1314, 5
      %v1317 = vor.u32 %v1313, %v1316
      %v1318 = vrot.slane %v1317, 4
      %v1320 = vshll.u32 %v1295, 16
      %v1322 = vrot.slane %v1320, 5
      %v1323 = vsel %vm691, %v1318, %v1322
      %v1325 = vshrl.u32 %v1296, 16
      %v1327 = vrot.slane %v1325, 4
      %v1328 = vshll.u32 %v1296, 16
      %v1330 = vrot.slane %v1328, 5
      %v1331 = vor.u32 %v1327, %v1330
      %v1332 = vrot.slane %v1331, 4
      %v1334 = vshll.u32 %v1297, 16
      %v1336 = vrot.slane %v1334, 5
      %v1337 = vsel %vm691, %v1332, %v1336
      %v1339 = vshrl.u32 %v1298, 16
      %v1341 = vrot.slane %v1339, 4
      %v1342 = vshll.u32 %v1298, 16
      %v1344 = vrot.slane %v1342, 5
      %v1345 = vor.u32 %v1341, %v1344
      %v1346 = vrot.slane %v1345, 4
      %v1348 = vshll.u32 %v1299, 16
      %v1350 = vrot.slane %v1348, 5
      %v1351 = vsel %vm691, %v1346, %v1350
      %v1353 = vshrl.u32 %v1300, 16
      %v1355 = vrot.slane %v1353, 4
      %v1356 = vshll.u32 %v1300, 16
      %v1358 = vrot.slane %v1356, 5
      %v1359 = vor.u32 %v1355, %v1358
      %v1360 = vrot.slane %v1359, 4
      %v1362 = vshll.u32 %v1301, 16
      %v1364 = vrot.slane %v1362, 5
      %v1365 = vsel %vm691, %v1360, %v1364
      %v1367 = vshrl.u32 %v1302, 16
      %v1369 = vrot.slane %v1367, 4
      %v1370 = vshll.u32 %v1302, 16
      %v1372 = vrot.slane %v1370, 5
      %v1373 = vor.u32 %v1369, %v1372
      %v1374 = vrot.slane %v1373, 4
      %v1376 = vshll.u32 %v1303, 16
      %v1378 = vrot.slane %v1376, 5
      %v1379 = vsel %vm691, %v1374, %v1378
      %v1381 = vshrl.u32 %v1304, 16
      %v1383 = vrot.slane %v1381, 4
      %v1384 = vshll.u32 %v1304, 16
      %v1386 = vrot.slane %v1384, 5
      %v1387 = vor.u32 %v1383, %v1386
      %v1388 = vrot.slane %v1387, 4
      %v1390 = vshll.u32 %v1305, 16
      %v1392 = vrot.slane %v1390, 5
      %v1393 = vsel %vm691, %v1388, %v1392
      %v1395 = vshrl.u32 %v1306, 16
      %v1397 = vrot.slane %v1395, 4
      %v1398 = vshll.u32 %v1306, 16
      %v1400 = vrot.slane %v1398, 5
      %v1401 = vor.u32 %v1397, %v1400
      %v1402 = vrot.slane %v1401, 4
      %v1404 = vshll.u32 %v1307, 16
      %v1406 = vrot.slane %v1404, 5
      %v1407 = vsel %vm691, %v1402, %v1406
      %v1409 = vshrl.u32 %v1308, 16
      %v1411 = vrot.slane %v1409, 4
      %v1412 = vshll.u32 %v1308, 16
      %v1414 = vrot.slane %v1412, 5
      %v1415 = vor.u32 %v1411, %v1414
      %v1416 = vrot.slane %v1415, 4
      %v1418 = vshll.u32 %v1309, 16
      %v1420 = vrot.slane %v1418, 5
      %v1421 = vsel %vm691, %v1416, %v1420
      %1422 = vrot.lane.b32.xlu0 %v1323, 56
      %v1423 = vpop.permute.xlu0 %1422
      %1424 = vrot.lane.b32.xlu0 %v1337, 56
      %v1425 = vpop.permute.xlu0 %1424
      %1426 = vrot.lane.b32.xlu0 %v1351, 56
      %v1427 = vpop.permute.xlu0 %1426
      %1428 = vrot.lane.b32.xlu0 %v1365, 56
      %v1429 = vpop.permute.xlu0 %1428
      %1430 = vrot.lane.b32.xlu0 %v1379, 56
      %v1431 = vpop.permute.xlu0 %1430
      %1432 = vrot.lane.b32.xlu0 %v1393, 56
      %v1433 = vpop.permute.xlu0 %1432
      %1434 = vrot.lane.b32.xlu0 %v1407, 56
      %v1435 = vpop.permute.xlu0 %1434
      %1436 = vrot.lane.b32.xlu0 %v1421, 56
      %v1437 = vpop.permute.xlu0 %1436
      %vm1446 = vcmask 519616
      %1447 = vst.msk [vmem:[#allocation3] sm:$0xf] %vm1446, %v1423
      %1448 = vst.msk [vmem:[#allocation3 + $0x4] sm:$0xf] %vm1446, %v1425
      %1449 = vst.msk [vmem:[#allocation3 + $0x8] sm:$0xf] %vm1446, %v1427
      %1450 = vst.msk [vmem:[#allocation3 + $0xc] sm:$0xf] %vm1446, %v1429
      %1451 = vst.msk [vmem:[#allocation3 + $0x10] sm:$0xf] %vm1446, %v1431
      %1452 = vst.msk [vmem:[#allocation3 + $0x14] sm:$0xf] %vm1446, %v1433
      %1453 = vst.msk [vmem:[#allocation3 + $0x18] sm:$0xf] %vm1446, %v1435
      %1454 = vst.msk [vmem:[#allocation3 + $0x1c] sm:$0xf] %vm1446, %v1437
      %v1455 = vld [vmem:[%s1244] sm:$0xe]
      %v1456 = vld [vmem:[%s1244 + $0x4] sm:$0x1]
      %v1457 = vld [vmem:[%s1244 + $0x8] sm:$0xe]
      %v1458 = vld [vmem:[%s1244 + $0xc] sm:$0x1]
      %v1459 = vld [vmem:[%s1244 + $0x10] sm:$0xe]
      %v1460 = vld [vmem:[%s1244 + $0x14] sm:$0x1]
      %v1461 = vld [vmem:[%s1244 + $0x18] sm:$0xe]
      %v1462 = vld [vmem:[%s1244 + $0x1c] sm:$0x1]
      %v1463 = vld [vmem:[%s1244 + $0x20] sm:$0xe]
      %v1464 = vld [vmem:[%s1244 + $0x24] sm:$0x1]
      %v1465 = vld [vmem:[%s1244 + $0x28] sm:$0xe]
      %v1466 = vld [vmem:[%s1244 + $0x2c] sm:$0x1]
      %v1467 = vld [vmem:[%s1244 + $0x30] sm:$0xe]
      %v1468 = vld [vmem:[%s1244 + $0x34] sm:$0x1]
      %v1469 = vld [vmem:[%s1244 + $0x38] sm:$0xe]
      %v1470 = vld [vmem:[%s1244 + $0x3c] sm:$0x1]
      %v1487 = vrot.slane %v1455, 5
      %v1488 = vrot.slane %v1487, 4
      %v1489 = vrot.slane %v1456, 5
      %v1490 = vsel %vm871, %v1488, %v1489
      %v1491 = vrot.slane %v1457, 5
      %v1492 = vrot.slane %v1491, 4
      %v1493 = vrot.slane %v1458, 5
      %v1494 = vsel %vm871, %v1492, %v1493
      %v1495 = vrot.slane %v1459, 5
      %v1496 = vrot.slane %v1495, 4
      %v1497 = vrot.slane %v1460, 5
      %v1498 = vsel %vm871, %v1496, %v1497
      %v1499 = vrot.slane %v1461, 5
      %v1500 = vrot.slane %v1499, 4
      %v1501 = vrot.slane %v1462, 5
      %v1502 = vsel %vm871, %v1500, %v1501
      %v1503 = vrot.slane %v1463, 5
      %v1504 = vrot.slane %v1503, 4
      %v1505 = vrot.slane %v1464, 5
      %v1506 = vsel %vm871, %v1504, %v1505
      %v1507 = vrot.slane %v1465, 5
      %v1508 = vrot.slane %v1507, 4
      %v1509 = vrot.slane %v1466, 5
      %v1510 = vsel %vm871, %v1508, %v1509
      %v1511 = vrot.slane %v1467, 5
      %v1512 = vrot.slane %v1511, 4
      %v1513 = vrot.slane %v1468, 5
      %v1514 = vsel %vm871, %v1512, %v1513
      %v1515 = vrot.slane %v1469, 5
      %v1516 = vrot.slane %v1515, 4
      %v1517 = vrot.slane %v1470, 5
      %v1518 = vsel %vm871, %v1516, %v1517
      %1519 = vrot.lane.b32.xlu0 %v1490, 64
      %v1520 = vpop.permute.xlu0 %1519
      %1521 = vrot.lane.b32.xlu0 %v1494, 64
      %v1522 = vpop.permute.xlu0 %1521
      %1523 = vrot.lane.b32.xlu0 %v1498, 64
      %v1524 = vpop.permute.xlu0 %1523
      %1525 = vrot.lane.b32.xlu0 %v1502, 64
      %v1526 = vpop.permute.xlu0 %1525
      %1527 = vrot.lane.b32.xlu0 %v1506, 64
      %v1528 = vpop.permute.xlu0 %1527
      %1529 = vrot.lane.b32.xlu0 %v1510, 64
      %v1530 = vpop.permute.xlu0 %1529
      %1531 = vrot.lane.b32.xlu0 %v1514, 64
      %v1532 = vpop.permute.xlu0 %1531
      %1533 = vrot.lane.b32.xlu0 %v1518, 64
      %v1534 = vpop.permute.xlu0 %1533
      %vm1543 = vcmask 585216
      %1544 = vst.msk [vmem:[#allocation3] sm:$0xf] %vm1543, %v1520
      %1545 = vst.msk [vmem:[#allocation3 + $0x4] sm:$0xf] %vm1543, %v1522
      %1546 = vst.msk [vmem:[#allocation3 + $0x8] sm:$0xf] %vm1543, %v1524
      %1547 = vst.msk [vmem:[#allocation3 + $0xc] sm:$0xf] %vm1543, %v1526
      %1548 = vst.msk [vmem:[#allocation3 + $0x10] sm:$0xf] %vm1543, %v1528
      %1549 = vst.msk [vmem:[#allocation3 + $0x14] sm:$0xf] %vm1543, %v1530
      %1550 = vst.msk [vmem:[#allocation3 + $0x18] sm:$0xf] %vm1543, %v1532
      %1551 = vst.msk [vmem:[#allocation3 + $0x1c] sm:$0xf] %vm1543, %v1534
      %v1552 = vld [vmem:[#allocation3] sm:$0xf]
      %v1553 = vld [vmem:[#allocation3 + $0x4] sm:$0xf]
      %v1554 = vld [vmem:[#allocation3 + $0x8] sm:$0xf]
      %v1555 = vld [vmem:[#allocation3 + $0xc] sm:$0xf]
      %v1556 = vld [vmem:[#allocation3 + $0x10] sm:$0xf]
      %v1557 = vld [vmem:[#allocation3 + $0x14] sm:$0xf]
      %v1558 = vld [vmem:[#allocation3 + $0x18] sm:$0xf]
      %v1559 = vld [vmem:[#allocation3 + $0x1c] sm:$0xf]
      %v1560 = vld [vmem:[%s1] sm:$0xf]
      %v1561 = vld [vmem:[%s1 + $0x4] sm:$0xf]
      %v1562 = vld [vmem:[%s1 + $0x8] sm:$0xf]
      %v1563 = vld [vmem:[%s1 + $0xc] sm:$0xf]
      %v1564 = vld [vmem:[%s1 + $0x10] sm:$0xf]
      %v1565 = vld [vmem:[%s1 + $0x14] sm:$0xf]
      %v1566 = vld [vmem:[%s1 + $0x18] sm:$0xf]
      %v1567 = vld [vmem:[%s1 + $0x1c] sm:$0xf]
      %v1568 = vld [vmem:[%s1 + $0x20] sm:$0xf]
      %v1577 = vunpack.c.l.b16 %v1552
      %v1578 = vunpack.c.l.b16 %v1553
      %v1579 = vunpack.c.l.b16 %v1554
      %v1580 = vunpack.c.l.b16 %v1555
      %v1581 = vunpack.c.l.b16 %v1556
      %v1582 = vunpack.c.l.b16 %v1557
      %v1583 = vunpack.c.l.b16 %v1558
      %v1584 = vunpack.c.l.b16 %v1559
      %v1585 = vpack.c.b16 %v1578, %v1577
      %v1586 = vpack.c.b16 %v1580, %v1579
      %v1587 = vpack.c.b16 %v1582, %v1581
      %v1588 = vpack.c.b16 %v1584, %v1583
      %v1598 = vunpack.c.l.b16 %v1560
      %v1599 = vunpack.c.l.b16 %v1561
      %v1600 = vunpack.c.l.b16 %v1562
      %v1601 = vunpack.c.l.b16 %v1563
      %v1602 = vunpack.c.l.b16 %v1564
      %v1603 = vunpack.c.l.b16 %v1565
      %v1604 = vunpack.c.l.b16 %v1566
      %v1605 = vunpack.c.l.b16 %v1567
      %v1606 = vunpack.c.l.b16 %v1568
      %v1607 = vpack.c.b16 %v1599, %v1598
      %v1608 = vpack.c.b16 %v1601, %v1600
      %v1609 = vpack.c.b16 %v1603, %v1602
      %v1610 = vpack.c.b16 %v1605, %v1604
      %v1611 = vpack.c.b16 %v1606, %v1606
      %vm1616 = vcmask 588800
      %v1618 = vsel %vm1616, %v1585, 0
      %v1621 = vsel %vm1616, %v1586, 0
      %v1624 = vsel %vm1616, %v1587, 0
      %v1627 = vsel %vm1616, %v1588, 0
      %vm1629 = vcmask 1043456
      %v1631 = vsel %vm1629, %v1611, 0
      %1633 = vmatprep.subr.bf16.mxu0 0
      %1634 = vmatpush1.bf16.msra.mxu0 0
      %1635 = vmatprep.subr.bf16.mxu0 0
      %1636 = vmatpush1.bf16.msra.mxu0 0
      %1637 = vmatprep.subr.bf16.mxu0 0
      %1638 = vmatpush1.bf16.msra.mxu0 0
      %1639 = vmatprep.subr.bf16.mxu0 0
      %1640 = vmatpush1.bf16.msra.mxu0 %v1631
      %1641 = vmatprep.subr.bf16.mxu0 0
      %1642 = vmatpush1.bf16.msra.mxu0 %v1610
      %1643 = vmatprep.subr.bf16.mxu0 0
      %1644 = vmatpush1.bf16.msra.mxu0 %v1609
      %1645 = vmatprep.subr.bf16.mxu0 0
      %1646 = vmatpush1.bf16.msra.mxu0 %v1608
      %1647 = vmatprep.subr.bf16.mxu0 0
      %1648 = vmatpush1.bf16.msra.mxu0 %v1607
      %1649 = vmatprep.subr.bf16.mxu0 0
      %1650 = vmatpush2.bf16.msra.mxu0 0
      %1651 = vmatprep.subr.bf16.mxu0 0
      %1652 = vmatpush2.bf16.msra.mxu0 0
      %1653 = vmatprep.subr.bf16.mxu0 0
      %1654 = vmatpush2.bf16.msra.mxu0 0
      %1655 = vmatprep.subr.bf16.mxu0 0
      %1656 = vmatpush2.bf16.msra.mxu0 0
      %1657 = vmatprep.subr.bf16.mxu0 0
      %1658 = vmatpush2.bf16.msra.mxu0 0
      %1659 = vmatprep.subr.bf16.mxu0 0
      %1660 = vmatpush2.bf16.msra.mxu0 0
      %1661 = vmatprep.subr.bf16.mxu0 0
      %1662 = vmatpush2.bf16.msra.mxu0 0
      %1663 = vmatprep.subr.bf16.mxu0 0
      %1664 = vmatpush2.bf16.msra.mxu0 0
      %1665 = vmatprep.mubr.bf16.mxu0 0
      %1666 = vmatmul.mubr.bf16.gmra.mxu0 %v1618
      %v1667 = vpop.f32.mrf.mxu0
      %v1668 = vadd.f32 0.0, %v1667
      %v1669 = vpop.f32.mrf.mxu0
      %v1670 = vpop.f32.mrf.mxu0
      %v1671 = vadd.f32 0.0, %v1670
      %v1672 = vpop.f32.mrf.mxu0
      %1673 = vmatprep.mubr.bf16.mxu0 0
      %1674 = vmatmul.mubr.bf16.gmra.mxu0 %v1621
      %v1675 = vpop.f32.mrf.mxu0
      %v1676 = vadd.f32 0.0, %v1675
      %v1677 = vpop.f32.mrf.mxu0
      %v1678 = vpop.f32.mrf.mxu0
      %v1679 = vadd.f32 0.0, %v1678
      %v1680 = vpop.f32.mrf.mxu0
      %1681 = vmatprep.mubr.bf16.mxu0 0
      %1682 = vmatmul.mubr.bf16.gmra.mxu0 %v1624
      %v1683 = vpop.f32.mrf.mxu0
      %v1684 = vadd.f32 0.0, %v1683
      %v1685 = vpop.f32.mrf.mxu0
      %v1686 = vpop.f32.mrf.mxu0
      %v1687 = vadd.f32 0.0, %v1686
      %v1688 = vpop.f32.mrf.mxu0
      %1689 = vmatprep.mubr.bf16.mxu0 0
      %1690 = vmatmul.mubr.bf16.gmra.mxu0 %v1627
      %v1691 = vpop.f32.mrf.mxu0
      %v1692 = vadd.f32 0.0, %v1691
      %v1693 = vpop.f32.mrf.mxu0
      %v1694 = vpop.f32.mrf.mxu0
      %v1695 = vadd.f32 0.0, %v1694
      %v1696 = vpop.f32.mrf.mxu0
      %1697 = vdwg.mxu0
      %v1698 = vld [vmem:[%s385] sm:$0xff]
      %v1699 = vld [vmem:[%s385 + $0x8] sm:$0xff]
      %v1700 = vld [vmem:[%s385 + $0x10] sm:$0xff]
      %v1701 = vld [vmem:[%s385 + $0x18] sm:$0xff]
      %v1702 = vld [vmem:[%s385 + $0x20] sm:$0xff]
      %v1703 = vld [vmem:[%s385 + $0x28] sm:$0xff]
      %v1704 = vld [vmem:[%s385 + $0x30] sm:$0xff]
      %v1705 = vld [vmem:[%s385 + $0x38] sm:$0xff]
      %v1706 = vld [vmem:[%s6] sm:$0x1]
      %v1708 = vlaneseq
      %v1709 = vshrl.u32 %v1708, 7
      %v1710 = vsub.s32 0, %v1709
      %v1711 = vrot.slane %v1706, %v1710
      %v1713 = vmul.f32 %v1698, %v1711
      %v1714 = vmul.f32 %v1699, %v1711
      %v1715 = vmul.f32 %v1700, %v1711
      %v1716 = vmul.f32 %v1701, %v1711
      %v1717 = vmul.f32 %v1702, %v1711
      %v1718 = vmul.f32 %v1703, %v1711
      %v1719 = vmul.f32 %v1704, %v1711
      %v1720 = vmul.f32 %v1705, %v1711
      %v1721 = vld [vmem:[%s7] sm:$0x1]
      %v1723 = vlaneseq
      %v1724 = vshrl.u32 %v1723, 7
      %v1725 = vsub.s32 0, %v1724
      %v1726 = vrot.slane %v1721, %v1725
      %v1728 = vadd.f32 %v1713, %v1726
      %v1729 = vadd.f32 %v1714, %v1726
      %v1730 = vadd.f32 %v1715, %v1726
      %v1731 = vadd.f32 %v1716, %v1726
      %v1732 = vadd.f32 %v1717, %v1726
      %v1733 = vadd.f32 %v1718, %v1726
      %v1734 = vadd.f32 %v1719, %v1726
      %v1735 = vadd.f32 %v1720, %v1726
      %vm1736 = vcmp.ge.f32.partialorder %v1728, 0.0
      %vm1737 = vcmp.ge.f32.partialorder %v1729, 0.0
      %vm1738 = vcmp.ge.f32.partialorder %v1730, 0.0
      %vm1739 = vcmp.ge.f32.partialorder %v1731, 0.0
      %vm1740 = vcmp.ge.f32.partialorder %v1732, 0.0
      %vm1741 = vcmp.ge.f32.partialorder %v1733, 0.0
      %vm1742 = vcmp.ge.f32.partialorder %v1734, 0.0
      %vm1743 = vcmp.ge.f32.partialorder %v1735, 0.0
      %v1744 = vmul.f32 %v1728, 0.1
      %v1745 = vmul.f32 %v1729, 0.1
      %v1746 = vmul.f32 %v1730, 0.1
      %v1747 = vmul.f32 %v1731, 0.1
      %v1748 = vmul.f32 %v1732, 0.1
      %v1749 = vmul.f32 %v1733, 0.1
      %v1750 = vmul.f32 %v1734, 0.1
      %v1751 = vmul.f32 %v1735, 0.1
      %v1752 = vsel %vm1736, %v1728, %v1744
      %v1753 = vsel %vm1737, %v1729, %v1745
      %v1754 = vsel %vm1738, %v1730, %v1746
      %v1755 = vsel %vm1739, %v1731, %v1747
      %v1756 = vsel %vm1740, %v1732, %v1748
      %v1757 = vsel %vm1741, %v1733, %v1749
      %v1758 = vsel %vm1742, %v1734, %v1750
      %v1759 = vsel %vm1743, %v1735, %v1751
      %v1760 = vpack.c.bf16 %v1753, %v1752
      %v1761 = vpack.c.bf16 %v1755, %v1754
      %v1762 = vpack.c.bf16 %v1757, %v1756
      %v1763 = vpack.c.bf16 %v1759, %v1758
      %v1764 = vld [vmem:[%s5] sm:$0x3]
      %vm1765 = vcmask 31744
      %v1767 = vsel %vm1765, %v1760, 0
      %v1770 = vsel %vm1765, %v1761, 0
      %v1773 = vsel %vm1765, %v1762, 0
      %v1776 = vsel %vm1765, %v1763, 0
      %vm1778 = vcmask 1041408
      %v1780 = vsel %vm1778, %v1764, 0
      %1782 = vmatprep.subr.bf16.mxu0 0
      %1783 = vmatpush1.bf16.msra.mxu0 0
      %1784 = vmatprep.subr.bf16.mxu0 0
      %1785 = vmatpush1.bf16.msra.mxu0 0
      %1786 = vmatprep.subr.bf16.mxu0 0
      %1787 = vmatpush1.bf16.msra.mxu0 0
      %1788 = vmatprep.subr.bf16.mxu0 0
      %1789 = vmatpush1.bf16.msra.mxu0 0
      %1790 = vmatprep.subr.bf16.mxu0 0
      %1791 = vmatpush1.bf16.msra.mxu0 0
      %1792 = vmatprep.subr.bf16.mxu0 0
      %1793 = vmatpush1.bf16.msra.mxu0 0
      %1794 = vmatprep.subr.bf16.mxu0 0
      %1795 = vmatpush1.bf16.msra.mxu0 0
      %1796 = vmatprep.subr.bf16.mxu0 0
      %1797 = vmatpush1.bf16.msra.mxu0 %v1780
      %1798 = vmatprep.subr.bf16.mxu0 0
      %1799 = vmatpush2.bf16.msra.mxu0 0
      %1800 = vmatprep.subr.bf16.mxu0 0
      %1801 = vmatpush2.bf16.msra.mxu0 0
      %1802 = vmatprep.subr.bf16.mxu0 0
      %1803 = vmatpush2.bf16.msra.mxu0 0
      %1804 = vmatprep.subr.bf16.mxu0 0
      %1805 = vmatpush2.bf16.msra.mxu0 0
      %1806 = vmatprep.subr.bf16.mxu0 0
      %1807 = vmatpush2.bf16.msra.mxu0 0
      %1808 = vmatprep.subr.bf16.mxu0 0
      %1809 = vmatpush2.bf16.msra.mxu0 0
      %1810 = vmatprep.subr.bf16.mxu0 0
      %1811 = vmatpush2.bf16.msra.mxu0 0
      %1812 = vmatprep.subr.bf16.mxu0 0
      %1813 = vmatpush2.bf16.msra.mxu0 0
      %1814 = vmatprep.mubr.bf16.mxu0 0
      %1815 = vmatmul.mubr.bf16.gmra.mxu0 %v1767
      %v1816 = vpop.f32.mrf.mxu0
      %v1817 = vadd.f32 0.0, %v1816
      %v1818 = vpop.f32.mrf.mxu0
      %v1819 = vpop.f32.mrf.mxu0
      %v1820 = vadd.f32 0.0, %v1819
      %v1821 = vpop.f32.mrf.mxu0
      %1822 = vmatprep.mubr.bf16.mxu0 0
      %1823 = vmatmul.mubr.bf16.gmra.mxu0 %v1770
      %v1824 = vpop.f32.mrf.mxu0
      %v1825 = vadd.f32 0.0, %v1824
      %v1826 = vpop.f32.mrf.mxu0
      %v1827 = vpop.f32.mrf.mxu0
      %v1828 = vadd.f32 0.0, %v1827
      %v1829 = vpop.f32.mrf.mxu0
      %1830 = vmatprep.mubr.bf16.mxu0 0
      %1831 = vmatmul.mubr.bf16.gmra.mxu0 %v1773
      %v1832 = vpop.f32.mrf.mxu0
      %v1833 = vadd.f32 0.0, %v1832
      %v1834 = vpop.f32.mrf.mxu0
      %v1835 = vpop.f32.mrf.mxu0
      %v1836 = vadd.f32 0.0, %v1835
      %v1837 = vpop.f32.mrf.mxu0
      %1838 = vmatprep.mubr.bf16.mxu0 0
      %1839 = vmatmul.mubr.bf16.gmra.mxu0 %v1776
      %v1840 = vpop.f32.mrf.mxu0
      %v1841 = vadd.f32 0.0, %v1840
      %v1842 = vpop.f32.mrf.mxu0
      %v1843 = vpop.f32.mrf.mxu0
      %v1844 = vadd.f32 0.0, %v1843
      %v1845 = vpop.f32.mrf.mxu0
      %1846 = vdwg.mxu0
      %v1847 = vadd.f32 %v1668, %v1817
      %v1848 = vadd.f32 %v1671, %v1820
      %v1849 = vadd.f32 %v1676, %v1825
      %v1850 = vadd.f32 %v1679, %v1828
      %v1851 = vadd.f32 %v1684, %v1833
      %v1852 = vadd.f32 %v1687, %v1836
      %v1853 = vadd.f32 %v1692, %v1841
      %v1854 = vadd.f32 %v1695, %v1844
      %v1855 = vadd.f32 %v1847, 0.0
      %v1856 = vadd.f32 %v1848, 0.0
      %v1857 = vadd.f32 %v1849, 0.0
      %v1858 = vadd.f32 %v1850, 0.0
      %v1859 = vadd.f32 %v1851, 0.0
      %v1860 = vadd.f32 %v1852, 0.0
      %v1861 = vadd.f32 %v1853, 0.0
      %v1862 = vadd.f32 %v1854, 0.0
      %vm1863 = vcmask 64512
      %v1864 = vsel %vm1863, %v1855, 0.0
      %v1865 = vsel %vm1863, %v1856, 0.0
      %v1866 = vadd.f32 %v1864, %v1865
      %v1867 = vsel %vm1863, %v1857, 0.0
      %v1868 = vadd.f32 %v1866, %v1867
      %v1869 = vsel %vm1863, %v1858, 0.0
      %v1870 = vadd.f32 %v1868, %v1869
      %v1871 = vsel %vm1863, %v1859, 0.0
      %v1872 = vadd.f32 %v1870, %v1871
      %v1873 = vsel %vm1863, %v1860, 0.0
      %v1874 = vadd.f32 %v1872, %v1873
      %v1875 = vsel %vm1863, %v1861, 0.0
      %v1876 = vadd.f32 %v1874, %v1875
      %v1877 = vsel %vm1863, %v1862, 0.0
      %v1878 = vadd.f32 %v1876, %v1877
      %v1879 = vrot.slane %v1878, 4
      %v1880 = vadd.f32 %v1878, %v1879
      %v1881 = vrot.slane %v1880, 2
      %v1882 = vadd.f32 %v1880, %v1881
      %v1883 = vrot.slane %v1882, 1
      %v1884 = vadd.f32 %v1882, %v1883
      %1885 = vst.msk [vmem:[%s393] sm:$0x1] %vm478, %v1884
      %v1886 = vmul.f32 %v1847, %v1847
      %v1887 = vmul.f32 %v1848, %v1848
      %v1888 = vmul.f32 %v1849, %v1849
      %v1889 = vmul.f32 %v1850, %v1850
      %v1890 = vmul.f32 %v1851, %v1851
      %v1891 = vmul.f32 %v1852, %v1852
      %v1892 = vmul.f32 %v1853, %v1853
      %v1893 = vmul.f32 %v1854, %v1854
      %v1894 = vadd.f32 %v1886, 0.0
      %v1895 = vadd.f32 %v1887, 0.0
      %v1896 = vadd.f32 %v1888, 0.0
      %v1897 = vadd.f32 %v1889, 0.0
      %v1898 = vadd.f32 %v1890, 0.0
      %v1899 = vadd.f32 %v1891, 0.0
      %v1900 = vadd.f32 %v1892, 0.0
      %v1901 = vadd.f32 %v1893, 0.0
      %v1902 = vsel %vm1863, %v1894, 0.0
      %v1903 = vsel %vm1863, %v1895, 0.0
      %v1904 = vadd.f32 %v1902, %v1903
      %v1905 = vsel %vm1863, %v1896, 0.0
      %v1906 = vadd.f32 %v1904, %v1905
      %v1907 = vsel %vm1863, %v1897, 0.0
      %v1908 = vadd.f32 %v1906, %v1907
      %v1909 = vsel %vm1863, %v1898, 0.0
      %v1910 = vadd.f32 %v1908, %v1909
      %v1911 = vsel %vm1863, %v1899, 0.0
      %v1912 = vadd.f32 %v1910, %v1911
      %v1913 = vsel %vm1863, %v1900, 0.0
      %v1914 = vadd.f32 %v1912, %v1913
      %v1915 = vsel %vm1863, %v1901, 0.0
      %v1916 = vadd.f32 %v1914, %v1915
      %v1917 = vrot.slane %v1916, 4
      %v1918 = vadd.f32 %v1916, %v1917
      %v1919 = vrot.slane %v1918, 2
      %v1920 = vadd.f32 %v1918, %v1919
      %v1921 = vrot.slane %v1920, 1
      %v1922 = vadd.f32 %v1920, %v1921
      %1923 = vst.msk [vmem:[%s396] sm:$0x1] %vm478, %v1922
      %v1924 = vpack.c.bf16 %v1848, %v1847
      %v1925 = vpack.c.bf16 %v1850, %v1849
      %v1926 = vpack.c.bf16 %v1852, %v1851
      %v1927 = vpack.c.bf16 %v1854, %v1853
      %v1932 = vunpack.c.l.b16 %v1924
      %v1933 = vunpack.c.h.b16 %v1924
      %v1934 = vunpack.c.l.b16 %v1925
      %v1935 = vunpack.c.h.b16 %v1925
      %v1936 = vunpack.c.l.b16 %v1926
      %v1937 = vunpack.c.h.b16 %v1926
      %v1938 = vunpack.c.l.b16 %v1927
      %v1939 = vunpack.c.h.b16 %v1927
      %v1940 = vpack.c.b16 %v1932, %v1932
      %v1941 = vpack.c.b16 %v1933, %v1933
      %v1942 = vpack.c.b16 %v1934, %v1934
      %v1943 = vpack.c.b16 %v1935, %v1935
      %v1944 = vpack.c.b16 %v1936, %v1936
      %v1945 = vpack.c.b16 %v1937, %v1937
      %v1946 = vpack.c.b16 %v1938, %v1938
      %v1947 = vpack.c.b16 %v1939, %v1939
      %1956 = vst.msk [vmem:[%s390] sm:$0xf] %vm476, %v1940
      %1957 = vst.msk [vmem:[%s390 + $0x4] sm:$0xf] %vm476, %v1941
      %1958 = vst.msk [vmem:[%s390 + $0x8] sm:$0xf] %vm476, %v1942
      %1959 = vst.msk [vmem:[%s390 + $0xc] sm:$0xf] %vm476, %v1943
      %1960 = vst.msk [vmem:[%s390 + $0x10] sm:$0xf] %vm476, %v1944
      %1961 = vst.msk [vmem:[%s390 + $0x14] sm:$0xf] %vm476, %v1945
      %1962 = vst.msk [vmem:[%s390 + $0x18] sm:$0xf] %vm476, %v1946
      %1963 = vst.msk [vmem:[%s390 + $0x1c] sm:$0xf] %vm476, %v1947
      %p1964 = scmp.lt.s32.totalorder %s22, 1
      %s1965 = scalar_select %p1964, %s22, 1
      %s1966 = smul.addr %s1965, 8
      %s1967 = smul.addr %s1966, 4
      %s1968 = scalar_lea.vmem %s8, %s1967
      %p1969 = scmp.lt.s32.totalorder %s22, 1
      %s1970 = scalar_select %p1969, %s22, 1
      %s1971 = scalar_lea.vmem %s9, %s1970
      %p1972 = scmp.lt.s32.totalorder %s22, 1
      %s1973 = scalar_select %p1972, %s22, 1
      %s1974 = scalar_lea.vmem %s10, %s1973
      // Predicated region
      $region53: #{_lambda_.7} parent=51 // pred_check
        %p1975 = pneg %p218
      $region54: #{_lambda_.7} parent=51 // pred_check_branch
        %1977 = sbr.rel (%p1975) target = $region56
      $region55: #{_lambda_.7} parent=51 // pred_region
        _
      $region56: #{_lambda_.7} parent=51 // pred_fallthru
        _
      // Predicated region
      $region57: #{_lambda_.7} parent=51 // pred_check
        %p1978 = pneg %p244
      $region58: #{_lambda_.7} parent=51 // pred_check_branch
        %1980 = sbr.rel (%p1978) target = $region60
      $region59: #{_lambda_.7} parent=51 // pred_region
        _
      $region60: #{_lambda_.7} parent=51 // pred_fallthru
        _
      // Predicated region
      $region61: #{_lambda_.7} parent=51 // pred_check
        %p1981 = pneg %p270
      $region62: #{_lambda_.7} parent=51 // pred_check_branch
        %1983 = sbr.rel (%p1981) target = $region64
      $region63: #{_lambda_.7} parent=51 // pred_region
        _
      $region64: #{_lambda_.7} parent=51 // pred_fallthru
        _
    $region52: #{_lambda_.7} parent=5 // pred_fallthru
      _
    %p1984 = scmp.le.s32.totalorder 2, %s17
    // Predicated region
    $region65: #{_lambda_.7} parent=5 // pred_check
      %p1985 = pneg %p1984
    $region66: #{_lambda_.7} parent=5 // pred_check_branch
      %1987 = sbr.rel (%p1985) target = $region68
    $region67: #{_lambda_.7} parent=5 // pred_region
      %s1988 = ssub.s32 %s17, 2
      // Predicated region
      $region69: #{_lambda_.7} parent=67 // pred_check
        %p1989 = pneg %p224
      $region70: #{_lambda_.7} parent=67 // pred_check_branch
        %1991 = sbr.rel (%p1989) target = $region72
      $region71: #{_lambda_.7} parent=67 // pred_region
        %p1992 = scmp.lt.s32.totalorder %s23, 1
        %s1993 = scalar_select %p1992, %s23, 1
        %s1994 = smul.addr %s1993, 8
        %s1995 = smul.addr %s1994, 4
        %s1996 = scalar_lea.vmem %s8, %s1995
      $region72: #{_lambda_.7} parent=67 // pred_fallthru
        _
      // Predicated region
      $region73: #{_lambda_.7} parent=67 // pred_check
        %p1997 = pneg %p250
      $region74: #{_lambda_.7} parent=67 // pred_check_branch
        %1999 = sbr.rel (%p1997) target = $region76
      $region75: #{_lambda_.7} parent=67 // pred_region
        %p2000 = scmp.lt.s32.totalorder %s23, 1
        %s2001 = scalar_select %p2000, %s23, 1
        %s2002 = scalar_lea.vmem %s9, %s2001
      $region76: #{_lambda_.7} parent=67 // pred_fallthru
        _
      // Predicated region
      $region77: #{_lambda_.7} parent=67 // pred_check
        %p2003 = pneg %p276
      $region78: #{_lambda_.7} parent=67 // pred_check_branch
        %2005 = sbr.rel (%p2003) target = $region80
      $region79: #{_lambda_.7} parent=67 // pred_region
        %p2006 = scmp.lt.s32.totalorder %s23, 1
        %s2007 = scalar_select %p2006, %s23, 1
        %s2008 = scalar_lea.vmem %s10, %s2007
      $region80: #{_lambda_.7} parent=67 // pred_fallthru
        _
    $region68: #{_lambda_.7} parent=5 // pred_fallthru
      _
  $region6: #{_lambda_.7} parent=0 // loop_footer
    %s21 = sadd.s32 1, %s17
  $region7: #{_lambda_.7} parent=0 // loop_footer_branch
    %16 = sbr.rel target = $region3
  $region8: #{_lambda_.7} parent=0 // loop_exit
    _

// kernel: _lambda_.9
$region0: #{_lambda_.9}
  #allocation0 [shape = 'u32[]', space=smem, size = 0x4, offset = 0x4, fixed_abs, tag = 'smem constant byte address 0x4 - core index']
  #allocation1 [shape = 'u32[144,128]{1,0:T(1,128)}', space=vmem, size = 0x12000, scoped, tag = 'internal scratch']
  #allocation2 [shape = 'bf16[1,10,10,8]{3,2,1,0:T(8,128)(2,1)}', space=vmem, size = 0xa000, scoped, tag = 'scratch operand']
  #allocation3 [shape = 'bf16[64,72]{1,0:T(8,128)(2,1)}', space=vmem, size = 0x4000, scoped, tag = 'scratch operand']
  %s0 = inlined_call_operand.vmem [shape: bf16[2,8,8,8], index: 0, kind: input, shape index: {}]
  %s1 = inlined_call_operand.vmem [shape: bf16[72,8], index: 1, kind: input, shape index: {}]
  %s2 = inlined_call_operand.vmem [shape: f32[1,8], index: 2, kind: input, shape index: {}]
  %s3 = inlined_call_operand.vmem [shape: f32[1,8], index: 3, kind: input, shape index: {}]
  %s4 = inlined_call_operand.vmem [shape: bf16[2,64,8], index: 4, kind: input, shape index: {}]
  %s5 = inlined_call_operand.vmem [shape: bf16[2,64,8], index: 5, kind: output, shape index: {0}]
  %s6 = inlined_call_operand.hbm [shape: f32[2,1,8], index: 6, kind: output, shape index: {1}]
  %s7 = inlined_call_operand.hbm [shape: f32[2,1,8], index: 7, kind: output, shape index: {2}]
  %8 = xla_tuple %s5, %s6, %s7
  %s9 = sld [smem:[#allocation0]]
  $region69: #{_lambda_.9} parent=0
    _
  %s11 = ssub.s32 1, %s9
  %s12 = scalar_select 0, %s11, %s9
  $region1: #{_lambda_.9} parent=0
    #allocation4 [shape = 'u8[1024]{0}', space=vmem, size = 0x400, scoped, tag = 'output window, operand 1']
    #allocation5 [shape = 's32[2]{0}', space=sflag, size = 0x8, scoped, tag = 'scoped memory for _lambda_.9']
    #allocation6 [shape = 'u8[1024]{0}', space=vmem, size = 0x400, scoped, tag = 'output window, operand 2']
    #allocation7 [shape = 's32[2]{0}', space=sflag, size = 0x8, scoped, tag = 'scoped memory for _lambda_.9']
    %13 = vsyncpa [#allocation5], 0
    %s14 = scalar_lea.sflag [#allocation5], 1
    %15 = vsyncpa %s14, 0
    %16 = vsyncpa [#allocation7], 0
    %s17 = scalar_lea.sflag [#allocation7], 1
    %18 = vsyncpa %s17, 0
    loop: start=0, step=1, limit=4
    $region2: #{_lambda_.9} parent=1 // loop_pre_header
      _
    $region3: #{_lambda_.9} parent=1 // loop_header
      %s20 = sphi 0, %s24
      %p21 = scmp.ge.s32.totalorder %s20, 4
      %s30 = sphi 0, %s32
      %s33 = sphi 0, %s30
      %s34 = sphi 0, %s33
      %s50 = sphi 0, %s34
      %s54 = sphi 0, %s54
      %s56 = sphi 0, %s54
      %s57 = sphi 0, %s56
      %s71 = sphi 0, %s57
      %s75 = sphi 0, %s75
      %s77 = sphi 0, %s75
      %s78 = sphi 0, %s77
      %s92 = sphi 0, %s78
      %s96 = sphi 0, %s96
      %s98 = sphi 0, %s96
      %s99 = sphi 0, %s98
      %s113 = sphi 0, %s99
      %s119 = sphi 0, %s121
      %s122 = sphi 0, %s119
      %s123 = sphi 0, %s122
      %s139 = sphi 0, %s123
      %s145 = sphi 0, %s147
      %s148 = sphi 0, %s145
      %s149 = sphi 0, %s148
      %s165 = sphi 0, %s149
      %s171 = sphi 0, %s173
      %s174 = sphi 0, %s171
      %s175 = sphi 0, %s174
      %s191 = sphi 0, %s175
      %s197 = sphi 0, %s199
      %s200 = sphi 0, %s197
      %s201 = sphi 0, %s200
      %s217 = sphi 0, %s201
    $region4: #{_lambda_.9} parent=1 // loop_header_branch
      %23 = sbr.rel (%p21) target = $region8
    $region5: #{_lambda_.9} parent=1 // loop_body
      %s25 = ssub.s32 %s20, 1
      %s26 = ssub.s32 %s20, 2
      %s27 = sadd.s32 %s20, 1
      %s28 = ssub.s32 %s20, %s27
      %p29 = scmp.eq.s32.totalorder %s28, 0
      %s31 = sadd.s32 %s30, 1
      %s32 = scalar_select %p29, %s30, %s31
      %p35 = pneg %p29
      %p36 = scmp.eq.s32.totalorder %s20, 1
      %p37 = por %p35, %p36
      %p38 = scmp.ne.s32.totalorder %s30, %s33
      %p39 = scmp.eq.s32.totalorder %s20, 0
      %p40 = por %p38, %p39
      %p41 = scmp.ne.s32.totalorder %s30, %s33
      %p42 = scmp.eq.s32.totalorder %s25, 1
      %p43 = por %p41, %p42
      %p44 = scmp.ne.s32.totalorder %s33, %s34
      %p45 = scmp.eq.s32.totalorder %s25, 0
      %p46 = por %p44, %p45
      %p47 = scmp.ne.s32.totalorder %s33, %s34
      %p48 = scmp.eq.s32.totalorder %s26, 1
      %p49 = por %p47, %p48
      %p51 = scmp.ne.s32.totalorder %s34, %s50
      %p52 = scmp.eq.s32.totalorder %s26, 0
      %p53 = por %p51, %p52
      %s55 = sadd.s32 %s54, 1
      %p58 = scmp.eq.s32.totalorder %s20, 1
      %p59 = scmp.ne.s32.totalorder %s54, %s56
      %p60 = scmp.eq.s32.totalorder %s20, 0
      %p61 = por %p59, %p60
      %p62 = scmp.ne.s32.totalorder %s54, %s56
      %p63 = scmp.eq.s32.totalorder %s25, 1
      %p64 = por %p62, %p63
      %p65 = scmp.ne.s32.totalorder %s56, %s57
      %p66 = scmp.eq.s32.totalorder %s25, 0
      %p67 = por %p65, %p66
      %p68 = scmp.ne.s32.totalorder %s56, %s57
      %p69 = scmp.eq.s32.totalorder %s26, 1
      %p70 = por %p68, %p69
      %p72 = scmp.ne.s32.totalorder %s57, %s71
      %p73 = scmp.eq.s32.totalorder %s26, 0
      %p74 = por %p72, %p73
      %s76 = sadd.s32 %s75, 1
      %p79 = scmp.eq.s32.totalorder %s20, 1
      %p80 = scmp.ne.s32.totalorder %s75, %s77
      %p81 = scmp.eq.s32.totalorder %s20, 0
      %p82 = por %p80, %p81
      %p83 = scmp.ne.s32.totalorder %s75, %s77
      %p84 = scmp.eq.s32.totalorder %s25, 1
      %p85 = por %p83, %p84
      %p86 = scmp.ne.s32.totalorder %s77, %s78
      %p87 = scmp.eq.s32.totalorder %s25, 0
      %p88 = por %p86, %p87
      %p89 = scmp.ne.s32.totalorder %s77, %s78
      %p90 = scmp.eq.s32.totalorder %s26, 1
      %p91 = por %p89, %p90
      %p93 = scmp.ne.s32.totalorder %s78, %s92
      %p94 = scmp.eq.s32.totalorder %s26, 0
      %p95 = por %p93, %p94
      %s97 = sadd.s32 %s96, 1
      %p100 = scmp.eq.s32.totalorder %s20, 1
      %p101 = scmp.ne.s32.totalorder %s96, %s98
      %p102 = scmp.eq.s32.totalorder %s20, 0
      %p103 = por %p101, %p102
      %p104 = scmp.ne.s32.totalorder %s96, %s98
      %p105 = scmp.eq.s32.totalorder %s25, 1
      %p106 = por %p104, %p105
      %p107 = scmp.ne.s32.totalorder %s98, %s99
      %p108 = scmp.eq.s32.totalorder %s25, 0
      %p109 = por %p107, %p108
      %p110 = scmp.ne.s32.totalorder %s98, %s99
      %p111 = scmp.eq.s32.totalorder %s26, 1
      %p112 = por %p110, %p111
      %p114 = scmp.ne.s32.totalorder %s99, %s113
      %p115 = scmp.eq.s32.totalorder %s26, 0
      %p116 = por %p114, %p115
      %s117 = ssub.s32 %s20, %s27
      %p118 = scmp.eq.s32.totalorder %s117, 0
      %s120 = sadd.s32 %s119, 1
      %s121 = scalar_select %p118, %s119, %s120
      %p124 = pneg %p118
      %p125 = scmp.eq.s32.totalorder %s20, 1
      %p126 = por %p124, %p125
      %p127 = scmp.ne.s32.totalorder %s119, %s122
      %p128 = scmp.eq.s32.totalorder %s20, 0
      %p129 = por %p127, %p128
      %p130 = scmp.ne.s32.totalorder %s119, %s122
      %p131 = scmp.eq.s32.totalorder %s25, 1
      %p132 = por %p130, %p131
      %p133 = scmp.ne.s32.totalorder %s122, %s123
      %p134 = scmp.eq.s32.totalorder %s25, 0
      %p135 = por %p133, %p134
      %p136 = scmp.ne.s32.totalorder %s122, %s123
      %p137 = scmp.eq.s32.totalorder %s26, 1
      %p138 = por %p136, %p137
      %p140 = scmp.ne.s32.totalorder %s123, %s139
      %p141 = scmp.eq.s32.totalorder %s26, 0
      %p142 = por %p140, %p141
      %s143 = ssub.s32 %s20, %s27
      %p144 = scmp.eq.s32.totalorder %s143, 0
      %s146 = sadd.s32 %s145, 1
      %s147 = scalar_select %p144, %s145, %s146
      %p150 = pneg %p144
      %p151 = scmp.eq.s32.totalorder %s20, 1
      %p152 = por %p150, %p151
      %p153 = scmp.ne.s32.totalorder %s145, %s148
      %p154 = scmp.eq.s32.totalorder %s20, 0
      %p155 = por %p153, %p154
      %p156 = scmp.ne.s32.totalorder %s145, %s148
      %p157 = scmp.eq.s32.totalorder %s25, 1
      %p158 = por %p156, %p157
      %p159 = scmp.ne.s32.totalorder %s148, %s149
      %p160 = scmp.eq.s32.totalorder %s25, 0
      %p161 = por %p159, %p160
      %p162 = scmp.ne.s32.totalorder %s148, %s149
      %p163 = scmp.eq.s32.totalorder %s26, 1
      %p164 = por %p162, %p163
      %p166 = scmp.ne.s32.totalorder %s149, %s165
      %p167 = scmp.eq.s32.totalorder %s26, 0
      %p168 = por %p166, %p167
      %s169 = ssub.s32 %s20, %s27
      %p170 = scmp.eq.s32.totalorder %s169, 0
      %s172 = sadd.s32 %s171, 1
      %s173 = scalar_select %p170, %s171, %s172
      %p176 = pneg %p170
      %p177 = scmp.eq.s32.totalorder %s20, 1
      %p178 = por %p176, %p177
      %p179 = scmp.ne.s32.totalorder %s171, %s174
      %p180 = scmp.eq.s32.totalorder %s20, 0
      %p181 = por %p179, %p180
      %p182 = scmp.ne.s32.totalorder %s171, %s174
      %p183 = scmp.eq.s32.totalorder %s25, 1
      %p184 = por %p182, %p183
      %p185 = scmp.ne.s32.totalorder %s174, %s175
      %p186 = scmp.eq.s32.totalorder %s25, 0
      %p187 = por %p185, %p186
      %p188 = scmp.ne.s32.totalorder %s174, %s175
      %p189 = scmp.eq.s32.totalorder %s26, 1
      %p190 = por %p188, %p189
      %p192 = scmp.ne.s32.totalorder %s175, %s191
      %p193 = scmp.eq.s32.totalorder %s26, 0
      %p194 = por %p192, %p193
      %s195 = ssub.s32 %s20, %s27
      %p196 = scmp.eq.s32.totalorder %s195, 0
      %s198 = sadd.s32 %s197, 1
      %s199 = scalar_select %p196, %s197, %s198
      %p202 = pneg %p196
      %p203 = scmp.eq.s32.totalorder %s20, 1
      %p204 = por %p202, %p203
      %p205 = scmp.ne.s32.totalorder %s197, %s200
      %p206 = scmp.eq.s32.totalorder %s20, 0
      %p207 = por %p205, %p206
      %p208 = scmp.ne.s32.totalorder %s197, %s200
      %p209 = scmp.eq.s32.totalorder %s25, 1
      %p210 = por %p208, %p209
      %p211 = scmp.ne.s32.totalorder %s200, %s201
      %p212 = scmp.eq.s32.totalorder %s25, 0
      %p213 = por %p211, %p212
      %p214 = scmp.ne.s32.totalorder %s200, %s201
      %p215 = scmp.eq.s32.totalorder %s26, 1
      %p216 = por %p214, %p215
      %p218 = scmp.ne.s32.totalorder %s201, %s217
      %p219 = scmp.eq.s32.totalorder %s26, 0
      %p220 = por %p218, %p219
      %p221 = scmp.le.s32.totalorder 1, %s20
      %p222 = scmp.lt.s32.totalorder %s20, 3
      %p223 = pnand %p221, %p222
      %p224 = pneg %p223
      // Predicated region
      $region9: #{_lambda_.9} parent=5 // pred_check
        _
      $region10: #{_lambda_.9} parent=5 // pred_check_branch
        %226 = sbr.rel (%p223) target = $region12
      $region11: #{_lambda_.9} parent=5 // pred_region
        %s227 = ssub.s32 %s20, 1
        // Predicated region
        $region13: #{_lambda_.9} parent=11 // pred_check
          %p228 = pneg %p67
        $region14: #{_lambda_.9} parent=11 // pred_check_branch
          %230 = sbr.rel (%p228) target = $region16
        $region15: #{_lambda_.9} parent=11 // pred_region
          _
        $region16: #{_lambda_.9} parent=11 // pred_fallthru
          _
        // Predicated region
        $region17: #{_lambda_.9} parent=11 // pred_check
          %p231 = pneg %p88
        $region18: #{_lambda_.9} parent=11 // pred_check_branch
          %233 = sbr.rel (%p231) target = $region20
        $region19: #{_lambda_.9} parent=11 // pred_region
          _
        $region20: #{_lambda_.9} parent=11 // pred_fallthru
          _
        // Predicated region
        $region21: #{_lambda_.9} parent=11 // pred_check
          %p234 = pneg %p109
        $region22: #{_lambda_.9} parent=11 // pred_check_branch
          %236 = sbr.rel (%p234) target = $region24
        $region23: #{_lambda_.9} parent=11 // pred_region
          _
        $region24: #{_lambda_.9} parent=11 // pred_fallthru
          _
      $region12: #{_lambda_.9} parent=5 // pred_fallthru
        _
      %p237 = scmp.lt.s32.totalorder %s20, 2
      // Predicated region
      $region25: #{_lambda_.9} parent=5 // pred_check
        %p238 = pneg %p237
      $region26: #{_lambda_.9} parent=5 // pred_check_branch
        %240 = sbr.rel (%p238) target = $region28
      $region27: #{_lambda_.9} parent=5 // pred_region
        // Predicated region
        $region29: #{_lambda_.9} parent=27 // pred_check
          %p241 = pneg %p40
        $region30: #{_lambda_.9} parent=27 // pred_check_branch
          %243 = sbr.rel (%p241) target = $region32
        $region31: #{_lambda_.9} parent=27 // pred_region
          %p244 = scmp.lt.s32.totalorder %s20, 1
          %s245 = scalar_select %p244, %s20, 1
          %s246 = smul.addr %s245, 8
          %s247 = smul.addr %s246, 4
          %s248 = scalar_lea.vmem %s0, %s247
        $region32: #{_lambda_.9} parent=27 // pred_fallthru
          _
        // Predicated region
        $region33: #{_lambda_.9} parent=27 // pred_check
          %p249 = pneg %p129
        $region34: #{_lambda_.9} parent=27 // pred_check_branch
          %251 = sbr.rel (%p249) target = $region36
        $region35: #{_lambda_.9} parent=27 // pred_region
          %p252 = scmp.lt.s32.totalorder %s20, 1
          %s253 = scalar_select %p252, %s20, 1
          %s254 = smul.addr %s253, 8
          %s255 = smul.addr %s254, 4
          %s256 = scalar_lea.vmem %s4, %s255
        $region36: #{_lambda_.9} parent=27 // pred_fallthru
          _
      $region28: #{_lambda_.9} parent=5 // pred_fallthru
        _
      %p257 = scmp.le.s32.totalorder 1, %s20
      %p258 = scmp.lt.s32.totalorder %s20, 3
      %p259 = pnand %p257, %p258
      %p260 = pneg %p259
      // Predicated region
      $region37: #{_lambda_.9} parent=5 // pred_check
        _
      $region38: #{_lambda_.9} parent=5 // pred_check_branch
        %262 = sbr.rel (%p259) target = $region40
      $region39: #{_lambda_.9} parent=5 // pred_region
        %s263 = ssub.s32 %s20, 1
        %p264 = scmp.lt.s32.totalorder %s25, 1
        %s265 = scalar_select %p264, %s25, 1
        %s266 = smul.addr %s265, 8
        %s267 = smul.addr %s266, 4
        %s268 = scalar_lea.vmem %s0, %s267
        %p269 = pneg %p46
        %p270 = pneg %p43
        %p271 = pneg %p67
        %p272 = pneg %p64
        %p273 = pneg %p88
        %p274 = pneg %p85
        %p275 = pneg %p109
        %p276 = pneg %p106
        %p277 = scmp.lt.s32.totalorder %s25, 1
        %s278 = scalar_select %p277, %s25, 1
        %s279 = smul.addr %s278, 8
        %s280 = smul.addr %s279, 4
        %s281 = scalar_lea.vmem %s4, %s280
        %p282 = pneg %p135
        %p283 = pneg %p132
        %p284 = pneg %p161
        %p285 = pneg %p158
        %p286 = scmp.lt.s32.totalorder %s25, 1
        %s287 = scalar_select %p286, %s25, 1
        %s288 = smul.addr %s287, 8
        %s289 = smul.addr %s288, 4
        %s290 = scalar_lea.vmem %s5, %s289
        %p291 = pneg %p187
        %p292 = pneg %p184
        %s293 = sand.u32 %s174, 1
        %s294 = scalar_lea.sflag [#allocation5], %s293
        %s295 = sand.u32 %s174, 1
        %s296 = scalar_lea.vmem [#allocation4], %s295
        %p297 = pneg %p213
        %p298 = pneg %p210
        %s299 = sand.u32 %s200, 1
        %s300 = scalar_lea.sflag [#allocation7], %s299
        %s301 = sand.u32 %s200, 1
        %s302 = scalar_lea.vmem [#allocation6], %s301
        %p303 = scmp.lt.s32.totalorder %s25, 1
        %s304 = scalar_select %p303, %s25, 1
        %s305 = smul.addr %s304, 8
        %s306 = smul.addr %s305, 4
        %s307 = scalar_lea.vmem %s0, %s306
        %p308 = scmp.lt.s32.totalorder %s25, 1
        %s309 = scalar_select %p308, %s25, 1
        %s310 = smul.addr %s309, 8
        %s311 = smul.addr %s310, 4
        %s312 = scalar_lea.vmem %s4, %s311
        %p313 = scmp.lt.s32.totalorder %s25, 1
        %s314 = scalar_select %p313, %s25, 1
        %s315 = smul.addr %s314, 8
        %s316 = smul.addr %s315, 4
        %s317 = scalar_lea.vmem %s5, %s316
        %v319 = vld [vmem:[%s307] sm:$0xf]
        %v320 = vld [vmem:[%s307 + $0x4] sm:$0xf]
        %v321 = vld [vmem:[%s307 + $0x8] sm:$0xf]
        %v322 = vld [vmem:[%s307 + $0xc] sm:$0xf]
        %v323 = vld [vmem:[%s307 + $0x10] sm:$0xf]
        %v324 = vld [vmem:[%s307 + $0x14] sm:$0xf]
        %v325 = vld [vmem:[%s307 + $0x18] sm:$0xf]
        %v326 = vld [vmem:[%s307 + $0x1c] sm:$0xf]
        %v327 = vunpack.c.l.bf16 %v319
        %v328 = vunpack.c.l.bf16 %v320
        %v329 = vunpack.c.l.bf16 %v321
        %v330 = vunpack.c.l.bf16 %v322
        %v331 = vunpack.c.l.bf16 %v323
        %v332 = vunpack.c.l.bf16 %v324
        %v333 = vunpack.c.l.bf16 %v325
        %v334 = vunpack.c.l.bf16 %v326
        %v335 = vld [vmem:[%s2] sm:$0x1]
        %v337 = vlaneseq
        %v338 = vshrl.u32 %v337, 7
        %v339 = vsub.s32 0, %v338
        %v340 = vrot.slane %v335, %v339
        %v342 = vmul.f32 %v327, %v340
        %v343 = vmul.f32 %v328, %v340
        %v344 = vmul.f32 %v329, %v340
        %v345 = vmul.f32 %v330, %v340
        %v346 = vmul.f32 %v331, %v340
        %v347 = vmul.f32 %v332, %v340
        %v348 = vmul.f32 %v333, %v340
        %v349 = vmul.f32 %v334, %v340
        %v350 = vld [vmem:[%s3] sm:$0x1]
        %v352 = vlaneseq
        %v353 = vshrl.u32 %v352, 7
        %v354 = vsub.s32 0, %v353
        %v355 = vrot.slane %v350, %v354
        %v357 = vadd.f32 %v342, %v355
        %v358 = vadd.f32 %v343, %v355
        %v359 = vadd.f32 %v344, %v355
        %v360 = vadd.f32 %v345, %v355
        %v361 = vadd.f32 %v346, %v355
        %v362 = vadd.f32 %v347, %v355
        %v363 = vadd.f32 %v348, %v355
        %v364 = vadd.f32 %v349, %v355
        %vm365 = vcmp.ge.f32.partialorder %v357, 0.0
        %vm366 = vcmp.ge.f32.partialorder %v358, 0.0
        %vm367 = vcmp.ge.f32.partialorder %v359, 0.0
        %vm368 = vcmp.ge.f32.partialorder %v360, 0.0
        %vm369 = vcmp.ge.f32.partialorder %v361, 0.0
        %vm370 = vcmp.ge.f32.partialorder %v362, 0.0
        %vm371 = vcmp.ge.f32.partialorder %v363, 0.0
        %vm372 = vcmp.ge.f32.partialorder %v364, 0.0
        %v373 = vmul.f32 %v357, 0.1
        %v374 = vmul.f32 %v358, 0.1
        %v375 = vmul.f32 %v359, 0.1
        %v376 = vmul.f32 %v360, 0.1
        %v377 = vmul.f32 %v361, 0.1
        %v378 = vmul.f32 %v362, 0.1
        %v379 = vmul.f32 %v363, 0.1
        %v380 = vmul.f32 %v364, 0.1
        %v381 = vsel %vm365, %v357, %v373
        %v382 = vsel %vm366, %v358, %v374
        %v383 = vsel %vm367, %v359, %v375
        %v384 = vsel %vm368, %v360, %v376
        %v385 = vsel %vm369, %v361, %v377
        %v386 = vsel %vm370, %v362, %v378
        %v387 = vsel %vm371, %v363, %v379
        %v388 = vsel %vm372, %v364, %v380
        %v389 = vpack.c.bf16 %v381, %v381
        %v390 = vpack.c.bf16 %v382, %v382
        %v391 = vpack.c.bf16 %v383, %v383
        %v392 = vpack.c.bf16 %v384, %v384
        %v393 = vpack.c.bf16 %v385, %v385
        %v394 = vpack.c.bf16 %v386, %v386
        %v395 = vpack.c.bf16 %v387, %v387
        %v396 = vpack.c.bf16 %v388, %v388
        %vm397 = vcmask 60416
        %398 = vst.msk [vmem:[#allocation2] sm:$0xf] %vm397, 0
        %vm399 = vcmask 57344
        %400 = vst.msk [vmem:[#allocation2 + $0x4] sm:$0x1] %vm399, 0
        %401 = vst.msk [vmem:[#allocation2 + $0x8] sm:$0xf] %vm397, 0
        %402 = vst.msk [vmem:[#allocation2 + $0xc] sm:$0x1] %vm399, 0
        %403 = vst.msk [vmem:[#allocation2 + $0x10] sm:$0xf] %vm397, 0
        %404 = vst.msk [vmem:[#allocation2 + $0x14] sm:$0x1] %vm399, 0
        %405 = vst.msk [vmem:[#allocation2 + $0x18] sm:$0xf] %vm397, 0
        %406 = vst.msk [vmem:[#allocation2 + $0x1c] sm:$0x1] %vm399, 0
        %407 = vst.msk [vmem:[#allocation2 + $0x20] sm:$0xf] %vm397, 0
        %408 = vst.msk [vmem:[#allocation2 + $0x24] sm:$0x1] %vm399, 0
        %409 = vst.msk [vmem:[#allocation2 + $0x28] sm:$0xf] %vm397, 0
        %410 = vst.msk [vmem:[#allocation2 + $0x2c] sm:$0x1] %vm399, 0
        %411 = vst.msk [vmem:[#allocation2 + $0x30] sm:$0xf] %vm397, 0
        %412 = vst.msk [vmem:[#allocation2 + $0x34] sm:$0x1] %vm399, 0
        %413 = vst.msk [vmem:[#allocation2 + $0x38] sm:$0xf] %vm397, 0
        %414 = vst.msk [vmem:[#allocation2 + $0x3c] sm:$0x1] %vm399, 0
        %415 = vst.msk [vmem:[#allocation2 + $0x40] sm:$0xf] %vm397, 0
        %416 = vst.msk [vmem:[#allocation2 + $0x44] sm:$0x1] %vm399, 0
        %417 = vst.msk [vmem:[#allocation2 + $0x48] sm:$0xf] %vm397, 0
        %418 = vst.msk [vmem:[#allocation2 + $0x4c] sm:$0x1] %vm399, 0
        %v427 = vunpack.c.l.b16 %v389
        %v428 = vunpack.c.l.b16 %v390
        %v429 = vunpack.c.l.b16 %v391
        %v430 = vunpack.c.l.b16 %v392
        %v431 = vunpack.c.l.b16 %v393
        %v432 = vunpack.c.l.b16 %v394
        %v433 = vunpack.c.l.b16 %v395
        %v434 = vunpack.c.l.b16 %v396
        %v435 = vpack.c.b16 %v427, %v427
        %v436 = vpack.c.b16 %v428, %v428
        %v437 = vpack.c.b16 %v429, %v429
        %v438 = vpack.c.b16 %v430, %v430
        %v439 = vpack.c.b16 %v431, %v431
        %v440 = vpack.c.b16 %v432, %v432
        %v441 = vpack.c.b16 %v433, %v433
        %v442 = vpack.c.b16 %v434, %v434
        %v444 = vshrl.u32 %v435, 16
        %v446 = vrot.slane %v444, 7
        %v447 = vshll.u32 %v435, 16
        %v449 = vor.u32 %v446, %v447
        %v450 = vrot.slane %v446, 4
        %v452 = vshrl.u32 %v436, 16
        %v454 = vrot.slane %v452, 7
        %v455 = vshll.u32 %v436, 16
        %v457 = vor.u32 %v454, %v455
        %v458 = vrot.slane %v454, 4
        %v460 = vshrl.u32 %v437, 16
        %v462 = vrot.slane %v460, 7
        %v463 = vshll.u32 %v437, 16
        %v465 = vor.u32 %v462, %v463
        %v466 = vrot.slane %v462, 4
        %v468 = vshrl.u32 %v438, 16
        %v470 = vrot.slane %v468, 7
        %v471 = vshll.u32 %v438, 16
        %v473 = vor.u32 %v470, %v471
        %v474 = vrot.slane %v470, 4
        %v476 = vshrl.u32 %v439, 16
        %v478 = vrot.slane %v476, 7
        %v479 = vshll.u32 %v439, 16
        %v481 = vor.u32 %v478, %v479
        %v482 = vrot.slane %v478, 4
        %v484 = vshrl.u32 %v440, 16
        %v486 = vrot.slane %v484, 7
        %v487 = vshll.u32 %v440, 16
        %v489 = vor.u32 %v486, %v487
        %v490 = vrot.slane %v486, 4
        %v492 = vshrl.u32 %v441, 16
        %v494 = vrot.slane %v492, 7
        %v495 = vshll.u32 %v441, 16
        %v497 = vor.u32 %v494, %v495
        %v498 = vrot.slane %v494, 4
        %v500 = vshrl.u32 %v442, 16
        %v502 = vrot.slane %v500, 7
        %v503 = vshll.u32 %v442, 16
        %v505 = vor.u32 %v502, %v503
        %v506 = vrot.slane %v502, 4
        %s523 = scalar_lea.vmem [#allocation2], 8
        %vm524 = vcmask 60416
        %vm525 = vsmask.f32 7938
        %vm526 = vmand %vm524, %vm525
        %v527 = vld [vmem:[%s523] sm:$0xf]
        %v528 = vsel %vm526, %v449, %v527
        %529 = vst [vmem:[%s523] sm:$0xf] %v528
        %vm530 = vcmask 57344
        %vm531 = vsmask.f32 256
        %vm532 = vmand %vm530, %vm531
        %v533 = vld [vmem:[%s523 + $0x4] sm:$0x1]
        %v534 = vsel %vm532, %v450, %v533
        %535 = vst [vmem:[%s523 + $0x4] sm:$0x1] %v534
        %v536 = vld [vmem:[%s523 + $0x8] sm:$0xf]
        %v537 = vsel %vm526, %v457, %v536
        %538 = vst [vmem:[%s523 + $0x8] sm:$0xf] %v537
        %v539 = vld [vmem:[%s523 + $0xc] sm:$0x1]
        %v540 = vsel %vm532, %v458, %v539
        %541 = vst [vmem:[%s523 + $0xc] sm:$0x1] %v540
        %v542 = vld [vmem:[%s523 + $0x10] sm:$0xf]
        %v543 = vsel %vm526, %v465, %v542
        %544 = vst [vmem:[%s523 + $0x10] sm:$0xf] %v543
        %v545 = vld [vmem:[%s523 + $0x14] sm:$0x1]
        %v546 = vsel %vm532, %v466, %v545
        %547 = vst [vmem:[%s523 + $0x14] sm:$0x1] %v546
        %v548 = vld [vmem:[%s523 + $0x18] sm:$0xf]
        %v549 = vsel %vm526, %v473, %v548
        %550 = vst [vmem:[%s523 + $0x18] sm:$0xf] %v549
        %v551 = vld [vmem:[%s523 + $0x1c] sm:$0x1]
        %v552 = vsel %vm532, %v474, %v551
        %553 = vst [vmem:[%s523 + $0x1c] sm:$0x1] %v552
        %v554 = vld [vmem:[%s523 + $0x20] sm:$0xf]
        %v555 = vsel %vm526, %v481, %v554
        %556 = vst [vmem:[%s523 + $0x20] sm:$0xf] %v555
        %v557 = vld [vmem:[%s523 + $0x24] sm:$0x1]
        %v558 = vsel %vm532, %v482, %v557
        %559 = vst [vmem:[%s523 + $0x24] sm:$0x1] %v558
        %v560 = vld [vmem:[%s523 + $0x28] sm:$0xf]
        %v561 = vsel %vm526, %v489, %v560
        %562 = vst [vmem:[%s523 + $0x28] sm:$0xf] %v561
        %v563 = vld [vmem:[%s523 + $0x2c] sm:$0x1]
        %v564 = vsel %vm532, %v490, %v563
        %565 = vst [vmem:[%s523 + $0x2c] sm:$0x1] %v564
        %v566 = vld [vmem:[%s523 + $0x30] sm:$0xf]
        %v567 = vsel %vm526, %v497, %v566
        %568 = vst [vmem:[%s523 + $0x30] sm:$0xf] %v567
        %v569 = vld [vmem:[%s523 + $0x34] sm:$0x1]
        %v570 = vsel %vm532, %v498, %v569
        %571 = vst [vmem:[%s523 + $0x34] sm:$0x1] %v570
        %v572 = vld [vmem:[%s523 + $0x38] sm:$0xf]
        %v573 = vsel %vm526, %v505, %v572
        %574 = vst [vmem:[%s523 + $0x38] sm:$0xf] %v573
        %v575 = vld [vmem:[%s523 + $0x3c] sm:$0x1]
        %v576 = vsel %vm532, %v506, %v575
        %577 = vst [vmem:[%s523 + $0x3c] sm:$0x1] %v576
        %v578 = vld [vmem:[#allocation2] sm:$0xf]
        %v579 = vld [vmem:[#allocation2 + $0x8] sm:$0xf]
        %v580 = vld [vmem:[#allocation2 + $0x10] sm:$0xf]
        %v581 = vld [vmem:[#allocation2 + $0x18] sm:$0xf]
        %v582 = vld [vmem:[#allocation2 + $0x20] sm:$0xf]
        %v583 = vld [vmem:[#allocation2 + $0x28] sm:$0xf]
        %v584 = vld [vmem:[#allocation2 + $0x30] sm:$0xf]
        %v585 = vld [vmem:[#allocation2 + $0x38] sm:$0xf]
        %586 = vst.msk [vmem:[#allocation3] sm:$0xf] %vm397, %v578
        %587 = vst.msk [vmem:[#allocation3 + $0x4] sm:$0xf] %vm397, %v579
        %588 = vst.msk [vmem:[#allocation3 + $0x8] sm:$0xf] %vm397, %v580
        %589 = vst.msk [vmem:[#allocation3 + $0xc] sm:$0xf] %vm397, %v581
        %590 = vst.msk [vmem:[#allocation3 + $0x10] sm:$0xf] %vm397, %v582
        %591 = vst.msk [vmem:[#allocation3 + $0x14] sm:$0xf] %vm397, %v583
        %592 = vst.msk [vmem:[#allocation3 + $0x18] sm:$0xf] %vm397, %v584
        %593 = vst.msk [vmem:[#allocation3 + $0x1c] sm:$0xf] %vm397, %v585
        %v594 = vld [vmem:[#allocation2] sm:$0xf]
        %v595 = vld [vmem:[#allocation2 + $0x4] sm:$0x1]
        %v596 = vld [vmem:[#allocation2 + $0x8] sm:$0xf]
        %v597 = vld [vmem:[#allocation2 + $0xc] sm:$0x1]
        %v598 = vld [vmem:[#allocation2 + $0x10] sm:$0xf]
        %v599 = vld [vmem:[#allocation2 + $0x14] sm:$0x1]
        %v600 = vld [vmem:[#allocation2 + $0x18] sm:$0xf]
        %v601 = vld [vmem:[#allocation2 + $0x1c] sm:$0x1]
        %v602 = vld [vmem:[#allocation2 + $0x20] sm:$0xf]
        %v603 = vld [vmem:[#allocation2 + $0x24] sm:$0x1]
        %v604 = vld [vmem:[#allocation2 + $0x28] sm:$0xf]
        %v605 = vld [vmem:[#allocation2 + $0x2c] sm:$0x1]
        %v606 = vld [vmem:[#allocation2 + $0x30] sm:$0xf]
        %v607 = vld [vmem:[#allocation2 + $0x34] sm:$0x1]
        %v608 = vld [vmem:[#allocation2 + $0x38] sm:$0xf]
        %v609 = vld [vmem:[#allocation2 + $0x3c] sm:$0x1]
        %vm610 = vsmask.f32 3328
        %vm611 = vsmask.f32 7440
        %vm612 = vmor %vm610, %vm611
        %v614 = vshrl.u32 %v594, 16
        %v616 = vrot.slane %v614, 4
        %v617 = vshll.u32 %v594, 16
        %v619 = vrot.slane %v617, 5
        %v620 = vor.u32 %v616, %v619
        %v621 = vrot.slane %v620, 4
        %v623 = vshll.u32 %v595, 16
        %v625 = vrot.slane %v623, 5
        %v626 = vsel %vm612, %v621, %v625
        %v628 = vshrl.u32 %v596, 16
        %v630 = vrot.slane %v628, 4
        %v631 = vshll.u32 %v596, 16
        %v633 = vrot.slane %v631, 5
        %v634 = vor.u32 %v630, %v633
        %v635 = vrot.slane %v634, 4
        %v637 = vshll.u32 %v597, 16
        %v639 = vrot.slane %v637, 5
        %v640 = vsel %vm612, %v635, %v639
        %v642 = vshrl.u32 %v598, 16
        %v644 = vrot.slane %v642, 4
        %v645 = vshll.u32 %v598, 16
        %v647 = vrot.slane %v645, 5
        %v648 = vor.u32 %v644, %v647
        %v649 = vrot.slane %v648, 4
        %v651 = vshll.u32 %v599, 16
        %v653 = vrot.slane %v651, 5
        %v654 = vsel %vm612, %v649, %v653
        %v656 = vshrl.u32 %v600, 16
        %v658 = vrot.slane %v656, 4
        %v659 = vshll.u32 %v600, 16
        %v661 = vrot.slane %v659, 5
        %v662 = vor.u32 %v658, %v661
        %v663 = vrot.slane %v662, 4
        %v665 = vshll.u32 %v601, 16
        %v667 = vrot.slane %v665, 5
        %v668 = vsel %vm612, %v663, %v667
        %v670 = vshrl.u32 %v602, 16
        %v672 = vrot.slane %v670, 4
        %v673 = vshll.u32 %v602, 16
        %v675 = vrot.slane %v673, 5
        %v676 = vor.u32 %v672, %v675
        %v677 = vrot.slane %v676, 4
        %v679 = vshll.u32 %v603, 16
        %v681 = vrot.slane %v679, 5
        %v682 = vsel %vm612, %v677, %v681
        %v684 = vshrl.u32 %v604, 16
        %v686 = vrot.slane %v684, 4
        %v687 = vshll.u32 %v604, 16
        %v689 = vrot.slane %v687, 5
        %v690 = vor.u32 %v686, %v689
        %v691 = vrot.slane %v690, 4
        %v693 = vshll.u32 %v605, 16
        %v695 = vrot.slane %v693, 5
        %v696 = vsel %vm612, %v691, %v695
        %v698 = vshrl.u32 %v606, 16
        %v700 = vrot.slane %v698, 4
        %v701 = vshll.u32 %v606, 16
        %v703 = vrot.slane %v701, 5
        %v704 = vor.u32 %v700, %v703
        %v705 = vrot.slane %v704, 4
        %v707 = vshll.u32 %v607, 16
        %v709 = vrot.slane %v707, 5
        %v710 = vsel %vm612, %v705, %v709
        %v712 = vshrl.u32 %v608, 16
        %v714 = vrot.slane %v712, 4
        %v715 = vshll.u32 %v608, 16
        %v717 = vrot.slane %v715, 5
        %v718 = vor.u32 %v714, %v717
        %v719 = vrot.slane %v718, 4
        %v721 = vshll.u32 %v609, 16
        %v723 = vrot.slane %v721, 5
        %v724 = vsel %vm612, %v719, %v723
        %725 = vrot.lane.b32.xlu0 %v626, 8
        %v726 = vpop.permute.xlu0 %725
        %727 = vrot.lane.b32.xlu0 %v640, 8
        %v728 = vpop.permute.xlu0 %727
        %729 = vrot.lane.b32.xlu0 %v654, 8
        %v730 = vpop.permute.xlu0 %729
        %731 = vrot.lane.b32.xlu0 %v668, 8
        %v732 = vpop.permute.xlu0 %731
        %733 = vrot.lane.b32.xlu0 %v682, 8
        %v734 = vpop.permute.xlu0 %733
        %735 = vrot.lane.b32.xlu0 %v696, 8
        %v736 = vpop.permute.xlu0 %735
        %737 = vrot.lane.b32.xlu0 %v710, 8
        %v738 = vpop.permute.xlu0 %737
        %739 = vrot.lane.b32.xlu0 %v724, 8
        %v740 = vpop.permute.xlu0 %739
        %vm749 = vcmask 126016
        %750 = vst.msk [vmem:[#allocation3] sm:$0xf] %vm749, %v726
        %751 = vst.msk [vmem:[#allocation3 + $0x4] sm:$0xf] %vm749, %v728
        %752 = vst.msk [vmem:[#allocation3 + $0x8] sm:$0xf] %vm749, %v730
        %753 = vst.msk [vmem:[#allocation3 + $0xc] sm:$0xf] %vm749, %v732
        %754 = vst.msk [vmem:[#allocation3 + $0x10] sm:$0xf] %vm749, %v734
        %755 = vst.msk [vmem:[#allocation3 + $0x14] sm:$0xf] %vm749, %v736
        %756 = vst.msk [vmem:[#allocation3 + $0x18] sm:$0xf] %vm749, %v738
        %757 = vst.msk [vmem:[#allocation3 + $0x1c] sm:$0xf] %vm749, %v740
        %v758 = vld [vmem:[#allocation2] sm:$0xe]
        %v759 = vld [vmem:[#allocation2 + $0x4] sm:$0x1]
        %v760 = vld [vmem:[#allocation2 + $0x8] sm:$0xe]
        %v761 = vld [vmem:[#allocation2 + $0xc] sm:$0x1]
        %v762 = vld [vmem:[#allocation2 + $0x10] sm:$0xe]
        %v763 = vld [vmem:[#allocation2 + $0x14] sm:$0x1]
        %v764 = vld [vmem:[#allocation2 + $0x18] sm:$0xe]
        %v765 = vld [vmem:[#allocation2 + $0x1c] sm:$0x1]
        %v766 = vld [vmem:[#allocation2 + $0x20] sm:$0xe]
        %v767 = vld [vmem:[#allocation2 + $0x24] sm:$0x1]
        %v768 = vld [vmem:[#allocation2 + $0x28] sm:$0xe]
        %v769 = vld [vmem:[#allocation2 + $0x2c] sm:$0x1]
        %v770 = vld [vmem:[#allocation2 + $0x30] sm:$0xe]
        %v771 = vld [vmem:[#allocation2 + $0x34] sm:$0x1]
        %v772 = vld [vmem:[#allocation2 + $0x38] sm:$0xe]
        %v773 = vld [vmem:[#allocation2 + $0x3c] sm:$0x1]
        %vm790 = vcmask 1042432
        %vm791 = vcmask 1046532
        %vm792 = vmor %vm790, %vm791
        %v793 = vrot.slane %v758, 5
        %v794 = vrot.slane %v793, 4
        %v795 = vrot.slane %v759, 5
        %v796 = vsel %vm792, %v794, %v795
        %v797 = vrot.slane %v760, 5
        %v798 = vrot.slane %v797, 4
        %v799 = vrot.slane %v761, 5
        %v800 = vsel %vm792, %v798, %v799
        %v801 = vrot.slane %v762, 5
        %v802 = vrot.slane %v801, 4
        %v803 = vrot.slane %v763, 5
        %v804 = vsel %vm792, %v802, %v803
        %v805 = vrot.slane %v764, 5
        %v806 = vrot.slane %v805, 4
        %v807 = vrot.slane %v765, 5
        %v808 = vsel %vm792, %v806, %v807
        %v809 = vrot.slane %v766, 5
        %v810 = vrot.slane %v809, 4
        %v811 = vrot.slane %v767, 5
        %v812 = vsel %vm792, %v810, %v811
        %v813 = vrot.slane %v768, 5
        %v814 = vrot.slane %v813, 4
        %v815 = vrot.slane %v769, 5
        %v816 = vsel %vm792, %v814, %v815
        %v817 = vrot.slane %v770, 5
        %v818 = vrot.slane %v817, 4
        %v819 = vrot.slane %v771, 5
        %v820 = vsel %vm792, %v818, %v819
        %v821 = vrot.slane %v772, 5
        %v822 = vrot.slane %v821, 4
        %v823 = vrot.slane %v773, 5
        %v824 = vsel %vm792, %v822, %v823
        %825 = vrot.lane.b32.xlu0 %v796, 16
        %v826 = vpop.permute.xlu0 %825
        %827 = vrot.lane.b32.xlu0 %v800, 16
        %v828 = vpop.permute.xlu0 %827
        %829 = vrot.lane.b32.xlu0 %v804, 16
        %v830 = vpop.permute.xlu0 %829
        %831 = vrot.lane.b32.xlu0 %v808, 16
        %v832 = vpop.permute.xlu0 %831
        %833 = vrot.lane.b32.xlu0 %v812, 16
        %v834 = vpop.permute.xlu0 %833
        %835 = vrot.lane.b32.xlu0 %v816, 16
        %v836 = vpop.permute.xlu0 %835
        %837 = vrot.lane.b32.xlu0 %v820, 16
        %v838 = vpop.permute.xlu0 %837
        %839 = vrot.lane.b32.xlu0 %v824, 16
        %v840 = vpop.permute.xlu0 %839
        %vm849 = vcmask 191616
        %850 = vst.msk [vmem:[#allocation3] sm:$0xf] %vm849, %v826
        %851 = vst.msk [vmem:[#allocation3 + $0x4] sm:$0xf] %vm849, %v828
        %852 = vst.msk [vmem:[#allocation3 + $0x8] sm:$0xf] %vm849, %v830
        %853 = vst.msk [vmem:[#allocation3 + $0xc] sm:$0xf] %vm849, %v832
        %854 = vst.msk [vmem:[#allocation3 + $0x10] sm:$0xf] %vm849, %v834
        %855 = vst.msk [vmem:[#allocation3 + $0x14] sm:$0xf] %vm849, %v836
        %856 = vst.msk [vmem:[#allocation3 + $0x18] sm:$0xf] %vm849, %v838
        %857 = vst.msk [vmem:[#allocation3 + $0x1c] sm:$0xf] %vm849, %v840
        %v858 = vld [vmem:[%s523] sm:$0xf]
        %v859 = vld [vmem:[%s523 + $0x8] sm:$0xf]
        %v860 = vld [vmem:[%s523 + $0x10] sm:$0xf]
        %v861 = vld [vmem:[%s523 + $0x18] sm:$0xf]
        %v862 = vld [vmem:[%s523 + $0x20] sm:$0xf]
        %v863 = vld [vmem:[%s523 + $0x28] sm:$0xf]
        %v864 = vld [vmem:[%s523 + $0x30] sm:$0xf]
        %v865 = vld [vmem:[%s523 + $0x38] sm:$0xf]
        %874 = vrot.lane.b32.xlu0 %v858, 24
        %v875 = vpop.permute.xlu0 %874
        %876 = vrot.lane.b32.xlu0 %v859, 24
        %v877 = vpop.permute.xlu0 %876
        %878 = vrot.lane.b32.xlu0 %v860, 24
        %v879 = vpop.permute.xlu0 %878
        %880 = vrot.lane.b32.xlu0 %v861, 24
        %v881 = vpop.permute.xlu0 %880
        %882 = vrot.lane.b32.xlu0 %v862, 24
        %v883 = vpop.permute.xlu0 %882
        %884 = vrot.lane.b32.xlu0 %v863, 24
        %v885 = vpop.permute.xlu0 %884
        %886 = vrot.lane.b32.xlu0 %v864, 24
        %v887 = vpop.permute.xlu0 %886
        %888 = vrot.lane.b32.xlu0 %v865, 24
        %v889 = vpop.permute.xlu0 %888
        %vm898 = vcmask 257216
        %899 = vst.msk [vmem:[#allocation3] sm:$0xf] %vm898, %v875
        %900 = vst.msk [vmem:[#allocation3 + $0x4] sm:$0xf] %vm898, %v877
        %901 = vst.msk [vmem:[#allocation3 + $0x8] sm:$0xf] %vm898, %v879
        %902 = vst.msk [vmem:[#allocation3 + $0xc] sm:$0xf] %vm898, %v881
        %903 = vst.msk [vmem:[#allocation3 + $0x10] sm:$0xf] %vm898, %v883
        %904 = vst.msk [vmem:[#allocation3 + $0x14] sm:$0xf] %vm898, %v885
        %905 = vst.msk [vmem:[#allocation3 + $0x18] sm:$0xf] %vm898, %v887
        %906 = vst.msk [vmem:[#allocation3 + $0x1c] sm:$0xf] %vm898, %v889
        %v907 = vld [vmem:[%s523] sm:$0xf]
        %v908 = vld [vmem:[%s523 + $0x4] sm:$0x1]
        %v909 = vld [vmem:[%s523 + $0x8] sm:$0xf]
        %v910 = vld [vmem:[%s523 + $0xc] sm:$0x1]
        %v911 = vld [vmem:[%s523 + $0x10] sm:$0xf]
        %v912 = vld [vmem:[%s523 + $0x14] sm:$0x1]
        %v913 = vld [vmem:[%s523 + $0x18] sm:$0xf]
        %v914 = vld [vmem:[%s523 + $0x1c] sm:$0x1]
        %v915 = vld [vmem:[%s523 + $0x20] sm:$0xf]
        %v916 = vld [vmem:[%s523 + $0x24] sm:$0x1]
        %v917 = vld [vmem:[%s523 + $0x28] sm:$0xf]
        %v918 = vld [vmem:[%s523 + $0x2c] sm:$0x1]
        %v919 = vld [vmem:[%s523 + $0x30] sm:$0xf]
        %v920 = vld [vmem:[%s523 + $0x34] sm:$0x1]
        %v921 = vld [vmem:[%s523 + $0x38] sm:$0xf]
        %v922 = vld [vmem:[%s523 + $0x3c] sm:$0x1]
        %v924 = vshrl.u32 %v907, 16
        %v926 = vrot.slane %v924, 4
        %v927 = vshll.u32 %v907, 16
        %v929 = vrot.slane %v927, 5
        %v930 = vor.u32 %v926, %v929
        %v931 = vrot.slane %v930, 4
        %v933 = vshll.u32 %v908, 16
        %v935 = vrot.slane %v933, 5
        %v936 = vsel %vm612, %v931, %v935
        %v938 = vshrl.u32 %v909, 16
        %v940 = vrot.slane %v938, 4
        %v941 = vshll.u32 %v909, 16
        %v943 = vrot.slane %v941, 5
        %v944 = vor.u32 %v940, %v943
        %v945 = vrot.slane %v944, 4
        %v947 = vshll.u32 %v910, 16
        %v949 = vrot.slane %v947, 5
        %v950 = vsel %vm612, %v945, %v949
        %v952 = vshrl.u32 %v911, 16
        %v954 = vrot.slane %v952, 4
        %v955 = vshll.u32 %v911, 16
        %v957 = vrot.slane %v955, 5
        %v958 = vor.u32 %v954, %v957
        %v959 = vrot.slane %v958, 4
        %v961 = vshll.u32 %v912, 16
        %v963 = vrot.slane %v961, 5
        %v964 = vsel %vm612, %v959, %v963
        %v966 = vshrl.u32 %v913, 16
        %v968 = vrot.slane %v966, 4
        %v969 = vshll.u32 %v913, 16
        %v971 = vrot.slane %v969, 5
        %v972 = vor.u32 %v968, %v971
        %v973 = vrot.slane %v972, 4
        %v975 = vshll.u32 %v914, 16
        %v977 = vrot.slane %v975, 5
        %v978 = vsel %vm612, %v973, %v977
        %v980 = vshrl.u32 %v915, 16
        %v982 = vrot.slane %v980, 4
        %v983 = vshll.u32 %v915, 16
        %v985 = vrot.slane %v983, 5
        %v986 = vor.u32 %v982, %v985
        %v987 = vrot.slane %v986, 4
        %v989 = vshll.u32 %v916, 16
        %v991 = vrot.slane %v989, 5
        %v992 = vsel %vm612, %v987, %v991
        %v994 = vshrl.u32 %v917, 16
        %v996 = vrot.slane %v994, 4
        %v997 = vshll.u32 %v917, 16
        %v999 = vrot.slane %v997, 5
        %v1000 = vor.u32 %v996, %v999
        %v1001 = vrot.slane %v1000, 4
        %v1003 = vshll.u32 %v918, 16
        %v1005 = vrot.slane %v1003, 5
        %v1006 = vsel %vm612, %v1001, %v1005
        %v1008 = vshrl.u32 %v919, 16
        %v1010 = vrot.slane %v1008, 4
        %v1011 = vshll.u32 %v919, 16
        %v1013 = vrot.slane %v1011, 5
        %v1014 = vor.u32 %v1010, %v1013
        %v1015 = vrot.slane %v1014, 4
        %v1017 = vshll.u32 %v920, 16
        %v1019 = vrot.slane %v1017, 5
        %v1020 = vsel %vm612, %v1015, %v1019
        %v1022 = vshrl.u32 %v921, 16
        %v1024 = vrot.slane %v1022, 4
        %v1025 = vshll.u32 %v921, 16
        %v1027 = vrot.slane %v1025, 5
        %v1028 = vor.u32 %v1024, %v1027
        %v1029 = vrot.slane %v1028, 4
        %v1031 = vshll.u32 %v922, 16
        %v1033 = vrot.slane %v1031, 5
        %v1034 = vsel %vm612, %v1029, %v1033
        %1035 = vrot.lane.b32.xlu0 %v936, 32
        %v1036 = vpop.permute.xlu0 %1035
        %1037 = vrot.lane.b32.xlu0 %v950, 32
        %v1038 = vpop.permute.xlu0 %1037
        %1039 = vrot.lane.b32.xlu0 %v964, 32
        %v1040 = vpop.permute.xlu0 %1039
        %1041 = vrot.lane.b32.xlu0 %v978, 32
        %v1042 = vpop.permute.xlu0 %1041
        %1043 = vrot.lane.b32.xlu0 %v992, 32
        %v1044 = vpop.permute.xlu0 %1043
        %1045 = vrot.lane.b32.xlu0 %v1006, 32
        %v1046 = vpop.permute.xlu0 %1045
        %1047 = vrot.lane.b32.xlu0 %v1020, 32
        %v1048 = vpop.permute.xlu0 %1047
        %1049 = vrot.lane.b32.xlu0 %v1034, 32
        %v1050 = vpop.permute.xlu0 %1049
        %vm1059 = vcmask 322816
        %1060 = vst.msk [vmem:[#allocation3] sm:$0xf] %vm1059, %v1036
        %1061 = vst.msk [vmem:[#allocation3 + $0x4] sm:$0xf] %vm1059, %v1038
        %1062 = vst.msk [vmem:[#allocation3 + $0x8] sm:$0xf] %vm1059, %v1040
        %1063 = vst.msk [vmem:[#allocation3 + $0xc] sm:$0xf] %vm1059, %v1042
        %1064 = vst.msk [vmem:[#allocation3 + $0x10] sm:$0xf] %vm1059, %v1044
        %1065 = vst.msk [vmem:[#allocation3 + $0x14] sm:$0xf] %vm1059, %v1046
        %1066 = vst.msk [vmem:[#allocation3 + $0x18] sm:$0xf] %vm1059, %v1048
        %1067 = vst.msk [vmem:[#allocation3 + $0x1c] sm:$0xf] %vm1059, %v1050
        %v1068 = vld [vmem:[%s523] sm:$0xe]
        %v1069 = vld [vmem:[%s523 + $0x4] sm:$0x1]
        %v1070 = vld [vmem:[%s523 + $0x8] sm:$0xe]
        %v1071 = vld [vmem:[%s523 + $0xc] sm:$0x1]
        %v1072 = vld [vmem:[%s523 + $0x10] sm:$0xe]
        %v1073 = vld [vmem:[%s523 + $0x14] sm:$0x1]
        %v1074 = vld [vmem:[%s523 + $0x18] sm:$0xe]
        %v1075 = vld [vmem:[%s523 + $0x1c] sm:$0x1]
        %v1076 = vld [vmem:[%s523 + $0x20] sm:$0xe]
        %v1077 = vld [vmem:[%s523 + $0x24] sm:$0x1]
        %v1078 = vld [vmem:[%s523 + $0x28] sm:$0xe]
        %v1079 = vld [vmem:[%s523 + $0x2c] sm:$0x1]
        %v1080 = vld [vmem:[%s523 + $0x30] sm:$0xe]
        %v1081 = vld [vmem:[%s523 + $0x34] sm:$0x1]
        %v1082 = vld [vmem:[%s523 + $0x38] sm:$0xe]
        %v1083 = vld [vmem:[%s523 + $0x3c] sm:$0x1]
        %v1100 = vrot.slane %v1068, 5
        %v1101 = vrot.slane %v1100, 4
        %v1102 = vrot.slane %v1069, 5
        %v1103 = vsel %vm792, %v1101, %v1102
        %v1104 = vrot.slane %v1070, 5
        %v1105 = vrot.slane %v1104, 4
        %v1106 = vrot.slane %v1071, 5
        %v1107 = vsel %vm792, %v1105, %v1106
        %v1108 = vrot.slane %v1072, 5
        %v1109 = vrot.slane %v1108, 4
        %v1110 = vrot.slane %v1073, 5
        %v1111 = vsel %vm792, %v1109, %v1110
        %v1112 = vrot.slane %v1074, 5
        %v1113 = vrot.slane %v1112, 4
        %v1114 = vrot.slane %v1075, 5
        %v1115 = vsel %vm792, %v1113, %v1114
        %v1116 = vrot.slane %v1076, 5
        %v1117 = vrot.slane %v1116, 4
        %v1118 = vrot.slane %v1077, 5
        %v1119 = vsel %vm792, %v1117, %v1118
        %v1120 = vrot.slane %v1078, 5
        %v1121 = vrot.slane %v1120, 4
        %v1122 = vrot.slane %v1079, 5
        %v1123 = vsel %vm792, %v1121, %v1122
        %v1124 = vrot.slane %v1080, 5
        %v1125 = vrot.slane %v1124, 4
        %v1126 = vrot.slane %v1081, 5
        %v1127 = vsel %vm792, %v1125, %v1126
        %v1128 = vrot.slane %v1082, 5
        %v1129 = vrot.slane %v1128, 4
        %v1130 = vrot.slane %v1083, 5
        %v1131 = vsel %vm792, %v1129, %v1130
        %1132 = vrot.lane.b32.xlu0 %v1103, 40
        %v1133 = vpop.permute.xlu0 %1132
        %1134 = vrot.lane.b32.xlu0 %v1107, 40
        %v1135 = vpop.permute.xlu0 %1134
        %1136 = vrot.lane.b32.xlu0 %v1111, 40
        %v1137 = vpop.permute.xlu0 %1136
        %1138 = vrot.lane.b32.xlu0 %v1115, 40
        %v1139 = vpop.permute.xlu0 %1138
        %1140 = vrot.lane.b32.xlu0 %v1119, 40
        %v1141 = vpop.permute.xlu0 %1140
        %1142 = vrot.lane.b32.xlu0 %v1123, 40
        %v1143 = vpop.permute.xlu0 %1142
        %1144 = vrot.lane.b32.xlu0 %v1127, 40
        %v1145 = vpop.permute.xlu0 %1144
        %1146 = vrot.lane.b32.xlu0 %v1131, 40
        %v1147 = vpop.permute.xlu0 %1146
        %vm1156 = vcmask 388416
        %1157 = vst.msk [vmem:[#allocation3] sm:$0xf] %vm1156, %v1133
        %1158 = vst.msk [vmem:[#allocation3 + $0x4] sm:$0xf] %vm1156, %v1135
        %1159 = vst.msk [vmem:[#allocation3 + $0x8] sm:$0xf] %vm1156, %v1137
        %1160 = vst.msk [vmem:[#allocation3 + $0xc] sm:$0xf] %vm1156, %v1139
        %1161 = vst.msk [vmem:[#allocation3 + $0x10] sm:$0xf] %vm1156, %v1141
        %1162 = vst.msk [vmem:[#allocation3 + $0x14] sm:$0xf] %vm1156, %v1143
        %1163 = vst.msk [vmem:[#allocation3 + $0x18] sm:$0xf] %vm1156, %v1145
        %1164 = vst.msk [vmem:[#allocation3 + $0x1c] sm:$0xf] %vm1156, %v1147
        %s1165 = scalar_lea.vmem [#allocation2], 16
        %v1166 = vld [vmem:[%s1165] sm:$0xf]
        %v1167 = vld [vmem:[%s1165 + $0x8] sm:$0xf]
        %v1168 = vld [vmem:[%s1165 + $0x10] sm:$0xf]
        %v1169 = vld [vmem:[%s1165 + $0x18] sm:$0xf]
        %v1170 = vld [vmem:[%s1165 + $0x20] sm:$0xf]
        %v1171 = vld [vmem:[%s1165 + $0x28] sm:$0xf]
        %v1172 = vld [vmem:[%s1165 + $0x30] sm:$0xf]
        %v1173 = vld [vmem:[%s1165 + $0x38] sm:$0xf]
        %1182 = vrot.lane.b32.xlu0 %v1166, 48
        %v1183 = vpop.permute.xlu0 %1182
        %1184 = vrot.lane.b32.xlu0 %v1167, 48
        %v1185 = vpop.permute.xlu0 %1184
        %1186 = vrot.lane.b32.xlu0 %v1168, 48
        %v1187 = vpop.permute.xlu0 %1186
        %1188 = vrot.lane.b32.xlu0 %v1169, 48
        %v1189 = vpop.permute.xlu0 %1188
        %1190 = vrot.lane.b32.xlu0 %v1170, 48
        %v1191 = vpop.permute.xlu0 %1190
        %1192 = vrot.lane.b32.xlu0 %v1171, 48
        %v1193 = vpop.permute.xlu0 %1192
        %1194 = vrot.lane.b32.xlu0 %v1172, 48
        %v1195 = vpop.permute.xlu0 %1194
        %1196 = vrot.lane.b32.xlu0 %v1173, 48
        %v1197 = vpop.permute.xlu0 %1196
        %vm1206 = vcmask 454016
        %1207 = vst.msk [vmem:[#allocation3] sm:$0xf] %vm1206, %v1183
        %1208 = vst.msk [vmem:[#allocation3 + $0x4] sm:$0xf] %vm1206, %v1185
        %1209 = vst.msk [vmem:[#allocation3 + $0x8] sm:$0xf] %vm1206, %v1187
        %1210 = vst.msk [vmem:[#allocation3 + $0xc] sm:$0xf] %vm1206, %v1189
        %1211 = vst.msk [vmem:[#allocation3 + $0x10] sm:$0xf] %vm1206, %v1191
        %1212 = vst.msk [vmem:[#allocation3 + $0x14] sm:$0xf] %vm1206, %v1193
        %1213 = vst.msk [vmem:[#allocation3 + $0x18] sm:$0xf] %vm1206, %v1195
        %1214 = vst.msk [vmem:[#allocation3 + $0x1c] sm:$0xf] %vm1206, %v1197
        %v1215 = vld [vmem:[%s1165] sm:$0xf]
        %v1216 = vld [vmem:[%s1165 + $0x4] sm:$0x1]
        %v1217 = vld [vmem:[%s1165 + $0x8] sm:$0xf]
        %v1218 = vld [vmem:[%s1165 + $0xc] sm:$0x1]
        %v1219 = vld [vmem:[%s1165 + $0x10] sm:$0xf]
        %v1220 = vld [vmem:[%s1165 + $0x14] sm:$0x1]
        %v1221 = vld [vmem:[%s1165 + $0x18] sm:$0xf]
        %v1222 = vld [vmem:[%s1165 + $0x1c] sm:$0x1]
        %v1223 = vld [vmem:[%s1165 + $0x20] sm:$0xf]
        %v1224 = vld [vmem:[%s1165 + $0x24] sm:$0x1]
        %v1225 = vld [vmem:[%s1165 + $0x28] sm:$0xf]
        %v1226 = vld [vmem:[%s1165 + $0x2c] sm:$0x1]
        %v1227 = vld [vmem:[%s1165 + $0x30] sm:$0xf]
        %v1228 = vld [vmem:[%s1165 + $0x34] sm:$0x1]
        %v1229 = vld [vmem:[%s1165 + $0x38] sm:$0xf]
        %v1230 = vld [vmem:[%s1165 + $0x3c] sm:$0x1]
        %v1232 = vshrl.u32 %v1215, 16
        %v1234 = vrot.slane %v1232, 4
        %v1235 = vshll.u32 %v1215, 16
        %v1237 = vrot.slane %v1235, 5
        %v1238 = vor.u32 %v1234, %v1237
        %v1239 = vrot.slane %v1238, 4
        %v1241 = vshll.u32 %v1216, 16
        %v1243 = vrot.slane %v1241, 5
        %v1244 = vsel %vm612, %v1239, %v1243
        %v1246 = vshrl.u32 %v1217, 16
        %v1248 = vrot.slane %v1246, 4
        %v1249 = vshll.u32 %v1217, 16
        %v1251 = vrot.slane %v1249, 5
        %v1252 = vor.u32 %v1248, %v1251
        %v1253 = vrot.slane %v1252, 4
        %v1255 = vshll.u32 %v1218, 16
        %v1257 = vrot.slane %v1255, 5
        %v1258 = vsel %vm612, %v1253, %v1257
        %v1260 = vshrl.u32 %v1219, 16
        %v1262 = vrot.slane %v1260, 4
        %v1263 = vshll.u32 %v1219, 16
        %v1265 = vrot.slane %v1263, 5
        %v1266 = vor.u32 %v1262, %v1265
        %v1267 = vrot.slane %v1266, 4
        %v1269 = vshll.u32 %v1220, 16
        %v1271 = vrot.slane %v1269, 5
        %v1272 = vsel %vm612, %v1267, %v1271
        %v1274 = vshrl.u32 %v1221, 16
        %v1276 = vrot.slane %v1274, 4
        %v1277 = vshll.u32 %v1221, 16
        %v1279 = vrot.slane %v1277, 5
        %v1280 = vor.u32 %v1276, %v1279
        %v1281 = vrot.slane %v1280, 4
        %v1283 = vshll.u32 %v1222, 16
        %v1285 = vrot.slane %v1283, 5
        %v1286 = vsel %vm612, %v1281, %v1285
        %v1288 = vshrl.u32 %v1223, 16
        %v1290 = vrot.slane %v1288, 4
        %v1291 = vshll.u32 %v1223, 16
        %v1293 = vrot.slane %v1291, 5
        %v1294 = vor.u32 %v1290, %v1293
        %v1295 = vrot.slane %v1294, 4
        %v1297 = vshll.u32 %v1224, 16
        %v1299 = vrot.slane %v1297, 5
        %v1300 = vsel %vm612, %v1295, %v1299
        %v1302 = vshrl.u32 %v1225, 16
        %v1304 = vrot.slane %v1302, 4
        %v1305 = vshll.u32 %v1225, 16
        %v1307 = vrot.slane %v1305, 5
        %v1308 = vor.u32 %v1304, %v1307
        %v1309 = vrot.slane %v1308, 4
        %v1311 = vshll.u32 %v1226, 16
        %v1313 = vrot.slane %v1311, 5
        %v1314 = vsel %vm612, %v1309, %v1313
        %v1316 = vshrl.u32 %v1227, 16
        %v1318 = vrot.slane %v1316, 4
        %v1319 = vshll.u32 %v1227, 16
        %v1321 = vrot.slane %v1319, 5
        %v1322 = vor.u32 %v1318, %v1321
        %v1323 = vrot.slane %v1322, 4
        %v1325 = vshll.u32 %v1228, 16
        %v1327 = vrot.slane %v1325, 5
        %v1328 = vsel %vm612, %v1323, %v1327
        %v1330 = vshrl.u32 %v1229, 16
        %v1332 = vrot.slane %v1330, 4
        %v1333 = vshll.u32 %v1229, 16
        %v1335 = vrot.slane %v1333, 5
        %v1336 = vor.u32 %v1332, %v1335
        %v1337 = vrot.slane %v1336, 4
        %v1339 = vshll.u32 %v1230, 16
        %v1341 = vrot.slane %v1339, 5
        %v1342 = vsel %vm612, %v1337, %v1341
        %1343 = vrot.lane.b32.xlu0 %v1244, 56
        %v1344 = vpop.permute.xlu0 %1343
        %1345 = vrot.lane.b32.xlu0 %v1258, 56
        %v1346 = vpop.permute.xlu0 %1345
        %1347 = vrot.lane.b32.xlu0 %v1272, 56
        %v1348 = vpop.permute.xlu0 %1347
        %1349 = vrot.lane.b32.xlu0 %v1286, 56
        %v1350 = vpop.permute.xlu0 %1349
        %1351 = vrot.lane.b32.xlu0 %v1300, 56
        %v1352 = vpop.permute.xlu0 %1351
        %1353 = vrot.lane.b32.xlu0 %v1314, 56
        %v1354 = vpop.permute.xlu0 %1353
        %1355 = vrot.lane.b32.xlu0 %v1328, 56
        %v1356 = vpop.permute.xlu0 %1355
        %1357 = vrot.lane.b32.xlu0 %v1342, 56
        %v1358 = vpop.permute.xlu0 %1357
        %vm1367 = vcmask 519616
        %1368 = vst.msk [vmem:[#allocation3] sm:$0xf] %vm1367, %v1344
        %1369 = vst.msk [vmem:[#allocation3 + $0x4] sm:$0xf] %vm1367, %v1346
        %1370 = vst.msk [vmem:[#allocation3 + $0x8] sm:$0xf] %vm1367, %v1348
        %1371 = vst.msk [vmem:[#allocation3 + $0xc] sm:$0xf] %vm1367, %v1350
        %1372 = vst.msk [vmem:[#allocation3 + $0x10] sm:$0xf] %vm1367, %v1352
        %1373 = vst.msk [vmem:[#allocation3 + $0x14] sm:$0xf] %vm1367, %v1354
        %1374 = vst.msk [vmem:[#allocation3 + $0x18] sm:$0xf] %vm1367, %v1356
        %1375 = vst.msk [vmem:[#allocation3 + $0x1c] sm:$0xf] %vm1367, %v1358
        %v1376 = vld [vmem:[%s1165] sm:$0xe]
        %v1377 = vld [vmem:[%s1165 + $0x4] sm:$0x1]
        %v1378 = vld [vmem:[%s1165 + $0x8] sm:$0xe]
        %v1379 = vld [vmem:[%s1165 + $0xc] sm:$0x1]
        %v1380 = vld [vmem:[%s1165 + $0x10] sm:$0xe]
        %v1381 = vld [vmem:[%s1165 + $0x14] sm:$0x1]
        %v1382 = vld [vmem:[%s1165 + $0x18] sm:$0xe]
        %v1383 = vld [vmem:[%s1165 + $0x1c] sm:$0x1]
        %v1384 = vld [vmem:[%s1165 + $0x20] sm:$0xe]
        %v1385 = vld [vmem:[%s1165 + $0x24] sm:$0x1]
        %v1386 = vld [vmem:[%s1165 + $0x28] sm:$0xe]
        %v1387 = vld [vmem:[%s1165 + $0x2c] sm:$0x1]
        %v1388 = vld [vmem:[%s1165 + $0x30] sm:$0xe]
        %v1389 = vld [vmem:[%s1165 + $0x34] sm:$0x1]
        %v1390 = vld [vmem:[%s1165 + $0x38] sm:$0xe]
        %v1391 = vld [vmem:[%s1165 + $0x3c] sm:$0x1]
        %v1408 = vrot.slane %v1376, 5
        %v1409 = vrot.slane %v1408, 4
        %v1410 = vrot.slane %v1377, 5
        %v1411 = vsel %vm792, %v1409, %v1410
        %v1412 = vrot.slane %v1378, 5
        %v1413 = vrot.slane %v1412, 4
        %v1414 = vrot.slane %v1379, 5
        %v1415 = vsel %vm792, %v1413, %v1414
        %v1416 = vrot.slane %v1380, 5
        %v1417 = vrot.slane %v1416, 4
        %v1418 = vrot.slane %v1381, 5
        %v1419 = vsel %vm792, %v1417, %v1418
        %v1420 = vrot.slane %v1382, 5
        %v1421 = vrot.slane %v1420, 4
        %v1422 = vrot.slane %v1383, 5
        %v1423 = vsel %vm792, %v1421, %v1422
        %v1424 = vrot.slane %v1384, 5
        %v1425 = vrot.slane %v1424, 4
        %v1426 = vrot.slane %v1385, 5
        %v1427 = vsel %vm792, %v1425, %v1426
        %v1428 = vrot.slane %v1386, 5
        %v1429 = vrot.slane %v1428, 4
        %v1430 = vrot.slane %v1387, 5
        %v1431 = vsel %vm792, %v1429, %v1430
        %v1432 = vrot.slane %v1388, 5
        %v1433 = vrot.slane %v1432, 4
        %v1434 = vrot.slane %v1389, 5
        %v1435 = vsel %vm792, %v1433, %v1434
        %v1436 = vrot.slane %v1390, 5
        %v1437 = vrot.slane %v1436, 4
        %v1438 = vrot.slane %v1391, 5
        %v1439 = vsel %vm792, %v1437, %v1438
        %1440 = vrot.lane.b32.xlu0 %v1411, 64
        %v1441 = vpop.permute.xlu0 %1440
        %1442 = vrot.lane.b32.xlu0 %v1415, 64
        %v1443 = vpop.permute.xlu0 %1442
        %1444 = vrot.lane.b32.xlu0 %v1419, 64
        %v1445 = vpop.permute.xlu0 %1444
        %1446 = vrot.lane.b32.xlu0 %v1423, 64
        %v1447 = vpop.permute.xlu0 %1446
        %1448 = vrot.lane.b32.xlu0 %v1427, 64
        %v1449 = vpop.permute.xlu0 %1448
        %1450 = vrot.lane.b32.xlu0 %v1431, 64
        %v1451 = vpop.permute.xlu0 %1450
        %1452 = vrot.lane.b32.xlu0 %v1435, 64
        %v1453 = vpop.permute.xlu0 %1452
        %1454 = vrot.lane.b32.xlu0 %v1439, 64
        %v1455 = vpop.permute.xlu0 %1454
        %vm1464 = vcmask 585216
        %1465 = vst.msk [vmem:[#allocation3] sm:$0xf] %vm1464, %v1441
        %1466 = vst.msk [vmem:[#allocation3 + $0x4] sm:$0xf] %vm1464, %v1443
        %1467 = vst.msk [vmem:[#allocation3 + $0x8] sm:$0xf] %vm1464, %v1445
        %1468 = vst.msk [vmem:[#allocation3 + $0xc] sm:$0xf] %vm1464, %v1447
        %1469 = vst.msk [vmem:[#allocation3 + $0x10] sm:$0xf] %vm1464, %v1449
        %1470 = vst.msk [vmem:[#allocation3 + $0x14] sm:$0xf] %vm1464, %v1451
        %1471 = vst.msk [vmem:[#allocation3 + $0x18] sm:$0xf] %vm1464, %v1453
        %1472 = vst.msk [vmem:[#allocation3 + $0x1c] sm:$0xf] %vm1464, %v1455
        %v1473 = vld [vmem:[#allocation3] sm:$0xf]
        %v1474 = vld [vmem:[#allocation3 + $0x4] sm:$0xf]
        %v1475 = vld [vmem:[#allocation3 + $0x8] sm:$0xf]
        %v1476 = vld [vmem:[#allocation3 + $0xc] sm:$0xf]
        %v1477 = vld [vmem:[#allocation3 + $0x10] sm:$0xf]
        %v1478 = vld [vmem:[#allocation3 + $0x14] sm:$0xf]
        %v1479 = vld [vmem:[#allocation3 + $0x18] sm:$0xf]
        %v1480 = vld [vmem:[#allocation3 + $0x1c] sm:$0xf]
        %v1481 = vld [vmem:[%s1] sm:$0xf]
        %v1482 = vld [vmem:[%s1 + $0x4] sm:$0xf]
        %v1483 = vld [vmem:[%s1 + $0x8] sm:$0xf]
        %v1484 = vld [vmem:[%s1 + $0xc] sm:$0xf]
        %v1485 = vld [vmem:[%s1 + $0x10] sm:$0xf]
        %v1486 = vld [vmem:[%s1 + $0x14] sm:$0xf]
        %v1487 = vld [vmem:[%s1 + $0x18] sm:$0xf]
        %v1488 = vld [vmem:[%s1 + $0x1c] sm:$0xf]
        %v1489 = vld [vmem:[%s1 + $0x20] sm:$0xf]
        %v1498 = vunpack.c.l.b16 %v1473
        %v1499 = vunpack.c.l.b16 %v1474
        %v1500 = vunpack.c.l.b16 %v1475
        %v1501 = vunpack.c.l.b16 %v1476
        %v1502 = vunpack.c.l.b16 %v1477
        %v1503 = vunpack.c.l.b16 %v1478
        %v1504 = vunpack.c.l.b16 %v1479
        %v1505 = vunpack.c.l.b16 %v1480
        %v1506 = vpack.c.b16 %v1499, %v1498
        %v1507 = vpack.c.b16 %v1501, %v1500
        %v1508 = vpack.c.b16 %v1503, %v1502
        %v1509 = vpack.c.b16 %v1505, %v1504
        %v1519 = vunpack.c.l.b16 %v1481
        %v1520 = vunpack.c.l.b16 %v1482
        %v1521 = vunpack.c.l.b16 %v1483
        %v1522 = vunpack.c.l.b16 %v1484
        %v1523 = vunpack.c.l.b16 %v1485
        %v1524 = vunpack.c.l.b16 %v1486
        %v1525 = vunpack.c.l.b16 %v1487
        %v1526 = vunpack.c.l.b16 %v1488
        %v1527 = vunpack.c.l.b16 %v1489
        %v1528 = vpack.c.b16 %v1520, %v1519
        %v1529 = vpack.c.b16 %v1522, %v1521
        %v1530 = vpack.c.b16 %v1524, %v1523
        %v1531 = vpack.c.b16 %v1526, %v1525
        %v1532 = vpack.c.b16 %v1527, %v1527
        %vm1537 = vcmask 588800
        %v1539 = vsel %vm1537, %v1506, 0
        %v1542 = vsel %vm1537, %v1507, 0
        %v1545 = vsel %vm1537, %v1508, 0
        %v1548 = vsel %vm1537, %v1509, 0
        %vm1550 = vcmask 1043456
        %v1552 = vsel %vm1550, %v1532, 0
        %1554 = vmatprep.subr.bf16.mxu0 0
        %1555 = vmatpush1.bf16.msra.mxu0 0
        %1556 = vmatprep.subr.bf16.mxu0 0
        %1557 = vmatpush1.bf16.msra.mxu0 0
        %1558 = vmatprep.subr.bf16.mxu0 0
        %1559 = vmatpush1.bf16.msra.mxu0 0
        %1560 = vmatprep.subr.bf16.mxu0 0
        %1561 = vmatpush1.bf16.msra.mxu0 %v1552
        %1562 = vmatprep.subr.bf16.mxu0 0
        %1563 = vmatpush1.bf16.msra.mxu0 %v1531
        %1564 = vmatprep.subr.bf16.mxu0 0
        %1565 = vmatpush1.bf16.msra.mxu0 %v1530
        %1566 = vmatprep.subr.bf16.mxu0 0
        %1567 = vmatpush1.bf16.msra.mxu0 %v1529
        %1568 = vmatprep.subr.bf16.mxu0 0
        %1569 = vmatpush1.bf16.msra.mxu0 %v1528
        %1570 = vmatprep.subr.bf16.mxu0 0
        %1571 = vmatpush2.bf16.msra.mxu0 0
        %1572 = vmatprep.subr.bf16.mxu0 0
        %1573 = vmatpush2.bf16.msra.mxu0 0
        %1574 = vmatprep.subr.bf16.mxu0 0
        %1575 = vmatpush2.bf16.msra.mxu0 0
        %1576 = vmatprep.subr.bf16.mxu0 0
        %1577 = vmatpush2.bf16.msra.mxu0 0
        %1578 = vmatprep.subr.bf16.mxu0 0
        %1579 = vmatpush2.bf16.msra.mxu0 0
        %1580 = vmatprep.subr.bf16.mxu0 0
        %1581 = vmatpush2.bf16.msra.mxu0 0
        %1582 = vmatprep.subr.bf16.mxu0 0
        %1583 = vmatpush2.bf16.msra.mxu0 0
        %1584 = vmatprep.subr.bf16.mxu0 0
        %1585 = vmatpush2.bf16.msra.mxu0 0
        %1586 = vmatprep.mubr.bf16.mxu0 0
        %1587 = vmatmul.mubr.bf16.gmra.mxu0 %v1539
        %v1588 = vpop.f32.mrf.mxu0
        %v1589 = vadd.f32 0.0, %v1588
        %v1590 = vpop.f32.mrf.mxu0
        %v1591 = vpop.f32.mrf.mxu0
        %v1592 = vadd.f32 0.0, %v1591
        %v1593 = vpop.f32.mrf.mxu0
        %1594 = vmatprep.mubr.bf16.mxu0 0
        %1595 = vmatmul.mubr.bf16.gmra.mxu0 %v1542
        %v1596 = vpop.f32.mrf.mxu0
        %v1597 = vadd.f32 0.0, %v1596
        %v1598 = vpop.f32.mrf.mxu0
        %v1599 = vpop.f32.mrf.mxu0
        %v1600 = vadd.f32 0.0, %v1599
        %v1601 = vpop.f32.mrf.mxu0
        %1602 = vmatprep.mubr.bf16.mxu0 0
        %1603 = vmatmul.mubr.bf16.gmra.mxu0 %v1545
        %v1604 = vpop.f32.mrf.mxu0
        %v1605 = vadd.f32 0.0, %v1604
        %v1606 = vpop.f32.mrf.mxu0
        %v1607 = vpop.f32.mrf.mxu0
        %v1608 = vadd.f32 0.0, %v1607
        %v1609 = vpop.f32.mrf.mxu0
        %1610 = vmatprep.mubr.bf16.mxu0 0
        %1611 = vmatmul.mubr.bf16.gmra.mxu0 %v1548
        %v1612 = vpop.f32.mrf.mxu0
        %v1613 = vadd.f32 0.0, %v1612
        %v1614 = vpop.f32.mrf.mxu0
        %v1615 = vpop.f32.mrf.mxu0
        %v1616 = vadd.f32 0.0, %v1615
        %v1617 = vpop.f32.mrf.mxu0
        %1618 = vdwg.mxu0
        %v1619 = vld [vmem:[%s312] sm:$0xf]
        %v1620 = vld [vmem:[%s312 + $0x4] sm:$0xf]
        %v1621 = vld [vmem:[%s312 + $0x8] sm:$0xf]
        %v1622 = vld [vmem:[%s312 + $0xc] sm:$0xf]
        %v1623 = vld [vmem:[%s312 + $0x10] sm:$0xf]
        %v1624 = vld [vmem:[%s312 + $0x14] sm:$0xf]
        %v1625 = vld [vmem:[%s312 + $0x18] sm:$0xf]
        %v1626 = vld [vmem:[%s312 + $0x1c] sm:$0xf]
        %v1627 = vunpack.c.l.bf16 %v1619
        %v1628 = vunpack.c.l.bf16 %v1620
        %v1629 = vunpack.c.l.bf16 %v1621
        %v1630 = vunpack.c.l.bf16 %v1622
        %v1631 = vunpack.c.l.bf16 %v1623
        %v1632 = vunpack.c.l.bf16 %v1624
        %v1633 = vunpack.c.l.bf16 %v1625
        %v1634 = vunpack.c.l.bf16 %v1626
        %v1635 = vadd.f32 %v1589, %v1627
        %v1636 = vadd.f32 %v1592, %v1628
        %v1637 = vadd.f32 %v1597, %v1629
        %v1638 = vadd.f32 %v1600, %v1630
        %v1639 = vadd.f32 %v1605, %v1631
        %v1640 = vadd.f32 %v1608, %v1632
        %v1641 = vadd.f32 %v1613, %v1633
        %v1642 = vadd.f32 %v1616, %v1634
        %v1643 = vadd.f32 %v1635, 0.0
        %v1644 = vadd.f32 %v1636, 0.0
        %v1645 = vadd.f32 %v1637, 0.0
        %v1646 = vadd.f32 %v1638, 0.0
        %v1647 = vadd.f32 %v1639, 0.0
        %v1648 = vadd.f32 %v1640, 0.0
        %v1649 = vadd.f32 %v1641, 0.0
        %v1650 = vadd.f32 %v1642, 0.0
        %vm1651 = vcmask 64512
        %v1652 = vsel %vm1651, %v1643, 0.0
        %v1653 = vsel %vm1651, %v1644, 0.0
        %v1654 = vadd.f32 %v1652, %v1653
        %v1655 = vsel %vm1651, %v1645, 0.0
        %v1656 = vadd.f32 %v1654, %v1655
        %v1657 = vsel %vm1651, %v1646, 0.0
        %v1658 = vadd.f32 %v1656, %v1657
        %v1659 = vsel %vm1651, %v1647, 0.0
        %v1660 = vadd.f32 %v1658, %v1659
        %v1661 = vsel %vm1651, %v1648, 0.0
        %v1662 = vadd.f32 %v1660, %v1661
        %v1663 = vsel %vm1651, %v1649, 0.0
        %v1664 = vadd.f32 %v1662, %v1663
        %v1665 = vsel %vm1651, %v1650, 0.0
        %v1666 = vadd.f32 %v1664, %v1665
        %v1667 = vrot.slane %v1666, 4
        %v1668 = vadd.f32 %v1666, %v1667
        %v1669 = vrot.slane %v1668, 2
        %v1670 = vadd.f32 %v1668, %v1669
        %v1671 = vrot.slane %v1670, 1
        %v1672 = vadd.f32 %v1670, %v1671
        %1673 = vst.msk [vmem:[%s296] sm:$0x1] %vm399, %v1672
        %v1674 = vmul.f32 %v1635, %v1635
        %v1675 = vmul.f32 %v1636, %v1636
        %v1676 = vmul.f32 %v1637, %v1637
        %v1677 = vmul.f32 %v1638, %v1638
        %v1678 = vmul.f32 %v1639, %v1639
        %v1679 = vmul.f32 %v1640, %v1640
        %v1680 = vmul.f32 %v1641, %v1641
        %v1681 = vmul.f32 %v1642, %v1642
        %v1682 = vadd.f32 %v1674, 0.0
        %v1683 = vadd.f32 %v1675, 0.0
        %v1684 = vadd.f32 %v1676, 0.0
        %v1685 = vadd.f32 %v1677, 0.0
        %v1686 = vadd.f32 %v1678, 0.0
        %v1687 = vadd.f32 %v1679, 0.0
        %v1688 = vadd.f32 %v1680, 0.0
        %v1689 = vadd.f32 %v1681, 0.0
        %v1690 = vsel %vm1651, %v1682, 0.0
        %v1691 = vsel %vm1651, %v1683, 0.0
        %v1692 = vadd.f32 %v1690, %v1691
        %v1693 = vsel %vm1651, %v1684, 0.0
        %v1694 = vadd.f32 %v1692, %v1693
        %v1695 = vsel %vm1651, %v1685, 0.0
        %v1696 = vadd.f32 %v1694, %v1695
        %v1697 = vsel %vm1651, %v1686, 0.0
        %v1698 = vadd.f32 %v1696, %v1697
        %v1699 = vsel %vm1651, %v1687, 0.0
        %v1700 = vadd.f32 %v1698, %v1699
        %v1701 = vsel %vm1651, %v1688, 0.0
        %v1702 = vadd.f32 %v1700, %v1701
        %v1703 = vsel %vm1651, %v1689, 0.0
        %v1704 = vadd.f32 %v1702, %v1703
        %v1705 = vrot.slane %v1704, 4
        %v1706 = vadd.f32 %v1704, %v1705
        %v1707 = vrot.slane %v1706, 2
        %v1708 = vadd.f32 %v1706, %v1707
        %v1709 = vrot.slane %v1708, 1
        %v1710 = vadd.f32 %v1708, %v1709
        %1711 = vst.msk [vmem:[%s302] sm:$0x1] %vm399, %v1710
        %v1712 = vpack.c.bf16 %v1636, %v1635
        %v1713 = vpack.c.bf16 %v1638, %v1637
        %v1714 = vpack.c.bf16 %v1640, %v1639
        %v1715 = vpack.c.bf16 %v1642, %v1641
        %v1720 = vunpack.c.l.b16 %v1712
        %v1721 = vunpack.c.h.b16 %v1712
        %v1722 = vunpack.c.l.b16 %v1713
        %v1723 = vunpack.c.h.b16 %v1713
        %v1724 = vunpack.c.l.b16 %v1714
        %v1725 = vunpack.c.h.b16 %v1714
        %v1726 = vunpack.c.l.b16 %v1715
        %v1727 = vunpack.c.h.b16 %v1715
        %v1728 = vpack.c.b16 %v1720, %v1720
        %v1729 = vpack.c.b16 %v1721, %v1721
        %v1730 = vpack.c.b16 %v1722, %v1722
        %v1731 = vpack.c.b16 %v1723, %v1723
        %v1732 = vpack.c.b16 %v1724, %v1724
        %v1733 = vpack.c.b16 %v1725, %v1725
        %v1734 = vpack.c.b16 %v1726, %v1726
        %v1735 = vpack.c.b16 %v1727, %v1727
        %1744 = vst.msk [vmem:[%s317] sm:$0xf] %vm397, %v1728
        %1745 = vst.msk [vmem:[%s317 + $0x4] sm:$0xf] %vm397, %v1729
        %1746 = vst.msk [vmem:[%s317 + $0x8] sm:$0xf] %vm397, %v1730
        %1747 = vst.msk [vmem:[%s317 + $0xc] sm:$0xf] %vm397, %v1731
        %1748 = vst.msk [vmem:[%s317 + $0x10] sm:$0xf] %vm397, %v1732
        %1749 = vst.msk [vmem:[%s317 + $0x14] sm:$0xf] %vm397, %v1733
        %1750 = vst.msk [vmem:[%s317 + $0x18] sm:$0xf] %vm397, %v1734
        %1751 = vst.msk [vmem:[%s317 + $0x1c] sm:$0xf] %vm397, %v1735
        %p1752 = scmp.lt.s32.totalorder %s25, 1
        %s1753 = scalar_select %p1752, %s25, 1
        %s1754 = smul.addr %s1753, 8
        %s1755 = smul.addr %s1754, 4
        %s1756 = scalar_lea.vmem %s5, %s1755
        %s1757 = sand.u32 %s174, 1
        %s1758 = scalar_lea.sflag [#allocation5], %s1757
        %s1759 = sand.u32 %s174, 1
        %s1760 = scalar_lea.vmem [#allocation4], %s1759
        %s1761 = sand.u32 %s200, 1
        %s1762 = scalar_lea.sflag [#allocation7], %s1761
        %s1763 = sand.u32 %s200, 1
        %s1764 = scalar_lea.vmem [#allocation6], %s1763
        // Predicated region
        $region41: #{_lambda_.9} parent=39 // pred_check
          %p1765 = pneg %p158
        $region42: #{_lambda_.9} parent=39 // pred_check_branch
          %1767 = sbr.rel (%p1765) target = $region44
        $region43: #{_lambda_.9} parent=39 // pred_region
          _
        $region44: #{_lambda_.9} parent=39 // pred_fallthru
          _
        // Predicated region
        $region45: #{_lambda_.9} parent=39 // pred_check
          %p1768 = pneg %p184
        $region46: #{_lambda_.9} parent=39 // pred_check_branch
          %1770 = sbr.rel (%p1768) target = $region48
        $region47: #{_lambda_.9} parent=39 // pred_region
          %s1772 = ssub.s32 16, 16
          %1773 = vsyncadd %s1758, %s1772
          %s1774 = smul.addr %s25, 16
          %s1775 = scalar_lea.hbm %s6, %s1774
          %s1777 = sshll.u32 %s1760, 4
          %s1778 = int_to_ptr.vmem [resolvable:$true] %s1777
          %1780 = dma.vmem_to_hbm [thread:$0]  %s1778, 16, %s1775, %s1758
        $region48: #{_lambda_.9} parent=39 // pred_fallthru
          _
        // Predicated region
        $region49: #{_lambda_.9} parent=39 // pred_check
          %p1781 = pneg %p210
        $region50: #{_lambda_.9} parent=39 // pred_check_branch
          %1783 = sbr.rel (%p1781) target = $region52
        $region51: #{_lambda_.9} parent=39 // pred_region
          %s1785 = ssub.s32 16, 16
          %1786 = vsyncadd %s1762, %s1785
          %s1787 = smul.addr %s25, 16
          %s1788 = scalar_lea.hbm %s7, %s1787
          %s1790 = sshll.u32 %s1764, 4
          %s1791 = int_to_ptr.vmem [resolvable:$true] %s1790
          %1793 = dma.vmem_to_hbm [thread:$0]  %s1791, 16, %s1788, %s1762
        $region52: #{_lambda_.9} parent=39 // pred_fallthru
          _
      $region40: #{_lambda_.9} parent=5 // pred_fallthru
        _
      %p1794 = scmp.le.s32.totalorder 2, %s20
      // Predicated region
      $region53: #{_lambda_.9} parent=5 // pred_check
        %p1795 = pneg %p1794
      $region54: #{_lambda_.9} parent=5 // pred_check_branch
        %1797 = sbr.rel (%p1795) target = $region56
      $region55: #{_lambda_.9} parent=5 // pred_region
        %s1798 = ssub.s32 %s20, 2
        // Predicated region
        $region57: #{_lambda_.9} parent=55 // pred_check
          %p1799 = pneg %p164
        $region58: #{_lambda_.9} parent=55 // pred_check_branch
          %1801 = sbr.rel (%p1799) target = $region60
        $region59: #{_lambda_.9} parent=55 // pred_region
          %p1802 = scmp.lt.s32.totalorder %s26, 1
          %s1803 = scalar_select %p1802, %s26, 1
          %s1804 = smul.addr %s1803, 8
          %s1805 = smul.addr %s1804, 4
          %s1806 = scalar_lea.vmem %s5, %s1805
        $region60: #{_lambda_.9} parent=55 // pred_fallthru
          _
        // Predicated region
        $region61: #{_lambda_.9} parent=55 // pred_check
          %p1807 = pneg %p190
        $region62: #{_lambda_.9} parent=55 // pred_check_branch
          %1809 = sbr.rel (%p1807) target = $region64
        $region63: #{_lambda_.9} parent=55 // pred_region
          %s1810 = sand.u32 %s175, 1
          %s1811 = scalar_lea.sflag [#allocation5], %s1810
          %s1812 = sand.u32 %s175, 1
          %s1813 = scalar_lea.vmem [#allocation4], %s1812
          %1814 = dma.done %s1811, 16
        $region64: #{_lambda_.9} parent=55 // pred_fallthru
          _
        // Predicated region
        $region65: #{_lambda_.9} parent=55 // pred_check
          %p1815 = pneg %p216
        $region66: #{_lambda_.9} parent=55 // pred_check_branch
          %1817 = sbr.rel (%p1815) target = $region68
        $region67: #{_lambda_.9} parent=55 // pred_region
          %s1818 = sand.u32 %s201, 1
          %s1819 = scalar_lea.sflag [#allocation7], %s1818
          %s1820 = sand.u32 %s201, 1
          %s1821 = scalar_lea.vmem [#allocation6], %s1820
          %1822 = dma.done %s1819, 16
        $region68: #{_lambda_.9} parent=55 // pred_fallthru
          _
      $region56: #{_lambda_.9} parent=5 // pred_fallthru
        _
    $region6: #{_lambda_.9} parent=1 // loop_footer
      %s24 = sadd.s32 1, %s20
    $region7: #{_lambda_.9} parent=1 // loop_footer_branch
      %19 = sbr.rel target = $region3
    $region8: #{_lambda_.9} parent=1 // loop_exit
      _
    %1823 = vsyncpa [#allocation5], 1
    %s1824 = scalar_lea.sflag [#allocation5], 1
    %1825 = vsyncpa %s1824, 1
    %1826 = vsyncpa [#allocation7], 1
    %s1827 = scalar_lea.sflag [#allocation7], 1
    %1828 = vsyncpa %s1827, 1

// kernel: _lambda_.6
$region0: #{_lambda_.6}
  #allocation0 [shape = 'u32[]', space=smem, size = 0x4, offset = 0x4, fixed_abs, tag = 'smem constant byte address 0x4 - core index']
  #allocation1 [shape = 'u32[144,128]{1,0:T(1,128)}', space=vmem, size = 0x12000, scoped, tag = 'internal scratch']
  #allocation2 [shape = 'bf16[1,36,9,4]{3,2,1,0:T(8,128)(2,1)}', space=vmem, size = 0x24000, scoped, tag = 'scratch operand']
  #allocation3 [shape = 'bf16[64,36]{1,0:T(8,128)(2,1)}', space=vmem, size = 0x4000, scoped, tag = 'scratch operand']
  %s0 = inlined_call_operand.vmem [shape: f32[2,36,9,4], index: 0, kind: input, shape index: {}]
  %s1 = inlined_call_operand.vmem [shape: bf16[36,8], index: 1, kind: input, shape index: {}]
  %s2 = inlined_call_operand.vmem [shape: f32[1,4], index: 2, kind: input, shape index: {}]
  %s3 = inlined_call_operand.vmem [shape: f32[1,4], index: 3, kind: input, shape index: {}]
  %s4 = inlined_call_operand.vmem [shape: f32[36,9,1], index: 4, kind: input, shape index: {}]
  %s5 = inlined_call_operand.vmem [shape: f32[2,1,8], index: 5, kind: input, shape index: {}]
  %s6 = inlined_call_operand.vmem [shape: bf16[2,64,8], index: 6, kind: output, shape index: {0}]
  %s7 = inlined_call_operand.vmem [shape: f32[2,1,8], index: 7, kind: output, shape index: {1}]
  %s8 = inlined_call_operand.vmem [shape: f32[2,1,8], index: 8, kind: output, shape index: {2}]
  %9 = xla_tuple %s6, %s7, %s8
  %s10 = sld [smem:[#allocation0]]
  $region73: #{_lambda_.6} parent=0
    _
  %s12 = ssub.s32 1, %s10
  %s13 = scalar_select 0, %s12, %s10
  loop: start=0, step=1, limit=4
  $region2: #{_lambda_.6} parent=0 // loop_pre_header
    _
  $region3: #{_lambda_.6} parent=0 // loop_header
    %s15 = sphi 0, %s19
    %p16 = scmp.ge.s32.totalorder %s15, 4
    %s25 = sphi 0, %s27
    %s28 = sphi 0, %s25
    %s29 = sphi 0, %s28
    %s45 = sphi 0, %s29
    %s49 = sphi 0, %s49
    %s51 = sphi 0, %s49
    %s52 = sphi 0, %s51
    %s66 = sphi 0, %s52
    %s70 = sphi 0, %s70
    %s72 = sphi 0, %s70
    %s73 = sphi 0, %s72
    %s87 = sphi 0, %s73
    %s91 = sphi 0, %s91
    %s93 = sphi 0, %s91
    %s94 = sphi 0, %s93
    %s108 = sphi 0, %s94
    %s112 = sphi 0, %s112
    %s114 = sphi 0, %s112
    %s115 = sphi 0, %s114
    %s129 = sphi 0, %s115
    %s135 = sphi 0, %s137
    %s138 = sphi 0, %s135
    %s139 = sphi 0, %s138
    %s155 = sphi 0, %s139
    %s161 = sphi 0, %s163
    %s164 = sphi 0, %s161
    %s165 = sphi 0, %s164
    %s181 = sphi 0, %s165
    %s187 = sphi 0, %s189
    %s190 = sphi 0, %s187
    %s191 = sphi 0, %s190
    %s207 = sphi 0, %s191
    %s213 = sphi 0, %s215
    %s216 = sphi 0, %s213
    %s217 = sphi 0, %s216
    %s233 = sphi 0, %s217
  $region4: #{_lambda_.6} parent=0 // loop_header_branch
    %18 = sbr.rel (%p16) target = $region8
  $region5: #{_lambda_.6} parent=0 // loop_body
    %s20 = ssub.s32 %s15, 1
    %s21 = ssub.s32 %s15, 2
    %s22 = sadd.s32 %s15, 1
    %s23 = ssub.s32 %s15, %s22
    %p24 = scmp.eq.s32.totalorder %s23, 0
    %s26 = sadd.s32 %s25, 1
    %s27 = scalar_select %p24, %s25, %s26
    %p30 = pneg %p24
    %p31 = scmp.eq.s32.totalorder %s15, 1
    %p32 = por %p30, %p31
    %p33 = scmp.ne.s32.totalorder %s25, %s28
    %p34 = scmp.eq.s32.totalorder %s15, 0
    %p35 = por %p33, %p34
    %p36 = scmp.ne.s32.totalorder %s25, %s28
    %p37 = scmp.eq.s32.totalorder %s20, 1
    %p38 = por %p36, %p37
    %p39 = scmp.ne.s32.totalorder %s28, %s29
    %p40 = scmp.eq.s32.totalorder %s20, 0
    %p41 = por %p39, %p40
    %p42 = scmp.ne.s32.totalorder %s28, %s29
    %p43 = scmp.eq.s32.totalorder %s21, 1
    %p44 = por %p42, %p43
    %p46 = scmp.ne.s32.totalorder %s29, %s45
    %p47 = scmp.eq.s32.totalorder %s21, 0
    %p48 = por %p46, %p47
    %s50 = sadd.s32 %s49, 1
    %p53 = scmp.eq.s32.totalorder %s15, 1
    %p54 = scmp.ne.s32.totalorder %s49, %s51
    %p55 = scmp.eq.s32.totalorder %s15, 0
    %p56 = por %p54, %p55
    %p57 = scmp.ne.s32.totalorder %s49, %s51
    %p58 = scmp.eq.s32.totalorder %s20, 1
    %p59 = por %p57, %p58
    %p60 = scmp.ne.s32.totalorder %s51, %s52
    %p61 = scmp.eq.s32.totalorder %s20, 0
    %p62 = por %p60, %p61
    %p63 = scmp.ne.s32.totalorder %s51, %s52
    %p64 = scmp.eq.s32.totalorder %s21, 1
    %p65 = por %p63, %p64
    %p67 = scmp.ne.s32.totalorder %s52, %s66
    %p68 = scmp.eq.s32.totalorder %s21, 0
    %p69 = por %p67, %p68
    %s71 = sadd.s32 %s70, 1
    %p74 = scmp.eq.s32.totalorder %s15, 1
    %p75 = scmp.ne.s32.totalorder %s70, %s72
    %p76 = scmp.eq.s32.totalorder %s15, 0
    %p77 = por %p75, %p76
    %p78 = scmp.ne.s32.totalorder %s70, %s72
    %p79 = scmp.eq.s32.totalorder %s20, 1
    %p80 = por %p78, %p79
    %p81 = scmp.ne.s32.totalorder %s72, %s73
    %p82 = scmp.eq.s32.totalorder %s20, 0
    %p83 = por %p81, %p82
    %p84 = scmp.ne.s32.totalorder %s72, %s73
    %p85 = scmp.eq.s32.totalorder %s21, 1
    %p86 = por %p84, %p85
    %p88 = scmp.ne.s32.totalorder %s73, %s87
    %p89 = scmp.eq.s32.totalorder %s21, 0
    %p90 = por %p88, %p89
    %s92 = sadd.s32 %s91, 1
    %p95 = scmp.eq.s32.totalorder %s15, 1
    %p96 = scmp.ne.s32.totalorder %s91, %s93
    %p97 = scmp.eq.s32.totalorder %s15, 0
    %p98 = por %p96, %p97
    %p99 = scmp.ne.s32.totalorder %s91, %s93
    %p100 = scmp.eq.s32.totalorder %s20, 1
    %p101 = por %p99, %p100
    %p102 = scmp.ne.s32.totalorder %s93, %s94
    %p103 = scmp.eq.s32.totalorder %s20, 0
    %p104 = por %p102, %p103
    %p105 = scmp.ne.s32.totalorder %s93, %s94
    %p106 = scmp.eq.s32.totalorder %s21, 1
    %p107 = por %p105, %p106
    %p109 = scmp.ne.s32.totalorder %s94, %s108
    %p110 = scmp.eq.s32.totalorder %s21, 0
    %p111 = por %p109, %p110
    %s113 = sadd.s32 %s112, 1
    %p116 = scmp.eq.s32.totalorder %s15, 1
    %p117 = scmp.ne.s32.totalorder %s112, %s114
    %p118 = scmp.eq.s32.totalorder %s15, 0
    %p119 = por %p117, %p118
    %p120 = scmp.ne.s32.totalorder %s112, %s114
    %p121 = scmp.eq.s32.totalorder %s20, 1
    %p122 = por %p120, %p121
    %p123 = scmp.ne.s32.totalorder %s114, %s115
    %p124 = scmp.eq.s32.totalorder %s20, 0
    %p125 = por %p123, %p124
    %p126 = scmp.ne.s32.totalorder %s114, %s115
    %p127 = scmp.eq.s32.totalorder %s21, 1
    %p128 = por %p126, %p127
    %p130 = scmp.ne.s32.totalorder %s115, %s129
    %p131 = scmp.eq.s32.totalorder %s21, 0
    %p132 = por %p130, %p131
    %s133 = ssub.s32 %s15, %s22
    %p134 = scmp.eq.s32.totalorder %s133, 0
    %s136 = sadd.s32 %s135, 1
    %s137 = scalar_select %p134, %s135, %s136
    %p140 = pneg %p134
    %p141 = scmp.eq.s32.totalorder %s15, 1
    %p142 = por %p140, %p141
    %p143 = scmp.ne.s32.totalorder %s135, %s138
    %p144 = scmp.eq.s32.totalorder %s15, 0
    %p145 = por %p143, %p144
    %p146 = scmp.ne.s32.totalorder %s135, %s138
    %p147 = scmp.eq.s32.totalorder %s20, 1
    %p148 = por %p146, %p147
    %p149 = scmp.ne.s32.totalorder %s138, %s139
    %p150 = scmp.eq.s32.totalorder %s20, 0
    %p151 = por %p149, %p150
    %p152 = scmp.ne.s32.totalorder %s138, %s139
    %p153 = scmp.eq.s32.totalorder %s21, 1
    %p154 = por %p152, %p153
    %p156 = scmp.ne.s32.totalorder %s139, %s155
    %p157 = scmp.eq.s32.totalorder %s21, 0
    %p158 = por %p156, %p157
    %s159 = ssub.s32 %s15, %s22
    %p160 = scmp.eq.s32.totalorder %s159, 0
    %s162 = sadd.s32 %s161, 1
    %s163 = scalar_select %p160, %s161, %s162
    %p166 = pneg %p160
    %p167 = scmp.eq.s32.totalorder %s15, 1
    %p168 = por %p166, %p167
    %p169 = scmp.ne.s32.totalorder %s161, %s164
    %p170 = scmp.eq.s32.totalorder %s15, 0
    %p171 = por %p169, %p170
    %p172 = scmp.ne.s32.totalorder %s161, %s164
    %p173 = scmp.eq.s32.totalorder %s20, 1
    %p174 = por %p172, %p173
    %p175 = scmp.ne.s32.totalorder %s164, %s165
    %p176 = scmp.eq.s32.totalorder %s20, 0
    %p177 = por %p175, %p176
    %p178 = scmp.ne.s32.totalorder %s164, %s165
    %p179 = scmp.eq.s32.totalorder %s21, 1
    %p180 = por %p178, %p179
    %p182 = scmp.ne.s32.totalorder %s165, %s181
    %p183 = scmp.eq.s32.totalorder %s21, 0
    %p184 = por %p182, %p183
    %s185 = ssub.s32 %s15, %s22
    %p186 = scmp.eq.s32.totalorder %s185, 0
    %s188 = sadd.s32 %s187, 1
    %s189 = scalar_select %p186, %s187, %s188
    %p192 = pneg %p186
    %p193 = scmp.eq.s32.totalorder %s15, 1
    %p194 = por %p192, %p193
    %p195 = scmp.ne.s32.totalorder %s187, %s190
    %p196 = scmp.eq.s32.totalorder %s15, 0
    %p197 = por %p195, %p196
    %p198 = scmp.ne.s32.totalorder %s187, %s190
    %p199 = scmp.eq.s32.totalorder %s20, 1
    %p200 = por %p198, %p199
    %p201 = scmp.ne.s32.totalorder %s190, %s191
    %p202 = scmp.eq.s32.totalorder %s20, 0
    %p203 = por %p201, %p202
    %p204 = scmp.ne.s32.totalorder %s190, %s191
    %p205 = scmp.eq.s32.totalorder %s21, 1
    %p206 = por %p204, %p205
    %p208 = scmp.ne.s32.totalorder %s191, %s207
    %p209 = scmp.eq.s32.totalorder %s21, 0
    %p210 = por %p208, %p209
    %s211 = ssub.s32 %s15, %s22
    %p212 = scmp.eq.s32.totalorder %s211, 0
    %s214 = sadd.s32 %s213, 1
    %s215 = scalar_select %p212, %s213, %s214
    %p218 = pneg %p212
    %p219 = scmp.eq.s32.totalorder %s15, 1
    %p220 = por %p218, %p219
    %p221 = scmp.ne.s32.totalorder %s213, %s216
    %p222 = scmp.eq.s32.totalorder %s15, 0
    %p223 = por %p221, %p222
    %p224 = scmp.ne.s32.totalorder %s213, %s216
    %p225 = scmp.eq.s32.totalorder %s20, 1
    %p226 = por %p224, %p225
    %p227 = scmp.ne.s32.totalorder %s216, %s217
    %p228 = scmp.eq.s32.totalorder %s20, 0
    %p229 = por %p227, %p228
    %p230 = scmp.ne.s32.totalorder %s216, %s217
    %p231 = scmp.eq.s32.totalorder %s21, 1
    %p232 = por %p230, %p231
    %p234 = scmp.ne.s32.totalorder %s217, %s233
    %p235 = scmp.eq.s32.totalorder %s21, 0
    %p236 = por %p234, %p235
    %p237 = scmp.le.s32.totalorder 1, %s15
    %p238 = scmp.lt.s32.totalorder %s15, 3
    %p239 = pnand %p237, %p238
    %p240 = pneg %p239
    // Predicated region
    $region9: #{_lambda_.6} parent=5 // pred_check
      _
    $region10: #{_lambda_.6} parent=5 // pred_check_branch
      %242 = sbr.rel (%p239) target = $region12
    $region11: #{_lambda_.6} parent=5 // pred_region
      %s243 = ssub.s32 %s15, 1
      // Predicated region
      $region13: #{_lambda_.6} parent=11 // pred_check
        %p244 = pneg %p62
      $region14: #{_lambda_.6} parent=11 // pred_check_branch
        %246 = sbr.rel (%p244) target = $region16
      $region15: #{_lambda_.6} parent=11 // pred_region
        _
      $region16: #{_lambda_.6} parent=11 // pred_fallthru
        _
      // Predicated region
      $region17: #{_lambda_.6} parent=11 // pred_check
        %p247 = pneg %p83
      $region18: #{_lambda_.6} parent=11 // pred_check_branch
        %249 = sbr.rel (%p247) target = $region20
      $region19: #{_lambda_.6} parent=11 // pred_region
        _
      $region20: #{_lambda_.6} parent=11 // pred_fallthru
        _
      // Predicated region
      $region21: #{_lambda_.6} parent=11 // pred_check
        %p250 = pneg %p104
      $region22: #{_lambda_.6} parent=11 // pred_check_branch
        %252 = sbr.rel (%p250) target = $region24
      $region23: #{_lambda_.6} parent=11 // pred_region
        _
      $region24: #{_lambda_.6} parent=11 // pred_fallthru
        _
      // Predicated region
      $region25: #{_lambda_.6} parent=11 // pred_check
        %p253 = pneg %p125
      $region26: #{_lambda_.6} parent=11 // pred_check_branch
        %255 = sbr.rel (%p253) target = $region28
      $region27: #{_lambda_.6} parent=11 // pred_region
        _
      $region28: #{_lambda_.6} parent=11 // pred_fallthru
        _
    $region12: #{_lambda_.6} parent=5 // pred_fallthru
      _
    %p256 = scmp.lt.s32.totalorder %s15, 2
    // Predicated region
    $region29: #{_lambda_.6} parent=5 // pred_check
      %p257 = pneg %p256
    $region30: #{_lambda_.6} parent=5 // pred_check_branch
      %259 = sbr.rel (%p257) target = $region32
    $region31: #{_lambda_.6} parent=5 // pred_region
      // Predicated region
      $region33: #{_lambda_.6} parent=31 // pred_check
        %p260 = pneg %p35
      $region34: #{_lambda_.6} parent=31 // pred_check_branch
        %262 = sbr.rel (%p260) target = $region36
      $region35: #{_lambda_.6} parent=31 // pred_region
        %p263 = scmp.lt.s32.totalorder %s15, 1
        %s264 = scalar_select %p263, %s15, 1
        %s265 = smul.addr %s264, 72
        %s266 = smul.addr %s265, 8
        %s267 = scalar_lea.vmem %s0, %s266
      $region36: #{_lambda_.6} parent=31 // pred_fallthru
        _
      // Predicated region
      $region37: #{_lambda_.6} parent=31 // pred_check
        %p268 = pneg %p145
      $region38: #{_lambda_.6} parent=31 // pred_check_branch
        %270 = sbr.rel (%p268) target = $region40
      $region39: #{_lambda_.6} parent=31 // pred_region
        %p271 = scmp.lt.s32.totalorder %s15, 1
        %s272 = scalar_select %p271, %s15, 1
        %s273 = scalar_lea.vmem %s5, %s272
      $region40: #{_lambda_.6} parent=31 // pred_fallthru
        _
    $region32: #{_lambda_.6} parent=5 // pred_fallthru
      _
    %p274 = scmp.le.s32.totalorder 1, %s15
    %p275 = scmp.lt.s32.totalorder %s15, 3
    %p276 = pnand %p274, %p275
    %p277 = pneg %p276
    // Predicated region
    $region41: #{_lambda_.6} parent=5 // pred_check
      _
    $region42: #{_lambda_.6} parent=5 // pred_check_branch
      %279 = sbr.rel (%p276) target = $region44
    $region43: #{_lambda_.6} parent=5 // pred_region
      %s280 = ssub.s32 %s15, 1
      %p281 = scmp.lt.s32.totalorder %s20, 1
      %s282 = scalar_select %p281, %s20, 1
      %s283 = smul.addr %s282, 72
      %s284 = smul.addr %s283, 8
      %s285 = scalar_lea.vmem %s0, %s284
      %p286 = pneg %p41
      %p287 = pneg %p38
      %p288 = pneg %p62
      %p289 = pneg %p59
      %p290 = pneg %p83
      %p291 = pneg %p80
      %p292 = pneg %p104
      %p293 = pneg %p101
      %p294 = pneg %p125
      %p295 = pneg %p122
      %p296 = scmp.lt.s32.totalorder %s20, 1
      %s297 = scalar_select %p296, %s20, 1
      %s298 = scalar_lea.vmem %s5, %s297
      %p299 = pneg %p151
      %p300 = pneg %p148
      %p301 = pneg %p177
      %p302 = pneg %p174
      %p303 = scmp.lt.s32.totalorder %s20, 1
      %s304 = scalar_select %p303, %s20, 1
      %s305 = smul.addr %s304, 8
      %s306 = smul.addr %s305, 4
      %s307 = scalar_lea.vmem %s6, %s306
      %p308 = pneg %p203
      %p309 = pneg %p200
      %p310 = scmp.lt.s32.totalorder %s20, 1
      %s311 = scalar_select %p310, %s20, 1
      %s312 = scalar_lea.vmem %s7, %s311
      %p313 = pneg %p229
      %p314 = pneg %p226
      %p315 = scmp.lt.s32.totalorder %s20, 1
      %s316 = scalar_select %p315, %s20, 1
      %s317 = scalar_lea.vmem %s8, %s316
      %p318 = scmp.lt.s32.totalorder %s20, 1
      %s319 = scalar_select %p318, %s20, 1
      %s320 = smul.addr %s319, 72
      %s321 = smul.addr %s320, 8
      %s322 = scalar_lea.vmem %s0, %s321
      %p323 = scmp.lt.s32.totalorder %s20, 1
      %s324 = scalar_select %p323, %s20, 1
      %s325 = scalar_lea.vmem %s5, %s324
      %p326 = scmp.lt.s32.totalorder %s20, 1
      %s327 = scalar_select %p326, %s20, 1
      %s328 = smul.addr %s327, 8
      %s329 = smul.addr %s328, 4
      %s330 = scalar_lea.vmem %s6, %s329
      %p331 = scmp.lt.s32.totalorder %s20, 1
      %s332 = scalar_select %p331, %s20, 1
      %s333 = scalar_lea.vmem %s7, %s332
      %p334 = scmp.lt.s32.totalorder %s20, 1
      %s335 = scalar_select %p334, %s20, 1
      %s336 = scalar_lea.vmem %s8, %s335
      %v338 = vld [vmem:[%s322] sm:$0xff]
      %v339 = vld [vmem:[%s322 + $0x8] sm:$0x1]
      %v340 = vld [vmem:[%s322 + $0x10] sm:$0xff]
      %v341 = vld [vmem:[%s322 + $0x18] sm:$0x1]
      %v342 = vld [vmem:[%s322 + $0x20] sm:$0xff]
      %v343 = vld [vmem:[%s322 + $0x28] sm:$0x1]
      %v344 = vld [vmem:[%s322 + $0x30] sm:$0xff]
      %v345 = vld [vmem:[%s322 + $0x38] sm:$0x1]
      %v346 = vld [vmem:[%s322 + $0x40] sm:$0xff]
      %v347 = vld [vmem:[%s322 + $0x48] sm:$0x1]
      %v348 = vld [vmem:[%s322 + $0x50] sm:$0xff]
      %v349 = vld [vmem:[%s322 + $0x58] sm:$0x1]
      %v350 = vld [vmem:[%s322 + $0x60] sm:$0xff]
      %v351 = vld [vmem:[%s322 + $0x68] sm:$0x1]
      %v352 = vld [vmem:[%s322 + $0x70] sm:$0xff]
      %v353 = vld [vmem:[%s322 + $0x78] sm:$0x1]
      %v354 = vld [vmem:[%s322 + $0x80] sm:$0xff]
      %v355 = vld [vmem:[%s322 + $0x88] sm:$0x1]
      %v356 = vld [vmem:[%s322 + $0x90] sm:$0xff]
      %v357 = vld [vmem:[%s322 + $0x98] sm:$0x1]
      %v358 = vld [vmem:[%s322 + $0xa0] sm:$0xff]
      %v359 = vld [vmem:[%s322 + $0xa8] sm:$0x1]
      %v360 = vld [vmem:[%s322 + $0xb0] sm:$0xff]
      %v361 = vld [vmem:[%s322 + $0xb8] sm:$0x1]
      %v362 = vld [vmem:[%s322 + $0xc0] sm:$0xff]
      %v363 = vld [vmem:[%s322 + $0xc8] sm:$0x1]
      %v364 = vld [vmem:[%s322 + $0xd0] sm:$0xff]
      %v365 = vld [vmem:[%s322 + $0xd8] sm:$0x1]
      %v366 = vld [vmem:[%s322 + $0xe0] sm:$0xff]
      %v367 = vld [vmem:[%s322 + $0xe8] sm:$0x1]
      %v368 = vld [vmem:[%s322 + $0xf0] sm:$0xff]
      %v369 = vld [vmem:[%s322 + $0xf8] sm:$0x1]
      %v370 = vld [vmem:[%s322 + $0x100] sm:$0xff]
      %v371 = vld [vmem:[%s322 + $0x108] sm:$0x1]
      %v372 = vld [vmem:[%s322 + $0x110] sm:$0xff]
      %v373 = vld [vmem:[%s322 + $0x118] sm:$0x1]
      %v374 = vld [vmem:[%s322 + $0x120] sm:$0xff]
      %v375 = vld [vmem:[%s322 + $0x128] sm:$0x1]
      %v376 = vld [vmem:[%s322 + $0x130] sm:$0xff]
      %v377 = vld [vmem:[%s322 + $0x138] sm:$0x1]
      %v378 = vld [vmem:[%s322 + $0x140] sm:$0xff]
      %v379 = vld [vmem:[%s322 + $0x148] sm:$0x1]
      %v380 = vld [vmem:[%s322 + $0x150] sm:$0xff]
      %v381 = vld [vmem:[%s322 + $0x158] sm:$0x1]
      %v382 = vld [vmem:[%s322 + $0x160] sm:$0xff]
      %v383 = vld [vmem:[%s322 + $0x168] sm:$0x1]
      %v384 = vld [vmem:[%s322 + $0x170] sm:$0xff]
      %v385 = vld [vmem:[%s322 + $0x178] sm:$0x1]
      %v386 = vld [vmem:[%s322 + $0x180] sm:$0xff]
      %v387 = vld [vmem:[%s322 + $0x188] sm:$0x1]
      %v388 = vld [vmem:[%s322 + $0x190] sm:$0xff]
      %v389 = vld [vmem:[%s322 + $0x198] sm:$0x1]
      %v390 = vld [vmem:[%s322 + $0x1a0] sm:$0xff]
      %v391 = vld [vmem:[%s322 + $0x1a8] sm:$0x1]
      %v392 = vld [vmem:[%s322 + $0x1b0] sm:$0xff]
      %v393 = vld [vmem:[%s322 + $0x1b8] sm:$0x1]
      %v394 = vld [vmem:[%s322 + $0x1c0] sm:$0xff]
      %v395 = vld [vmem:[%s322 + $0x1c8] sm:$0x1]
      %v396 = vld [vmem:[%s322 + $0x1d0] sm:$0xff]
      %v397 = vld [vmem:[%s322 + $0x1d8] sm:$0x1]
      %v398 = vld [vmem:[%s322 + $0x1e0] sm:$0xff]
      %v399 = vld [vmem:[%s322 + $0x1e8] sm:$0x1]
      %v400 = vld [vmem:[%s322 + $0x1f0] sm:$0xff]
      %v401 = vld [vmem:[%s322 + $0x1f8] sm:$0x1]
      %v402 = vld [vmem:[%s322 + $0x200] sm:$0xff]
      %v403 = vld [vmem:[%s322 + $0x208] sm:$0x1]
      %v404 = vld [vmem:[%s322 + $0x210] sm:$0xff]
      %v405 = vld [vmem:[%s322 + $0x218] sm:$0x1]
      %v406 = vld [vmem:[%s322 + $0x220] sm:$0xff]
      %v407 = vld [vmem:[%s322 + $0x228] sm:$0x1]
      %v408 = vld [vmem:[%s322 + $0x230] sm:$0xff]
      %v409 = vld [vmem:[%s322 + $0x238] sm:$0x1]
      %v410 = vld [vmem:[%s2] sm:$0x1]
      %v412 = vlaneseq
      %v413 = vshrl.u32 %v412, 7
      %v414 = vsub.s32 0, %v413
      %v415 = vrot.slane %v410, %v414
      %v417 = vmul.f32 %v338, %v415
      %v418 = vmul.f32 %v339, %v415
      %v419 = vmul.f32 %v340, %v415
      %v420 = vmul.f32 %v341, %v415
      %v421 = vmul.f32 %v342, %v415
      %v422 = vmul.f32 %v343, %v415
      %v423 = vmul.f32 %v344, %v415
      %v424 = vmul.f32 %v345, %v415
      %v425 = vmul.f32 %v346, %v415
      %v426 = vmul.f32 %v347, %v415
      %v427 = vmul.f32 %v348, %v415
      %v428 = vmul.f32 %v349, %v415
      %v429 = vmul.f32 %v350, %v415
      %v430 = vmul.f32 %v351, %v415
      %v431 = vmul.f32 %v352, %v415
      %v432 = vmul.f32 %v353, %v415
      %v433 = vmul.f32 %v354, %v415
      %v434 = vmul.f32 %v355, %v415
      %v435 = vmul.f32 %v356, %v415
      %v436 = vmul.f32 %v357, %v415
      %v437 = vmul.f32 %v358, %v415
      %v438 = vmul.f32 %v359, %v415
      %v439 = vmul.f32 %v360, %v415
      %v440 = vmul.f32 %v361, %v415
      %v441 = vmul.f32 %v362, %v415
      %v442 = vmul.f32 %v363, %v415
      %v443 = vmul.f32 %v364, %v415
      %v444 = vmul.f32 %v365, %v415
      %v445 = vmul.f32 %v366, %v415
      %v446 = vmul.f32 %v367, %v415
      %v447 = vmul.f32 %v368, %v415
      %v448 = vmul.f32 %v369, %v415
      %v449 = vmul.f32 %v370, %v415
      %v450 = vmul.f32 %v371, %v415
      %v451 = vmul.f32 %v372, %v415
      %v452 = vmul.f32 %v373, %v415
      %v453 = vmul.f32 %v374, %v415
      %v454 = vmul.f32 %v375, %v415
      %v455 = vmul.f32 %v376, %v415
      %v456 = vmul.f32 %v377, %v415
      %v457 = vmul.f32 %v378, %v415
      %v458 = vmul.f32 %v379, %v415
      %v459 = vmul.f32 %v380, %v415
      %v460 = vmul.f32 %v381, %v415
      %v461 = vmul.f32 %v382, %v415
      %v462 = vmul.f32 %v383, %v415
      %v463 = vmul.f32 %v384, %v415
      %v464 = vmul.f32 %v385, %v415
      %v465 = vmul.f32 %v386, %v415
      %v466 = vmul.f32 %v387, %v415
      %v467 = vmul.f32 %v388, %v415
      %v468 = vmul.f32 %v389, %v415
      %v469 = vmul.f32 %v390, %v415
      %v470 = vmul.f32 %v391, %v415
      %v471 = vmul.f32 %v392, %v415
      %v472 = vmul.f32 %v393, %v415
      %v473 = vmul.f32 %v394, %v415
      %v474 = vmul.f32 %v395, %v415
      %v475 = vmul.f32 %v396, %v415
      %v476 = vmul.f32 %v397, %v415
      %v477 = vmul.f32 %v398, %v415
      %v478 = vmul.f32 %v399, %v415
      %v479 = vmul.f32 %v400, %v415
      %v480 = vmul.f32 %v401, %v415
      %v481 = vmul.f32 %v402, %v415
      %v482 = vmul.f32 %v403, %v415
      %v483 = vmul.f32 %v404, %v415
      %v484 = vmul.f32 %v405, %v415
      %v485 = vmul.f32 %v406, %v415
      %v486 = vmul.f32 %v407, %v415
      %v487 = vmul.f32 %v408, %v415
      %v488 = vmul.f32 %v409, %v415
      %v489 = vld [vmem:[%s3] sm:$0x1]
      %v491 = vlaneseq
      %v492 = vshrl.u32 %v491, 7
      %v493 = vsub.s32 0, %v492
      %v494 = vrot.slane %v489, %v493
      %v496 = vadd.f32 %v417, %v494
      %v497 = vadd.f32 %v418, %v494
      %v498 = vadd.f32 %v419, %v494
      %v499 = vadd.f32 %v420, %v494
      %v500 = vadd.f32 %v421, %v494
      %v501 = vadd.f32 %v422, %v494
      %v502 = vadd.f32 %v423, %v494
      %v503 = vadd.f32 %v424, %v494
      %v504 = vadd.f32 %v425, %v494
      %v505 = vadd.f32 %v426, %v494
      %v506 = vadd.f32 %v427, %v494
      %v507 = vadd.f32 %v428, %v494
      %v508 = vadd.f32 %v429, %v494
      %v509 = vadd.f32 %v430, %v494
      %v510 = vadd.f32 %v431, %v494
      %v511 = vadd.f32 %v432, %v494
      %v512 = vadd.f32 %v433, %v494
      %v513 = vadd.f32 %v434, %v494
      %v514 = vadd.f32 %v435, %v494
      %v515 = vadd.f32 %v436, %v494
      %v516 = vadd.f32 %v437, %v494
      %v517 = vadd.f32 %v438, %v494
      %v518 = vadd.f32 %v439, %v494
      %v519 = vadd.f32 %v440, %v494
      %v520 = vadd.f32 %v441, %v494
      %v521 = vadd.f32 %v442, %v494
      %v522 = vadd.f32 %v443, %v494
      %v523 = vadd.f32 %v444, %v494
      %v524 = vadd.f32 %v445, %v494
      %v525 = vadd.f32 %v446, %v494
      %v526 = vadd.f32 %v447, %v494
      %v527 = vadd.f32 %v448, %v494
      %v528 = vadd.f32 %v449, %v494
      %v529 = vadd.f32 %v450, %v494
      %v530 = vadd.f32 %v451, %v494
      %v531 = vadd.f32 %v452, %v494
      %v532 = vadd.f32 %v453, %v494
      %v533 = vadd.f32 %v454, %v494
      %v534 = vadd.f32 %v455, %v494
      %v535 = vadd.f32 %v456, %v494
      %v536 = vadd.f32 %v457, %v494
      %v537 = vadd.f32 %v458, %v494
      %v538 = vadd.f32 %v459, %v494
      %v539 = vadd.f32 %v460, %v494
      %v540 = vadd.f32 %v461, %v494
      %v541 = vadd.f32 %v462, %v494
      %v542 = vadd.f32 %v463, %v494
      %v543 = vadd.f32 %v464, %v494
      %v544 = vadd.f32 %v465, %v494
      %v545 = vadd.f32 %v466, %v494
      %v546 = vadd.f32 %v467, %v494
      %v547 = vadd.f32 %v468, %v494
      %v548 = vadd.f32 %v469, %v494
      %v549 = vadd.f32 %v470, %v494
      %v550 = vadd.f32 %v471, %v494
      %v551 = vadd.f32 %v472, %v494
      %v552 = vadd.f32 %v473, %v494
      %v553 = vadd.f32 %v474, %v494
      %v554 = vadd.f32 %v475, %v494
      %v555 = vadd.f32 %v476, %v494
      %v556 = vadd.f32 %v477, %v494
      %v557 = vadd.f32 %v478, %v494
      %v558 = vadd.f32 %v479, %v494
      %v559 = vadd.f32 %v480, %v494
      %v560 = vadd.f32 %v481, %v494
      %v561 = vadd.f32 %v482, %v494
      %v562 = vadd.f32 %v483, %v494
      %v563 = vadd.f32 %v484, %v494
      %v564 = vadd.f32 %v485, %v494
      %v565 = vadd.f32 %v486, %v494
      %v566 = vadd.f32 %v487, %v494
      %v567 = vadd.f32 %v488, %v494
      %vm568 = vcmp.ge.f32.partialorder %v496, 0.0
      %vm569 = vcmp.ge.f32.partialorder %v497, 0.0
      %vm570 = vcmp.ge.f32.partialorder %v498, 0.0
      %vm571 = vcmp.ge.f32.partialorder %v499, 0.0
      %vm572 = vcmp.ge.f32.partialorder %v500, 0.0
      %vm573 = vcmp.ge.f32.partialorder %v501, 0.0
      %vm574 = vcmp.ge.f32.partialorder %v502, 0.0
      %vm575 = vcmp.ge.f32.partialorder %v503, 0.0
      %vm576 = vcmp.ge.f32.partialorder %v504, 0.0
      %vm577 = vcmp.ge.f32.partialorder %v505, 0.0
      %vm578 = vcmp.ge.f32.partialorder %v506, 0.0
      %vm579 = vcmp.ge.f32.partialorder %v507, 0.0
      %vm580 = vcmp.ge.f32.partialorder %v508, 0.0
      %vm581 = vcmp.ge.f32.partialorder %v509, 0.0
      %vm582 = vcmp.ge.f32.partialorder %v510, 0.0
      %vm583 = vcmp.ge.f32.partialorder %v511, 0.0
      %vm584 = vcmp.ge.f32.partialorder %v512, 0.0
      %vm585 = vcmp.ge.f32.partialorder %v513, 0.0
      %vm586 = vcmp.ge.f32.partialorder %v514, 0.0
      %vm587 = vcmp.ge.f32.partialorder %v515, 0.0
      %vm588 = vcmp.ge.f32.partialorder %v516, 0.0
      %vm589 = vcmp.ge.f32.partialorder %v517, 0.0
      %vm590 = vcmp.ge.f32.partialorder %v518, 0.0
      %vm591 = vcmp.ge.f32.partialorder %v519, 0.0
      %vm592 = vcmp.ge.f32.partialorder %v520, 0.0
      %vm593 = vcmp.ge.f32.partialorder %v521, 0.0
      %vm594 = vcmp.ge.f32.partialorder %v522, 0.0
      %vm595 = vcmp.ge.f32.partialorder %v523, 0.0
      %vm596 = vcmp.ge.f32.partialorder %v524, 0.0
      %vm597 = vcmp.ge.f32.partialorder %v525, 0.0
      %vm598 = vcmp.ge.f32.partialorder %v526, 0.0
      %vm599 = vcmp.ge.f32.partialorder %v527, 0.0
      %vm600 = vcmp.ge.f32.partialorder %v528, 0.0
      %vm601 = vcmp.ge.f32.partialorder %v529, 0.0
      %vm602 = vcmp.ge.f32.partialorder %v530, 0.0
      %vm603 = vcmp.ge.f32.partialorder %v531, 0.0
      %vm604 = vcmp.ge.f32.partialorder %v532, 0.0
      %vm605 = vcmp.ge.f32.partialorder %v533, 0.0
      %vm606 = vcmp.ge.f32.partialorder %v534, 0.0
      %vm607 = vcmp.ge.f32.partialorder %v535, 0.0
      %vm608 = vcmp.ge.f32.partialorder %v536, 0.0
      %vm609 = vcmp.ge.f32.partialorder %v537, 0.0
      %vm610 = vcmp.ge.f32.partialorder %v538, 0.0
      %vm611 = vcmp.ge.f32.partialorder %v539, 0.0
      %vm612 = vcmp.ge.f32.partialorder %v540, 0.0
      %vm613 = vcmp.ge.f32.partialorder %v541, 0.0
      %vm614 = vcmp.ge.f32.partialorder %v542, 0.0
      %vm615 = vcmp.ge.f32.partialorder %v543, 0.0
      %vm616 = vcmp.ge.f32.partialorder %v544, 0.0
      %vm617 = vcmp.ge.f32.partialorder %v545, 0.0
      %vm618 = vcmp.ge.f32.partialorder %v546, 0.0
      %vm619 = vcmp.ge.f32.partialorder %v547, 0.0
      %vm620 = vcmp.ge.f32.partialorder %v548, 0.0
      %vm621 = vcmp.ge.f32.partialorder %v549, 0.0
      %vm622 = vcmp.ge.f32.partialorder %v550, 0.0
      %vm623 = vcmp.ge.f32.partialorder %v551, 0.0
      %vm624 = vcmp.ge.f32.partialorder %v552, 0.0
      %vm625 = vcmp.ge.f32.partialorder %v553, 0.0
      %vm626 = vcmp.ge.f32.partialorder %v554, 0.0
      %vm627 = vcmp.ge.f32.partialorder %v555, 0.0
      %vm628 = vcmp.ge.f32.partialorder %v556, 0.0
      %vm629 = vcmp.ge.f32.partialorder %v557, 0.0
      %vm630 = vcmp.ge.f32.partialorder %v558, 0.0
      %vm631 = vcmp.ge.f32.partialorder %v559, 0.0
      %vm632 = vcmp.ge.f32.partialorder %v560, 0.0
      %vm633 = vcmp.ge.f32.partialorder %v561, 0.0
      %vm634 = vcmp.ge.f32.partialorder %v562, 0.0
      %vm635 = vcmp.ge.f32.partialorder %v563, 0.0
      %vm636 = vcmp.ge.f32.partialorder %v564, 0.0
      %vm637 = vcmp.ge.f32.partialorder %v565, 0.0
      %vm638 = vcmp.ge.f32.partialorder %v566, 0.0
      %vm639 = vcmp.ge.f32.partialorder %v567, 0.0
      %v640 = vmul.f32 %v496, 0.1
      %v641 = vmul.f32 %v497, 0.1
      %v642 = vmul.f32 %v498, 0.1
      %v643 = vmul.f32 %v499, 0.1
      %v644 = vmul.f32 %v500, 0.1
      %v645 = vmul.f32 %v501, 0.1
      %v646 = vmul.f32 %v502, 0.1
      %v647 = vmul.f32 %v503, 0.1
      %v648 = vmul.f32 %v504, 0.1
      %v649 = vmul.f32 %v505, 0.1
      %v650 = vmul.f32 %v506, 0.1
      %v651 = vmul.f32 %v507, 0.1
      %v652 = vmul.f32 %v508, 0.1
      %v653 = vmul.f32 %v509, 0.1
      %v654 = vmul.f32 %v510, 0.1
      %v655 = vmul.f32 %v511, 0.1
      %v656 = vmul.f32 %v512, 0.1
      %v657 = vmul.f32 %v513, 0.1
      %v658 = vmul.f32 %v514, 0.1
      %v659 = vmul.f32 %v515, 0.1
      %v660 = vmul.f32 %v516, 0.1
      %v661 = vmul.f32 %v517, 0.1
      %v662 = vmul.f32 %v518, 0.1
      %v663 = vmul.f32 %v519, 0.1
      %v664 = vmul.f32 %v520, 0.1
      %v665 = vmul.f32 %v521, 0.1
      %v666 = vmul.f32 %v522, 0.1
      %v667 = vmul.f32 %v523, 0.1
      %v668 = vmul.f32 %v524, 0.1
      %v669 = vmul.f32 %v525, 0.1
      %v670 = vmul.f32 %v526, 0.1
      %v671 = vmul.f32 %v527, 0.1
      %v672 = vmul.f32 %v528, 0.1
      %v673 = vmul.f32 %v529, 0.1
      %v674 = vmul.f32 %v530, 0.1
      %v675 = vmul.f32 %v531, 0.1
      %v676 = vmul.f32 %v532, 0.1
      %v677 = vmul.f32 %v533, 0.1
      %v678 = vmul.f32 %v534, 0.1
      %v679 = vmul.f32 %v535, 0.1
      %v680 = vmul.f32 %v536, 0.1
      %v681 = vmul.f32 %v537, 0.1
      %v682 = vmul.f32 %v538, 0.1
      %v683 = vmul.f32 %v539, 0.1
      %v684 = vmul.f32 %v540, 0.1
      %v685 = vmul.f32 %v541, 0.1
      %v686 = vmul.f32 %v542, 0.1
      %v687 = vmul.f32 %v543, 0.1
      %v688 = vmul.f32 %v544, 0.1
      %v689 = vmul.f32 %v545, 0.1
      %v690 = vmul.f32 %v546, 0.1
      %v691 = vmul.f32 %v547, 0.1
      %v692 = vmul.f32 %v548, 0.1
      %v693 = vmul.f32 %v549, 0.1
      %v694 = vmul.f32 %v550, 0.1
      %v695 = vmul.f32 %v551, 0.1
      %v696 = vmul.f32 %v552, 0.1
      %v697 = vmul.f32 %v553, 0.1
      %v698 = vmul.f32 %v554, 0.1
      %v699 = vmul.f32 %v555, 0.1
      %v700 = vmul.f32 %v556, 0.1
      %v701 = vmul.f32 %v557, 0.1
      %v702 = vmul.f32 %v558, 0.1
      %v703 = vmul.f32 %v559, 0.1
      %v704 = vmul.f32 %v560, 0.1
      %v705 = vmul.f32 %v561, 0.1
      %v706 = vmul.f32 %v562, 0.1
      %v707 = vmul.f32 %v563, 0.1
      %v708 = vmul.f32 %v564, 0.1
      %v709 = vmul.f32 %v565, 0.1
      %v710 = vmul.f32 %v566, 0.1
      %v711 = vmul.f32 %v567, 0.1
      %v712 = vsel %vm568, %v496, %v640
      %v713 = vsel %vm569, %v497, %v641
      %v714 = vsel %vm570, %v498, %v642
      %v715 = vsel %vm571, %v499, %v643
      %v716 = vsel %vm572, %v500, %v644
      %v717 = vsel %vm573, %v501, %v645
      %v718 = vsel %vm574, %v502, %v646
      %v719 = vsel %vm575, %v503, %v647
      %v720 = vsel %vm576, %v504, %v648
      %v721 = vsel %vm577, %v505, %v649
      %v722 = vsel %vm578, %v506, %v650
      %v723 = vsel %vm579, %v507, %v651
      %v724 = vsel %vm580, %v508, %v652
      %v725 = vsel %vm581, %v509, %v653
      %v726 = vsel %vm582, %v510, %v654
      %v727 = vsel %vm583, %v511, %v655
      %v728 = vsel %vm584, %v512, %v656
      %v729 = vsel %vm585, %v513, %v657
      %v730 = vsel %vm586, %v514, %v658
      %v731 = vsel %vm587, %v515, %v659
      %v732 = vsel %vm588, %v516, %v660
      %v733 = vsel %vm589, %v517, %v661
      %v734 = vsel %vm590, %v518, %v662
      %v735 = vsel %vm591, %v519, %v663
      %v736 = vsel %vm592, %v520, %v664
      %v737 = vsel %vm593, %v521, %v665
      %v738 = vsel %vm594, %v522, %v666
      %v739 = vsel %vm595, %v523, %v667
      %v740 = vsel %vm596, %v524, %v668
      %v741 = vsel %vm597, %v525, %v669
      %v742 = vsel %vm598, %v526, %v670
      %v743 = vsel %vm599, %v527, %v671
      %v744 = vsel %vm600, %v528, %v672
      %v745 = vsel %vm601, %v529, %v673
      %v746 = vsel %vm602, %v530, %v674
      %v747 = vsel %vm603, %v531, %v675
      %v748 = vsel %vm604, %v532, %v676
      %v749 = vsel %vm605, %v533, %v677
      %v750 = vsel %vm606, %v534, %v678
      %v751 = vsel %vm607, %v535, %v679
      %v752 = vsel %vm608, %v536, %v680
      %v753 = vsel %vm609, %v537, %v681
      %v754 = vsel %vm610, %v538, %v682
      %v755 = vsel %vm611, %v539, %v683
      %v756 = vsel %vm612, %v540, %v684
      %v757 = vsel %vm613, %v541, %v685
      %v758 = vsel %vm614, %v542, %v686
      %v759 = vsel %vm615, %v543, %v687
      %v760 = vsel %vm616, %v544, %v688
      %v761 = vsel %vm617, %v545, %v689
      %v762 = vsel %vm618, %v546, %v690
      %v763 = vsel %vm619, %v547, %v691
      %v764 = vsel %vm620, %v548, %v692
      %v765 = vsel %vm621, %v549, %v693
      %v766 = vsel %vm622, %v550, %v694
      %v767 = vsel %vm623, %v551, %v695
      %v768 = vsel %vm624, %v552, %v696
      %v769 = vsel %vm625, %v553, %v697
      %v770 = vsel %vm626, %v554, %v698
      %v771 = vsel %vm627, %v555, %v699
      %v772 = vsel %vm628, %v556, %v700
      %v773 = vsel %vm629, %v557, %v701
      %v774 = vsel %vm630, %v558, %v702
      %v775 = vsel %vm631, %v559, %v703
      %v776 = vsel %vm632, %v560, %v704
      %v777 = vsel %vm633, %v561, %v705
      %v778 = vsel %vm634, %v562, %v706
      %v779 = vsel %vm635, %v563, %v707
      %v780 = vsel %vm636, %v564, %v708
      %v781 = vsel %vm637, %v565, %v709
      %v782 = vsel %vm638, %v566, %v710
      %v783 = vsel %vm639, %v567, %v711
      %v784 = vld [vmem:[%s4] sm:$0xff]
      %v785 = vld [vmem:[%s4 + $0x8] sm:$0x1]
      %v786 = vld [vmem:[%s4 + $0x10] sm:$0xff]
      %v787 = vld [vmem:[%s4 + $0x18] sm:$0x1]
      %v788 = vld [vmem:[%s4 + $0x20] sm:$0xff]
      %v789 = vld [vmem:[%s4 + $0x28] sm:$0x1]
      %v790 = vld [vmem:[%s4 + $0x30] sm:$0xff]
      %v791 = vld [vmem:[%s4 + $0x38] sm:$0x1]
      %v792 = vld [vmem:[%s4 + $0x40] sm:$0xff]
      %v793 = vld [vmem:[%s4 + $0x48] sm:$0x1]
      %v794 = vld [vmem:[%s4 + $0x50] sm:$0xff]
      %v795 = vld [vmem:[%s4 + $0x58] sm:$0x1]
      %v796 = vld [vmem:[%s4 + $0x60] sm:$0xff]
      %v797 = vld [vmem:[%s4 + $0x68] sm:$0x1]
      %v798 = vld [vmem:[%s4 + $0x70] sm:$0xff]
      %v799 = vld [vmem:[%s4 + $0x78] sm:$0x1]
      %v800 = vld [vmem:[%s4 + $0x80] sm:$0xff]
      %v801 = vld [vmem:[%s4 + $0x88] sm:$0x1]
      %v802 = vld [vmem:[%s4 + $0x90] sm:$0xff]
      %v803 = vld [vmem:[%s4 + $0x98] sm:$0x1]
      %v804 = vld [vmem:[%s4 + $0xa0] sm:$0xff]
      %v805 = vld [vmem:[%s4 + $0xa8] sm:$0x1]
      %v806 = vld [vmem:[%s4 + $0xb0] sm:$0xff]
      %v807 = vld [vmem:[%s4 + $0xb8] sm:$0x1]
      %v808 = vld [vmem:[%s4 + $0xc0] sm:$0xff]
      %v809 = vld [vmem:[%s4 + $0xc8] sm:$0x1]
      %v810 = vld [vmem:[%s4 + $0xd0] sm:$0xff]
      %v811 = vld [vmem:[%s4 + $0xd8] sm:$0x1]
      %v812 = vld [vmem:[%s4 + $0xe0] sm:$0xff]
      %v813 = vld [vmem:[%s4 + $0xe8] sm:$0x1]
      %v814 = vld [vmem:[%s4 + $0xf0] sm:$0xff]
      %v815 = vld [vmem:[%s4 + $0xf8] sm:$0x1]
      %v816 = vld [vmem:[%s4 + $0x100] sm:$0xff]
      %v817 = vld [vmem:[%s4 + $0x108] sm:$0x1]
      %v818 = vld [vmem:[%s4 + $0x110] sm:$0xff]
      %v819 = vld [vmem:[%s4 + $0x118] sm:$0x1]
      %v820 = vld [vmem:[%s4 + $0x120] sm:$0xff]
      %v821 = vld [vmem:[%s4 + $0x128] sm:$0x1]
      %v822 = vld [vmem:[%s4 + $0x130] sm:$0xff]
      %v823 = vld [vmem:[%s4 + $0x138] sm:$0x1]
      %v824 = vld [vmem:[%s4 + $0x140] sm:$0xff]
      %v825 = vld [vmem:[%s4 + $0x148] sm:$0x1]
      %v826 = vld [vmem:[%s4 + $0x150] sm:$0xff]
      %v827 = vld [vmem:[%s4 + $0x158] sm:$0x1]
      %v828 = vld [vmem:[%s4 + $0x160] sm:$0xff]
      %v829 = vld [vmem:[%s4 + $0x168] sm:$0x1]
      %v830 = vld [vmem:[%s4 + $0x170] sm:$0xff]
      %v831 = vld [vmem:[%s4 + $0x178] sm:$0x1]
      %v832 = vld [vmem:[%s4 + $0x180] sm:$0xff]
      %v833 = vld [vmem:[%s4 + $0x188] sm:$0x1]
      %v834 = vld [vmem:[%s4 + $0x190] sm:$0xff]
      %v835 = vld [vmem:[%s4 + $0x198] sm:$0x1]
      %v836 = vld [vmem:[%s4 + $0x1a0] sm:$0xff]
      %v837 = vld [vmem:[%s4 + $0x1a8] sm:$0x1]
      %v838 = vld [vmem:[%s4 + $0x1b0] sm:$0xff]
      %v839 = vld [vmem:[%s4 + $0x1b8] sm:$0x1]
      %v840 = vld [vmem:[%s4 + $0x1c0] sm:$0xff]
      %v841 = vld [vmem:[%s4 + $0x1c8] sm:$0x1]
      %v842 = vld [vmem:[%s4 + $0x1d0] sm:$0xff]
      %v843 = vld [vmem:[%s4 + $0x1d8] sm:$0x1]
      %v844 = vld [vmem:[%s4 + $0x1e0] sm:$0xff]
      %v845 = vld [vmem:[%s4 + $0x1e8] sm:$0x1]
      %v846 = vld [vmem:[%s4 + $0x1f0] sm:$0xff]
      %v847 = vld [vmem:[%s4 + $0x1f8] sm:$0x1]
      %v848 = vld [vmem:[%s4 + $0x200] sm:$0xff]
      %v849 = vld [vmem:[%s4 + $0x208] sm:$0x1]
      %v850 = vld [vmem:[%s4 + $0x210] sm:$0xff]
      %v851 = vld [vmem:[%s4 + $0x218] sm:$0x1]
      %v852 = vld [vmem:[%s4 + $0x220] sm:$0xff]
      %v853 = vld [vmem:[%s4 + $0x228] sm:$0x1]
      %v854 = vld [vmem:[%s4 + $0x230] sm:$0xff]
      %v855 = vld [vmem:[%s4 + $0x238] sm:$0x1]
      %857 = vset.pattern.permute.xlu0 0
      %858 = vperm.xlu0 %857, %v784
      %v859 = vpop.permute.xlu0 %858
      %862 = vset.pattern.permute.xlu0 0
      %863 = vperm.xlu0 %862, %v785
      %v864 = vpop.permute.xlu0 %863
      %867 = vset.pattern.permute.xlu0 0
      %868 = vperm.xlu0 %867, %v786
      %v869 = vpop.permute.xlu0 %868
      %872 = vset.pattern.permute.xlu0 0
      %873 = vperm.xlu0 %872, %v787
      %v874 = vpop.permute.xlu0 %873
      %877 = vset.pattern.permute.xlu0 0
      %878 = vperm.xlu0 %877, %v788
      %v879 = vpop.permute.xlu0 %878
      %882 = vset.pattern.permute.xlu0 0
      %883 = vperm.xlu0 %882, %v789
      %v884 = vpop.permute.xlu0 %883
      %887 = vset.pattern.permute.xlu0 0
      %888 = vperm.xlu0 %887, %v790
      %v889 = vpop.permute.xlu0 %888
      %892 = vset.pattern.permute.xlu0 0
      %893 = vperm.xlu0 %892, %v791
      %v894 = vpop.permute.xlu0 %893
      %897 = vset.pattern.permute.xlu0 0
      %898 = vperm.xlu0 %897, %v792
      %v899 = vpop.permute.xlu0 %898
      %902 = vset.pattern.permute.xlu0 0
      %903 = vperm.xlu0 %902, %v793
      %v904 = vpop.permute.xlu0 %903
      %907 = vset.pattern.permute.xlu0 0
      %908 = vperm.xlu0 %907, %v794
      %v909 = vpop.permute.xlu0 %908
      %912 = vset.pattern.permute.xlu0 0
      %913 = vperm.xlu0 %912, %v795
      %v914 = vpop.permute.xlu0 %913
      %917 = vset.pattern.permute.xlu0 0
      %918 = vperm.xlu0 %917, %v796
      %v919 = vpop.permute.xlu0 %918
      %922 = vset.pattern.permute.xlu0 0
      %923 = vperm.xlu0 %922, %v797
      %v924 = vpop.permute.xlu0 %923
      %927 = vset.pattern.permute.xlu0 0
      %928 = vperm.xlu0 %927, %v798
      %v929 = vpop.permute.xlu0 %928
      %932 = vset.pattern.permute.xlu0 0
      %933 = vperm.xlu0 %932, %v799
      %v934 = vpop.permute.xlu0 %933
      %937 = vset.pattern.permute.xlu0 0
      %938 = vperm.xlu0 %937, %v800
      %v939 = vpop.permute.xlu0 %938
      %942 = vset.pattern.permute.xlu0 0
      %943 = vperm.xlu0 %942, %v801
      %v944 = vpop.permute.xlu0 %943
      %947 = vset.pattern.permute.xlu0 0
      %948 = vperm.xlu0 %947, %v802
      %v949 = vpop.permute.xlu0 %948
      %952 = vset.pattern.permute.xlu0 0
      %953 = vperm.xlu0 %952, %v803
      %v954 = vpop.permute.xlu0 %953
      %957 = vset.pattern.permute.xlu0 0
      %958 = vperm.xlu0 %957, %v804
      %v959 = vpop.permute.xlu0 %958
      %962 = vset.pattern.permute.xlu0 0
      %963 = vperm.xlu0 %962, %v805
      %v964 = vpop.permute.xlu0 %963
      %967 = vset.pattern.permute.xlu0 0
      %968 = vperm.xlu0 %967, %v806
      %v969 = vpop.permute.xlu0 %968
      %972 = vset.pattern.permute.xlu0 0
      %973 = vperm.xlu0 %972, %v807
      %v974 = vpop.permute.xlu0 %973
      %977 = vset.pattern.permute.xlu0 0
      %978 = vperm.xlu0 %977, %v808
      %v979 = vpop.permute.xlu0 %978
      %982 = vset.pattern.permute.xlu0 0
      %983 = vperm.xlu0 %982, %v809
      %v984 = vpop.permute.xlu0 %983
      %987 = vset.pattern.permute.xlu0 0
      %988 = vperm.xlu0 %987, %v810
      %v989 = vpop.permute.xlu0 %988
      %992 = vset.pattern.permute.xlu0 0
      %993 = vperm.xlu0 %992, %v811
      %v994 = vpop.permute.xlu0 %993
      %997 = vset.pattern.permute.xlu0 0
      %998 = vperm.xlu0 %997, %v812
      %v999 = vpop.permute.xlu0 %998
      %1002 = vset.pattern.permute.xlu0 0
      %1003 = vperm.xlu0 %1002, %v813
      %v1004 = vpop.permute.xlu0 %1003
      %1007 = vset.pattern.permute.xlu0 0
      %1008 = vperm.xlu0 %1007, %v814
      %v1009 = vpop.permute.xlu0 %1008
      %1012 = vset.pattern.permute.xlu0 0
      %1013 = vperm.xlu0 %1012, %v815
      %v1014 = vpop.permute.xlu0 %1013
      %1017 = vset.pattern.permute.xlu0 0
      %1018 = vperm.xlu0 %1017, %v816
      %v1019 = vpop.permute.xlu0 %1018
      %1022 = vset.pattern.permute.xlu0 0
      %1023 = vperm.xlu0 %1022, %v817
      %v1024 = vpop.permute.xlu0 %1023
      %1027 = vset.pattern.permute.xlu0 0
      %1028 = vperm.xlu0 %1027, %v818
      %v1029 = vpop.permute.xlu0 %1028
      %1032 = vset.pattern.permute.xlu0 0
      %1033 = vperm.xlu0 %1032, %v819
      %v1034 = vpop.permute.xlu0 %1033
      %1037 = vset.pattern.permute.xlu0 0
      %1038 = vperm.xlu0 %1037, %v820
      %v1039 = vpop.permute.xlu0 %1038
      %1042 = vset.pattern.permute.xlu0 0
      %1043 = vperm.xlu0 %1042, %v821
      %v1044 = vpop.permute.xlu0 %1043
      %1047 = vset.pattern.permute.xlu0 0
      %1048 = vperm.xlu0 %1047, %v822
      %v1049 = vpop.permute.xlu0 %1048
      %1052 = vset.pattern.permute.xlu0 0
      %1053 = vperm.xlu0 %1052, %v823
      %v1054 = vpop.permute.xlu0 %1053
      %1057 = vset.pattern.permute.xlu0 0
      %1058 = vperm.xlu0 %1057, %v824
      %v1059 = vpop.permute.xlu0 %1058
      %1062 = vset.pattern.permute.xlu0 0
      %1063 = vperm.xlu0 %1062, %v825
      %v1064 = vpop.permute.xlu0 %1063
      %1067 = vset.pattern.permute.xlu0 0
      %1068 = vperm.xlu0 %1067, %v826
      %v1069 = vpop.permute.xlu0 %1068
      %1072 = vset.pattern.permute.xlu0 0
      %1073 = vperm.xlu0 %1072, %v827
      %v1074 = vpop.permute.xlu0 %1073
      %1077 = vset.pattern.permute.xlu0 0
      %1078 = vperm.xlu0 %1077, %v828
      %v1079 = vpop.permute.xlu0 %1078
      %1082 = vset.pattern.permute.xlu0 0
      %1083 = vperm.xlu0 %1082, %v829
      %v1084 = vpop.permute.xlu0 %1083
      %1087 = vset.pattern.permute.xlu0 0
      %1088 = vperm.xlu0 %1087, %v830
      %v1089 = vpop.permute.xlu0 %1088
      %1092 = vset.pattern.permute.xlu0 0
      %1093 = vperm.xlu0 %1092, %v831
      %v1094 = vpop.permute.xlu0 %1093
      %1097 = vset.pattern.permute.xlu0 0
      %1098 = vperm.xlu0 %1097, %v832
      %v1099 = vpop.permute.xlu0 %1098
      %1102 = vset.pattern.permute.xlu0 0
      %1103 = vperm.xlu0 %1102, %v833
      %v1104 = vpop.permute.xlu0 %1103
      %1107 = vset.pattern.permute.xlu0 0
      %1108 = vperm.xlu0 %1107, %v834
      %v1109 = vpop.permute.xlu0 %1108
      %1112 = vset.pattern.permute.xlu0 0
      %1113 = vperm.xlu0 %1112, %v835
      %v1114 = vpop.permute.xlu0 %1113
      %1117 = vset.pattern.permute.xlu0 0
      %1118 = vperm.xlu0 %1117, %v836
      %v1119 = vpop.permute.xlu0 %1118
      %1122 = vset.pattern.permute.xlu0 0
      %1123 = vperm.xlu0 %1122, %v837
      %v1124 = vpop.permute.xlu0 %1123
      %1127 = vset.pattern.permute.xlu0 0
      %1128 = vperm.xlu0 %1127, %v838
      %v1129 = vpop.permute.xlu0 %1128
      %1132 = vset.pattern.permute.xlu0 0
      %1133 = vperm.xlu0 %1132, %v839
      %v1134 = vpop.permute.xlu0 %1133
      %1137 = vset.pattern.permute.xlu0 0
      %1138 = vperm.xlu0 %1137, %v840
      %v1139 = vpop.permute.xlu0 %1138
      %1142 = vset.pattern.permute.xlu0 0
      %1143 = vperm.xlu0 %1142, %v841
      %v1144 = vpop.permute.xlu0 %1143
      %1147 = vset.pattern.permute.xlu0 0
      %1148 = vperm.xlu0 %1147, %v842
      %v1149 = vpop.permute.xlu0 %1148
      %1152 = vset.pattern.permute.xlu0 0
      %1153 = vperm.xlu0 %1152, %v843
      %v1154 = vpop.permute.xlu0 %1153
      %1157 = vset.pattern.permute.xlu0 0
      %1158 = vperm.xlu0 %1157, %v844
      %v1159 = vpop.permute.xlu0 %1158
      %1162 = vset.pattern.permute.xlu0 0
      %1163 = vperm.xlu0 %1162, %v845
      %v1164 = vpop.permute.xlu0 %1163
      %1167 = vset.pattern.permute.xlu0 0
      %1168 = vperm.xlu0 %1167, %v846
      %v1169 = vpop.permute.xlu0 %1168
      %1172 = vset.pattern.permute.xlu0 0
      %1173 = vperm.xlu0 %1172, %v847
      %v1174 = vpop.permute.xlu0 %1173
      %1177 = vset.pattern.permute.xlu0 0
      %1178 = vperm.xlu0 %1177, %v848
      %v1179 = vpop.permute.xlu0 %1178
      %1182 = vset.pattern.permute.xlu0 0
      %1183 = vperm.xlu0 %1182, %v849
      %v1184 = vpop.permute.xlu0 %1183
      %1187 = vset.pattern.permute.xlu0 0
      %1188 = vperm.xlu0 %1187, %v850
      %v1189 = vpop.permute.xlu0 %1188
      %1192 = vset.pattern.permute.xlu0 0
      %1193 = vperm.xlu0 %1192, %v851
      %v1194 = vpop.permute.xlu0 %1193
      %1197 = vset.pattern.permute.xlu0 0
      %1198 = vperm.xlu0 %1197, %v852
      %v1199 = vpop.permute.xlu0 %1198
      %1202 = vset.pattern.permute.xlu0 0
      %1203 = vperm.xlu0 %1202, %v853
      %v1204 = vpop.permute.xlu0 %1203
      %1207 = vset.pattern.permute.xlu0 0
      %1208 = vperm.xlu0 %1207, %v854
      %v1209 = vpop.permute.xlu0 %1208
      %1212 = vset.pattern.permute.xlu0 0
      %1213 = vperm.xlu0 %1212, %v855
      %v1214 = vpop.permute.xlu0 %1213
      %v1216 = vmul.f32 %v712, %v859
      %v1217 = vmul.f32 %v713, %v864
      %v1218 = vmul.f32 %v714, %v869
      %v1219 = vmul.f32 %v715, %v874
      %v1220 = vmul.f32 %v716, %v879
      %v1221 = vmul.f32 %v717, %v884
      %v1222 = vmul.f32 %v718, %v889
      %v1223 = vmul.f32 %v719, %v894
      %v1224 = vmul.f32 %v720, %v899
      %v1225 = vmul.f32 %v721, %v904
      %v1226 = vmul.f32 %v722, %v909
      %v1227 = vmul.f32 %v723, %v914
      %v1228 = vmul.f32 %v724, %v919
      %v1229 = vmul.f32 %v725, %v924
      %v1230 = vmul.f32 %v726, %v929
      %v1231 = vmul.f32 %v727, %v934
      %v1232 = vmul.f32 %v728, %v939
      %v1233 = vmul.f32 %v729, %v944
      %v1234 = vmul.f32 %v730, %v949
      %v1235 = vmul.f32 %v731, %v954
      %v1236 = vmul.f32 %v732, %v959
      %v1237 = vmul.f32 %v733, %v964
      %v1238 = vmul.f32 %v734, %v969
      %v1239 = vmul.f32 %v735, %v974
      %v1240 = vmul.f32 %v736, %v979
      %v1241 = vmul.f32 %v737, %v984
      %v1242 = vmul.f32 %v738, %v989
      %v1243 = vmul.f32 %v739, %v994
      %v1244 = vmul.f32 %v740, %v999
      %v1245 = vmul.f32 %v741, %v1004
      %v1246 = vmul.f32 %v742, %v1009
      %v1247 = vmul.f32 %v743, %v1014
      %v1248 = vmul.f32 %v744, %v1019
      %v1249 = vmul.f32 %v745, %v1024
      %v1250 = vmul.f32 %v746, %v1029
      %v1251 = vmul.f32 %v747, %v1034
      %v1252 = vmul.f32 %v748, %v1039
      %v1253 = vmul.f32 %v749, %v1044
      %v1254 = vmul.f32 %v750, %v1049
      %v1255 = vmul.f32 %v751, %v1054
      %v1256 = vmul.f32 %v752, %v1059
      %v1257 = vmul.f32 %v753, %v1064
      %v1258 = vmul.f32 %v754, %v1069
      %v1259 = vmul.f32 %v755, %v1074
      %v1260 = vmul.f32 %v756, %v1079
      %v1261 = vmul.f32 %v757, %v1084
      %v1262 = vmul.f32 %v758, %v1089
      %v1263 = vmul.f32 %v759, %v1094
      %v1264 = vmul.f32 %v760, %v1099
      %v1265 = vmul.f32 %v761, %v1104
      %v1266 = vmul.f32 %v762, %v1109
      %v1267 = vmul.f32 %v763, %v1114
      %v1268 = vmul.f32 %v764, %v1119
      %v1269 = vmul.f32 %v765, %v1124
      %v1270 = vmul.f32 %v766, %v1129
      %v1271 = vmul.f32 %v767, %v1134
      %v1272 = vmul.f32 %v768, %v1139
      %v1273 = vmul.f32 %v769, %v1144
      %v1274 = vmul.f32 %v770, %v1149
      %v1275 = vmul.f32 %v771, %v1154
      %v1276 = vmul.f32 %v772, %v1159
      %v1277 = vmul.f32 %v773, %v1164
      %v1278 = vmul.f32 %v774, %v1169
      %v1279 = vmul.f32 %v775, %v1174
      %v1280 = vmul.f32 %v776, %v1179
      %v1281 = vmul.f32 %v777, %v1184
      %v1282 = vmul.f32 %v778, %v1189
      %v1283 = vmul.f32 %v779, %v1194
      %v1284 = vmul.f32 %v780, %v1199
      %v1285 = vmul.f32 %v781, %v1204
      %v1286 = vmul.f32 %v782, %v1209
      %v1287 = vmul.f32 %v783, %v1214
      %v1288 = vpack.c.bf16 %v1217, %v1216
      %v1289 = vpack.c.bf16 %v1219, %v1218
      %v1290 = vpack.c.bf16 %v1221, %v1220
      %v1291 = vpack.c.bf16 %v1223, %v1222
      %v1292 = vpack.c.bf16 %v1225, %v1224
      %v1293 = vpack.c.bf16 %v1227, %v1226
      %v1294 = vpack.c.bf16 %v1229, %v1228
      %v1295 = vpack.c.bf16 %v1231, %v1230
      %v1296 = vpack.c.bf16 %v1233, %v1232
      %v1297 = vpack.c.bf16 %v1235, %v1234
      %v1298 = vpack.c.bf16 %v1237, %v1236
      %v1299 = vpack.c.bf16 %v1239, %v1238
      %v1300 = vpack.c.bf16 %v1241, %v1240
      %v1301 = vpack.c.bf16 %v1243, %v1242
      %v1302 = vpack.c.bf16 %v1245, %v1244
      %v1303 = vpack.c.bf16 %v1247, %v1246
      %v1304 = vpack.c.bf16 %v1249, %v1248
      %v1305 = vpack.c.bf16 %v1251, %v1250
      %v1306 = vpack.c.bf16 %v1253, %v1252
      %v1307 = vpack.c.bf16 %v1255, %v1254
      %v1308 = vpack.c.bf16 %v1257, %v1256
      %v1309 = vpack.c.bf16 %v1259, %v1258
      %v1310 = vpack.c.bf16 %v1261, %v1260
      %v1311 = vpack.c.bf16 %v1263, %v1262
      %v1312 = vpack.c.bf16 %v1265, %v1264
      %v1313 = vpack.c.bf16 %v1267, %v1266
      %v1314 = vpack.c.bf16 %v1269, %v1268
      %v1315 = vpack.c.bf16 %v1271, %v1270
      %v1316 = vpack.c.bf16 %v1273, %v1272
      %v1317 = vpack.c.bf16 %v1275, %v1274
      %v1318 = vpack.c.bf16 %v1277, %v1276
      %v1319 = vpack.c.bf16 %v1279, %v1278
      %v1320 = vpack.c.bf16 %v1281, %v1280
      %v1321 = vpack.c.bf16 %v1283, %v1282
      %v1322 = vpack.c.bf16 %v1285, %v1284
      %v1323 = vpack.c.bf16 %v1287, %v1286
      %v1360 = vunpack.c.l.b16 %v1288
      %v1361 = vunpack.c.h.b16 %v1288
      %v1362 = vunpack.c.l.b16 %v1289
      %v1363 = vunpack.c.h.b16 %v1289
      %v1364 = vunpack.c.l.b16 %v1290
      %v1365 = vunpack.c.h.b16 %v1290
      %v1366 = vunpack.c.l.b16 %v1291
      %v1367 = vunpack.c.h.b16 %v1291
      %v1368 = vunpack.c.l.b16 %v1292
      %v1369 = vunpack.c.h.b16 %v1292
      %v1370 = vunpack.c.l.b16 %v1293
      %v1371 = vunpack.c.h.b16 %v1293
      %v1372 = vunpack.c.l.b16 %v1294
      %v1373 = vunpack.c.h.b16 %v1294
      %v1374 = vunpack.c.l.b16 %v1295
      %v1375 = vunpack.c.h.b16 %v1295
      %v1376 = vunpack.c.l.b16 %v1296
      %v1377 = vunpack.c.h.b16 %v1296
      %v1378 = vunpack.c.l.b16 %v1297
      %v1379 = vunpack.c.h.b16 %v1297
      %v1380 = vunpack.c.l.b16 %v1298
      %v1381 = vunpack.c.h.b16 %v1298
      %v1382 = vunpack.c.l.b16 %v1299
      %v1383 = vunpack.c.h.b16 %v1299
      %v1384 = vunpack.c.l.b16 %v1300
      %v1385 = vunpack.c.h.b16 %v1300
      %v1386 = vunpack.c.l.b16 %v1301
      %v1387 = vunpack.c.h.b16 %v1301
      %v1388 = vunpack.c.l.b16 %v1302
      %v1389 = vunpack.c.h.b16 %v1302
      %v1390 = vunpack.c.l.b16 %v1303
      %v1391 = vunpack.c.h.b16 %v1303
      %v1392 = vunpack.c.l.b16 %v1304
      %v1393 = vunpack.c.h.b16 %v1304
      %v1394 = vunpack.c.l.b16 %v1305
      %v1395 = vunpack.c.h.b16 %v1305
      %v1396 = vunpack.c.l.b16 %v1306
      %v1397 = vunpack.c.h.b16 %v1306
      %v1398 = vunpack.c.l.b16 %v1307
      %v1399 = vunpack.c.h.b16 %v1307
      %v1400 = vunpack.c.l.b16 %v1308
      %v1401 = vunpack.c.h.b16 %v1308
      %v1402 = vunpack.c.l.b16 %v1309
      %v1403 = vunpack.c.h.b16 %v1309
      %v1404 = vunpack.c.l.b16 %v1310
      %v1405 = vunpack.c.h.b16 %v1310
      %v1406 = vunpack.c.l.b16 %v1311
      %v1407 = vunpack.c.h.b16 %v1311
      %v1408 = vunpack.c.l.b16 %v1312
      %v1409 = vunpack.c.h.b16 %v1312
      %v1410 = vunpack.c.l.b16 %v1313
      %v1411 = vunpack.c.h.b16 %v1313
      %v1412 = vunpack.c.l.b16 %v1314
      %v1413 = vunpack.c.h.b16 %v1314
      %v1414 = vunpack.c.l.b16 %v1315
      %v1415 = vunpack.c.h.b16 %v1315
      %v1416 = vunpack.c.l.b16 %v1316
      %v1417 = vunpack.c.h.b16 %v1316
      %v1418 = vunpack.c.l.b16 %v1317
      %v1419 = vunpack.c.h.b16 %v1317
      %v1420 = vunpack.c.l.b16 %v1318
      %v1421 = vunpack.c.h.b16 %v1318
      %v1422 = vunpack.c.l.b16 %v1319
      %v1423 = vunpack.c.h.b16 %v1319
      %v1424 = vunpack.c.l.b16 %v1320
      %v1425 = vunpack.c.h.b16 %v1320
      %v1426 = vunpack.c.l.b16 %v1321
      %v1427 = vunpack.c.h.b16 %v1321
      %v1428 = vunpack.c.l.b16 %v1322
      %v1429 = vunpack.c.h.b16 %v1322
      %v1430 = vunpack.c.l.b16 %v1323
      %v1431 = vunpack.c.h.b16 %v1323
      %v1432 = vpack.c.b16 %v1360, %v1360
      %v1433 = vpack.c.b16 %v1361, %v1361
      %v1434 = vpack.c.b16 %v1362, %v1362
      %v1435 = vpack.c.b16 %v1363, %v1363
      %v1436 = vpack.c.b16 %v1364, %v1364
      %v1437 = vpack.c.b16 %v1365, %v1365
      %v1438 = vpack.c.b16 %v1366, %v1366
      %v1439 = vpack.c.b16 %v1367, %v1367
      %v1440 = vpack.c.b16 %v1368, %v1368
      %v1441 = vpack.c.b16 %v1369, %v1369
      %v1442 = vpack.c.b16 %v1370, %v1370
      %v1443 = vpack.c.b16 %v1371, %v1371
      %v1444 = vpack.c.b16 %v1372, %v1372
      %v1445 = vpack.c.b16 %v1373, %v1373
      %v1446 = vpack.c.b16 %v1374, %v1374
      %v1447 = vpack.c.b16 %v1375, %v1375
      %v1448 = vpack.c.b16 %v1376, %v1376
      %v1449 = vpack.c.b16 %v1377, %v1377
      %v1450 = vpack.c.b16 %v1378, %v1378
      %v1451 = vpack.c.b16 %v1379, %v1379
      %v1452 = vpack.c.b16 %v1380, %v1380
      %v1453 = vpack.c.b16 %v1381, %v1381
      %v1454 = vpack.c.b16 %v1382, %v1382
      %v1455 = vpack.c.b16 %v1383, %v1383
      %v1456 = vpack.c.b16 %v1384, %v1384
      %v1457 = vpack.c.b16 %v1385, %v1385
      %v1458 = vpack.c.b16 %v1386, %v1386
      %v1459 = vpack.c.b16 %v1387, %v1387
      %v1460 = vpack.c.b16 %v1388, %v1388
      %v1461 = vpack.c.b16 %v1389, %v1389
      %v1462 = vpack.c.b16 %v1390, %v1390
      %v1463 = vpack.c.b16 %v1391, %v1391
      %v1464 = vpack.c.b16 %v1392, %v1392
      %v1465 = vpack.c.b16 %v1393, %v1393
      %v1466 = vpack.c.b16 %v1394, %v1394
      %v1467 = vpack.c.b16 %v1395, %v1395
      %v1468 = vpack.c.b16 %v1396, %v1396
      %v1469 = vpack.c.b16 %v1397, %v1397
      %v1470 = vpack.c.b16 %v1398, %v1398
      %v1471 = vpack.c.b16 %v1399, %v1399
      %v1472 = vpack.c.b16 %v1400, %v1400
      %v1473 = vpack.c.b16 %v1401, %v1401
      %v1474 = vpack.c.b16 %v1402, %v1402
      %v1475 = vpack.c.b16 %v1403, %v1403
      %v1476 = vpack.c.b16 %v1404, %v1404
      %v1477 = vpack.c.b16 %v1405, %v1405
      %v1478 = vpack.c.b16 %v1406, %v1406
      %v1479 = vpack.c.b16 %v1407, %v1407
      %v1480 = vpack.c.b16 %v1408, %v1408
      %v1481 = vpack.c.b16 %v1409, %v1409
      %v1482 = vpack.c.b16 %v1410, %v1410
      %v1483 = vpack.c.b16 %v1411, %v1411
      %v1484 = vpack.c.b16 %v1412, %v1412
      %v1485 = vpack.c.b16 %v1413, %v1413
      %v1486 = vpack.c.b16 %v1414, %v1414
      %v1487 = vpack.c.b16 %v1415, %v1415
      %v1488 = vpack.c.b16 %v1416, %v1416
      %v1489 = vpack.c.b16 %v1417, %v1417
      %v1490 = vpack.c.b16 %v1418, %v1418
      %v1491 = vpack.c.b16 %v1419, %v1419
      %v1492 = vpack.c.b16 %v1420, %v1420
      %v1493 = vpack.c.b16 %v1421, %v1421
      %v1494 = vpack.c.b16 %v1422, %v1422
      %v1495 = vpack.c.b16 %v1423, %v1423
      %v1496 = vpack.c.b16 %v1424, %v1424
      %v1497 = vpack.c.b16 %v1425, %v1425
      %v1498 = vpack.c.b16 %v1426, %v1426
      %v1499 = vpack.c.b16 %v1427, %v1427
      %v1500 = vpack.c.b16 %v1428, %v1428
      %v1501 = vpack.c.b16 %v1429, %v1429
      %v1502 = vpack.c.b16 %v1430, %v1430
      %v1503 = vpack.c.b16 %v1431, %v1431
      %vm1576 = vcmask 27648
      %1577 = vst.msk [vmem:[#allocation2] sm:$0xf] %vm1576, %v1432
      %vm1578 = vcmask 24576
      %vm1579 = vsmask.f32 256
      %vm1580 = vmand %vm1578, %vm1579
      %v1581 = vld [vmem:[#allocation2 + $0x4] sm:$0x1]
      %v1582 = vsel %vm1580, %v1433, %v1581
      %1583 = vst [vmem:[#allocation2 + $0x4] sm:$0x1] %v1582
      %1584 = vst.msk [vmem:[#allocation2 + $0x8] sm:$0xf] %vm1576, %v1434
      %v1585 = vld [vmem:[#allocation2 + $0xc] sm:$0x1]
      %v1586 = vsel %vm1580, %v1435, %v1585
      %1587 = vst [vmem:[#allocation2 + $0xc] sm:$0x1] %v1586
      %1588 = vst.msk [vmem:[#allocation2 + $0x10] sm:$0xf] %vm1576, %v1436
      %v1589 = vld [vmem:[#allocation2 + $0x14] sm:$0x1]
      %v1590 = vsel %vm1580, %v1437, %v1589
      %1591 = vst [vmem:[#allocation2 + $0x14] sm:$0x1] %v1590
      %1592 = vst.msk [vmem:[#allocation2 + $0x18] sm:$0xf] %vm1576, %v1438
      %v1593 = vld [vmem:[#allocation2 + $0x1c] sm:$0x1]
      %v1594 = vsel %vm1580, %v1439, %v1593
      %1595 = vst [vmem:[#allocation2 + $0x1c] sm:$0x1] %v1594
      %1596 = vst.msk [vmem:[#allocation2 + $0x20] sm:$0xf] %vm1576, %v1440
      %v1597 = vld [vmem:[#allocation2 + $0x24] sm:$0x1]
      %v1598 = vsel %vm1580, %v1441, %v1597
      %1599 = vst [vmem:[#allocation2 + $0x24] sm:$0x1] %v1598
      %1600 = vst.msk [vmem:[#allocation2 + $0x28] sm:$0xf] %vm1576, %v1442
      %v1601 = vld [vmem:[#allocation2 + $0x2c] sm:$0x1]
      %v1602 = vsel %vm1580, %v1443, %v1601
      %1603 = vst [vmem:[#allocation2 + $0x2c] sm:$0x1] %v1602
      %1604 = vst.msk [vmem:[#allocation2 + $0x30] sm:$0xf] %vm1576, %v1444
      %v1605 = vld [vmem:[#allocation2 + $0x34] sm:$0x1]
      %v1606 = vsel %vm1580, %v1445, %v1605
      %1607 = vst [vmem:[#allocation2 + $0x34] sm:$0x1] %v1606
      %1608 = vst.msk [vmem:[#allocation2 + $0x38] sm:$0xf] %vm1576, %v1446
      %v1609 = vld [vmem:[#allocation2 + $0x3c] sm:$0x1]
      %v1610 = vsel %vm1580, %v1447, %v1609
      %1611 = vst [vmem:[#allocation2 + $0x3c] sm:$0x1] %v1610
      %1612 = vst.msk [vmem:[#allocation2 + $0x40] sm:$0xf] %vm1576, %v1448
      %v1613 = vld [vmem:[#allocation2 + $0x44] sm:$0x1]
      %v1614 = vsel %vm1580, %v1449, %v1613
      %1615 = vst [vmem:[#allocation2 + $0x44] sm:$0x1] %v1614
      %1616 = vst.msk [vmem:[#allocation2 + $0x48] sm:$0xf] %vm1576, %v1450
      %v1617 = vld [vmem:[#allocation2 + $0x4c] sm:$0x1]
      %v1618 = vsel %vm1580, %v1451, %v1617
      %1619 = vst [vmem:[#allocation2 + $0x4c] sm:$0x1] %v1618
      %1620 = vst.msk [vmem:[#allocation2 + $0x50] sm:$0xf] %vm1576, %v1452
      %v1621 = vld [vmem:[#allocation2 + $0x54] sm:$0x1]
      %v1622 = vsel %vm1580, %v1453, %v1621
      %1623 = vst [vmem:[#allocation2 + $0x54] sm:$0x1] %v1622
      %1624 = vst.msk [vmem:[#allocation2 + $0x58] sm:$0xf] %vm1576, %v1454
      %v1625 = vld [vmem:[#allocation2 + $0x5c] sm:$0x1]
      %v1626 = vsel %vm1580, %v1455, %v1625
      %1627 = vst [vmem:[#allocation2 + $0x5c] sm:$0x1] %v1626
      %1628 = vst.msk [vmem:[#allocation2 + $0x60] sm:$0xf] %vm1576, %v1456
      %v1629 = vld [vmem:[#allocation2 + $0x64] sm:$0x1]
      %v1630 = vsel %vm1580, %v1457, %v1629
      %1631 = vst [vmem:[#allocation2 + $0x64] sm:$0x1] %v1630
      %1632 = vst.msk [vmem:[#allocation2 + $0x68] sm:$0xf] %vm1576, %v1458
      %v1633 = vld [vmem:[#allocation2 + $0x6c] sm:$0x1]
      %v1634 = vsel %vm1580, %v1459, %v1633
      %1635 = vst [vmem:[#allocation2 + $0x6c] sm:$0x1] %v1634
      %1636 = vst.msk [vmem:[#allocation2 + $0x70] sm:$0xf] %vm1576, %v1460
      %v1637 = vld [vmem:[#allocation2 + $0x74] sm:$0x1]
      %v1638 = vsel %vm1580, %v1461, %v1637
      %1639 = vst [vmem:[#allocation2 + $0x74] sm:$0x1] %v1638
      %1640 = vst.msk [vmem:[#allocation2 + $0x78] sm:$0xf] %vm1576, %v1462
      %v1641 = vld [vmem:[#allocation2 + $0x7c] sm:$0x1]
      %v1642 = vsel %vm1580, %v1463, %v1641
      %1643 = vst [vmem:[#allocation2 + $0x7c] sm:$0x1] %v1642
      %1644 = vst.msk [vmem:[#allocation2 + $0x80] sm:$0xf] %vm1576, %v1464
      %v1645 = vld [vmem:[#allocation2 + $0x84] sm:$0x1]
      %v1646 = vsel %vm1580, %v1465, %v1645
      %1647 = vst [vmem:[#allocation2 + $0x84] sm:$0x1] %v1646
      %1648 = vst.msk [vmem:[#allocation2 + $0x88] sm:$0xf] %vm1576, %v1466
      %v1649 = vld [vmem:[#allocation2 + $0x8c] sm:$0x1]
      %v1650 = vsel %vm1580, %v1467, %v1649
      %1651 = vst [vmem:[#allocation2 + $0x8c] sm:$0x1] %v1650
      %1652 = vst.msk [vmem:[#allocation2 + $0x90] sm:$0xf] %vm1576, %v1468
      %v1653 = vld [vmem:[#allocation2 + $0x94] sm:$0x1]
      %v1654 = vsel %vm1580, %v1469, %v1653
      %1655 = vst [vmem:[#allocation2 + $0x94] sm:$0x1] %v1654
      %1656 = vst.msk [vmem:[#allocation2 + $0x98] sm:$0xf] %vm1576, %v1470
      %v1657 = vld [vmem:[#allocation2 + $0x9c] sm:$0x1]
      %v1658 = vsel %vm1580, %v1471, %v1657
      %1659 = vst [vmem:[#allocation2 + $0x9c] sm:$0x1] %v1658
      %1660 = vst.msk [vmem:[#allocation2 + $0xa0] sm:$0xf] %vm1576, %v1472
      %v1661 = vld [vmem:[#allocation2 + $0xa4] sm:$0x1]
      %v1662 = vsel %vm1580, %v1473, %v1661
      %1663 = vst [vmem:[#allocation2 + $0xa4] sm:$0x1] %v1662
      %1664 = vst.msk [vmem:[#allocation2 + $0xa8] sm:$0xf] %vm1576, %v1474
      %v1665 = vld [vmem:[#allocation2 + $0xac] sm:$0x1]
      %v1666 = vsel %vm1580, %v1475, %v1665
      %1667 = vst [vmem:[#allocation2 + $0xac] sm:$0x1] %v1666
      %1668 = vst.msk [vmem:[#allocation2 + $0xb0] sm:$0xf] %vm1576, %v1476
      %v1669 = vld [vmem:[#allocation2 + $0xb4] sm:$0x1]
      %v1670 = vsel %vm1580, %v1477, %v1669
      %1671 = vst [vmem:[#allocation2 + $0xb4] sm:$0x1] %v1670
      %1672 = vst.msk [vmem:[#allocation2 + $0xb8] sm:$0xf] %vm1576, %v1478
      %v1673 = vld [vmem:[#allocation2 + $0xbc] sm:$0x1]
      %v1674 = vsel %vm1580, %v1479, %v1673
      %1675 = vst [vmem:[#allocation2 + $0xbc] sm:$0x1] %v1674
      %1676 = vst.msk [vmem:[#allocation2 + $0xc0] sm:$0xf] %vm1576, %v1480
      %v1677 = vld [vmem:[#allocation2 + $0xc4] sm:$0x1]
      %v1678 = vsel %vm1580, %v1481, %v1677
      %1679 = vst [vmem:[#allocation2 + $0xc4] sm:$0x1] %v1678
      %1680 = vst.msk [vmem:[#allocation2 + $0xc8] sm:$0xf] %vm1576, %v1482
      %v1681 = vld [vmem:[#allocation2 + $0xcc] sm:$0x1]
      %v1682 = vsel %vm1580, %v1483, %v1681
      %1683 = vst [vmem:[#allocation2 + $0xcc] sm:$0x1] %v1682
      %1684 = vst.msk [vmem:[#allocation2 + $0xd0] sm:$0xf] %vm1576, %v1484
      %v1685 = vld [vmem:[#allocation2 + $0xd4] sm:$0x1]
      %v1686 = vsel %vm1580, %v1485, %v1685
      %1687 = vst [vmem:[#allocation2 + $0xd4] sm:$0x1] %v1686
      %1688 = vst.msk [vmem:[#allocation2 + $0xd8] sm:$0xf] %vm1576, %v1486
      %v1689 = vld [vmem:[#allocation2 + $0xdc] sm:$0x1]
      %v1690 = vsel %vm1580, %v1487, %v1689
      %1691 = vst [vmem:[#allocation2 + $0xdc] sm:$0x1] %v1690
      %1692 = vst.msk [vmem:[#allocation2 + $0xe0] sm:$0xf] %vm1576, %v1488
      %v1693 = vld [vmem:[#allocation2 + $0xe4] sm:$0x1]
      %v1694 = vsel %vm1580, %v1489, %v1693
      %1695 = vst [vmem:[#allocation2 + $0xe4] sm:$0x1] %v1694
      %1696 = vst.msk [vmem:[#allocation2 + $0xe8] sm:$0xf] %vm1576, %v1490
      %v1697 = vld [vmem:[#allocation2 + $0xec] sm:$0x1]
      %v1698 = vsel %vm1580, %v1491, %v1697
      %1699 = vst [vmem:[#allocation2 + $0xec] sm:$0x1] %v1698
      %1700 = vst.msk [vmem:[#allocation2 + $0xf0] sm:$0xf] %vm1576, %v1492
      %v1701 = vld [vmem:[#allocation2 + $0xf4] sm:$0x1]
      %v1702 = vsel %vm1580, %v1493, %v1701
      %1703 = vst [vmem:[#allocation2 + $0xf4] sm:$0x1] %v1702
      %1704 = vst.msk [vmem:[#allocation2 + $0xf8] sm:$0xf] %vm1576, %v1494
      %v1705 = vld [vmem:[#allocation2 + $0xfc] sm:$0x1]
      %v1706 = vsel %vm1580, %v1495, %v1705
      %1707 = vst [vmem:[#allocation2 + $0xfc] sm:$0x1] %v1706
      %1708 = vst.msk [vmem:[#allocation2 + $0x100] sm:$0xf] %vm1576, %v1496
      %v1709 = vld [vmem:[#allocation2 + $0x104] sm:$0x1]
      %v1710 = vsel %vm1580, %v1497, %v1709
      %1711 = vst [vmem:[#allocation2 + $0x104] sm:$0x1] %v1710
      %1712 = vst.msk [vmem:[#allocation2 + $0x108] sm:$0xf] %vm1576, %v1498
      %v1713 = vld [vmem:[#allocation2 + $0x10c] sm:$0x1]
      %v1714 = vsel %vm1580, %v1499, %v1713
      %1715 = vst [vmem:[#allocation2 + $0x10c] sm:$0x1] %v1714
      %1716 = vst.msk [vmem:[#allocation2 + $0x110] sm:$0xf] %vm1576, %v1500
      %v1717 = vld [vmem:[#allocation2 + $0x114] sm:$0x1]
      %v1718 = vsel %vm1580, %v1501, %v1717
      %1719 = vst [vmem:[#allocation2 + $0x114] sm:$0x1] %v1718
      %1720 = vst.msk [vmem:[#allocation2 + $0x118] sm:$0xf] %vm1576, %v1502
      %v1721 = vld [vmem:[#allocation2 + $0x11c] sm:$0x1]
      %v1722 = vsel %vm1580, %v1503, %v1721
      %1723 = vst [vmem:[#allocation2 + $0x11c] sm:$0x1] %v1722
      %v1724 = vld [vmem:[#allocation2] sm:$0xf]
      %v1725 = vld [vmem:[#allocation2 + $0x8] sm:$0xf]
      %v1726 = vld [vmem:[#allocation2 + $0x10] sm:$0xf]
      %v1727 = vld [vmem:[#allocation2 + $0x18] sm:$0xf]
      %v1728 = vld [vmem:[#allocation2 + $0x20] sm:$0xf]
      %v1729 = vld [vmem:[#allocation2 + $0x28] sm:$0xf]
      %v1730 = vld [vmem:[#allocation2 + $0x30] sm:$0xf]
      %v1731 = vld [vmem:[#allocation2 + $0x38] sm:$0xf]
      %1732 = vst.msk [vmem:[#allocation3] sm:$0xf] %vm1576, %v1724
      %1733 = vst.msk [vmem:[#allocation3 + $0x4] sm:$0xf] %vm1576, %v1725
      %1734 = vst.msk [vmem:[#allocation3 + $0x8] sm:$0xf] %vm1576, %v1726
      %1735 = vst.msk [vmem:[#allocation3 + $0xc] sm:$0xf] %vm1576, %v1727
      %1736 = vst.msk [vmem:[#allocation3 + $0x10] sm:$0xf] %vm1576, %v1728
      %1737 = vst.msk [vmem:[#allocation3 + $0x14] sm:$0xf] %vm1576, %v1729
      %1738 = vst.msk [vmem:[#allocation3 + $0x18] sm:$0xf] %vm1576, %v1730
      %1739 = vst.msk [vmem:[#allocation3 + $0x1c] sm:$0xf] %vm1576, %v1731
      %s1740 = scalar_lea.vmem [#allocation2], 72
      %v1741 = vld [vmem:[%s1740] sm:$0xf]
      %v1742 = vld [vmem:[%s1740 + $0x8] sm:$0xf]
      %v1743 = vld [vmem:[%s1740 + $0x10] sm:$0xf]
      %v1744 = vld [vmem:[%s1740 + $0x18] sm:$0xf]
      %v1745 = vld [vmem:[%s1740 + $0x20] sm:$0xf]
      %v1746 = vld [vmem:[%s1740 + $0x28] sm:$0xf]
      %v1747 = vld [vmem:[%s1740 + $0x30] sm:$0xf]
      %v1748 = vld [vmem:[%s1740 + $0x38] sm:$0xf]
      %1757 = vrot.lane.b32.xlu0 %v1741, 4
      %v1758 = vpop.permute.xlu0 %1757
      %1759 = vrot.lane.b32.xlu0 %v1742, 4
      %v1760 = vpop.permute.xlu0 %1759
      %1761 = vrot.lane.b32.xlu0 %v1743, 4
      %v1762 = vpop.permute.xlu0 %1761
      %1763 = vrot.lane.b32.xlu0 %v1744, 4
      %v1764 = vpop.permute.xlu0 %1763
      %1765 = vrot.lane.b32.xlu0 %v1745, 4
      %v1766 = vpop.permute.xlu0 %1765
      %1767 = vrot.lane.b32.xlu0 %v1746, 4
      %v1768 = vpop.permute.xlu0 %1767
      %1769 = vrot.lane.b32.xlu0 %v1747, 4
      %v1770 = vpop.permute.xlu0 %1769
      %1771 = vrot.lane.b32.xlu0 %v1748, 4
      %v1772 = vpop.permute.xlu0 %1771
      %vm1781 = vcmask 60448
      %1782 = vst.msk [vmem:[#allocation3] sm:$0xf] %vm1781, %v1758
      %1783 = vst.msk [vmem:[#allocation3 + $0x4] sm:$0xf] %vm1781, %v1760
      %1784 = vst.msk [vmem:[#allocation3 + $0x8] sm:$0xf] %vm1781, %v1762
      %1785 = vst.msk [vmem:[#allocation3 + $0xc] sm:$0xf] %vm1781, %v1764
      %1786 = vst.msk [vmem:[#allocation3 + $0x10] sm:$0xf] %vm1781, %v1766
      %1787 = vst.msk [vmem:[#allocation3 + $0x14] sm:$0xf] %vm1781, %v1768
      %1788 = vst.msk [vmem:[#allocation3 + $0x18] sm:$0xf] %vm1781, %v1770
      %1789 = vst.msk [vmem:[#allocation3 + $0x1c] sm:$0xf] %vm1781, %v1772
      %v1790 = vld [vmem:[#allocation2] sm:$0xf]
      %v1791 = vld [vmem:[#allocation2 + $0x4] sm:$0x1]
      %v1792 = vld [vmem:[#allocation2 + $0x8] sm:$0xf]
      %v1793 = vld [vmem:[#allocation2 + $0xc] sm:$0x1]
      %v1794 = vld [vmem:[#allocation2 + $0x10] sm:$0xf]
      %v1795 = vld [vmem:[#allocation2 + $0x14] sm:$0x1]
      %v1796 = vld [vmem:[#allocation2 + $0x18] sm:$0xf]
      %v1797 = vld [vmem:[#allocation2 + $0x1c] sm:$0x1]
      %v1798 = vld [vmem:[#allocation2 + $0x20] sm:$0xf]
      %v1799 = vld [vmem:[#allocation2 + $0x24] sm:$0x1]
      %v1800 = vld [vmem:[#allocation2 + $0x28] sm:$0xf]
      %v1801 = vld [vmem:[#allocation2 + $0x2c] sm:$0x1]
      %v1802 = vld [vmem:[#allocation2 + $0x30] sm:$0xf]
      %v1803 = vld [vmem:[#allocation2 + $0x34] sm:$0x1]
      %v1804 = vld [vmem:[#allocation2 + $0x38] sm:$0xf]
      %v1805 = vld [vmem:[#allocation2 + $0x3c] sm:$0x1]
      %vm1806 = vsmask.f32 3328
      %vm1807 = vsmask.f32 7440
      %vm1808 = vmor %vm1806, %vm1807
      %v1810 = vshrl.u32 %v1790, 16
      %v1812 = vrot.slane %v1810, 4
      %v1813 = vshll.u32 %v1790, 16
      %v1815 = vrot.slane %v1813, 5
      %v1816 = vor.u32 %v1812, %v1815
      %v1817 = vrot.slane %v1816, 4
      %v1819 = vshll.u32 %v1791, 16
      %v1821 = vrot.slane %v1819, 5
      %v1822 = vsel %vm1808, %v1817, %v1821
      %v1824 = vshrl.u32 %v1792, 16
      %v1826 = vrot.slane %v1824, 4
      %v1827 = vshll.u32 %v1792, 16
      %v1829 = vrot.slane %v1827, 5
      %v1830 = vor.u32 %v1826, %v1829
      %v1831 = vrot.slane %v1830, 4
      %v1833 = vshll.u32 %v1793, 16
      %v1835 = vrot.slane %v1833, 5
      %v1836 = vsel %vm1808, %v1831, %v1835
      %v1838 = vshrl.u32 %v1794, 16
      %v1840 = vrot.slane %v1838, 4
      %v1841 = vshll.u32 %v1794, 16
      %v1843 = vrot.slane %v1841, 5
      %v1844 = vor.u32 %v1840, %v1843
      %v1845 = vrot.slane %v1844, 4
      %v1847 = vshll.u32 %v1795, 16
      %v1849 = vrot.slane %v1847, 5
      %v1850 = vsel %vm1808, %v1845, %v1849
      %v1852 = vshrl.u32 %v1796, 16
      %v1854 = vrot.slane %v1852, 4
      %v1855 = vshll.u32 %v1796, 16
      %v1857 = vrot.slane %v1855, 5
      %v1858 = vor.u32 %v1854, %v1857
      %v1859 = vrot.slane %v1858, 4
      %v1861 = vshll.u32 %v1797, 16
      %v1863 = vrot.slane %v1861, 5
      %v1864 = vsel %vm1808, %v1859, %v1863
      %v1866 = vshrl.u32 %v1798, 16
      %v1868 = vrot.slane %v1866, 4
      %v1869 = vshll.u32 %v1798, 16
      %v1871 = vrot.slane %v1869, 5
      %v1872 = vor.u32 %v1868, %v1871
      %v1873 = vrot.slane %v1872, 4
      %v1875 = vshll.u32 %v1799, 16
      %v1877 = vrot.slane %v1875, 5
      %v1878 = vsel %vm1808, %v1873, %v1877
      %v1880 = vshrl.u32 %v1800, 16
      %v1882 = vrot.slane %v1880, 4
      %v1883 = vshll.u32 %v1800, 16
      %v1885 = vrot.slane %v1883, 5
      %v1886 = vor.u32 %v1882, %v1885
      %v1887 = vrot.slane %v1886, 4
      %v1889 = vshll.u32 %v1801, 16
      %v1891 = vrot.slane %v1889, 5
      %v1892 = vsel %vm1808, %v1887, %v1891
      %v1894 = vshrl.u32 %v1802, 16
      %v1896 = vrot.slane %v1894, 4
      %v1897 = vshll.u32 %v1802, 16
      %v1899 = vrot.slane %v1897, 5
      %v1900 = vor.u32 %v1896, %v1899
      %v1901 = vrot.slane %v1900, 4
      %v1903 = vshll.u32 %v1803, 16
      %v1905 = vrot.slane %v1903, 5
      %v1906 = vsel %vm1808, %v1901, %v1905
      %v1908 = vshrl.u32 %v1804, 16
      %v1910 = vrot.slane %v1908, 4
      %v1911 = vshll.u32 %v1804, 16
      %v1913 = vrot.slane %v1911, 5
      %v1914 = vor.u32 %v1910, %v1913
      %v1915 = vrot.slane %v1914, 4
      %v1917 = vshll.u32 %v1805, 16
      %v1919 = vrot.slane %v1917, 5
      %v1920 = vsel %vm1808, %v1915, %v1919
      %1921 = vrot.lane.b32.xlu0 %v1822, 8
      %v1922 = vpop.permute.xlu0 %1921
      %1923 = vrot.lane.b32.xlu0 %v1836, 8
      %v1924 = vpop.permute.xlu0 %1923
      %1925 = vrot.lane.b32.xlu0 %v1850, 8
      %v1926 = vpop.permute.xlu0 %1925
      %1927 = vrot.lane.b32.xlu0 %v1864, 8
      %v1928 = vpop.permute.xlu0 %1927
      %1929 = vrot.lane.b32.xlu0 %v1878, 8
      %v1930 = vpop.permute.xlu0 %1929
      %1931 = vrot.lane.b32.xlu0 %v1892, 8
      %v1932 = vpop.permute.xlu0 %1931
      %1933 = vrot.lane.b32.xlu0 %v1906, 8
      %v1934 = vpop.permute.xlu0 %1933
      %1935 = vrot.lane.b32.xlu0 %v1920, 8
      %v1936 = vpop.permute.xlu0 %1935
      %vm1945 = vcmask 93248
      %1946 = vst.msk [vmem:[#allocation3] sm:$0xf] %vm1945, %v1922
      %1947 = vst.msk [vmem:[#allocation3 + $0x4] sm:$0xf] %vm1945, %v1924
      %1948 = vst.msk [vmem:[#allocation3 + $0x8] sm:$0xf] %vm1945, %v1926
      %1949 = vst.msk [vmem:[#allocation3 + $0xc] sm:$0xf] %vm1945, %v1928
      %1950 = vst.msk [vmem:[#allocation3 + $0x10] sm:$0xf] %vm1945, %v1930
      %1951 = vst.msk [vmem:[#allocation3 + $0x14] sm:$0xf] %vm1945, %v1932
      %1952 = vst.msk [vmem:[#allocation3 + $0x18] sm:$0xf] %vm1945, %v1934
      %1953 = vst.msk [vmem:[#allocation3 + $0x1c] sm:$0xf] %vm1945, %v1936
      %s1954 = scalar_lea.vmem [#allocation2], 144
      %v1955 = vld [vmem:[%s1954] sm:$0xf]
      %v1956 = vld [vmem:[%s1954 + $0x8] sm:$0xf]
      %v1957 = vld [vmem:[%s1954 + $0x10] sm:$0xf]
      %v1958 = vld [vmem:[%s1954 + $0x18] sm:$0xf]
      %v1959 = vld [vmem:[%s1954 + $0x20] sm:$0xf]
      %v1960 = vld [vmem:[%s1954 + $0x28] sm:$0xf]
      %v1961 = vld [vmem:[%s1954 + $0x30] sm:$0xf]
      %v1962 = vld [vmem:[%s1954 + $0x38] sm:$0xf]
      %1971 = vrot.lane.b32.xlu0 %v1955, 12
      %v1972 = vpop.permute.xlu0 %1971
      %1973 = vrot.lane.b32.xlu0 %v1956, 12
      %v1974 = vpop.permute.xlu0 %1973
      %1975 = vrot.lane.b32.xlu0 %v1957, 12
      %v1976 = vpop.permute.xlu0 %1975
      %1977 = vrot.lane.b32.xlu0 %v1958, 12
      %v1978 = vpop.permute.xlu0 %1977
      %1979 = vrot.lane.b32.xlu0 %v1959, 12
      %v1980 = vpop.permute.xlu0 %1979
      %1981 = vrot.lane.b32.xlu0 %v1960, 12
      %v1982 = vpop.permute.xlu0 %1981
      %1983 = vrot.lane.b32.xlu0 %v1961, 12
      %v1984 = vpop.permute.xlu0 %1983
      %1985 = vrot.lane.b32.xlu0 %v1962, 12
      %v1986 = vpop.permute.xlu0 %1985
      %vm1995 = vcmask 126048
      %1996 = vst.msk [vmem:[#allocation3] sm:$0xf] %vm1995, %v1972
      %1997 = vst.msk [vmem:[#allocation3 + $0x4] sm:$0xf] %vm1995, %v1974
      %1998 = vst.msk [vmem:[#allocation3 + $0x8] sm:$0xf] %vm1995, %v1976
      %1999 = vst.msk [vmem:[#allocation3 + $0xc] sm:$0xf] %vm1995, %v1978
      %2000 = vst.msk [vmem:[#allocation3 + $0x10] sm:$0xf] %vm1995, %v1980
      %2001 = vst.msk [vmem:[#allocation3 + $0x14] sm:$0xf] %vm1995, %v1982
      %2002 = vst.msk [vmem:[#allocation3 + $0x18] sm:$0xf] %vm1995, %v1984
      %2003 = vst.msk [vmem:[#allocation3 + $0x1c] sm:$0xf] %vm1995, %v1986
      %s2004 = scalar_lea.vmem [#allocation2], 216
      %v2005 = vld [vmem:[%s2004] sm:$0xf]
      %v2006 = vld [vmem:[%s2004 + $0x8] sm:$0xf]
      %v2007 = vld [vmem:[%s2004 + $0x10] sm:$0xf]
      %v2008 = vld [vmem:[%s2004 + $0x18] sm:$0xf]
      %v2009 = vld [vmem:[%s2004 + $0x20] sm:$0xf]
      %v2010 = vld [vmem:[%s2004 + $0x28] sm:$0xf]
      %v2011 = vld [vmem:[%s2004 + $0x30] sm:$0xf]
      %v2012 = vld [vmem:[%s2004 + $0x38] sm:$0xf]
      %2021 = vrot.lane.b32.xlu0 %v2005, 16
      %v2022 = vpop.permute.xlu0 %2021
      %2023 = vrot.lane.b32.xlu0 %v2006, 16
      %v2024 = vpop.permute.xlu0 %2023
      %2025 = vrot.lane.b32.xlu0 %v2007, 16
      %v2026 = vpop.permute.xlu0 %2025
      %2027 = vrot.lane.b32.xlu0 %v2008, 16
      %v2028 = vpop.permute.xlu0 %2027
      %2029 = vrot.lane.b32.xlu0 %v2009, 16
      %v2030 = vpop.permute.xlu0 %2029
      %2031 = vrot.lane.b32.xlu0 %v2010, 16
      %v2032 = vpop.permute.xlu0 %2031
      %2033 = vrot.lane.b32.xlu0 %v2011, 16
      %v2034 = vpop.permute.xlu0 %2033
      %2035 = vrot.lane.b32.xlu0 %v2012, 16
      %v2036 = vpop.permute.xlu0 %2035
      %vm2045 = vcmask 158848
      %2046 = vst.msk [vmem:[#allocation3] sm:$0xf] %vm2045, %v2022
      %2047 = vst.msk [vmem:[#allocation3 + $0x4] sm:$0xf] %vm2045, %v2024
      %2048 = vst.msk [vmem:[#allocation3 + $0x8] sm:$0xf] %vm2045, %v2026
      %2049 = vst.msk [vmem:[#allocation3 + $0xc] sm:$0xf] %vm2045, %v2028
      %2050 = vst.msk [vmem:[#allocation3 + $0x10] sm:$0xf] %vm2045, %v2030
      %2051 = vst.msk [vmem:[#allocation3 + $0x14] sm:$0xf] %vm2045, %v2032
      %2052 = vst.msk [vmem:[#allocation3 + $0x18] sm:$0xf] %vm2045, %v2034
      %2053 = vst.msk [vmem:[#allocation3 + $0x1c] sm:$0xf] %vm2045, %v2036
      %v2054 = vld [vmem:[%s1954] sm:$0xf]
      %v2055 = vld [vmem:[%s1954 + $0x4] sm:$0x1]
      %v2056 = vld [vmem:[%s1954 + $0x8] sm:$0xf]
      %v2057 = vld [vmem:[%s1954 + $0xc] sm:$0x1]
      %v2058 = vld [vmem:[%s1954 + $0x10] sm:$0xf]
      %v2059 = vld [vmem:[%s1954 + $0x14] sm:$0x1]
      %v2060 = vld [vmem:[%s1954 + $0x18] sm:$0xf]
      %v2061 = vld [vmem:[%s1954 + $0x1c] sm:$0x1]
      %v2062 = vld [vmem:[%s1954 + $0x20] sm:$0xf]
      %v2063 = vld [vmem:[%s1954 + $0x24] sm:$0x1]
      %v2064 = vld [vmem:[%s1954 + $0x28] sm:$0xf]
      %v2065 = vld [vmem:[%s1954 + $0x2c] sm:$0x1]
      %v2066 = vld [vmem:[%s1954 + $0x30] sm:$0xf]
      %v2067 = vld [vmem:[%s1954 + $0x34] sm:$0x1]
      %v2068 = vld [vmem:[%s1954 + $0x38] sm:$0xf]
      %v2069 = vld [vmem:[%s1954 + $0x3c] sm:$0x1]
      %v2071 = vshrl.u32 %v2054, 16
      %v2073 = vrot.slane %v2071, 4
      %v2074 = vshll.u32 %v2054, 16
      %v2076 = vrot.slane %v2074, 5
      %v2077 = vor.u32 %v2073, %v2076
      %v2078 = vrot.slane %v2077, 4
      %v2080 = vshll.u32 %v2055, 16
      %v2082 = vrot.slane %v2080, 5
      %v2083 = vsel %vm1808, %v2078, %v2082
      %v2085 = vshrl.u32 %v2056, 16
      %v2087 = vrot.slane %v2085, 4
      %v2088 = vshll.u32 %v2056, 16
      %v2090 = vrot.slane %v2088, 5
      %v2091 = vor.u32 %v2087, %v2090
      %v2092 = vrot.slane %v2091, 4
      %v2094 = vshll.u32 %v2057, 16
      %v2096 = vrot.slane %v2094, 5
      %v2097 = vsel %vm1808, %v2092, %v2096
      %v2099 = vshrl.u32 %v2058, 16
      %v2101 = vrot.slane %v2099, 4
      %v2102 = vshll.u32 %v2058, 16
      %v2104 = vrot.slane %v2102, 5
      %v2105 = vor.u32 %v2101, %v2104
      %v2106 = vrot.slane %v2105, 4
      %v2108 = vshll.u32 %v2059, 16
      %v2110 = vrot.slane %v2108, 5
      %v2111 = vsel %vm1808, %v2106, %v2110
      %v2113 = vshrl.u32 %v2060, 16
      %v2115 = vrot.slane %v2113, 4
      %v2116 = vshll.u32 %v2060, 16
      %v2118 = vrot.slane %v2116, 5
      %v2119 = vor.u32 %v2115, %v2118
      %v2120 = vrot.slane %v2119, 4
      %v2122 = vshll.u32 %v2061, 16
      %v2124 = vrot.slane %v2122, 5
      %v2125 = vsel %vm1808, %v2120, %v2124
      %v2127 = vshrl.u32 %v2062, 16
      %v2129 = vrot.slane %v2127, 4
      %v2130 = vshll.u32 %v2062, 16
      %v2132 = vrot.slane %v2130, 5
      %v2133 = vor.u32 %v2129, %v2132
      %v2134 = vrot.slane %v2133, 4
      %v2136 = vshll.u32 %v2063, 16
      %v2138 = vrot.slane %v2136, 5
      %v2139 = vsel %vm1808, %v2134, %v2138
      %v2141 = vshrl.u32 %v2064, 16
      %v2143 = vrot.slane %v2141, 4
      %v2144 = vshll.u32 %v2064, 16
      %v2146 = vrot.slane %v2144, 5
      %v2147 = vor.u32 %v2143, %v2146
      %v2148 = vrot.slane %v2147, 4
      %v2150 = vshll.u32 %v2065, 16
      %v2152 = vrot.slane %v2150, 5
      %v2153 = vsel %vm1808, %v2148, %v2152
      %v2155 = vshrl.u32 %v2066, 16
      %v2157 = vrot.slane %v2155, 4
      %v2158 = vshll.u32 %v2066, 16
      %v2160 = vrot.slane %v2158, 5
      %v2161 = vor.u32 %v2157, %v2160
      %v2162 = vrot.slane %v2161, 4
      %v2164 = vshll.u32 %v2067, 16
      %v2166 = vrot.slane %v2164, 5
      %v2167 = vsel %vm1808, %v2162, %v2166
      %v2169 = vshrl.u32 %v2068, 16
      %v2171 = vrot.slane %v2169, 4
      %v2172 = vshll.u32 %v2068, 16
      %v2174 = vrot.slane %v2172, 5
      %v2175 = vor.u32 %v2171, %v2174
      %v2176 = vrot.slane %v2175, 4
      %v2178 = vshll.u32 %v2069, 16
      %v2180 = vrot.slane %v2178, 5
      %v2181 = vsel %vm1808, %v2176, %v2180
      %2182 = vrot.lane.b32.xlu0 %v2083, 20
      %v2183 = vpop.permute.xlu0 %2182
      %2184 = vrot.lane.b32.xlu0 %v2097, 20
      %v2185 = vpop.permute.xlu0 %2184
      %2186 = vrot.lane.b32.xlu0 %v2111, 20
      %v2187 = vpop.permute.xlu0 %2186
      %2188 = vrot.lane.b32.xlu0 %v2125, 20
      %v2189 = vpop.permute.xlu0 %2188
      %2190 = vrot.lane.b32.xlu0 %v2139, 20
      %v2191 = vpop.permute.xlu0 %2190
      %2192 = vrot.lane.b32.xlu0 %v2153, 20
      %v2193 = vpop.permute.xlu0 %2192
      %2194 = vrot.lane.b32.xlu0 %v2167, 20
      %v2195 = vpop.permute.xlu0 %2194
      %2196 = vrot.lane.b32.xlu0 %v2181, 20
      %v2197 = vpop.permute.xlu0 %2196
      %vm2206 = vcmask 191648
      %2207 = vst.msk [vmem:[#allocation3] sm:$0xf] %vm2206, %v2183
      %2208 = vst.msk [vmem:[#allocation3 + $0x4] sm:$0xf] %vm2206, %v2185
      %2209 = vst.msk [vmem:[#allocation3 + $0x8] sm:$0xf] %vm2206, %v2187
      %2210 = vst.msk [vmem:[#allocation3 + $0xc] sm:$0xf] %vm2206, %v2189
      %2211 = vst.msk [vmem:[#allocation3 + $0x10] sm:$0xf] %vm2206, %v2191
      %2212 = vst.msk [vmem:[#allocation3 + $0x14] sm:$0xf] %vm2206, %v2193
      %2213 = vst.msk [vmem:[#allocation3 + $0x18] sm:$0xf] %vm2206, %v2195
      %2214 = vst.msk [vmem:[#allocation3 + $0x1c] sm:$0xf] %vm2206, %v2197
      %s2215 = scalar_lea.vmem [#allocation2], 8
      %v2216 = vld [vmem:[%s2215] sm:$0xf]
      %v2217 = vld [vmem:[%s2215 + $0x8] sm:$0xf]
      %v2218 = vld [vmem:[%s2215 + $0x10] sm:$0xf]
      %v2219 = vld [vmem:[%s2215 + $0x18] sm:$0xf]
      %v2220 = vld [vmem:[%s2215 + $0x20] sm:$0xf]
      %v2221 = vld [vmem:[%s2215 + $0x28] sm:$0xf]
      %v2222 = vld [vmem:[%s2215 + $0x30] sm:$0xf]
      %v2223 = vld [vmem:[%s2215 + $0x38] sm:$0xf]
      %2232 = vrot.lane.b32.xlu0 %v2216, 24
      %v2233 = vpop.permute.xlu0 %2232
      %2234 = vrot.lane.b32.xlu0 %v2217, 24
      %v2235 = vpop.permute.xlu0 %2234
      %2236 = vrot.lane.b32.xlu0 %v2218, 24
      %v2237 = vpop.permute.xlu0 %2236
      %2238 = vrot.lane.b32.xlu0 %v2219, 24
      %v2239 = vpop.permute.xlu0 %2238
      %2240 = vrot.lane.b32.xlu0 %v2220, 24
      %v2241 = vpop.permute.xlu0 %2240
      %2242 = vrot.lane.b32.xlu0 %v2221, 24
      %v2243 = vpop.permute.xlu0 %2242
      %2244 = vrot.lane.b32.xlu0 %v2222, 24
      %v2245 = vpop.permute.xlu0 %2244
      %2246 = vrot.lane.b32.xlu0 %v2223, 24
      %v2247 = vpop.permute.xlu0 %2246
      %vm2256 = vcmask 224448
      %2257 = vst.msk [vmem:[#allocation3] sm:$0xf] %vm2256, %v2233
      %2258 = vst.msk [vmem:[#allocation3 + $0x4] sm:$0xf] %vm2256, %v2235
      %2259 = vst.msk [vmem:[#allocation3 + $0x8] sm:$0xf] %vm2256, %v2237
      %2260 = vst.msk [vmem:[#allocation3 + $0xc] sm:$0xf] %vm2256, %v2239
      %2261 = vst.msk [vmem:[#allocation3 + $0x10] sm:$0xf] %vm2256, %v2241
      %2262 = vst.msk [vmem:[#allocation3 + $0x14] sm:$0xf] %vm2256, %v2243
      %2263 = vst.msk [vmem:[#allocation3 + $0x18] sm:$0xf] %vm2256, %v2245
      %2264 = vst.msk [vmem:[#allocation3 + $0x1c] sm:$0xf] %vm2256, %v2247
      %s2265 = scalar_lea.vmem [#allocation2], 80
      %v2266 = vld [vmem:[%s2265] sm:$0xf]
      %v2267 = vld [vmem:[%s2265 + $0x8] sm:$0xf]
      %v2268 = vld [vmem:[%s2265 + $0x10] sm:$0xf]
      %v2269 = vld [vmem:[%s2265 + $0x18] sm:$0xf]
      %v2270 = vld [vmem:[%s2265 + $0x20] sm:$0xf]
      %v2271 = vld [vmem:[%s2265 + $0x28] sm:$0xf]
      %v2272 = vld [vmem:[%s2265 + $0x30] sm:$0xf]
      %v2273 = vld [vmem:[%s2265 + $0x38] sm:$0xf]
      %2282 = vrot.lane.b32.xlu0 %v2266, 28
      %v2283 = vpop.permute.xlu0 %2282
      %2284 = vrot.lane.b32.xlu0 %v2267, 28
      %v2285 = vpop.permute.xlu0 %2284
      %2286 = vrot.lane.b32.xlu0 %v2268, 28
      %v2287 = vpop.permute.xlu0 %2286
      %2288 = vrot.lane.b32.xlu0 %v2269, 28
      %v2289 = vpop.permute.xlu0 %2288
      %2290 = vrot.lane.b32.xlu0 %v2270, 28
      %v2291 = vpop.permute.xlu0 %2290
      %2292 = vrot.lane.b32.xlu0 %v2271, 28
      %v2293 = vpop.permute.xlu0 %2292
      %2294 = vrot.lane.b32.xlu0 %v2272, 28
      %v2295 = vpop.permute.xlu0 %2294
      %2296 = vrot.lane.b32.xlu0 %v2273, 28
      %v2297 = vpop.permute.xlu0 %2296
      %vm2306 = vcmask 257248
      %2307 = vst.msk [vmem:[#allocation3] sm:$0xf] %vm2306, %v2283
      %2308 = vst.msk [vmem:[#allocation3 + $0x4] sm:$0xf] %vm2306, %v2285
      %2309 = vst.msk [vmem:[#allocation3 + $0x8] sm:$0xf] %vm2306, %v2287
      %2310 = vst.msk [vmem:[#allocation3 + $0xc] sm:$0xf] %vm2306, %v2289
      %2311 = vst.msk [vmem:[#allocation3 + $0x10] sm:$0xf] %vm2306, %v2291
      %2312 = vst.msk [vmem:[#allocation3 + $0x14] sm:$0xf] %vm2306, %v2293
      %2313 = vst.msk [vmem:[#allocation3 + $0x18] sm:$0xf] %vm2306, %v2295
      %2314 = vst.msk [vmem:[#allocation3 + $0x1c] sm:$0xf] %vm2306, %v2297
      %v2315 = vld [vmem:[%s2215] sm:$0xf]
      %v2316 = vld [vmem:[%s2215 + $0x4] sm:$0x1]
      %v2317 = vld [vmem:[%s2215 + $0x8] sm:$0xf]
      %v2318 = vld [vmem:[%s2215 + $0xc] sm:$0x1]
      %v2319 = vld [vmem:[%s2215 + $0x10] sm:$0xf]
      %v2320 = vld [vmem:[%s2215 + $0x14] sm:$0x1]
      %v2321 = vld [vmem:[%s2215 + $0x18] sm:$0xf]
      %v2322 = vld [vmem:[%s2215 + $0x1c] sm:$0x1]
      %v2323 = vld [vmem:[%s2215 + $0x20] sm:$0xf]
      %v2324 = vld [vmem:[%s2215 + $0x24] sm:$0x1]
      %v2325 = vld [vmem:[%s2215 + $0x28] sm:$0xf]
      %v2326 = vld [vmem:[%s2215 + $0x2c] sm:$0x1]
      %v2327 = vld [vmem:[%s2215 + $0x30] sm:$0xf]
      %v2328 = vld [vmem:[%s2215 + $0x34] sm:$0x1]
      %v2329 = vld [vmem:[%s2215 + $0x38] sm:$0xf]
      %v2330 = vld [vmem:[%s2215 + $0x3c] sm:$0x1]
      %v2332 = vshrl.u32 %v2315, 16
      %v2334 = vrot.slane %v2332, 4
      %v2335 = vshll.u32 %v2315, 16
      %v2337 = vrot.slane %v2335, 5
      %v2338 = vor.u32 %v2334, %v2337
      %v2339 = vrot.slane %v2338, 4
      %v2341 = vshll.u32 %v2316, 16
      %v2343 = vrot.slane %v2341, 5
      %v2344 = vsel %vm1808, %v2339, %v2343
      %v2346 = vshrl.u32 %v2317, 16
      %v2348 = vrot.slane %v2346, 4
      %v2349 = vshll.u32 %v2317, 16
      %v2351 = vrot.slane %v2349, 5
      %v2352 = vor.u32 %v2348, %v2351
      %v2353 = vrot.slane %v2352, 4
      %v2355 = vshll.u32 %v2318, 16
      %v2357 = vrot.slane %v2355, 5
      %v2358 = vsel %vm1808, %v2353, %v2357
      %v2360 = vshrl.u32 %v2319, 16
      %v2362 = vrot.slane %v2360, 4
      %v2363 = vshll.u32 %v2319, 16
      %v2365 = vrot.slane %v2363, 5
      %v2366 = vor.u32 %v2362, %v2365
      %v2367 = vrot.slane %v2366, 4
      %v2369 = vshll.u32 %v2320, 16
      %v2371 = vrot.slane %v2369, 5
      %v2372 = vsel %vm1808, %v2367, %v2371
      %v2374 = vshrl.u32 %v2321, 16
      %v2376 = vrot.slane %v2374, 4
      %v2377 = vshll.u32 %v2321, 16
      %v2379 = vrot.slane %v2377, 5
      %v2380 = vor.u32 %v2376, %v2379
      %v2381 = vrot.slane %v2380, 4
      %v2383 = vshll.u32 %v2322, 16
      %v2385 = vrot.slane %v2383, 5
      %v2386 = vsel %vm1808, %v2381, %v2385
      %v2388 = vshrl.u32 %v2323, 16
      %v2390 = vrot.slane %v2388, 4
      %v2391 = vshll.u32 %v2323, 16
      %v2393 = vrot.slane %v2391, 5
      %v2394 = vor.u32 %v2390, %v2393
      %v2395 = vrot.slane %v2394, 4
      %v2397 = vshll.u32 %v2324, 16
      %v2399 = vrot.slane %v2397, 5
      %v2400 = vsel %vm1808, %v2395, %v2399
      %v2402 = vshrl.u32 %v2325, 16
      %v2404 = vrot.slane %v2402, 4
      %v2405 = vshll.u32 %v2325, 16
      %v2407 = vrot.slane %v2405, 5
      %v2408 = vor.u32 %v2404, %v2407
      %v2409 = vrot.slane %v2408, 4
      %v2411 = vshll.u32 %v2326, 16
      %v2413 = vrot.slane %v2411, 5
      %v2414 = vsel %vm1808, %v2409, %v2413
      %v2416 = vshrl.u32 %v2327, 16
      %v2418 = vrot.slane %v2416, 4
      %v2419 = vshll.u32 %v2327, 16
      %v2421 = vrot.slane %v2419, 5
      %v2422 = vor.u32 %v2418, %v2421
      %v2423 = vrot.slane %v2422, 4
      %v2425 = vshll.u32 %v2328, 16
      %v2427 = vrot.slane %v2425, 5
      %v2428 = vsel %vm1808, %v2423, %v2427
      %v2430 = vshrl.u32 %v2329, 16
      %v2432 = vrot.slane %v2430, 4
      %v2433 = vshll.u32 %v2329, 16
      %v2435 = vrot.slane %v2433, 5
      %v2436 = vor.u32 %v2432, %v2435
      %v2437 = vrot.slane %v2436, 4
      %v2439 = vshll.u32 %v2330, 16
      %v2441 = vrot.slane %v2439, 5
      %v2442 = vsel %vm1808, %v2437, %v2441
      %2443 = vrot.lane.b32.xlu0 %v2344, 32
      %v2444 = vpop.permute.xlu0 %2443
      %2445 = vrot.lane.b32.xlu0 %v2358, 32
      %v2446 = vpop.permute.xlu0 %2445
      %2447 = vrot.lane.b32.xlu0 %v2372, 32
      %v2448 = vpop.permute.xlu0 %2447
      %2449 = vrot.lane.b32.xlu0 %v2386, 32
      %v2450 = vpop.permute.xlu0 %2449
      %2451 = vrot.lane.b32.xlu0 %v2400, 32
      %v2452 = vpop.permute.xlu0 %2451
      %2453 = vrot.lane.b32.xlu0 %v2414, 32
      %v2454 = vpop.permute.xlu0 %2453
      %2455 = vrot.lane.b32.xlu0 %v2428, 32
      %v2456 = vpop.permute.xlu0 %2455
      %2457 = vrot.lane.b32.xlu0 %v2442, 32
      %v2458 = vpop.permute.xlu0 %2457
      %vm2467 = vcmask 290048
      %2468 = vst.msk [vmem:[#allocation3] sm:$0xf] %vm2467, %v2444
      %2469 = vst.msk [vmem:[#allocation3 + $0x4] sm:$0xf] %vm2467, %v2446
      %2470 = vst.msk [vmem:[#allocation3 + $0x8] sm:$0xf] %vm2467, %v2448
      %2471 = vst.msk [vmem:[#allocation3 + $0xc] sm:$0xf] %vm2467, %v2450
      %2472 = vst.msk [vmem:[#allocation3 + $0x10] sm:$0xf] %vm2467, %v2452
      %2473 = vst.msk [vmem:[#allocation3 + $0x14] sm:$0xf] %vm2467, %v2454
      %2474 = vst.msk [vmem:[#allocation3 + $0x18] sm:$0xf] %vm2467, %v2456
      %2475 = vst.msk [vmem:[#allocation3 + $0x1c] sm:$0xf] %vm2467, %v2458
      %v2476 = vld [vmem:[#allocation3] sm:$0xf]
      %v2477 = vld [vmem:[#allocation3 + $0x4] sm:$0xf]
      %v2478 = vld [vmem:[#allocation3 + $0x8] sm:$0xf]
      %v2479 = vld [vmem:[#allocation3 + $0xc] sm:$0xf]
      %v2480 = vld [vmem:[#allocation3 + $0x10] sm:$0xf]
      %v2481 = vld [vmem:[#allocation3 + $0x14] sm:$0xf]
      %v2482 = vld [vmem:[#allocation3 + $0x18] sm:$0xf]
      %v2483 = vld [vmem:[#allocation3 + $0x1c] sm:$0xf]
      %v2484 = vld [vmem:[%s1] sm:$0xf]
      %v2485 = vld [vmem:[%s1 + $0x4] sm:$0xf]
      %v2486 = vld [vmem:[%s1 + $0x8] sm:$0xf]
      %v2487 = vld [vmem:[%s1 + $0xc] sm:$0xf]
      %v2488 = vld [vmem:[%s1 + $0x10] sm:$0x3]
      %v2497 = vunpack.c.l.b16 %v2476
      %v2498 = vunpack.c.l.b16 %v2477
      %v2499 = vunpack.c.l.b16 %v2478
      %v2500 = vunpack.c.l.b16 %v2479
      %v2501 = vunpack.c.l.b16 %v2480
      %v2502 = vunpack.c.l.b16 %v2481
      %v2503 = vunpack.c.l.b16 %v2482
      %v2504 = vunpack.c.l.b16 %v2483
      %v2505 = vpack.c.b16 %v2498, %v2497
      %v2506 = vpack.c.b16 %v2500, %v2499
      %v2507 = vpack.c.b16 %v2502, %v2501
      %v2508 = vpack.c.b16 %v2504, %v2503
      %v2514 = vunpack.c.l.b16 %v2484
      %v2515 = vunpack.c.l.b16 %v2485
      %v2516 = vunpack.c.l.b16 %v2486
      %v2517 = vunpack.c.l.b16 %v2487
      %v2518 = vunpack.c.l.b16 %v2488
      %v2519 = vpack.c.b16 %v2515, %v2514
      %v2520 = vpack.c.b16 %v2517, %v2516
      %v2521 = vpack.c.b16 %v2518, %v2518
      %vm2524 = vcmask 293888
      %v2526 = vsel %vm2524, %v2505, 0
      %v2529 = vsel %vm2524, %v2506, 0
      %v2532 = vsel %vm2524, %v2507, 0
      %v2535 = vsel %vm2524, %v2508, 0
      %vm2537 = vcmask 1041408
      %v2539 = vsel %vm2537, %v2521, 0
      %2541 = vmatprep.subr.bf16.mxu0 0
      %2542 = vmatpush1.bf16.msra.mxu0 0
      %2543 = vmatprep.subr.bf16.mxu0 0
      %2544 = vmatpush1.bf16.msra.mxu0 0
      %2545 = vmatprep.subr.bf16.mxu0 0
      %2546 = vmatpush1.bf16.msra.mxu0 0
      %2547 = vmatprep.subr.bf16.mxu0 0
      %2548 = vmatpush1.bf16.msra.mxu0 0
      %2549 = vmatprep.subr.bf16.mxu0 0
      %2550 = vmatpush1.bf16.msra.mxu0 0
      %2551 = vmatprep.subr.bf16.mxu0 0
      %2552 = vmatpush1.bf16.msra.mxu0 %v2539
      %2553 = vmatprep.subr.bf16.mxu0 0
      %2554 = vmatpush1.bf16.msra.mxu0 %v2520
      %2555 = vmatprep.subr.bf16.mxu0 0
      %2556 = vmatpush1.bf16.msra.mxu0 %v2519
      %2557 = vmatprep.subr.bf16.mxu0 0
      %2558 = vmatpush2.bf16.msra.mxu0 0
      %2559 = vmatprep.subr.bf16.mxu0 0
      %2560 = vmatpush2.bf16.msra.mxu0 0
      %2561 = vmatprep.subr.bf16.mxu0 0
      %2562 = vmatpush2.bf16.msra.mxu0 0
      %2563 = vmatprep.subr.bf16.mxu0 0
      %2564 = vmatpush2.bf16.msra.mxu0 0
      %2565 = vmatprep.subr.bf16.mxu0 0
      %2566 = vmatpush2.bf16.msra.mxu0 0
      %2567 = vmatprep.subr.bf16.mxu0 0
      %2568 = vmatpush2.bf16.msra.mxu0 0
      %2569 = vmatprep.subr.bf16.mxu0 0
      %2570 = vmatpush2.bf16.msra.mxu0 0
      %2571 = vmatprep.subr.bf16.mxu0 0
      %2572 = vmatpush2.bf16.msra.mxu0 0
      %2573 = vmatprep.mubr.bf16.mxu0 0
      %2574 = vmatmul.mubr.bf16.gmra.mxu0 %v2526
      %v2575 = vpop.f32.mrf.mxu0
      %v2576 = vadd.f32 0.0, %v2575
      %v2577 = vpop.f32.mrf.mxu0
      %v2578 = vpop.f32.mrf.mxu0
      %v2579 = vadd.f32 0.0, %v2578
      %v2580 = vpop.f32.mrf.mxu0
      %2581 = vmatprep.mubr.bf16.mxu0 0
      %2582 = vmatmul.mubr.bf16.gmra.mxu0 %v2529
      %v2583 = vpop.f32.mrf.mxu0
      %v2584 = vadd.f32 0.0, %v2583
      %v2585 = vpop.f32.mrf.mxu0
      %v2586 = vpop.f32.mrf.mxu0
      %v2587 = vadd.f32 0.0, %v2586
      %v2588 = vpop.f32.mrf.mxu0
      %2589 = vmatprep.mubr.bf16.mxu0 0
      %2590 = vmatmul.mubr.bf16.gmra.mxu0 %v2532
      %v2591 = vpop.f32.mrf.mxu0
      %v2592 = vadd.f32 0.0, %v2591
      %v2593 = vpop.f32.mrf.mxu0
      %v2594 = vpop.f32.mrf.mxu0
      %v2595 = vadd.f32 0.0, %v2594
      %v2596 = vpop.f32.mrf.mxu0
      %2597 = vmatprep.mubr.bf16.mxu0 0
      %2598 = vmatmul.mubr.bf16.gmra.mxu0 %v2535
      %v2599 = vpop.f32.mrf.mxu0
      %v2600 = vadd.f32 0.0, %v2599
      %v2601 = vpop.f32.mrf.mxu0
      %v2602 = vpop.f32.mrf.mxu0
      %v2603 = vadd.f32 0.0, %v2602
      %v2604 = vpop.f32.mrf.mxu0
      %2605 = vdwg.mxu0
      %v2606 = vld [vmem:[%s325] sm:$0x1]
      %v2608 = vlaneseq
      %v2609 = vshrl.u32 %v2608, 7
      %v2610 = vsub.s32 0, %v2609
      %v2611 = vrot.slane %v2606, %v2610
      %v2613 = vadd.f32 %v2576, %v2611
      %v2614 = vadd.f32 %v2579, %v2611
      %v2615 = vadd.f32 %v2584, %v2611
      %v2616 = vadd.f32 %v2587, %v2611
      %v2617 = vadd.f32 %v2592, %v2611
      %v2618 = vadd.f32 %v2595, %v2611
      %v2619 = vadd.f32 %v2600, %v2611
      %v2620 = vadd.f32 %v2603, %v2611
      %v2621 = vadd.f32 %v2613, 0.0
      %v2622 = vadd.f32 %v2614, 0.0
      %v2623 = vadd.f32 %v2615, 0.0
      %v2624 = vadd.f32 %v2616, 0.0
      %v2625 = vadd.f32 %v2617, 0.0
      %v2626 = vadd.f32 %v2618, 0.0
      %v2627 = vadd.f32 %v2619, 0.0
      %v2628 = vadd.f32 %v2620, 0.0
      %vm2629 = vcmask 64512
      %v2630 = vsel %vm2629, %v2621, 0.0
      %v2631 = vsel %vm2629, %v2622, 0.0
      %v2632 = vadd.f32 %v2630, %v2631
      %v2633 = vsel %vm2629, %v2623, 0.0
      %v2634 = vadd.f32 %v2632, %v2633
      %v2635 = vsel %vm2629, %v2624, 0.0
      %v2636 = vadd.f32 %v2634, %v2635
      %v2637 = vsel %vm2629, %v2625, 0.0
      %v2638 = vadd.f32 %v2636, %v2637
      %v2639 = vsel %vm2629, %v2626, 0.0
      %v2640 = vadd.f32 %v2638, %v2639
      %v2641 = vsel %vm2629, %v2627, 0.0
      %v2642 = vadd.f32 %v2640, %v2641
      %v2643 = vsel %vm2629, %v2628, 0.0
      %v2644 = vadd.f32 %v2642, %v2643
      %v2645 = vrot.slane %v2644, 4
      %v2646 = vadd.f32 %v2644, %v2645
      %v2647 = vrot.slane %v2646, 2
      %v2648 = vadd.f32 %v2646, %v2647
      %v2649 = vrot.slane %v2648, 1
      %v2650 = vadd.f32 %v2648, %v2649
      %vm2651 = vcmask 57344
      %2652 = vst.msk [vmem:[%s333] sm:$0x1] %vm2651, %v2650
      %v2653 = vmul.f32 %v2613, %v2613
      %v2654 = vmul.f32 %v2614, %v2614
      %v2655 = vmul.f32 %v2615, %v2615
      %v2656 = vmul.f32 %v2616, %v2616
      %v2657 = vmul.f32 %v2617, %v2617
      %v2658 = vmul.f32 %v2618, %v2618
      %v2659 = vmul.f32 %v2619, %v2619
      %v2660 = vmul.f32 %v2620, %v2620
      %v2661 = vadd.f32 %v2653, 0.0
      %v2662 = vadd.f32 %v2654, 0.0
      %v2663 = vadd.f32 %v2655, 0.0
      %v2664 = vadd.f32 %v2656, 0.0
      %v2665 = vadd.f32 %v2657, 0.0
      %v2666 = vadd.f32 %v2658, 0.0
      %v2667 = vadd.f32 %v2659, 0.0
      %v2668 = vadd.f32 %v2660, 0.0
      %v2669 = vsel %vm2629, %v2661, 0.0
      %v2670 = vsel %vm2629, %v2662, 0.0
      %v2671 = vadd.f32 %v2669, %v2670
      %v2672 = vsel %vm2629, %v2663, 0.0
      %v2673 = vadd.f32 %v2671, %v2672
      %v2674 = vsel %vm2629, %v2664, 0.0
      %v2675 = vadd.f32 %v2673, %v2674
      %v2676 = vsel %vm2629, %v2665, 0.0
      %v2677 = vadd.f32 %v2675, %v2676
      %v2678 = vsel %vm2629, %v2666, 0.0
      %v2679 = vadd.f32 %v2677, %v2678
      %v2680 = vsel %vm2629, %v2667, 0.0
      %v2681 = vadd.f32 %v2679, %v2680
      %v2682 = vsel %vm2629, %v2668, 0.0
      %v2683 = vadd.f32 %v2681, %v2682
      %v2684 = vrot.slane %v2683, 4
      %v2685 = vadd.f32 %v2683, %v2684
      %v2686 = vrot.slane %v2685, 2
      %v2687 = vadd.f32 %v2685, %v2686
      %v2688 = vrot.slane %v2687, 1
      %v2689 = vadd.f32 %v2687, %v2688
      %2690 = vst.msk [vmem:[%s336] sm:$0x1] %vm2651, %v2689
      %v2691 = vpack.c.bf16 %v2614, %v2613
      %v2692 = vpack.c.bf16 %v2616, %v2615
      %v2693 = vpack.c.bf16 %v2618, %v2617
      %v2694 = vpack.c.bf16 %v2620, %v2619
      %v2699 = vunpack.c.l.b16 %v2691
      %v2700 = vunpack.c.h.b16 %v2691
      %v2701 = vunpack.c.l.b16 %v2692
      %v2702 = vunpack.c.h.b16 %v2692
      %v2703 = vunpack.c.l.b16 %v2693
      %v2704 = vunpack.c.h.b16 %v2693
      %v2705 = vunpack.c.l.b16 %v2694
      %v2706 = vunpack.c.h.b16 %v2694
      %v2707 = vpack.c.b16 %v2699, %v2699
      %v2708 = vpack.c.b16 %v2700, %v2700
      %v2709 = vpack.c.b16 %v2701, %v2701
      %v2710 = vpack.c.b16 %v2702, %v2702
      %v2711 = vpack.c.b16 %v2703, %v2703
      %v2712 = vpack.c.b16 %v2704, %v2704
      %v2713 = vpack.c.b16 %v2705, %v2705
      %v2714 = vpack.c.b16 %v2706, %v2706
      %vm2723 = vcmask 60416
      %2724 = vst.msk [vmem:[%s330] sm:$0xf] %vm2723, %v2707
      %2725 = vst.msk [vmem:[%s330 + $0x4] sm:$0xf] %vm2723, %v2708
      %2726 = vst.msk [vmem:[%s330 + $0x8] sm:$0xf] %vm2723, %v2709
      %2727 = vst.msk [vmem:[%s330 + $0xc] sm:$0xf] %vm2723, %v2710
      %2728 = vst.msk [vmem:[%s330 + $0x10] sm:$0xf] %vm2723, %v2711
      %2729 = vst.msk [vmem:[%s330 + $0x14] sm:$0xf] %vm2723, %v2712
      %2730 = vst.msk [vmem:[%s330 + $0x18] sm:$0xf] %vm2723, %v2713
      %2731 = vst.msk [vmem:[%s330 + $0x1c] sm:$0xf] %vm2723, %v2714
      %p2732 = scmp.lt.s32.totalorder %s20, 1
      %s2733 = scalar_select %p2732, %s20, 1
      %s2734 = smul.addr %s2733, 8
      %s2735 = smul.addr %s2734, 4
      %s2736 = scalar_lea.vmem %s6, %s2735
      %p2737 = scmp.lt.s32.totalorder %s20, 1
      %s2738 = scalar_select %p2737, %s20, 1
      %s2739 = scalar_lea.vmem %s7, %s2738
      %p2740 = scmp.lt.s32.totalorder %s20, 1
      %s2741 = scalar_select %p2740, %s20, 1
      %s2742 = scalar_lea.vmem %s8, %s2741
      // Predicated region
      $region45: #{_lambda_.6} parent=43 // pred_check
        %p2743 = pneg %p174
      $region46: #{_lambda_.6} parent=43 // pred_check_branch
        %2745 = sbr.rel (%p2743) target = $region48
      $region47: #{_lambda_.6} parent=43 // pred_region
        _
      $region48: #{_lambda_.6} parent=43 // pred_fallthru
        _
      // Predicated region
      $region49: #{_lambda_.6} parent=43 // pred_check
        %p2746 = pneg %p200
      $region50: #{_lambda_.6} parent=43 // pred_check_branch
        %2748 = sbr.rel (%p2746) target = $region52
      $region51: #{_lambda_.6} parent=43 // pred_region
        _
      $region52: #{_lambda_.6} parent=43 // pred_fallthru
        _
      // Predicated region
      $region53: #{_lambda_.6} parent=43 // pred_check
        %p2749 = pneg %p226
      $region54: #{_lambda_.6} parent=43 // pred_check_branch
        %2751 = sbr.rel (%p2749) target = $region56
      $region55: #{_lambda_.6} parent=43 // pred_region
        _
      $region56: #{_lambda_.6} parent=43 // pred_fallthru
        _
    $region44: #{_lambda_.6} parent=5 // pred_fallthru
      _
    %p2752 = scmp.le.s32.totalorder 2, %s15
    // Predicated region
    $region57: #{_lambda_.6} parent=5 // pred_check
      %p2753 = pneg %p2752
    $region58: #{_lambda_.6} parent=5 // pred_check_branch
      %2755 = sbr.rel (%p2753) target = $region60
    $region59: #{_lambda_.6} parent=5 // pred_region
      %s2756 = ssub.s32 %s15, 2
      // Predicated region
      $region61: #{_lambda_.6} parent=59 // pred_check
        %p2757 = pneg %p180
      $region62: #{_lambda_.6} parent=59 // pred_check_branch
        %2759 = sbr.rel (%p2757) target = $region64
      $region63: #{_lambda_.6} parent=59 // pred_region
        %p2760 = scmp.lt.s32.totalorder %s21, 1
        %s2761 = scalar_select %p2760, %s21, 1
        %s2762 = smul.addr %s2761, 8
        %s2763 = smul.addr %s2762, 4
        %s2764 = scalar_lea.vmem %s6, %s2763
      $region64: #{_lambda_.6} parent=59 // pred_fallthru
        _
      // Predicated region
      $region65: #{_lambda_.6} parent=59 // pred_check
        %p2765 = pneg %p206
      $region66: #{_lambda_.6} parent=59 // pred_check_branch
        %2767 = sbr.rel (%p2765) target = $region68
      $region67: #{_lambda_.6} parent=59 // pred_region
        %p2768 = scmp.lt.s32.totalorder %s21, 1
        %s2769 = scalar_select %p2768, %s21, 1
        %s2770 = scalar_lea.vmem %s7, %s2769
      $region68: #{_lambda_.6} parent=59 // pred_fallthru
        _
      // Predicated region
      $region69: #{_lambda_.6} parent=59 // pred_check
        %p2771 = pneg %p232
      $region70: #{_lambda_.6} parent=59 // pred_check_branch
        %2773 = sbr.rel (%p2771) target = $region72
      $region71: #{_lambda_.6} parent=59 // pred_region
        %p2774 = scmp.lt.s32.totalorder %s21, 1
        %s2775 = scalar_select %p2774, %s21, 1
        %s2776 = scalar_lea.vmem %s8, %s2775
      $region72: #{_lambda_.6} parent=59 // pred_fallthru
        _
    $region60: #{_lambda_.6} parent=5 // pred_fallthru
      _
  $region6: #{_lambda_.6} parent=0 // loop_footer
    %s19 = sadd.s32 1, %s15
  $region7: #{_lambda_.6} parent=0 // loop_footer_branch
    %14 = sbr.rel target = $region3
  $region8: #{_lambda_.6} parent=0 // loop_exit
    _

</llo_original>
